<compile_context>
chip_gen: v7x
topology: tpu7x:2x2x1
jax: 0.10.0
libtpu: 0.0.40
codegen_flags: <defaults>
</compile_context>

<pallas_src>
import functools
import math

import jax
import jax.numpy as jnp
from jax import lax
from jax.experimental import pallas as pl
from jax.experimental.pallas import tpu as pltpu

VMEM_LIMIT = 48 * 1024 * 1024     # explicit scoped-VMEM budget (fits v5e/v6e/v7x)
PAD_LEFT = 16                     # sublane-aligned left margin for the halo scratch


# ---------------------------------------------------------------------------
# Kernels
# ---------------------------------------------------------------------------
def _pw_bn_relu_kernel(x_ref, w_ref, b_ref, o_ref):
    # 1x1 conv (BN scale pre-folded into w) + bias + ReLU
    # x: (TM, Cin) f32, w: (Cin, Cout) bf16, b: (1, Cout) f32 -> o: (TM, Cout) bf16
    x = x_ref[...].astype(jnp.bfloat16)
    y = jnp.dot(x, w_ref[...], preferred_element_type=jnp.float32)
    y = y + b_ref[...]
    o_ref[...] = jnp.maximum(y, 0.0).astype(o_ref.dtype)


def _pw_bn_add_relu_kernel(h_ref, w_ref, b_ref, r_ref, o_ref):
    # 1x1 conv (BN scale folded) + bias + residual add + ReLU
    # h: (TM, DC) bf16, w: (DC, Cout) bf16, b: (1, Cout) f32, r: (TM, Cout) f32
    y = jnp.dot(h_ref[...], w_ref[...], preferred_element_type=jnp.float32)
    y = y + b_ref[...] + r_ref[...]
    o_ref[...] = jnp.maximum(y, 0.0).astype(o_ref.dtype)


def _gconv3x3_bn_relu_kernel(x_ref, w_ref, b_ref, o_ref, xp_ref, acc_ref, *,
                             stride, Ho, Wo):
    # grouped 3x3 conv (block-densified per channel-block, BN scale folded) + bias + ReLU
    # x:  (1, H, W, CB)      bf16   input tile (one image, one channel block)
    # w:  (1, 3, 3, CB, CB)  bf16   weight for this channel block
    # b:  (1, 1, CB)         f32
    # o:  (1, Ho, Wo, CB)    bf16
    # xp: (H+2, W+2*PAD_LEFT, CB) bf16 scratch  -- zero-filled halo buffer
    # acc:(Ho*Wo, CB)        f32 scratch accumulator
    H, W, CB = x_ref.shape[1], x_ref.shape[2], x_ref.shape[3]

    # halo handled entirely in VMEM: zero-fill, then copy the tile into the
    # interior at a sublane-aligned column offset (no HBM pad round trip).
    xp_ref[...] = jnp.zeros_like(xp_ref)
    xp_ref[1:H + 1, PAD_LEFT:PAD_LEFT + W, :] = x_ref[0]

    acc_ref[...] = jnp.zeros_like(acc_ref)
    hspan = (Ho - 1) * stride + 1
    wspan = (Wo - 1) * stride + 1
    for ky in range(3):
        for kx in range(3):
            wk = w_ref[0, ky, kx]                       # (CB, CB) bf16
            col0 = PAD_LEFT - 1 + kx                    # padded col kx -> scratch col
            if stride == 1:
                xs = xp_ref[ky:ky + Ho, col0:col0 + Wo, :]
            else:
                # TODO(synk): stride>1 keeps an in-register strided slice; a valid
                # no-downsample ResNeXt block always has stride == 1.
                xs = xp_ref[ky:ky + hspan, col0:col0 + wspan, :][::stride, ::stride, :]
            acc_ref[...] += jnp.dot(xs.reshape(Ho * Wo, CB), wk,
                                    preferred_element_type=jnp.float32)
    y = acc_ref[...] + b_ref[0]
    y = jnp.maximum(y, 0.0)
    o_ref[0] = y.reshape(Ho, Wo, CB).astype(o_ref.dtype)


# ---------------------------------------------------------------------------
# pallas_call wrappers
# ---------------------------------------------------------------------------
def _pick_m_tile(m):
    # largest tile that divides M while keeping >=2 grid steps (megacore / pipelining)
    for t in (512, 256, 128, 64, 32, 16, 8):
        if m % t == 0 and m // t >= 2:
            return t
    return m


def _cparams(sem):
    return pltpu.CompilerParams(dimension_semantics=sem,
                                vmem_limit_bytes=VMEM_LIMIT)


def pointwise_bn_relu(x2d, w, b):
    M, Cin = x2d.shape
    Cout = w.shape[1]
    TM = _pick_m_tile(M)
    cost = pl.CostEstimate(
        flops=2 * M * Cin * Cout, transcendentals=0,
        bytes_accessed=M * Cin * 4 + Cin * Cout * 2 + Cout * 4 + M * Cout * 2)
    return pl.pallas_call(
        _pw_bn_relu_kernel,
        grid=(M // TM,),
        in_specs=[pl.BlockSpec((TM, Cin), lambda i: (i, 0)),
                  pl.BlockSpec((Cin, Cout), lambda i: (0, 0)),
                  pl.BlockSpec((1, Cout), lambda i: (0, 0))],
        out_specs=pl.BlockSpec((TM, Cout), lambda i: (i, 0)),
        out_shape=jax.ShapeDtypeStruct((M, Cout), jnp.bfloat16),
        compiler_params=_cparams(("parallel",)),
        cost_estimate=cost,
    )(x2d, w, b)


def pointwise_bn_add_relu(h2d, w, b, r2d):
    M, Cin = h2d.shape
    Cout = w.shape[1]
    TM = _pick_m_tile(M)
    cost = pl.CostEstimate(
        flops=2 * M * Cin * Cout, transcendentals=0,
        bytes_accessed=M * Cin * 2 + Cin * Cout * 2 + Cout * 4 + M * Cout * 8)
    return pl.pallas_call(
        _pw_bn_add_relu_kernel,
        grid=(M // TM,),
        in_specs=[pl.BlockSpec((TM, Cin), lambda i: (i, 0)),
                  pl.BlockSpec((Cin, Cout), lambda i: (0, 0)),
                  pl.BlockSpec((1, Cout), lambda i: (0, 0)),
                  pl.BlockSpec((TM, Cout), lambda i: (i, 0))],
        out_specs=pl.BlockSpec((TM, Cout), lambda i: (i, 0)),
        out_shape=jax.ShapeDtypeStruct((M, Cout), jnp.float32),
        compiler_params=_cparams(("parallel",)),
        cost_estimate=cost,
    )(h2d, w, b, r2d)


def conv3x3_grouped_bn_relu(h, w_dense, b, stride):
    N, H, W, DC = h.shape
    G, _, _, CB, _ = w_dense.shape
    Ho = (H + 2 - 3) // stride + 1
    Wo = (W + 2 - 3) // stride + 1
    kern = functools.partial(_gconv3x3_bn_relu_kernel, stride=stride, Ho=Ho, Wo=Wo)
    cost = pl.CostEstimate(
        flops=2 * N * Ho * Wo * 9 * DC * CB, transcendentals=0,
        bytes_accessed=(h.size * 2 + w_dense.size * 2 + b.size * 4
                        + N * Ho * Wo * DC * 2))
    return pl.pallas_call(
        kern,
        grid=(N, G),
        in_specs=[pl.BlockSpec((1, H, W, CB), lambda n, g: (n, 0, 0, g)),
                  pl.BlockSpec((1, 3, 3, CB, CB), lambda n, g: (g, 0, 0, 0, 0)),
                  pl.BlockSpec((1, 1, CB), lambda n, g: (g, 0, 0))],
        out_specs=pl.BlockSpec((1, Ho, Wo, CB), lambda n, g: (n, 0, 0, g)),
        out_shape=jax.ShapeDtypeStruct((N, Ho, Wo, DC), jnp.bfloat16),
        scratch_shapes=[pltpu.VMEM((H + 2, W + 2 * PAD_LEFT, CB), jnp.bfloat16),
                        pltpu.VMEM((Ho * Wo, CB), jnp.float32)],
        compiler_params=_cparams(("parallel", "parallel")),
        cost_estimate=cost,
    )(h, w_dense, b)


# ---------------------------------------------------------------------------
# Parameter construction (deterministic, synthetic)
# ---------------------------------------------------------------------------
def fold_bn(gamma, beta, mean, var, eps=1e-5):
    scale = gamma / jnp.sqrt(var + eps)
    bias = beta - mean * scale
    return scale, bias


def make_params(key, inplanes, planes, cardinality, base_width):
    D = int(math.floor(planes * (base_width / 64.0)))
    DC = D * cardinality
    Cout = planes * 4
    ks = jax.random.split(key, 6)

    def winit(k, shape):
        fan_in = 1
        for s in shape[1:]:
            fan_in *= s
        return jax.random.normal(k, shape, jnp.float32) / math.sqrt(fan_in)

    # torch-layout weights (OIHW)
    w_reduce_t = winit(ks[0], (DC, inplanes, 1, 1))
    w_conv_t = winit(ks[1], (DC, D, 3, 3))
    w_expand_t = winit(ks[2], (Cout, DC, 1, 1))

    def bn_params(k, c):
        k1, k2, k3, k4 = jax.random.split(k, 4)
        gamma = 1.0 + 0.1 * jax.random.normal(k1, (c,), jnp.float32)
        beta = 0.1 * jax.random.normal(k2, (c,), jnp.float32)
        mean = 0.1 * jax.random.normal(k3, (c,), jnp.float32)
        var = 1.0 + 0.1 * jax.random.uniform(k4, (c,), jnp.float32)
        return gamma, beta, mean, var

    bn_reduce = bn_params(ks[3], DC)
    bn_mid = bn_params(ks[4], DC)
    bn_expand = bn_params(ks[5], Cout)

    torch_params = dict(w_reduce_t=w_reduce_t, w_conv_t=w_conv_t,
                        w_expand_t=w_expand_t, bn_reduce=bn_reduce,
                        bn=bn_mid, bn_expand=bn_expand)

    s_r, b_r = fold_bn(*bn_reduce)
    s_m, b_m = fold_bn(*bn_mid)
    s_e, b_e = fold_bn(*bn_expand)

    # Channel-block size for the grouped conv: pack whole groups so the MXU sees
    # >=128-wide matmuls when possible (per-group when D >= 128, densified otherwise).
    gpb = cardinality
    for cand in range(1, cardinality + 1):
        if cardinality % cand == 0 and cand * D >= 128:
            gpb = cand
            break
    CB = gpb * D
    G = cardinality // gpb

    # Block-densified grouped 3x3 weight, built vectorized: (G, 3, 3, CB, CB)
    wg = w_conv_t.reshape(cardinality, D, D, 3, 3)       # (grp, out, in, kh, kw)
    wt = jnp.transpose(wg, (0, 3, 4, 2, 1))              # (grp, kh, kw, in, out)
    wb = wt.reshape(G, gpb, 3, 3, D, D)
    eye = jnp.eye(gpb, dtype=wt.dtype)
    dense = jnp.einsum('gpkhio,pq->gkhpiqo', wb, eye)    # block-diagonal per block
    dense = dense.reshape(G, 3, 3, CB, CB)
    dense = dense * s_m.reshape(G, 1, 1, 1, CB)          # fold BN scale (out channels)

    kernel_params = dict(
        w_reduce=(jnp.transpose(w_reduce_t[:, :, 0, 0], (1, 0))
                  * s_r[None, :]).astype(jnp.bfloat16),              # (Cin, DC)
        b_reduce=b_r.reshape(1, DC),
        w_conv=dense.astype(jnp.bfloat16),                            # (G,3,3,CB,CB)
        b_conv=b_m.reshape(G, 1, CB),
        w_expand=(jnp.transpose(w_expand_t[:, :, 0, 0], (1, 0))
                  * s_e[None, :]).astype(jnp.bfloat16),               # (DC, Cout)
        b_expand=b_e.reshape(1, Cout),
    )
    return torch_params, kernel_params


# ---------------------------------------------------------------------------
# Forward pass (Pallas) and pure-JAX reference
# ---------------------------------------------------------------------------
@functools.partial(jax.jit, static_argnames=("stride",))
def resnext_bottleneck_forward(x_nchw, p, stride=1):
    # downsample is None in the spec usage => stride == 1 and inplanes == planes*4.
    # TODO(synk): downsample branch of the module is not implemented (None here).
    N, Cin, H, W = x_nchw.shape
    DC = p['w_reduce'].shape[1]
    Cout = p['w_expand'].shape[1]
    x = jnp.transpose(x_nchw, (0, 2, 3, 1))                  # NHWC, channels on lanes

    h1 = pointwise_bn_relu(x.reshape(N * H * W, Cin),
                           p['w_reduce'], p['b_reduce'])      # (M, DC) bf16
    h1 = h1.reshape(N, H, W, DC)

    h2 = conv3x3_grouped_bn_relu(h1, p['w_conv'], p['b_conv'], stride)
    _, Ho, Wo, _ = h2.shape

    residual = x.reshape(N * Ho * Wo, Cout)                   # valid: stride==1, Cin==Cout
    out2d = pointwise_bn_add_relu(h2.reshape(N * Ho * Wo, DC),
                                  p['w_expand'], p['b_expand'], residual)
    out = out2d.reshape(N, Ho, Wo, Cout)
    return jnp.transpose(out, (0, 3, 1, 2))                   # back to NCHW


def reference_forward(x, tp, stride, cardinality, eps=1e-5):
    def bn(y, g, b, m, v):
        g, b, m, v = (t[None, :, None, None] for t in (g, b, m, v))
        return (y - m) / jnp.sqrt(v + eps) * g + b

    dn = ('NCHW', 'OIHW', 'NCHW')
    hp = jax.lax.Precision.HIGHEST
    y = lax.conv_general_dilated(x, tp['w_reduce_t'], (1, 1), 'VALID',
                                 dimension_numbers=dn, precision=hp)
    y = jnp.maximum(bn(y, *tp['bn_reduce']), 0.0)
    y = lax.conv_general_dilated(y, tp['w_conv_t'], (stride, stride),
                                 ((1, 1), (1, 1)), dimension_numbers=dn,
                                 feature_group_count=cardinality, precision=hp)
    y = jnp.maximum(bn(y, *tp['bn']), 0.0)
    y = lax.conv_general_dilated(y, tp['w_expand_t'], (1, 1), 'VALID',
                                 dimension_numbers=dn, precision=hp)
    y = bn(y, *tp['bn_expand'])
    return jnp.maximum(x + y, 0.0)


# ---------------------------------------------------------------------------
if __name__ == "__main__":
    # Small self-consistent configuration (downsample=None => inplanes == planes*4)
    N, H, W = 2, 16, 16
    planes, cardinality, base_width, stride = 4, 4, 64, 1
    inplanes = planes * 4                                      # 16

    key = jax.random.PRNGKey(0)
    kx, kp = jax.random.split(key)
    x = jax.random.normal(kx, (N, inplanes, H, W), jnp.float32)   # NCHW input

    torch_params, kernel_params = make_params(kp, inplanes, planes,
                                              cardinality, base_width)

    out = resnext_bottleneck_forward(x, kernel_params, stride=stride)
    out = jax.block_until_ready(out)

    ref = jax.block_until_ready(reference_forward(x, torch_params, stride, cardinality))

    assert out.shape == (N, inplanes, H, W)
    # Kernel runs bf16 matmuls with f32 accumulation; reference is f32 HIGHEST.
    assert jnp.allclose(out, ref, rtol=1e-1, atol=1e-1), \
        f"max abs err = {float(jnp.max(jnp.abs(out - ref)))}"

    print("KERNEL_OK")
</pallas_src>

<mosaic_0001>
module attributes {stable_mosaic.version = 11 : i64} {
  func.func @_pw_bn_add_relu_kernel(%arg0: i32, %arg1: memref<256x16xbf16, #tpu.memory_space<vmem>>, %arg2: memref<16x16xbf16, #tpu.memory_space<vmem>>, %arg3: memref<1x16xf32, #tpu.memory_space<vmem>>, %arg4: memref<256x16xf32, #tpu.memory_space<vmem>>, %arg5: memref<256x16xf32, #tpu.memory_space<vmem>>) attributes {dimension_semantics = [#tpu.dimension_semantics<parallel>], iteration_bounds = array<i64: 2>, scalar_prefetch = 0 : i64, scratch_operands = 0 : i64, tpu.core_type = #tpu.core_type<tc>, window_params = [{transform_indices = @transform_0, window_bounds = array<i64: 256, 16>}, {pipeline_mode = #tpu.pipeline_mode<synchronous>, transform_indices = @transform_1, window_bounds = array<i64: 16, 16>}, {pipeline_mode = #tpu.pipeline_mode<synchronous>, transform_indices = @transform_2, window_bounds = array<i64: 1, 16>}, {transform_indices = @transform_3, window_bounds = array<i64: 256, 16>}, {transform_indices = @transform_4, window_bounds = array<i64: 256, 16>}]} {
    %c0 = arith.constant 0 : index
    %c0_0 = arith.constant 0 : index
    %0 = vector.load %arg1[%c0, %c0_0] : memref<256x16xbf16, #tpu.memory_space<vmem>>, vector<256x16xbf16>
    %c0_1 = arith.constant 0 : index
    %c0_2 = arith.constant 0 : index
    %1 = vector.load %arg2[%c0_1, %c0_2] : memref<16x16xbf16, #tpu.memory_space<vmem>>, vector<16x16xbf16>
    %cst = arith.constant dense<0.000000e+00> : vector<256x16xf32>
    %2 = tpu.matmul %0, %1, %cst {dimension_numbers = #tpu.dot_dimension_numbers<[1], [0], [0], [1], [0, 0, 1, 1], [], []>} : vector<256x16xbf16>, vector<16x16xbf16>, vector<256x16xf32> -> vector<256x16xf32>
    %c0_3 = arith.constant 0 : index
    %c0_4 = arith.constant 0 : index
    %3 = vector.load %arg3[%c0_3, %c0_4] : memref<1x16xf32, #tpu.memory_space<vmem>>, vector<1x16xf32>
    %4 = vector.broadcast %3 : vector<1x16xf32> to vector<256x16xf32>
    %5 = arith.addf %2, %4 : vector<256x16xf32>
    %c0_5 = arith.constant 0 : index
    %c0_6 = arith.constant 0 : index
    %6 = vector.load %arg4[%c0_5, %c0_6] : memref<256x16xf32, #tpu.memory_space<vmem>>, vector<256x16xf32>
    %7 = arith.addf %5, %6 : vector<256x16xf32>
    %cst_7 = arith.constant 0.000000e+00 : f32
    %8 = vector.broadcast %cst_7 : f32 to vector<256x16xf32>
    %9 = arith.maximumf %7, %8 : vector<256x16xf32>
    %c0_8 = arith.constant 0 : index
    %c0_9 = arith.constant 0 : index
    %10 = vector.load %arg5[%c0_8, %c0_9] : memref<256x16xf32, #tpu.memory_space<vmem>>, vector<256x16xf32>
    tpu.vector_store %arg5[%c0_8, %c0_9], %9 {strides = array<i32>} : memref<256x16xf32, #tpu.memory_space<vmem>>, vector<256x16xf32>,
    return
  }
  func.func @transform_0(%arg0: i32) -> (i32, i32) {
    %c0_i32 = arith.constant 0 : i32
    %c0_i32_0 = arith.constant 0 : i32
    return %arg0, %c0_i32 : i32, i32
  }
  func.func @transform_1(%arg0: i32) -> (i32, i32) {
    %c0_i32 = arith.constant 0 : i32
    %c0_i32_0 = arith.constant 0 : i32
    %c0_i32_1 = arith.constant 0 : i32
    return %c0_i32, %c0_i32_0 : i32, i32
  }
  func.func @transform_2(%arg0: i32) -> (i32, i32) {
    %c0_i32 = arith.constant 0 : i32
    %c0_i32_0 = arith.constant 0 : i32
    %c0_i32_1 = arith.constant 0 : i32
    return %c0_i32, %c0_i32_0 : i32, i32
  }
  func.func @transform_3(%arg0: i32) -> (i32, i32) {
    %c0_i32 = arith.constant 0 : i32
    %c0_i32_0 = arith.constant 0 : i32
    return %arg0, %c0_i32 : i32, i32
  }
  func.func @transform_4(%arg0: i32) -> (i32, i32) {
    %c0_i32 = arith.constant 0 : i32
    %c0_i32_0 = arith.constant 0 : i32
    return %arg0, %c0_i32 : i32, i32
  }
}

module attributes {stable_mosaic.version = 11 : i64} {
  func.func @_pw_bn_relu_kernel(%arg0: i32, %arg1: memref<256x16xf32, #tpu.memory_space<vmem>>, %arg2: memref<16x16xbf16, #tpu.memory_space<vmem>>, %arg3: memref<1x16xf32, #tpu.memory_space<vmem>>, %arg4: memref<256x16xbf16, #tpu.memory_space<vmem>>) attributes {dimension_semantics = [#tpu.dimension_semantics<parallel>], iteration_bounds = array<i64: 2>, scalar_prefetch = 0 : i64, scratch_operands = 0 : i64, tpu.core_type = #tpu.core_type<tc>, window_params = [{transform_indices = @transform_0, window_bounds = array<i64: 256, 16>}, {pipeline_mode = #tpu.pipeline_mode<synchronous>, transform_indices = @transform_1, window_bounds = array<i64: 16, 16>}, {pipeline_mode = #tpu.pipeline_mode<synchronous>, transform_indices = @transform_2, window_bounds = array<i64: 1, 16>}, {transform_indices = @transform_3, window_bounds = array<i64: 256, 16>}]} {
    %c0 = arith.constant 0 : index
    %c0_0 = arith.constant 0 : index
    %0 = vector.load %arg1[%c0, %c0_0] : memref<256x16xf32, #tpu.memory_space<vmem>>, vector<256x16xf32>
    %1 = arith.truncf %0 : vector<256x16xf32> to vector<256x16xbf16>
    %c0_1 = arith.constant 0 : index
    %c0_2 = arith.constant 0 : index
    %2 = vector.load %arg2[%c0_1, %c0_2] : memref<16x16xbf16, #tpu.memory_space<vmem>>, vector<16x16xbf16>
    %cst = arith.constant dense<0.000000e+00> : vector<256x16xf32>
    %3 = tpu.matmul %1, %2, %cst {dimension_numbers = #tpu.dot_dimension_numbers<[1], [0], [0], [1], [0, 0, 1, 1], [], []>} : vector<256x16xbf16>, vector<16x16xbf16>, vector<256x16xf32> -> vector<256x16xf32>
    %c0_3 = arith.constant 0 : index
    %c0_4 = arith.constant 0 : index
    %4 = vector.load %arg3[%c0_3, %c0_4] : memref<1x16xf32, #tpu.memory_space<vmem>>, vector<1x16xf32>
    %5 = vector.broadcast %4 : vector<1x16xf32> to vector<256x16xf32>
    %6 = arith.addf %3, %5 : vector<256x16xf32>
    %cst_5 = arith.constant 0.000000e+00 : f32
    %7 = vector.broadcast %cst_5 : f32 to vector<256x16xf32>
    %8 = arith.maximumf %6, %7 : vector<256x16xf32>
    %9 = arith.truncf %8 : vector<256x16xf32> to vector<256x16xbf16>
    %c0_6 = arith.constant 0 : index
    %c0_7 = arith.constant 0 : index
    %10 = vector.load %arg4[%c0_6, %c0_7] : memref<256x16xbf16, #tpu.memory_space<vmem>>, vector<256x16xbf16>
    tpu.vector_store %arg4[%c0_6, %c0_7], %9 {strides = array<i32>} : memref<256x16xbf16, #tpu.memory_space<vmem>>, vector<256x16xbf16>,
    return
  }
  func.func @transform_0(%arg0: i32) -> (i32, i32) {
    %c0_i32 = arith.constant 0 : i32
    %c0_i32_0 = arith.constant 0 : i32
    return %arg0, %c0_i32 : i32, i32
  }
  func.func @transform_1(%arg0: i32) -> (i32, i32) {
    %c0_i32 = arith.constant 0 : i32
    %c0_i32_0 = arith.constant 0 : i32
    %c0_i32_1 = arith.constant 0 : i32
    return %c0_i32, %c0_i32_0 : i32, i32
  }
  func.func @transform_2(%arg0: i32) -> (i32, i32) {
    %c0_i32 = arith.constant 0 : i32
    %c0_i32_0 = arith.constant 0 : i32
    %c0_i32_1 = arith.constant 0 : i32
    return %c0_i32, %c0_i32_0 : i32, i32
  }
  func.func @transform_3(%arg0: i32) -> (i32, i32) {
    %c0_i32 = arith.constant 0 : i32
    %c0_i32_0 = arith.constant 0 : i32
    return %arg0, %c0_i32 : i32, i32
  }
}

module attributes {stable_mosaic.version = 11 : i64} {
  func.func @_gconv3x3_bn_relu_kernel(%arg0: i32, %arg1: i32, %arg2: memref<1x16x16x16xbf16, #tpu.memory_space<vmem>>, %arg3: memref<1x3x3x16x16xbf16, #tpu.memory_space<vmem>>, %arg4: memref<1x1x16xf32, #tpu.memory_space<vmem>>, %arg5: memref<1x16x16x16xbf16, #tpu.memory_space<vmem>>, %arg6: memref<18x48x16xbf16, #tpu.memory_space<vmem>>, %arg7: memref<256x16xf32, #tpu.memory_space<vmem>>) attributes {dimension_semantics = [#tpu.dimension_semantics<parallel>, #tpu.dimension_semantics<parallel>], iteration_bounds = array<i64: 2, 1>, scalar_prefetch = 0 : i64, scratch_operands = 2 : i64, tpu.core_type = #tpu.core_type<tc>, window_params = [{transform_indices = @transform_0, window_bounds = array<i64: 1, 16, 16, 16>}, {transform_indices = @transform_1, window_bounds = array<i64: 1, 3, 3, 16, 16>}, {transform_indices = @transform_2, window_bounds = array<i64: 1, 1, 16>}, {transform_indices = @transform_3, window_bounds = array<i64: 1, 16, 16, 16>}]} {
    %cst = arith.constant 0.000000e+00 : bf16
    %0 = vector.broadcast %cst : bf16 to vector<18x48x16xbf16>
    %c0 = arith.constant 0 : index
    %c0_0 = arith.constant 0 : index
    %c0_1 = arith.constant 0 : index
    %1 = vector.load %arg6[%c0, %c0_0, %c0_1] : memref<18x48x16xbf16, #tpu.memory_space<vmem>>, vector<18x48x16xbf16>
    tpu.vector_store %arg6[%c0, %c0_0, %c0_1], %0 {strides = array<i32>} : memref<18x48x16xbf16, #tpu.memory_space<vmem>>, vector<18x48x16xbf16>,
    %c0_2 = arith.constant 0 : index
    %c0_3 = arith.constant 0 : index
    %c0_4 = arith.constant 0 : index
    %c0_5 = arith.constant 0 : index
    %2 = vector.load %arg2[%c0_2, %c0_3, %c0_4, %c0_5] : memref<1x16x16x16xbf16, #tpu.memory_space<vmem>>, vector<1x16x16x16xbf16>
    %3 = vector.shape_cast %2 : vector<1x16x16x16xbf16> to vector<16x16x16xbf16>
    %c1 = arith.constant 1 : index
    %c16 = arith.constant 16 : index
    %c0_6 = arith.constant 0 : index
    %4 = vector.load %arg6[%c1, %c16, %c0_6] : memref<18x48x16xbf16, #tpu.memory_space<vmem>>, vector<16x16x16xbf16>
    tpu.vector_store %arg6[%c1, %c16, %c0_6], %3 {strides = array<i32>} : memref<18x48x16xbf16, #tpu.memory_space<vmem>>, vector<16x16x16xbf16>,
    %cst_7 = arith.constant 0.000000e+00 : f32
    %5 = vector.broadcast %cst_7 : f32 to vector<256x16xf32>
    %c0_8 = arith.constant 0 : index
    %c0_9 = arith.constant 0 : index
    %6 = vector.load %arg7[%c0_8, %c0_9] : memref<256x16xf32, #tpu.memory_space<vmem>>, vector<256x16xf32>
    tpu.vector_store %arg7[%c0_8, %c0_9], %5 {strides = array<i32>} : memref<256x16xf32, #tpu.memory_space<vmem>>, vector<256x16xf32>,
    %c0_10 = arith.constant 0 : index
    %c0_11 = arith.constant 0 : index
    %c0_12 = arith.constant 0 : index
    %c0_13 = arith.constant 0 : index
    %c0_14 = arith.constant 0 : index
    %7 = vector.load %arg3[%c0_10, %c0_11, %c0_12, %c0_13, %c0_14] : memref<1x3x3x16x16xbf16, #tpu.memory_space<vmem>>, vector<1x1x1x16x16xbf16>
    %8 = vector.shape_cast %7 : vector<1x1x1x16x16xbf16> to vector<16x16xbf16>
    %c0_15 = arith.constant 0 : index
    %c15 = arith.constant 15 : index
    %c0_16 = arith.constant 0 : index
    %9 = vector.load %arg6[%c0_15, %c15, %c0_16] : memref<18x48x16xbf16, #tpu.memory_space<vmem>>, vector<16x16x16xbf16>
    %c0_17 = arith.constant 0 : index
    %c0_18 = arith.constant 0 : index
    %10 = vector.load %arg7[%c0_17, %c0_18] : memref<256x16xf32, #tpu.memory_space<vmem>>, vector<256x16xf32>
    %11 = vector.shape_cast %9 : vector<16x16x16xbf16> to vector<256x16xbf16>
    %cst_19 = arith.constant dense<0.000000e+00> : vector<256x16xf32>
    %12 = tpu.matmul %11, %8, %cst_19 {dimension_numbers = #tpu.dot_dimension_numbers<[1], [0], [0], [1], [0, 0, 1, 1], [], []>} : vector<256x16xbf16>, vector<16x16xbf16>, vector<256x16xf32> -> vector<256x16xf32>
    %13 = arith.addf %10, %12 : vector<256x16xf32>
    %c0_20 = arith.constant 0 : index
    %c0_21 = arith.constant 0 : index
    %14 = vector.load %arg7[%c0_20, %c0_21] : memref<256x16xf32, #tpu.memory_space<vmem>>, vector<256x16xf32>
    tpu.vector_store %arg7[%c0_20, %c0_21], %13 {strides = array<i32>} : memref<256x16xf32, #tpu.memory_space<vmem>>, vector<256x16xf32>,
    %c0_22 = arith.constant 0 : index
    %c0_23 = arith.constant 0 : index
    %c1_24 = arith.constant 1 : index
    %c0_25 = arith.constant 0 : index
    %c0_26 = arith.constant 0 : index
    %15 = vector.load %arg3[%c0_22, %c0_23, %c1_24, %c0_25, %c0_26] : memref<1x3x3x16x16xbf16, #tpu.memory_space<vmem>>, vector<1x1x1x16x16xbf16>
    %16 = vector.shape_cast %15 : vector<1x1x1x16x16xbf16> to vector<16x16xbf16>
    %c0_27 = arith.constant 0 : index
    %c16_28 = arith.constant 16 : index
    %c0_29 = arith.constant 0 : index
    %17 = vector.load %arg6[%c0_27, %c16_28, %c0_29] : memref<18x48x16xbf16, #tpu.memory_space<vmem>>, vector<16x16x16xbf16>
    %c0_30 = arith.constant 0 : index
    %c0_31 = arith.constant 0 : index
    %18 = vector.load %arg7[%c0_30, %c0_31] : memref<256x16xf32, #tpu.memory_space<vmem>>, vector<256x16xf32>
    %19 = vector.shape_cast %17 : vector<16x16x16xbf16> to vector<256x16xbf16>
    %cst_32 = arith.constant dense<0.000000e+00> : vector<256x16xf32>
    %20 = tpu.matmul %19, %16, %cst_32 {dimension_numbers = #tpu.dot_dimension_numbers<[1], [0], [0], [1], [0, 0, 1, 1], [], []>} : vector<256x16xbf16>, vector<16x16xbf16>, vector<256x16xf32> -> vector<256x16xf32>
    %21 = arith.addf %18, %20 : vector<256x16xf32>
    %c0_33 = arith.constant 0 : index
    %c0_34 = arith.constant 0 : index
    %22 = vector.load %arg7[%c0_33, %c0_34] : memref<256x16xf32, #tpu.memory_space<vmem>>, vector<256x16xf32>
    tpu.vector_store %arg7[%c0_33, %c0_34], %21 {strides = array<i32>} : memref<256x16xf32, #tpu.memory_space<vmem>>, vector<256x16xf32>,
    %c0_35 = arith.constant 0 : index
    %c0_36 = arith.constant 0 : index
    %c2 = arith.constant 2 : index
    %c0_37 = arith.constant 0 : index
    %c0_38 = arith.constant 0 : index
    %23 = vector.load %arg3[%c0_35, %c0_36, %c2, %c0_37, %c0_38] : memref<1x3x3x16x16xbf16, #tpu.memory_space<vmem>>, vector<1x1x1x16x16xbf16>
    %24 = vector.shape_cast %23 : vector<1x1x1x16x16xbf16> to vector<16x16xbf16>
    %c0_39 = arith.constant 0 : index
    %c17 = arith.constant 17 : index
    %c0_40 = arith.constant 0 : index
    %25 = vector.load %arg6[%c0_39, %c17, %c0_40] : memref<18x48x16xbf16, #tpu.memory_space<vmem>>, vector<16x16x16xbf16>
    %c0_41 = arith.constant 0 : index
    %c0_42 = arith.constant 0 : index
    %26 = vector.load %arg7[%c0_41, %c0_42] : memref<256x16xf32, #tpu.memory_space<vmem>>, vector<256x16xf32>
    %27 = vector.shape_cast %25 : vector<16x16x16xbf16> to vector<256x16xbf16>
    %cst_43 = arith.constant dense<0.000000e+00> : vector<256x16xf32>
    %28 = tpu.matmul %27, %24, %cst_43 {dimension_numbers = #tpu.dot_dimension_numbers<[1], [0], [0], [1], [0, 0, 1, 1], [], []>} : vector<256x16xbf16>, vector<16x16xbf16>, vector<256x16xf32> -> vector<256x16xf32>
    %29 = arith.addf %26, %28 : vector<256x16xf32>
    %c0_44 = arith.constant 0 : index
    %c0_45 = arith.constant 0 : index
    %30 = vector.load %arg7[%c0_44, %c0_45] : memref<256x16xf32, #tpu.memory_space<vmem>>, vector<256x16xf32>
    tpu.vector_store %arg7[%c0_44, %c0_45], %29 {strides = array<i32>} : memref<256x16xf32, #tpu.memory_space<vmem>>, vector<256x16xf32>,
    %c0_46 = arith.constant 0 : index
    %c1_47 = arith.constant 1 : index
    %c0_48 = arith.constant 0 : index
    %c0_49 = arith.constant 0 : index
    %c0_50 = arith.constant 0 : index
    %31 = vector.load %arg3[%c0_46, %c1_47, %c0_48, %c0_49, %c0_50] : memref<1x3x3x16x16xbf16, #tpu.memory_space<vmem>>, vector<1x1x1x16x16xbf16>
    %32 = vector.shape_cast %31 : vector<1x1x1x16x16xbf16> to vector<16x16xbf16>
    %c1_51 = arith.constant 1 : index
    %c15_52 = arith.constant 15 : index
    %c0_53 = arith.constant 0 : index
    %33 = vector.load %arg6[%c1_51, %c15_52, %c0_53] : memref<18x48x16xbf16, #tpu.memory_space<vmem>>, vector<16x16x16xbf16>
    %c0_54 = arith.constant 0 : index
    %c0_55 = arith.constant 0 : index
    %34 = vector.load %arg7[%c0_54, %c0_55] : memref<256x16xf32, #tpu.memory_space<vmem>>, vector<256x16xf32>
    %35 = vector.shape_cast %33 : vector<16x16x16xbf16> to vector<256x16xbf16>
    %cst_56 = arith.constant dense<0.000000e+00> : vector<256x16xf32>
    %36 = tpu.matmul %35, %32, %cst_56 {dimension_numbers = #tpu.dot_dimension_numbers<[1], [0], [0], [1], [0, 0, 1, 1], [], []>} : vector<256x16xbf16>, vector<16x16xbf16>, vector<256x16xf32> -> vector<256x16xf32>
    %37 = arith.addf %34, %36 : vector<256x16xf32>
    %c0_57 = arith.constant 0 : index
    %c0_58 = arith.constant 0 : index
    %38 = vector.load %arg7[%c0_57, %c0_58] : memref<256x16xf32, #tpu.memory_space<vmem>>, vector<256x16xf32>
    tpu.vector_store %arg7[%c0_57, %c0_58], %37 {strides = array<i32>} : memref<256x16xf32, #tpu.memory_space<vmem>>, vector<256x16xf32>,
    %c0_59 = arith.constant 0 : index
    %c1_60 = arith.constant 1 : index
    %c1_61 = arith.constant 1 : index
    %c0_62 = arith.constant 0 : index
    %c0_63 = arith.constant 0 : index
    %39 = vector.load %arg3[%c0_59, %c1_60, %c1_61, %c0_62, %c0_63] : memref<1x3x3x16x16xbf16, #tpu.memory_space<vmem>>, vector<1x1x1x16x16xbf16>
    %40 = vector.shape_cast %39 : vector<1x1x1x16x16xbf16> to vector<16x16xbf16>
    %c1_64 = arith.constant 1 : index
    %c16_65 = arith.constant 16 : index
    %c0_66 = arith.constant 0 : index
    %41 = vector.load %arg6[%c1_64, %c16_65, %c0_66] : memref<18x48x16xbf16, #tpu.memory_space<vmem>>, vector<16x16x16xbf16>
    %c0_67 = arith.constant 0 : index
    %c0_68 = arith.constant 0 : index
    %42 = vector.load %arg7[%c0_67, %c0_68] : memref<256x16xf32, #tpu.memory_space<vmem>>, vector<256x16xf32>
    %43 = vector.shape_cast %41 : vector<16x16x16xbf16> to vector<256x16xbf16>
    %cst_69 = arith.constant dense<0.000000e+00> : vector<256x16xf32>
    %44 = tpu.matmul %43, %40, %cst_69 {dimension_numbers = #tpu.dot_dimension_numbers<[1], [0], [0], [1], [0, 0, 1, 1], [], []>} : vector<256x16xbf16>, vector<16x16xbf16>, vector<256x16xf32> -> vector<256x16xf32>
    %45 = arith.addf %42, %44 : vector<256x16xf32>
    %c0_70 = arith.constant 0 : index
    %c0_71 = arith.constant 0 : index
    %46 = vector.load %arg7[%c0_70, %c0_71] : memref<256x16xf32, #tpu.memory_space<vmem>>, vector<256x16xf32>
    tpu.vector_store %arg7[%c0_70, %c0_71], %45 {strides = array<i32>} : memref<256x16xf32, #tpu.memory_space<vmem>>, vector<256x16xf32>,
    %c0_72 = arith.constant 0 : index
    %c1_73 = arith.constant 1 : index
    %c2_74 = arith.constant 2 : index
    %c0_75 = arith.constant 0 : index
    %c0_76 = arith.constant 0 : index
    %47 = vector.load %arg3[%c0_72, %c1_73, %c2_74, %c0_75, %c0_76] : memref<1x3x3x16x16xbf16, #tpu.memory_space<vmem>>, vector<1x1x1x16x16xbf16>
    %48 = vector.shape_cast %47 : vector<1x1x1x16x16xbf16> to vector<16x16xbf16>
    %c1_77 = arith.constant 1 : index
    %c17_78 = arith.constant 17 : index
    %c0_79 = arith.constant 0 : index
    %49 = vector.load %arg6[%c1_77, %c17_78, %c0_79] : memref<18x48x16xbf16, #tpu.memory_space<vmem>>, vector<16x16x16xbf16>
    %c0_80 = arith.constant 0 : index
    %c0_81 = arith.constant 0 : index
    %50 = vector.load %arg7[%c0_80, %c0_81] : memref<256x16xf32, #tpu.memory_space<vmem>>, vector<256x16xf32>
    %51 = vector.shape_cast %49 : vector<16x16x16xbf16> to vector<256x16xbf16>
    %cst_82 = arith.constant dense<0.000000e+00> : vector<256x16xf32>
    %52 = tpu.matmul %51, %48, %cst_82 {dimension_numbers = #tpu.dot_dimension_numbers<[1], [0], [0], [1], [0, 0, 1, 1], [], []>} : vector<256x16xbf16>, vector<16x16xbf16>, vector<256x16xf32> -> vector<256x16xf32>
    %53 = arith.addf %50, %52 : vector<256x16xf32>
    %c0_83 = arith.constant 0 : index
    %c0_84 = arith.constant 0 : index
    %54 = vector.load %arg7[%c0_83, %c0_84] : memref<256x16xf32, #tpu.memory_space<vmem>>, vector<256x16xf32>
    tpu.vector_store %arg7[%c0_83, %c0_84], %53 {strides = array<i32>} : memref<256x16xf32, #tpu.memory_space<vmem>>, vector<256x16xf32>,
    %c0_85 = arith.constant 0 : index
    %c2_86 = arith.constant 2 : index
    %c0_87 = arith.constant 0 : index
    %c0_88 = arith.constant 0 : index
    %c0_89 = arith.constant 0 : index
    %55 = vector.load %arg3[%c0_85, %c2_86, %c0_87, %c0_88, %c0_89] : memref<1x3x3x16x16xbf16, #tpu.memory_space<vmem>>, vector<1x1x1x16x16xbf16>
    %56 = vector.shape_cast %55 : vector<1x1x1x16x16xbf16> to vector<16x16xbf16>
    %c2_90 = arith.constant 2 : index
    %c15_91 = arith.constant 15 : index
    %c0_92 = arith.constant 0 : index
    %57 = vector.load %arg6[%c2_90, %c15_91, %c0_92] : memref<18x48x16xbf16, #tpu.memory_space<vmem>>, vector<16x16x16xbf16>
    %c0_93 = arith.constant 0 : index
    %c0_94 = arith.constant 0 : index
    %58 = vector.load %arg7[%c0_93, %c0_94] : memref<256x16xf32, #tpu.memory_space<vmem>>, vector<256x16xf32>
    %59 = vector.shape_cast %57 : vector<16x16x16xbf16> to vector<256x16xbf16>
    %cst_95 = arith.constant dense<0.000000e+00> : vector<256x16xf32>
    %60 = tpu.matmul %59, %56, %cst_95 {dimension_numbers = #tpu.dot_dimension_numbers<[1], [0], [0], [1], [0, 0, 1, 1], [], []>} : vector<256x16xbf16>, vector<16x16xbf16>, vector<256x16xf32> -> vector<256x16xf32>
    %61 = arith.addf %58, %60 : vector<256x16xf32>
    %c0_96 = arith.constant 0 : index
    %c0_97 = arith.constant 0 : index
    %62 = vector.load %arg7[%c0_96, %c0_97] : memref<256x16xf32, #tpu.memory_space<vmem>>, vector<256x16xf32>
    tpu.vector_store %arg7[%c0_96, %c0_97], %61 {strides = array<i32>} : memref<256x16xf32, #tpu.memory_space<vmem>>, vector<256x16xf32>,
    %c0_98 = arith.constant 0 : index
    %c2_99 = arith.constant 2 : index
    %c1_100 = arith.constant 1 : index
    %c0_101 = arith.constant 0 : index
    %c0_102 = arith.constant 0 : index
    %63 = vector.load %arg3[%c0_98, %c2_99, %c1_100, %c0_101, %c0_102] : memref<1x3x3x16x16xbf16, #tpu.memory_space<vmem>>, vector<1x1x1x16x16xbf16>
    %64 = vector.shape_cast %63 : vector<1x1x1x16x16xbf16> to vector<16x16xbf16>
    %c2_103 = arith.constant 2 : index
    %c16_104 = arith.constant 16 : index
    %c0_105 = arith.constant 0 : index
    %65 = vector.load %arg6[%c2_103, %c16_104, %c0_105] : memref<18x48x16xbf16, #tpu.memory_space<vmem>>, vector<16x16x16xbf16>
    %c0_106 = arith.constant 0 : index
    %c0_107 = arith.constant 0 : index
    %66 = vector.load %arg7[%c0_106, %c0_107] : memref<256x16xf32, #tpu.memory_space<vmem>>, vector<256x16xf32>
    %67 = vector.shape_cast %65 : vector<16x16x16xbf16> to vector<256x16xbf16>
    %cst_108 = arith.constant dense<0.000000e+00> : vector<256x16xf32>
    %68 = tpu.matmul %67, %64, %cst_108 {dimension_numbers = #tpu.dot_dimension_numbers<[1], [0], [0], [1], [0, 0, 1, 1], [], []>} : vector<256x16xbf16>, vector<16x16xbf16>, vector<256x16xf32> -> vector<256x16xf32>
    %69 = arith.addf %66, %68 : vector<256x16xf32>
    %c0_109 = arith.constant 0 : index
    %c0_110 = arith.constant 0 : index
    %70 = vector.load %arg7[%c0_109, %c0_110] : memref<256x16xf32, #tpu.memory_space<vmem>>, vector<256x16xf32>
    tpu.vector_store %arg7[%c0_109, %c0_110], %69 {strides = array<i32>} : memref<256x16xf32, #tpu.memory_space<vmem>>, vector<256x16xf32>,
    %c0_111 = arith.constant 0 : index
    %c2_112 = arith.constant 2 : index
    %c2_113 = arith.constant 2 : index
    %c0_114 = arith.constant 0 : index
    %c0_115 = arith.constant 0 : index
    %71 = vector.load %arg3[%c0_111, %c2_112, %c2_113, %c0_114, %c0_115] : memref<1x3x3x16x16xbf16, #tpu.memory_space<vmem>>, vector<1x1x1x16x16xbf16>
    %72 = vector.shape_cast %71 : vector<1x1x1x16x16xbf16> to vector<16x16xbf16>
    %c2_116 = arith.constant 2 : index
    %c17_117 = arith.constant 17 : index
    %c0_118 = arith.constant 0 : index
    %73 = vector.load %arg6[%c2_116, %c17_117, %c0_118] : memref<18x48x16xbf16, #tpu.memory_space<vmem>>, vector<16x16x16xbf16>
    %c0_119 = arith.constant 0 : index
    %c0_120 = arith.constant 0 : index
    %74 = vector.load %arg7[%c0_119, %c0_120] : memref<256x16xf32, #tpu.memory_space<vmem>>, vector<256x16xf32>
    %75 = vector.shape_cast %73 : vector<16x16x16xbf16> to vector<256x16xbf16>
    %cst_121 = arith.constant dense<0.000000e+00> : vector<256x16xf32>
    %76 = tpu.matmul %75, %72, %cst_121 {dimension_numbers = #tpu.dot_dimension_numbers<[1], [0], [0], [1], [0, 0, 1, 1], [], []>} : vector<256x16xbf16>, vector<16x16xbf16>, vector<256x16xf32> -> vector<256x16xf32>
    %77 = arith.addf %74, %76 : vector<256x16xf32>
    %c0_122 = arith.constant 0 : index
    %c0_123 = arith.constant 0 : index
    %78 = vector.load %arg7[%c0_122, %c0_123] : memref<256x16xf32, #tpu.memory_space<vmem>>, vector<256x16xf32>
    tpu.vector_store %arg7[%c0_122, %c0_123], %77 {strides = array<i32>} : memref<256x16xf32, #tpu.memory_space<vmem>>, vector<256x16xf32>,
    %c0_124 = arith.constant 0 : index
    %c0_125 = arith.constant 0 : index
    %79 = vector.load %arg7[%c0_124, %c0_125] : memref<256x16xf32, #tpu.memory_space<vmem>>, vector<256x16xf32>
    %c0_126 = arith.constant 0 : index
    %c0_127 = arith.constant 0 : index
    %c0_128 = arith.constant 0 : index
    %80 = vector.load %arg4[%c0_126, %c0_127, %c0_128] : memref<1x1x16xf32, #tpu.memory_space<vmem>>, vector<1x1x16xf32>
    %81 = vector.shape_cast %80 : vector<1x1x16xf32> to vector<1x16xf32>
    %82 = vector.broadcast %81 : vector<1x16xf32> to vector<256x16xf32>
    %83 = arith.addf %79, %82 : vector<256x16xf32>
    %cst_129 = arith.constant 0.000000e+00 : f32
    %84 = vector.broadcast %cst_129 : f32 to vector<256x16xf32>
    %85 = arith.maximumf %83, %84 : vector<256x16xf32>
    %86 = vector.shape_cast %85 : vector<256x16xf32> to vector<16x16x16xf32>
    %87 = arith.truncf %86 : vector<16x16x16xf32> to vector<16x16x16xbf16>
    %c0_130 = arith.constant 0 : index
    %c0_131 = arith.constant 0 : index
    %c0_132 = arith.constant 0 : index
    %c0_133 = arith.constant 0 : index
    %88 = vector.load %arg5[%c0_130, %c0_131, %c0_132, %c0_133] : memref<1x16x16x16xbf16, #tpu.memory_space<vmem>>, vector<1x16x16x16xbf16>
    %89 = vector.shape_cast %88 : vector<1x16x16x16xbf16> to vector<16x16x16xbf16>
    %90 = vector.shape_cast %87 : vector<16x16x16xbf16> to vector<1x16x16x16xbf16>
    tpu.vector_store %arg5[%c0_130, %c0_131, %c0_132, %c0_133], %90 {strides = array<i32>} : memref<1x16x16x16xbf16, #tpu.memory_space<vmem>>, vector<1x16x16x16xbf16>,
    return
  }
  func.func @transform_0(%arg0: i32, %arg1: i32) -> (i32, i32, i32, i32) {
    %c0_i32 = arith.constant 0 : i32
    %c0_i32_0 = arith.constant 0 : i32
    %c0_i32_1 = arith.constant 0 : i32
    return %arg0, %c0_i32, %c0_i32_0, %arg1 : i32, i32, i32, i32
  }
  func.func @transform_1(%arg0: i32, %arg1: i32) -> (i32, i32, i32, i32, i32) {
    %c0_i32 = arith.constant 0 : i32
    %c0_i32_0 = arith.constant 0 : i32
    %c0_i32_1 = arith.constant 0 : i32
    %c0_i32_2 = arith.constant 0 : i32
    %c0_i32_3 = arith.constant 0 : i32
    return %arg1, %c0_i32, %c0_i32_0, %c0_i32_1, %c0_i32_2 : i32, i32, i32, i32, i32
  }
  func.func @transform_2(%arg0: i32, %arg1: i32) -> (i32, i32, i32) {
    %c0_i32 = arith.constant 0 : i32
    %c0_i32_0 = arith.constant 0 : i32
    %c0_i32_1 = arith.constant 0 : i32
    return %arg1, %c0_i32, %c0_i32_0 : i32, i32, i32
  }
  func.func @transform_3(%arg0: i32, %arg1: i32) -> (i32, i32, i32, i32) {
    %c0_i32 = arith.constant 0 : i32
    %c0_i32_0 = arith.constant 0 : i32
    %c0_i32_1 = arith.constant 0 : i32
    return %arg0, %c0_i32, %c0_i32_0, %arg1 : i32, i32, i32, i32
  }
}

</mosaic_0001>

<llo_original>
// kernel: resnext_bottleneck_forward.5
$region0: #{resnext_bottleneck_forward.5}
  #allocation0 [shape = 'u32[]', space=smem, size = 0x4, offset = 0x4, fixed_abs, tag = 'smem constant byte address 0x4 - core index']
  #allocation1 [shape = 'u32[144,128]{1,0:T(1,128)}', space=vmem, size = 0x12000, scoped, tag = 'internal scratch']
  %s0 = inlined_call_operand.vmem [shape: bf16[512,16], index: 0, kind: input, shape index: {}]
  %s1 = inlined_call_operand.vmem [shape: bf16[16,16], index: 1, kind: input, shape index: {}]
  %s2 = inlined_call_operand.vmem [shape: f32[1,16], index: 2, kind: input, shape index: {}]
  %s3 = inlined_call_operand.vmem [shape: f32[512,16], index: 3, kind: input, shape index: {}]
  %s4 = inlined_call_operand.vmem [shape: f32[512,16], index: 4, kind: output, shape index: {}]
  %s5 = sld [smem:[#allocation0]]
  $region49: #{resnext_bottleneck_forward.5} parent=0
    _
  %s7 = ssub.s32 1, %s5
  %s8 = scalar_select 0, %s7, %s5
  loop: start=0, step=1, limit=4
  $region2: #{resnext_bottleneck_forward.5} parent=0 // loop_pre_header
    _
  $region3: #{resnext_bottleneck_forward.5} parent=0 // loop_header
    %s10 = sphi 0, %s14
    %p11 = scmp.ge.s32.totalorder %s10, 4
    %s20 = sphi 0, %s22
    %s23 = sphi 0, %s20
    %s24 = sphi 0, %s23
    %s40 = sphi 0, %s24
    %s44 = sphi 0, %s44
    %s46 = sphi 0, %s44
    %s47 = sphi 0, %s46
    %s61 = sphi 0, %s47
    %s65 = sphi 0, %s65
    %s67 = sphi 0, %s65
    %s68 = sphi 0, %s67
    %s82 = sphi 0, %s68
    %s88 = sphi 0, %s90
    %s91 = sphi 0, %s88
    %s92 = sphi 0, %s91
    %s108 = sphi 0, %s92
    %s114 = sphi 0, %s116
    %s117 = sphi 0, %s114
    %s118 = sphi 0, %s117
    %s134 = sphi 0, %s118
  $region4: #{resnext_bottleneck_forward.5} parent=0 // loop_header_branch
    %13 = sbr.rel (%p11) target = $region8
  $region5: #{resnext_bottleneck_forward.5} parent=0 // loop_body
    %s15 = ssub.s32 %s10, 1
    %s16 = ssub.s32 %s10, 2
    %s17 = sadd.s32 %s10, 1
    %s18 = ssub.s32 %s10, %s17
    %p19 = scmp.eq.s32.totalorder %s18, 0
    %s21 = sadd.s32 %s20, 1
    %s22 = scalar_select %p19, %s20, %s21
    %p25 = pneg %p19
    %p26 = scmp.eq.s32.totalorder %s10, 1
    %p27 = por %p25, %p26
    %p28 = scmp.ne.s32.totalorder %s20, %s23
    %p29 = scmp.eq.s32.totalorder %s10, 0
    %p30 = por %p28, %p29
    %p31 = scmp.ne.s32.totalorder %s20, %s23
    %p32 = scmp.eq.s32.totalorder %s15, 1
    %p33 = por %p31, %p32
    %p34 = scmp.ne.s32.totalorder %s23, %s24
    %p35 = scmp.eq.s32.totalorder %s15, 0
    %p36 = por %p34, %p35
    %p37 = scmp.ne.s32.totalorder %s23, %s24
    %p38 = scmp.eq.s32.totalorder %s16, 1
    %p39 = por %p37, %p38
    %p41 = scmp.ne.s32.totalorder %s24, %s40
    %p42 = scmp.eq.s32.totalorder %s16, 0
    %p43 = por %p41, %p42
    %s45 = sadd.s32 %s44, 1
    %p48 = scmp.eq.s32.totalorder %s10, 1
    %p49 = scmp.ne.s32.totalorder %s44, %s46
    %p50 = scmp.eq.s32.totalorder %s10, 0
    %p51 = por %p49, %p50
    %p52 = scmp.ne.s32.totalorder %s44, %s46
    %p53 = scmp.eq.s32.totalorder %s15, 1
    %p54 = por %p52, %p53
    %p55 = scmp.ne.s32.totalorder %s46, %s47
    %p56 = scmp.eq.s32.totalorder %s15, 0
    %p57 = por %p55, %p56
    %p58 = scmp.ne.s32.totalorder %s46, %s47
    %p59 = scmp.eq.s32.totalorder %s16, 1
    %p60 = por %p58, %p59
    %p62 = scmp.ne.s32.totalorder %s47, %s61
    %p63 = scmp.eq.s32.totalorder %s16, 0
    %p64 = por %p62, %p63
    %s66 = sadd.s32 %s65, 1
    %p69 = scmp.eq.s32.totalorder %s10, 1
    %p70 = scmp.ne.s32.totalorder %s65, %s67
    %p71 = scmp.eq.s32.totalorder %s10, 0
    %p72 = por %p70, %p71
    %p73 = scmp.ne.s32.totalorder %s65, %s67
    %p74 = scmp.eq.s32.totalorder %s15, 1
    %p75 = por %p73, %p74
    %p76 = scmp.ne.s32.totalorder %s67, %s68
    %p77 = scmp.eq.s32.totalorder %s15, 0
    %p78 = por %p76, %p77
    %p79 = scmp.ne.s32.totalorder %s67, %s68
    %p80 = scmp.eq.s32.totalorder %s16, 1
    %p81 = por %p79, %p80
    %p83 = scmp.ne.s32.totalorder %s68, %s82
    %p84 = scmp.eq.s32.totalorder %s16, 0
    %p85 = por %p83, %p84
    %s86 = ssub.s32 %s10, %s17
    %p87 = scmp.eq.s32.totalorder %s86, 0
    %s89 = sadd.s32 %s88, 1
    %s90 = scalar_select %p87, %s88, %s89
    %p93 = pneg %p87
    %p94 = scmp.eq.s32.totalorder %s10, 1
    %p95 = por %p93, %p94
    %p96 = scmp.ne.s32.totalorder %s88, %s91
    %p97 = scmp.eq.s32.totalorder %s10, 0
    %p98 = por %p96, %p97
    %p99 = scmp.ne.s32.totalorder %s88, %s91
    %p100 = scmp.eq.s32.totalorder %s15, 1
    %p101 = por %p99, %p100
    %p102 = scmp.ne.s32.totalorder %s91, %s92
    %p103 = scmp.eq.s32.totalorder %s15, 0
    %p104 = por %p102, %p103
    %p105 = scmp.ne.s32.totalorder %s91, %s92
    %p106 = scmp.eq.s32.totalorder %s16, 1
    %p107 = por %p105, %p106
    %p109 = scmp.ne.s32.totalorder %s92, %s108
    %p110 = scmp.eq.s32.totalorder %s16, 0
    %p111 = por %p109, %p110
    %s112 = ssub.s32 %s10, %s17
    %p113 = scmp.eq.s32.totalorder %s112, 0
    %s115 = sadd.s32 %s114, 1
    %s116 = scalar_select %p113, %s114, %s115
    %p119 = pneg %p113
    %p120 = scmp.eq.s32.totalorder %s10, 1
    %p121 = por %p119, %p120
    %p122 = scmp.ne.s32.totalorder %s114, %s117
    %p123 = scmp.eq.s32.totalorder %s10, 0
    %p124 = por %p122, %p123
    %p125 = scmp.ne.s32.totalorder %s114, %s117
    %p126 = scmp.eq.s32.totalorder %s15, 1
    %p127 = por %p125, %p126
    %p128 = scmp.ne.s32.totalorder %s117, %s118
    %p129 = scmp.eq.s32.totalorder %s15, 0
    %p130 = por %p128, %p129
    %p131 = scmp.ne.s32.totalorder %s117, %s118
    %p132 = scmp.eq.s32.totalorder %s16, 1
    %p133 = por %p131, %p132
    %p135 = scmp.ne.s32.totalorder %s118, %s134
    %p136 = scmp.eq.s32.totalorder %s16, 0
    %p137 = por %p135, %p136
    %p138 = scmp.le.s32.totalorder 1, %s10
    %p139 = scmp.lt.s32.totalorder %s10, 3
    %p140 = pnand %p138, %p139
    %p141 = pneg %p140
    // Predicated region
    $region9: #{resnext_bottleneck_forward.5} parent=5 // pred_check
      _
    $region10: #{resnext_bottleneck_forward.5} parent=5 // pred_check_branch
      %143 = sbr.rel (%p140) target = $region12
    $region11: #{resnext_bottleneck_forward.5} parent=5 // pred_region
      %s144 = ssub.s32 %s10, 1
      // Predicated region
      $region13: #{resnext_bottleneck_forward.5} parent=11 // pred_check
        %p145 = pneg %p57
      $region14: #{resnext_bottleneck_forward.5} parent=11 // pred_check_branch
        %147 = sbr.rel (%p145) target = $region16
      $region15: #{resnext_bottleneck_forward.5} parent=11 // pred_region
        _
      $region16: #{resnext_bottleneck_forward.5} parent=11 // pred_fallthru
        _
      // Predicated region
      $region17: #{resnext_bottleneck_forward.5} parent=11 // pred_check
        %p148 = pneg %p78
      $region18: #{resnext_bottleneck_forward.5} parent=11 // pred_check_branch
        %150 = sbr.rel (%p148) target = $region20
      $region19: #{resnext_bottleneck_forward.5} parent=11 // pred_region
        _
      $region20: #{resnext_bottleneck_forward.5} parent=11 // pred_fallthru
        _
    $region12: #{resnext_bottleneck_forward.5} parent=5 // pred_fallthru
      _
    %p151 = scmp.lt.s32.totalorder %s10, 2
    // Predicated region
    $region21: #{resnext_bottleneck_forward.5} parent=5 // pred_check
      %p152 = pneg %p151
    $region22: #{resnext_bottleneck_forward.5} parent=5 // pred_check_branch
      %154 = sbr.rel (%p152) target = $region24
    $region23: #{resnext_bottleneck_forward.5} parent=5 // pred_region
      // Predicated region
      $region25: #{resnext_bottleneck_forward.5} parent=23 // pred_check
        %p155 = pneg %p30
      $region26: #{resnext_bottleneck_forward.5} parent=23 // pred_check_branch
        %157 = sbr.rel (%p155) target = $region28
      $region27: #{resnext_bottleneck_forward.5} parent=23 // pred_region
        %s158 = smul.u32 32, %s10
        %p159 = scmp.lt.s32.totalorder %s158, 63
        %s160 = scalar_select %p159, %s158, 63
        %s161 = smul.addr %s160, 4
        %s162 = scalar_lea.vmem %s0, %s161
        %s163 = smul.u32 32, %s10
      $region28: #{resnext_bottleneck_forward.5} parent=23 // pred_fallthru
        _
      // Predicated region
      $region29: #{resnext_bottleneck_forward.5} parent=23 // pred_check
        %p164 = pneg %p98
      $region30: #{resnext_bottleneck_forward.5} parent=23 // pred_check_branch
        %166 = sbr.rel (%p164) target = $region32
      $region31: #{resnext_bottleneck_forward.5} parent=23 // pred_region
        %s167 = smul.u32 32, %s10
        %p168 = scmp.lt.s32.totalorder %s167, 63
        %s169 = scalar_select %p168, %s167, 63
        %s170 = smul.addr %s169, 8
        %s171 = scalar_lea.vmem %s3, %s170
        %s172 = smul.u32 32, %s10
      $region32: #{resnext_bottleneck_forward.5} parent=23 // pred_fallthru
        _
    $region24: #{resnext_bottleneck_forward.5} parent=5 // pred_fallthru
      _
    %p173 = scmp.le.s32.totalorder 1, %s10
    %p174 = scmp.lt.s32.totalorder %s10, 3
    %p175 = pnand %p173, %p174
    %p176 = pneg %p175
    // Predicated region
    $region33: #{resnext_bottleneck_forward.5} parent=5 // pred_check
      _
    $region34: #{resnext_bottleneck_forward.5} parent=5 // pred_check_branch
      %178 = sbr.rel (%p175) target = $region36
    $region35: #{resnext_bottleneck_forward.5} parent=5 // pred_region
      %s179 = ssub.s32 %s10, 1
      %s180 = smul.u32 32, %s15
      %p181 = scmp.lt.s32.totalorder %s180, 63
      %s182 = scalar_select %p181, %s180, 63
      %s183 = smul.addr %s182, 4
      %s184 = scalar_lea.vmem %s0, %s183
      %p185 = pneg %p36
      %p186 = pneg %p33
      %p187 = pneg %p57
      %p188 = pneg %p54
      %p189 = pneg %p78
      %p190 = pneg %p75
      %s191 = smul.u32 32, %s15
      %p192 = scmp.lt.s32.totalorder %s191, 63
      %s193 = scalar_select %p192, %s191, 63
      %s194 = smul.addr %s193, 8
      %s195 = scalar_lea.vmem %s3, %s194
      %p196 = pneg %p104
      %p197 = pneg %p101
      %p198 = pneg %p130
      %p199 = pneg %p127
      %s200 = smul.u32 32, %s15
      %p201 = scmp.lt.s32.totalorder %s200, 63
      %s202 = scalar_select %p201, %s200, 63
      %s203 = smul.addr %s202, 8
      %s204 = scalar_lea.vmem %s4, %s203
      %s205 = smul.u32 32, %s15
      %p206 = scmp.lt.s32.totalorder %s205, 63
      %s207 = scalar_select %p206, %s205, 63
      %s208 = smul.addr %s207, 4
      %s209 = scalar_lea.vmem %s0, %s208
      %s210 = smul.u32 32, %s15
      %s211 = smul.u32 32, %s15
      %p212 = scmp.lt.s32.totalorder %s211, 63
      %s213 = scalar_select %p212, %s211, 63
      %s214 = smul.addr %s213, 8
      %s215 = scalar_lea.vmem %s3, %s214
      %s216 = smul.u32 32, %s15
      %s217 = smul.u32 32, %s15
      %p218 = scmp.lt.s32.totalorder %s217, 63
      %s219 = scalar_select %p218, %s217, 63
      %s220 = smul.addr %s219, 8
      %s221 = scalar_lea.vmem %s4, %s220
      %s222 = smul.u32 32, %s15
      %v224 = vld [vmem:[%s209] sm:$0xf]
      %v225 = vld [vmem:[%s209 + $0x4] sm:$0xf]
      %v226 = vld [vmem:[%s209 + $0x8] sm:$0xf]
      %v227 = vld [vmem:[%s209 + $0xc] sm:$0xf]
      %v228 = vld [vmem:[%s209 + $0x10] sm:$0xf]
      %v229 = vld [vmem:[%s209 + $0x14] sm:$0xf]
      %v230 = vld [vmem:[%s209 + $0x18] sm:$0xf]
      %v231 = vld [vmem:[%s209 + $0x1c] sm:$0xf]
      %v232 = vld [vmem:[%s209 + $0x20] sm:$0xf]
      %v233 = vld [vmem:[%s209 + $0x24] sm:$0xf]
      %v234 = vld [vmem:[%s209 + $0x28] sm:$0xf]
      %v235 = vld [vmem:[%s209 + $0x2c] sm:$0xf]
      %v236 = vld [vmem:[%s209 + $0x30] sm:$0xf]
      %v237 = vld [vmem:[%s209 + $0x34] sm:$0xf]
      %v238 = vld [vmem:[%s209 + $0x38] sm:$0xf]
      %v239 = vld [vmem:[%s209 + $0x3c] sm:$0xf]
      %v240 = vld [vmem:[%s209 + $0x40] sm:$0xf]
      %v241 = vld [vmem:[%s209 + $0x44] sm:$0xf]
      %v242 = vld [vmem:[%s209 + $0x48] sm:$0xf]
      %v243 = vld [vmem:[%s209 + $0x4c] sm:$0xf]
      %v244 = vld [vmem:[%s209 + $0x50] sm:$0xf]
      %v245 = vld [vmem:[%s209 + $0x54] sm:$0xf]
      %v246 = vld [vmem:[%s209 + $0x58] sm:$0xf]
      %v247 = vld [vmem:[%s209 + $0x5c] sm:$0xf]
      %v248 = vld [vmem:[%s209 + $0x60] sm:$0xf]
      %v249 = vld [vmem:[%s209 + $0x64] sm:$0xf]
      %v250 = vld [vmem:[%s209 + $0x68] sm:$0xf]
      %v251 = vld [vmem:[%s209 + $0x6c] sm:$0xf]
      %v252 = vld [vmem:[%s209 + $0x70] sm:$0xf]
      %v253 = vld [vmem:[%s209 + $0x74] sm:$0xf]
      %v254 = vld [vmem:[%s209 + $0x78] sm:$0xf]
      %v255 = vld [vmem:[%s209 + $0x7c] sm:$0xf]
      %v256 = vld [vmem:[%s1] sm:$0xf]
      %v257 = vld [vmem:[%s1 + $0x4] sm:$0xf]
      %v258 = vld [vmem:[%s2] sm:$0x1]
      %v260 = vlaneseq
      %v261 = vshrl.u32 %v260, 7
      %v262 = vsub.s32 0, %v261
      %v263 = vrot.slane %v258, %v262
      %v297 = vunpack.c.l.b16 %v224
      %v298 = vunpack.c.l.b16 %v225
      %v299 = vunpack.c.l.b16 %v226
      %v300 = vunpack.c.l.b16 %v227
      %v301 = vunpack.c.l.b16 %v228
      %v302 = vunpack.c.l.b16 %v229
      %v303 = vunpack.c.l.b16 %v230
      %v304 = vunpack.c.l.b16 %v231
      %v305 = vunpack.c.l.b16 %v232
      %v306 = vunpack.c.l.b16 %v233
      %v307 = vunpack.c.l.b16 %v234
      %v308 = vunpack.c.l.b16 %v235
      %v309 = vunpack.c.l.b16 %v236
      %v310 = vunpack.c.l.b16 %v237
      %v311 = vunpack.c.l.b16 %v238
      %v312 = vunpack.c.l.b16 %v239
      %v313 = vunpack.c.l.b16 %v240
      %v314 = vunpack.c.l.b16 %v241
      %v315 = vunpack.c.l.b16 %v242
      %v316 = vunpack.c.l.b16 %v243
      %v317 = vunpack.c.l.b16 %v244
      %v318 = vunpack.c.l.b16 %v245
      %v319 = vunpack.c.l.b16 %v246
      %v320 = vunpack.c.l.b16 %v247
      %v321 = vunpack.c.l.b16 %v248
      %v322 = vunpack.c.l.b16 %v249
      %v323 = vunpack.c.l.b16 %v250
      %v324 = vunpack.c.l.b16 %v251
      %v325 = vunpack.c.l.b16 %v252
      %v326 = vunpack.c.l.b16 %v253
      %v327 = vunpack.c.l.b16 %v254
      %v328 = vunpack.c.l.b16 %v255
      %v329 = vpack.c.b16 %v298, %v297
      %v330 = vpack.c.b16 %v300, %v299
      %v331 = vpack.c.b16 %v302, %v301
      %v332 = vpack.c.b16 %v304, %v303
      %v333 = vpack.c.b16 %v306, %v305
      %v334 = vpack.c.b16 %v308, %v307
      %v335 = vpack.c.b16 %v310, %v309
      %v336 = vpack.c.b16 %v312, %v311
      %v337 = vpack.c.b16 %v314, %v313
      %v338 = vpack.c.b16 %v316, %v315
      %v339 = vpack.c.b16 %v318, %v317
      %v340 = vpack.c.b16 %v320, %v319
      %v341 = vpack.c.b16 %v322, %v321
      %v342 = vpack.c.b16 %v324, %v323
      %v343 = vpack.c.b16 %v326, %v325
      %v344 = vpack.c.b16 %v328, %v327
      %v347 = vunpack.c.l.b16 %v256
      %v348 = vunpack.c.l.b16 %v257
      %v349 = vpack.c.b16 %v348, %v347
      %vm351 = vcmask 130048
      %v353 = vsel %vm351, %v329, 0
      %v356 = vsel %vm351, %v330, 0
      %v359 = vsel %vm351, %v331, 0
      %v362 = vsel %vm351, %v332, 0
      %v365 = vsel %vm351, %v333, 0
      %v368 = vsel %vm351, %v334, 0
      %v371 = vsel %vm351, %v335, 0
      %v374 = vsel %vm351, %v336, 0
      %v377 = vsel %vm351, %v337, 0
      %v380 = vsel %vm351, %v338, 0
      %v383 = vsel %vm351, %v339, 0
      %v386 = vsel %vm351, %v340, 0
      %v389 = vsel %vm351, %v341, 0
      %v392 = vsel %vm351, %v342, 0
      %v395 = vsel %vm351, %v343, 0
      %v398 = vsel %vm351, %v344, 0
      %400 = vmatprep.subr.bf16.mxu0 0
      %401 = vmatpush1.bf16.msra.mxu0 %v349
      %402 = vmatprep.subr.bf16.mxu0 0
      %403 = vmatpush1.bf16.msra.mxu0 0
      %404 = vmatprep.subr.bf16.mxu0 0
      %405 = vmatpush1.bf16.msra.mxu0 0
      %406 = vmatprep.subr.bf16.mxu0 0
      %407 = vmatpush1.bf16.msra.mxu0 0
      %408 = vmatprep.subr.bf16.mxu0 0
      %409 = vmatpush1.bf16.msra.mxu0 0
      %410 = vmatprep.subr.bf16.mxu0 0
      %411 = vmatpush1.bf16.msra.mxu0 0
      %412 = vmatprep.subr.bf16.mxu0 0
      %413 = vmatpush1.bf16.msra.mxu0 0
      %414 = vmatprep.subr.bf16.mxu0 0
      %415 = vmatpush1.bf16.msra.mxu0 0
      %416 = vmatprep.subr.bf16.mxu0 0
      %417 = vmatpush1.bf16.msra.mxu0 0
      %418 = vmatprep.subr.bf16.mxu0 0
      %419 = vmatpush1.bf16.msra.mxu0 0
      %420 = vmatprep.subr.bf16.mxu0 0
      %421 = vmatpush1.bf16.msra.mxu0 0
      %422 = vmatprep.subr.bf16.mxu0 0
      %423 = vmatpush1.bf16.msra.mxu0 0
      %424 = vmatprep.subr.bf16.mxu0 0
      %425 = vmatpush1.bf16.msra.mxu0 0
      %426 = vmatprep.subr.bf16.mxu0 0
      %427 = vmatpush1.bf16.msra.mxu0 0
      %428 = vmatprep.subr.bf16.mxu0 0
      %429 = vmatpush1.bf16.msra.mxu0 0
      %430 = vmatprep.subr.bf16.mxu0 0
      %431 = vmatpush1.bf16.msra.mxu0 0
      %432 = vmatprep.mubr.bf16.mxu0 0
      %433 = vmatmul.mubr.bf16.gmra.mrb[0].mxu0 %v353
      %v434 = vpop.f32.mrb[0].mxu0
      %v435 = vadd.f32 %v263, %v434
      %v436 = vpop.f32.mrb[0].mxu0
      %v437 = vpop.f32.mrb[0].mxu0
      %v438 = vadd.f32 %v263, %v437
      %v439 = vpop.f32.mrb[0].mxu0
      %440 = vmatprep.mubr.bf16.mxu0 0
      %441 = vmatmul.mubr.bf16.gmra.mrb[0].mxu0 %v356
      %v442 = vpop.f32.mrb[0].mxu0
      %v443 = vadd.f32 %v263, %v442
      %v444 = vpop.f32.mrb[0].mxu0
      %v445 = vpop.f32.mrb[0].mxu0
      %v446 = vadd.f32 %v263, %v445
      %v447 = vpop.f32.mrb[0].mxu0
      %448 = vmatprep.mubr.bf16.mxu0 0
      %449 = vmatmul.mubr.bf16.gmra.mrb[0].mxu0 %v359
      %v450 = vpop.f32.mrb[0].mxu0
      %v451 = vadd.f32 %v263, %v450
      %v452 = vpop.f32.mrb[0].mxu0
      %v453 = vpop.f32.mrb[0].mxu0
      %v454 = vadd.f32 %v263, %v453
      %v455 = vpop.f32.mrb[0].mxu0
      %456 = vmatprep.mubr.bf16.mxu0 0
      %457 = vmatmul.mubr.bf16.gmra.mrb[0].mxu0 %v362
      %v458 = vpop.f32.mrb[0].mxu0
      %v459 = vadd.f32 %v263, %v458
      %v460 = vpop.f32.mrb[0].mxu0
      %v461 = vpop.f32.mrb[0].mxu0
      %v462 = vadd.f32 %v263, %v461
      %v463 = vpop.f32.mrb[0].mxu0
      %464 = vmatprep.mubr.bf16.mxu0 0
      %465 = vmatmul.mubr.bf16.gmra.mrb[0].mxu0 %v365
      %v466 = vpop.f32.mrb[0].mxu0
      %v467 = vadd.f32 %v263, %v466
      %v468 = vpop.f32.mrb[0].mxu0
      %v469 = vpop.f32.mrb[0].mxu0
      %v470 = vadd.f32 %v263, %v469
      %v471 = vpop.f32.mrb[0].mxu0
      %472 = vmatprep.mubr.bf16.mxu0 0
      %473 = vmatmul.mubr.bf16.gmra.mrb[0].mxu0 %v368
      %v474 = vpop.f32.mrb[0].mxu0
      %v475 = vadd.f32 %v263, %v474
      %v476 = vpop.f32.mrb[0].mxu0
      %v477 = vpop.f32.mrb[0].mxu0
      %v478 = vadd.f32 %v263, %v477
      %v479 = vpop.f32.mrb[0].mxu0
      %480 = vmatprep.mubr.bf16.mxu0 0
      %481 = vmatmul.mubr.bf16.gmra.mrb[0].mxu0 %v371
      %v482 = vpop.f32.mrb[0].mxu0
      %v483 = vadd.f32 %v263, %v482
      %v484 = vpop.f32.mrb[0].mxu0
      %v485 = vpop.f32.mrb[0].mxu0
      %v486 = vadd.f32 %v263, %v485
      %v487 = vpop.f32.mrb[0].mxu0
      %488 = vmatprep.mubr.bf16.mxu0 0
      %489 = vmatmul.mubr.bf16.gmra.mrb[0].mxu0 %v374
      %v490 = vpop.f32.mrb[0].mxu0
      %v491 = vadd.f32 %v263, %v490
      %v492 = vpop.f32.mrb[0].mxu0
      %v493 = vpop.f32.mrb[0].mxu0
      %v494 = vadd.f32 %v263, %v493
      %v495 = vpop.f32.mrb[0].mxu0
      %496 = vmatprep.mubr.bf16.mxu0 0
      %497 = vmatmul.mubr.bf16.gmra.mrb[0].mxu0 %v377
      %v498 = vpop.f32.mrb[0].mxu0
      %v499 = vadd.f32 %v263, %v498
      %v500 = vpop.f32.mrb[0].mxu0
      %v501 = vpop.f32.mrb[0].mxu0
      %v502 = vadd.f32 %v263, %v501
      %v503 = vpop.f32.mrb[0].mxu0
      %504 = vmatprep.mubr.bf16.mxu0 0
      %505 = vmatmul.mubr.bf16.gmra.mrb[0].mxu0 %v380
      %v506 = vpop.f32.mrb[0].mxu0
      %v507 = vadd.f32 %v263, %v506
      %v508 = vpop.f32.mrb[0].mxu0
      %v509 = vpop.f32.mrb[0].mxu0
      %v510 = vadd.f32 %v263, %v509
      %v511 = vpop.f32.mrb[0].mxu0
      %512 = vmatprep.mubr.bf16.mxu0 0
      %513 = vmatmul.mubr.bf16.gmra.mrb[0].mxu0 %v383
      %v514 = vpop.f32.mrb[0].mxu0
      %v515 = vadd.f32 %v263, %v514
      %v516 = vpop.f32.mrb[0].mxu0
      %v517 = vpop.f32.mrb[0].mxu0
      %v518 = vadd.f32 %v263, %v517
      %v519 = vpop.f32.mrb[0].mxu0
      %520 = vmatprep.mubr.bf16.mxu0 0
      %521 = vmatmul.mubr.bf16.gmra.mrb[0].mxu0 %v386
      %v522 = vpop.f32.mrb[0].mxu0
      %v523 = vadd.f32 %v263, %v522
      %v524 = vpop.f32.mrb[0].mxu0
      %v525 = vpop.f32.mrb[0].mxu0
      %v526 = vadd.f32 %v263, %v525
      %v527 = vpop.f32.mrb[0].mxu0
      %528 = vmatprep.mubr.bf16.mxu0 0
      %529 = vmatmul.mubr.bf16.gmra.mrb[0].mxu0 %v389
      %v530 = vpop.f32.mrb[0].mxu0
      %v531 = vadd.f32 %v263, %v530
      %v532 = vpop.f32.mrb[0].mxu0
      %v533 = vpop.f32.mrb[0].mxu0
      %v534 = vadd.f32 %v263, %v533
      %v535 = vpop.f32.mrb[0].mxu0
      %536 = vmatprep.mubr.bf16.mxu0 0
      %537 = vmatmul.mubr.bf16.gmra.mrb[0].mxu0 %v392
      %v538 = vpop.f32.mrb[0].mxu0
      %v539 = vadd.f32 %v263, %v538
      %v540 = vpop.f32.mrb[0].mxu0
      %v541 = vpop.f32.mrb[0].mxu0
      %v542 = vadd.f32 %v263, %v541
      %v543 = vpop.f32.mrb[0].mxu0
      %544 = vmatprep.mubr.bf16.mxu0 0
      %545 = vmatmul.mubr.bf16.gmra.mrb[0].mxu0 %v395
      %v546 = vpop.f32.mrb[0].mxu0
      %v547 = vadd.f32 %v263, %v546
      %v548 = vpop.f32.mrb[0].mxu0
      %v549 = vpop.f32.mrb[0].mxu0
      %v550 = vadd.f32 %v263, %v549
      %v551 = vpop.f32.mrb[0].mxu0
      %552 = vmatprep.mubr.bf16.mxu0 0
      %553 = vmatmul.mubr.bf16.gmra.mrb[0].mxu0 %v398
      %v554 = vpop.f32.mrb[0].mxu0
      %v555 = vadd.f32 %v263, %v554
      %v556 = vpop.f32.mrb[0].mxu0
      %v557 = vpop.f32.mrb[0].mxu0
      %v558 = vadd.f32 %v263, %v557
      %v559 = vpop.f32.mrb[0].mxu0
      %560 = vdwg.mxu0
      %v561 = vld [vmem:[%s215] sm:$0xff]
      %v562 = vld [vmem:[%s215 + $0x8] sm:$0xff]
      %v563 = vld [vmem:[%s215 + $0x10] sm:$0xff]
      %v564 = vld [vmem:[%s215 + $0x18] sm:$0xff]
      %v565 = vld [vmem:[%s215 + $0x20] sm:$0xff]
      %v566 = vld [vmem:[%s215 + $0x28] sm:$0xff]
      %v567 = vld [vmem:[%s215 + $0x30] sm:$0xff]
      %v568 = vld [vmem:[%s215 + $0x38] sm:$0xff]
      %v569 = vld [vmem:[%s215 + $0x40] sm:$0xff]
      %v570 = vld [vmem:[%s215 + $0x48] sm:$0xff]
      %v571 = vld [vmem:[%s215 + $0x50] sm:$0xff]
      %v572 = vld [vmem:[%s215 + $0x58] sm:$0xff]
      %v573 = vld [vmem:[%s215 + $0x60] sm:$0xff]
      %v574 = vld [vmem:[%s215 + $0x68] sm:$0xff]
      %v575 = vld [vmem:[%s215 + $0x70] sm:$0xff]
      %v576 = vld [vmem:[%s215 + $0x78] sm:$0xff]
      %v577 = vld [vmem:[%s215 + $0x80] sm:$0xff]
      %v578 = vld [vmem:[%s215 + $0x88] sm:$0xff]
      %v579 = vld [vmem:[%s215 + $0x90] sm:$0xff]
      %v580 = vld [vmem:[%s215 + $0x98] sm:$0xff]
      %v581 = vld [vmem:[%s215 + $0xa0] sm:$0xff]
      %v582 = vld [vmem:[%s215 + $0xa8] sm:$0xff]
      %v583 = vld [vmem:[%s215 + $0xb0] sm:$0xff]
      %v584 = vld [vmem:[%s215 + $0xb8] sm:$0xff]
      %v585 = vld [vmem:[%s215 + $0xc0] sm:$0xff]
      %v586 = vld [vmem:[%s215 + $0xc8] sm:$0xff]
      %v587 = vld [vmem:[%s215 + $0xd0] sm:$0xff]
      %v588 = vld [vmem:[%s215 + $0xd8] sm:$0xff]
      %v589 = vld [vmem:[%s215 + $0xe0] sm:$0xff]
      %v590 = vld [vmem:[%s215 + $0xe8] sm:$0xff]
      %v591 = vld [vmem:[%s215 + $0xf0] sm:$0xff]
      %v592 = vld [vmem:[%s215 + $0xf8] sm:$0xff]
      %v593 = vadd.f32 %v435, %v561
      %v594 = vadd.f32 %v438, %v562
      %v595 = vadd.f32 %v443, %v563
      %v596 = vadd.f32 %v446, %v564
      %v597 = vadd.f32 %v451, %v565
      %v598 = vadd.f32 %v454, %v566
      %v599 = vadd.f32 %v459, %v567
      %v600 = vadd.f32 %v462, %v568
      %v601 = vadd.f32 %v467, %v569
      %v602 = vadd.f32 %v470, %v570
      %v603 = vadd.f32 %v475, %v571
      %v604 = vadd.f32 %v478, %v572
      %v605 = vadd.f32 %v483, %v573
      %v606 = vadd.f32 %v486, %v574
      %v607 = vadd.f32 %v491, %v575
      %v608 = vadd.f32 %v494, %v576
      %v609 = vadd.f32 %v499, %v577
      %v610 = vadd.f32 %v502, %v578
      %v611 = vadd.f32 %v507, %v579
      %v612 = vadd.f32 %v510, %v580
      %v613 = vadd.f32 %v515, %v581
      %v614 = vadd.f32 %v518, %v582
      %v615 = vadd.f32 %v523, %v583
      %v616 = vadd.f32 %v526, %v584
      %v617 = vadd.f32 %v531, %v585
      %v618 = vadd.f32 %v534, %v586
      %v619 = vadd.f32 %v539, %v587
      %v620 = vadd.f32 %v542, %v588
      %v621 = vadd.f32 %v547, %v589
      %v622 = vadd.f32 %v550, %v590
      %v623 = vadd.f32 %v555, %v591
      %v624 = vadd.f32 %v558, %v592
      %v625 = vmax.f32 %v593, 0.0
      %v626 = vmax.f32 %v594, 0.0
      %v627 = vmax.f32 %v595, 0.0
      %v628 = vmax.f32 %v596, 0.0
      %v629 = vmax.f32 %v597, 0.0
      %v630 = vmax.f32 %v598, 0.0
      %v631 = vmax.f32 %v599, 0.0
      %v632 = vmax.f32 %v600, 0.0
      %v633 = vmax.f32 %v601, 0.0
      %v634 = vmax.f32 %v602, 0.0
      %v635 = vmax.f32 %v603, 0.0
      %v636 = vmax.f32 %v604, 0.0
      %v637 = vmax.f32 %v605, 0.0
      %v638 = vmax.f32 %v606, 0.0
      %v639 = vmax.f32 %v607, 0.0
      %v640 = vmax.f32 %v608, 0.0
      %v641 = vmax.f32 %v609, 0.0
      %v642 = vmax.f32 %v610, 0.0
      %v643 = vmax.f32 %v611, 0.0
      %v644 = vmax.f32 %v612, 0.0
      %v645 = vmax.f32 %v613, 0.0
      %v646 = vmax.f32 %v614, 0.0
      %v647 = vmax.f32 %v615, 0.0
      %v648 = vmax.f32 %v616, 0.0
      %v649 = vmax.f32 %v617, 0.0
      %v650 = vmax.f32 %v618, 0.0
      %v651 = vmax.f32 %v619, 0.0
      %v652 = vmax.f32 %v620, 0.0
      %v653 = vmax.f32 %v621, 0.0
      %v654 = vmax.f32 %v622, 0.0
      %v655 = vmax.f32 %v623, 0.0
      %v656 = vmax.f32 %v624, 0.0
      %657 = vst.msk [vmem:[%s221] sm:$0xff] %vm351, %v625
      %658 = vst.msk [vmem:[%s221 + $0x8] sm:$0xff] %vm351, %v626
      %659 = vst.msk [vmem:[%s221 + $0x10] sm:$0xff] %vm351, %v627
      %660 = vst.msk [vmem:[%s221 + $0x18] sm:$0xff] %vm351, %v628
      %661 = vst.msk [vmem:[%s221 + $0x20] sm:$0xff] %vm351, %v629
      %662 = vst.msk [vmem:[%s221 + $0x28] sm:$0xff] %vm351, %v630
      %663 = vst.msk [vmem:[%s221 + $0x30] sm:$0xff] %vm351, %v631
      %664 = vst.msk [vmem:[%s221 + $0x38] sm:$0xff] %vm351, %v632
      %665 = vst.msk [vmem:[%s221 + $0x40] sm:$0xff] %vm351, %v633
      %666 = vst.msk [vmem:[%s221 + $0x48] sm:$0xff] %vm351, %v634
      %667 = vst.msk [vmem:[%s221 + $0x50] sm:$0xff] %vm351, %v635
      %668 = vst.msk [vmem:[%s221 + $0x58] sm:$0xff] %vm351, %v636
      %669 = vst.msk [vmem:[%s221 + $0x60] sm:$0xff] %vm351, %v637
      %670 = vst.msk [vmem:[%s221 + $0x68] sm:$0xff] %vm351, %v638
      %671 = vst.msk [vmem:[%s221 + $0x70] sm:$0xff] %vm351, %v639
      %672 = vst.msk [vmem:[%s221 + $0x78] sm:$0xff] %vm351, %v640
      %673 = vst.msk [vmem:[%s221 + $0x80] sm:$0xff] %vm351, %v641
      %674 = vst.msk [vmem:[%s221 + $0x88] sm:$0xff] %vm351, %v642
      %675 = vst.msk [vmem:[%s221 + $0x90] sm:$0xff] %vm351, %v643
      %676 = vst.msk [vmem:[%s221 + $0x98] sm:$0xff] %vm351, %v644
      %677 = vst.msk [vmem:[%s221 + $0xa0] sm:$0xff] %vm351, %v645
      %678 = vst.msk [vmem:[%s221 + $0xa8] sm:$0xff] %vm351, %v646
      %679 = vst.msk [vmem:[%s221 + $0xb0] sm:$0xff] %vm351, %v647
      %680 = vst.msk [vmem:[%s221 + $0xb8] sm:$0xff] %vm351, %v648
      %681 = vst.msk [vmem:[%s221 + $0xc0] sm:$0xff] %vm351, %v649
      %682 = vst.msk [vmem:[%s221 + $0xc8] sm:$0xff] %vm351, %v650
      %683 = vst.msk [vmem:[%s221 + $0xd0] sm:$0xff] %vm351, %v651
      %684 = vst.msk [vmem:[%s221 + $0xd8] sm:$0xff] %vm351, %v652
      %685 = vst.msk [vmem:[%s221 + $0xe0] sm:$0xff] %vm351, %v653
      %686 = vst.msk [vmem:[%s221 + $0xe8] sm:$0xff] %vm351, %v654
      %687 = vst.msk [vmem:[%s221 + $0xf0] sm:$0xff] %vm351, %v655
      %688 = vst.msk [vmem:[%s221 + $0xf8] sm:$0xff] %vm351, %v656
      %s689 = smul.u32 32, %s15
      %p690 = scmp.lt.s32.totalorder %s689, 63
      %s691 = scalar_select %p690, %s689, 63
      %s692 = smul.addr %s691, 8
      %s693 = scalar_lea.vmem %s4, %s692
      // Predicated region
      $region37: #{resnext_bottleneck_forward.5} parent=35 // pred_check
        %p694 = pneg %p127
      $region38: #{resnext_bottleneck_forward.5} parent=35 // pred_check_branch
        %696 = sbr.rel (%p694) target = $region40
      $region39: #{resnext_bottleneck_forward.5} parent=35 // pred_region
        %s697 = smul.u32 32, %s15
      $region40: #{resnext_bottleneck_forward.5} parent=35 // pred_fallthru
        _
    $region36: #{resnext_bottleneck_forward.5} parent=5 // pred_fallthru
      _
    %p698 = scmp.le.s32.totalorder 2, %s10
    // Predicated region
    $region41: #{resnext_bottleneck_forward.5} parent=5 // pred_check
      %p699 = pneg %p698
    $region42: #{resnext_bottleneck_forward.5} parent=5 // pred_check_branch
      %701 = sbr.rel (%p699) target = $region44
    $region43: #{resnext_bottleneck_forward.5} parent=5 // pred_region
      %s702 = ssub.s32 %s10, 2
      // Predicated region
      $region45: #{resnext_bottleneck_forward.5} parent=43 // pred_check
        %p703 = pneg %p133
      $region46: #{resnext_bottleneck_forward.5} parent=43 // pred_check_branch
        %705 = sbr.rel (%p703) target = $region48
      $region47: #{resnext_bottleneck_forward.5} parent=43 // pred_region
        %s706 = smul.u32 32, %s16
        %p707 = scmp.lt.s32.totalorder %s706, 63
        %s708 = scalar_select %p707, %s706, 63
        %s709 = smul.addr %s708, 8
        %s710 = scalar_lea.vmem %s4, %s709
      $region48: #{resnext_bottleneck_forward.5} parent=43 // pred_fallthru
        _
    $region44: #{resnext_bottleneck_forward.5} parent=5 // pred_fallthru
      _
  $region6: #{resnext_bottleneck_forward.5} parent=0 // loop_footer
    %s14 = sadd.s32 1, %s10
  $region7: #{resnext_bottleneck_forward.5} parent=0 // loop_footer_branch
    %9 = sbr.rel target = $region3
  $region8: #{resnext_bottleneck_forward.5} parent=0 // loop_exit
    _

// kernel: resnext_bottleneck_forward.3
$region0: #{resnext_bottleneck_forward.3}
  #allocation0 [shape = 'u32[]', space=smem, size = 0x4, offset = 0x4, fixed_abs, tag = 'smem constant byte address 0x4 - core index']
  #allocation1 [shape = 'u32[144,128]{1,0:T(1,128)}', space=vmem, size = 0x12000, scoped, tag = 'internal scratch']
  %s0 = inlined_call_operand.vmem [shape: f32[512,16], index: 0, kind: input, shape index: {}]
  %s1 = inlined_call_operand.vmem [shape: bf16[16,16], index: 1, kind: input, shape index: {}]
  %s2 = inlined_call_operand.vmem [shape: f32[1,16], index: 2, kind: input, shape index: {}]
  %s3 = inlined_call_operand.vmem [shape: bf16[512,16], index: 3, kind: output, shape index: {}]
  %s4 = sld [smem:[#allocation0]]
  $region45: #{resnext_bottleneck_forward.3} parent=0
    _
  %s6 = ssub.s32 1, %s4
  %s7 = scalar_select 0, %s6, %s4
  loop: start=0, step=1, limit=4
  $region2: #{resnext_bottleneck_forward.3} parent=0 // loop_pre_header
    _
  $region3: #{resnext_bottleneck_forward.3} parent=0 // loop_header
    %s9 = sphi 0, %s13
    %p10 = scmp.ge.s32.totalorder %s9, 4
    %s19 = sphi 0, %s21
    %s22 = sphi 0, %s19
    %s23 = sphi 0, %s22
    %s39 = sphi 0, %s23
    %s43 = sphi 0, %s43
    %s45 = sphi 0, %s43
    %s46 = sphi 0, %s45
    %s60 = sphi 0, %s46
    %s64 = sphi 0, %s64
    %s66 = sphi 0, %s64
    %s67 = sphi 0, %s66
    %s81 = sphi 0, %s67
    %s87 = sphi 0, %s89
    %s90 = sphi 0, %s87
    %s91 = sphi 0, %s90
    %s107 = sphi 0, %s91
  $region4: #{resnext_bottleneck_forward.3} parent=0 // loop_header_branch
    %12 = sbr.rel (%p10) target = $region8
  $region5: #{resnext_bottleneck_forward.3} parent=0 // loop_body
    %s14 = ssub.s32 %s9, 1
    %s15 = ssub.s32 %s9, 2
    %s16 = sadd.s32 %s9, 1
    %s17 = ssub.s32 %s9, %s16
    %p18 = scmp.eq.s32.totalorder %s17, 0
    %s20 = sadd.s32 %s19, 1
    %s21 = scalar_select %p18, %s19, %s20
    %p24 = pneg %p18
    %p25 = scmp.eq.s32.totalorder %s9, 1
    %p26 = por %p24, %p25
    %p27 = scmp.ne.s32.totalorder %s19, %s22
    %p28 = scmp.eq.s32.totalorder %s9, 0
    %p29 = por %p27, %p28
    %p30 = scmp.ne.s32.totalorder %s19, %s22
    %p31 = scmp.eq.s32.totalorder %s14, 1
    %p32 = por %p30, %p31
    %p33 = scmp.ne.s32.totalorder %s22, %s23
    %p34 = scmp.eq.s32.totalorder %s14, 0
    %p35 = por %p33, %p34
    %p36 = scmp.ne.s32.totalorder %s22, %s23
    %p37 = scmp.eq.s32.totalorder %s15, 1
    %p38 = por %p36, %p37
    %p40 = scmp.ne.s32.totalorder %s23, %s39
    %p41 = scmp.eq.s32.totalorder %s15, 0
    %p42 = por %p40, %p41
    %s44 = sadd.s32 %s43, 1
    %p47 = scmp.eq.s32.totalorder %s9, 1
    %p48 = scmp.ne.s32.totalorder %s43, %s45
    %p49 = scmp.eq.s32.totalorder %s9, 0
    %p50 = por %p48, %p49
    %p51 = scmp.ne.s32.totalorder %s43, %s45
    %p52 = scmp.eq.s32.totalorder %s14, 1
    %p53 = por %p51, %p52
    %p54 = scmp.ne.s32.totalorder %s45, %s46
    %p55 = scmp.eq.s32.totalorder %s14, 0
    %p56 = por %p54, %p55
    %p57 = scmp.ne.s32.totalorder %s45, %s46
    %p58 = scmp.eq.s32.totalorder %s15, 1
    %p59 = por %p57, %p58
    %p61 = scmp.ne.s32.totalorder %s46, %s60
    %p62 = scmp.eq.s32.totalorder %s15, 0
    %p63 = por %p61, %p62
    %s65 = sadd.s32 %s64, 1
    %p68 = scmp.eq.s32.totalorder %s9, 1
    %p69 = scmp.ne.s32.totalorder %s64, %s66
    %p70 = scmp.eq.s32.totalorder %s9, 0
    %p71 = por %p69, %p70
    %p72 = scmp.ne.s32.totalorder %s64, %s66
    %p73 = scmp.eq.s32.totalorder %s14, 1
    %p74 = por %p72, %p73
    %p75 = scmp.ne.s32.totalorder %s66, %s67
    %p76 = scmp.eq.s32.totalorder %s14, 0
    %p77 = por %p75, %p76
    %p78 = scmp.ne.s32.totalorder %s66, %s67
    %p79 = scmp.eq.s32.totalorder %s15, 1
    %p80 = por %p78, %p79
    %p82 = scmp.ne.s32.totalorder %s67, %s81
    %p83 = scmp.eq.s32.totalorder %s15, 0
    %p84 = por %p82, %p83
    %s85 = ssub.s32 %s9, %s16
    %p86 = scmp.eq.s32.totalorder %s85, 0
    %s88 = sadd.s32 %s87, 1
    %s89 = scalar_select %p86, %s87, %s88
    %p92 = pneg %p86
    %p93 = scmp.eq.s32.totalorder %s9, 1
    %p94 = por %p92, %p93
    %p95 = scmp.ne.s32.totalorder %s87, %s90
    %p96 = scmp.eq.s32.totalorder %s9, 0
    %p97 = por %p95, %p96
    %p98 = scmp.ne.s32.totalorder %s87, %s90
    %p99 = scmp.eq.s32.totalorder %s14, 1
    %p100 = por %p98, %p99
    %p101 = scmp.ne.s32.totalorder %s90, %s91
    %p102 = scmp.eq.s32.totalorder %s14, 0
    %p103 = por %p101, %p102
    %p104 = scmp.ne.s32.totalorder %s90, %s91
    %p105 = scmp.eq.s32.totalorder %s15, 1
    %p106 = por %p104, %p105
    %p108 = scmp.ne.s32.totalorder %s91, %s107
    %p109 = scmp.eq.s32.totalorder %s15, 0
    %p110 = por %p108, %p109
    %p111 = scmp.le.s32.totalorder 1, %s9
    %p112 = scmp.lt.s32.totalorder %s9, 3
    %p113 = pnand %p111, %p112
    %p114 = pneg %p113
    // Predicated region
    $region9: #{resnext_bottleneck_forward.3} parent=5 // pred_check
      _
    $region10: #{resnext_bottleneck_forward.3} parent=5 // pred_check_branch
      %116 = sbr.rel (%p113) target = $region12
    $region11: #{resnext_bottleneck_forward.3} parent=5 // pred_region
      %s117 = ssub.s32 %s9, 1
      // Predicated region
      $region13: #{resnext_bottleneck_forward.3} parent=11 // pred_check
        %p118 = pneg %p56
      $region14: #{resnext_bottleneck_forward.3} parent=11 // pred_check_branch
        %120 = sbr.rel (%p118) target = $region16
      $region15: #{resnext_bottleneck_forward.3} parent=11 // pred_region
        _
      $region16: #{resnext_bottleneck_forward.3} parent=11 // pred_fallthru
        _
      // Predicated region
      $region17: #{resnext_bottleneck_forward.3} parent=11 // pred_check
        %p121 = pneg %p77
      $region18: #{resnext_bottleneck_forward.3} parent=11 // pred_check_branch
        %123 = sbr.rel (%p121) target = $region20
      $region19: #{resnext_bottleneck_forward.3} parent=11 // pred_region
        _
      $region20: #{resnext_bottleneck_forward.3} parent=11 // pred_fallthru
        _
    $region12: #{resnext_bottleneck_forward.3} parent=5 // pred_fallthru
      _
    %p124 = scmp.lt.s32.totalorder %s9, 2
    // Predicated region
    $region21: #{resnext_bottleneck_forward.3} parent=5 // pred_check
      %p125 = pneg %p124
    $region22: #{resnext_bottleneck_forward.3} parent=5 // pred_check_branch
      %127 = sbr.rel (%p125) target = $region24
    $region23: #{resnext_bottleneck_forward.3} parent=5 // pred_region
      // Predicated region
      $region25: #{resnext_bottleneck_forward.3} parent=23 // pred_check
        %p128 = pneg %p29
      $region26: #{resnext_bottleneck_forward.3} parent=23 // pred_check_branch
        %130 = sbr.rel (%p128) target = $region28
      $region27: #{resnext_bottleneck_forward.3} parent=23 // pred_region
        %s131 = smul.u32 32, %s9
        %p132 = scmp.lt.s32.totalorder %s131, 63
        %s133 = scalar_select %p132, %s131, 63
        %s134 = smul.addr %s133, 8
        %s135 = scalar_lea.vmem %s0, %s134
        %s136 = smul.u32 32, %s9
      $region28: #{resnext_bottleneck_forward.3} parent=23 // pred_fallthru
        _
    $region24: #{resnext_bottleneck_forward.3} parent=5 // pred_fallthru
      _
    %p137 = scmp.le.s32.totalorder 1, %s9
    %p138 = scmp.lt.s32.totalorder %s9, 3
    %p139 = pnand %p137, %p138
    %p140 = pneg %p139
    // Predicated region
    $region29: #{resnext_bottleneck_forward.3} parent=5 // pred_check
      _
    $region30: #{resnext_bottleneck_forward.3} parent=5 // pred_check_branch
      %142 = sbr.rel (%p139) target = $region32
    $region31: #{resnext_bottleneck_forward.3} parent=5 // pred_region
      %s143 = ssub.s32 %s9, 1
      %s144 = smul.u32 32, %s14
      %p145 = scmp.lt.s32.totalorder %s144, 63
      %s146 = scalar_select %p145, %s144, 63
      %s147 = smul.addr %s146, 8
      %s148 = scalar_lea.vmem %s0, %s147
      %p149 = pneg %p35
      %p150 = pneg %p32
      %p151 = pneg %p56
      %p152 = pneg %p53
      %p153 = pneg %p77
      %p154 = pneg %p74
      %p155 = pneg %p103
      %p156 = pneg %p100
      %s157 = smul.u32 32, %s14
      %p158 = scmp.lt.s32.totalorder %s157, 63
      %s159 = scalar_select %p158, %s157, 63
      %s160 = smul.addr %s159, 4
      %s161 = scalar_lea.vmem %s3, %s160
      %s162 = smul.u32 32, %s14
      %p163 = scmp.lt.s32.totalorder %s162, 63
      %s164 = scalar_select %p163, %s162, 63
      %s165 = smul.addr %s164, 8
      %s166 = scalar_lea.vmem %s0, %s165
      %s167 = smul.u32 32, %s14
      %s168 = smul.u32 32, %s14
      %p169 = scmp.lt.s32.totalorder %s168, 63
      %s170 = scalar_select %p169, %s168, 63
      %s171 = smul.addr %s170, 4
      %s172 = scalar_lea.vmem %s3, %s171
      %s173 = smul.u32 32, %s14
      %v175 = vld [vmem:[%s166] sm:$0xff]
      %v176 = vld [vmem:[%s166 + $0x8] sm:$0xff]
      %v177 = vld [vmem:[%s166 + $0x10] sm:$0xff]
      %v178 = vld [vmem:[%s166 + $0x18] sm:$0xff]
      %v179 = vld [vmem:[%s166 + $0x20] sm:$0xff]
      %v180 = vld [vmem:[%s166 + $0x28] sm:$0xff]
      %v181 = vld [vmem:[%s166 + $0x30] sm:$0xff]
      %v182 = vld [vmem:[%s166 + $0x38] sm:$0xff]
      %v183 = vld [vmem:[%s166 + $0x40] sm:$0xff]
      %v184 = vld [vmem:[%s166 + $0x48] sm:$0xff]
      %v185 = vld [vmem:[%s166 + $0x50] sm:$0xff]
      %v186 = vld [vmem:[%s166 + $0x58] sm:$0xff]
      %v187 = vld [vmem:[%s166 + $0x60] sm:$0xff]
      %v188 = vld [vmem:[%s166 + $0x68] sm:$0xff]
      %v189 = vld [vmem:[%s166 + $0x70] sm:$0xff]
      %v190 = vld [vmem:[%s166 + $0x78] sm:$0xff]
      %v191 = vld [vmem:[%s166 + $0x80] sm:$0xff]
      %v192 = vld [vmem:[%s166 + $0x88] sm:$0xff]
      %v193 = vld [vmem:[%s166 + $0x90] sm:$0xff]
      %v194 = vld [vmem:[%s166 + $0x98] sm:$0xff]
      %v195 = vld [vmem:[%s166 + $0xa0] sm:$0xff]
      %v196 = vld [vmem:[%s166 + $0xa8] sm:$0xff]
      %v197 = vld [vmem:[%s166 + $0xb0] sm:$0xff]
      %v198 = vld [vmem:[%s166 + $0xb8] sm:$0xff]
      %v199 = vld [vmem:[%s166 + $0xc0] sm:$0xff]
      %v200 = vld [vmem:[%s166 + $0xc8] sm:$0xff]
      %v201 = vld [vmem:[%s166 + $0xd0] sm:$0xff]
      %v202 = vld [vmem:[%s166 + $0xd8] sm:$0xff]
      %v203 = vld [vmem:[%s166 + $0xe0] sm:$0xff]
      %v204 = vld [vmem:[%s166 + $0xe8] sm:$0xff]
      %v205 = vld [vmem:[%s166 + $0xf0] sm:$0xff]
      %v206 = vld [vmem:[%s166 + $0xf8] sm:$0xff]
      %v207 = vpack.c.bf16 %v176, %v175
      %v208 = vpack.c.bf16 %v178, %v177
      %v209 = vpack.c.bf16 %v180, %v179
      %v210 = vpack.c.bf16 %v182, %v181
      %v211 = vpack.c.bf16 %v184, %v183
      %v212 = vpack.c.bf16 %v186, %v185
      %v213 = vpack.c.bf16 %v188, %v187
      %v214 = vpack.c.bf16 %v190, %v189
      %v215 = vpack.c.bf16 %v192, %v191
      %v216 = vpack.c.bf16 %v194, %v193
      %v217 = vpack.c.bf16 %v196, %v195
      %v218 = vpack.c.bf16 %v198, %v197
      %v219 = vpack.c.bf16 %v200, %v199
      %v220 = vpack.c.bf16 %v202, %v201
      %v221 = vpack.c.bf16 %v204, %v203
      %v222 = vpack.c.bf16 %v206, %v205
      %v223 = vld [vmem:[%s1] sm:$0xf]
      %v224 = vld [vmem:[%s1 + $0x4] sm:$0xf]
      %v225 = vld [vmem:[%s2] sm:$0x1]
      %v227 = vlaneseq
      %v228 = vshrl.u32 %v227, 7
      %v229 = vsub.s32 0, %v228
      %v230 = vrot.slane %v225, %v229
      %v234 = vunpack.c.l.b16 %v223
      %v235 = vunpack.c.l.b16 %v224
      %v236 = vpack.c.b16 %v235, %v234
      %vm238 = vcmask 130048
      %v240 = vsel %vm238, %v207, 0
      %v243 = vsel %vm238, %v208, 0
      %v246 = vsel %vm238, %v209, 0
      %v249 = vsel %vm238, %v210, 0
      %v252 = vsel %vm238, %v211, 0
      %v255 = vsel %vm238, %v212, 0
      %v258 = vsel %vm238, %v213, 0
      %v261 = vsel %vm238, %v214, 0
      %v264 = vsel %vm238, %v215, 0
      %v267 = vsel %vm238, %v216, 0
      %v270 = vsel %vm238, %v217, 0
      %v273 = vsel %vm238, %v218, 0
      %v276 = vsel %vm238, %v219, 0
      %v279 = vsel %vm238, %v220, 0
      %v282 = vsel %vm238, %v221, 0
      %v285 = vsel %vm238, %v222, 0
      %287 = vmatprep.subr.bf16.mxu0 0
      %288 = vmatpush1.bf16.msra.mxu0 %v236
      %289 = vmatprep.subr.bf16.mxu0 0
      %290 = vmatpush1.bf16.msra.mxu0 0
      %291 = vmatprep.subr.bf16.mxu0 0
      %292 = vmatpush1.bf16.msra.mxu0 0
      %293 = vmatprep.subr.bf16.mxu0 0
      %294 = vmatpush1.bf16.msra.mxu0 0
      %295 = vmatprep.subr.bf16.mxu0 0
      %296 = vmatpush1.bf16.msra.mxu0 0
      %297 = vmatprep.subr.bf16.mxu0 0
      %298 = vmatpush1.bf16.msra.mxu0 0
      %299 = vmatprep.subr.bf16.mxu0 0
      %300 = vmatpush1.bf16.msra.mxu0 0
      %301 = vmatprep.subr.bf16.mxu0 0
      %302 = vmatpush1.bf16.msra.mxu0 0
      %303 = vmatprep.subr.bf16.mxu0 0
      %304 = vmatpush1.bf16.msra.mxu0 0
      %305 = vmatprep.subr.bf16.mxu0 0
      %306 = vmatpush1.bf16.msra.mxu0 0
      %307 = vmatprep.subr.bf16.mxu0 0
      %308 = vmatpush1.bf16.msra.mxu0 0
      %309 = vmatprep.subr.bf16.mxu0 0
      %310 = vmatpush1.bf16.msra.mxu0 0
      %311 = vmatprep.subr.bf16.mxu0 0
      %312 = vmatpush1.bf16.msra.mxu0 0
      %313 = vmatprep.subr.bf16.mxu0 0
      %314 = vmatpush1.bf16.msra.mxu0 0
      %315 = vmatprep.subr.bf16.mxu0 0
      %316 = vmatpush1.bf16.msra.mxu0 0
      %317 = vmatprep.subr.bf16.mxu0 0
      %318 = vmatpush1.bf16.msra.mxu0 0
      %319 = vmatprep.mubr.bf16.mxu0 0
      %320 = vmatmul.mubr.bf16.gmra.mrb[0].mxu0 %v240
      %v321 = vpop.f32.mrb[0].mxu0
      %v322 = vadd.f32 %v230, %v321
      %v323 = vpop.f32.mrb[0].mxu0
      %v324 = vpop.f32.mrb[0].mxu0
      %v325 = vadd.f32 %v230, %v324
      %v326 = vpop.f32.mrb[0].mxu0
      %327 = vmatprep.mubr.bf16.mxu0 0
      %328 = vmatmul.mubr.bf16.gmra.mrb[0].mxu0 %v243
      %v329 = vpop.f32.mrb[0].mxu0
      %v330 = vadd.f32 %v230, %v329
      %v331 = vpop.f32.mrb[0].mxu0
      %v332 = vpop.f32.mrb[0].mxu0
      %v333 = vadd.f32 %v230, %v332
      %v334 = vpop.f32.mrb[0].mxu0
      %335 = vmatprep.mubr.bf16.mxu0 0
      %336 = vmatmul.mubr.bf16.gmra.mrb[0].mxu0 %v246
      %v337 = vpop.f32.mrb[0].mxu0
      %v338 = vadd.f32 %v230, %v337
      %v339 = vpop.f32.mrb[0].mxu0
      %v340 = vpop.f32.mrb[0].mxu0
      %v341 = vadd.f32 %v230, %v340
      %v342 = vpop.f32.mrb[0].mxu0
      %343 = vmatprep.mubr.bf16.mxu0 0
      %344 = vmatmul.mubr.bf16.gmra.mrb[0].mxu0 %v249
      %v345 = vpop.f32.mrb[0].mxu0
      %v346 = vadd.f32 %v230, %v345
      %v347 = vpop.f32.mrb[0].mxu0
      %v348 = vpop.f32.mrb[0].mxu0
      %v349 = vadd.f32 %v230, %v348
      %v350 = vpop.f32.mrb[0].mxu0
      %351 = vmatprep.mubr.bf16.mxu0 0
      %352 = vmatmul.mubr.bf16.gmra.mrb[0].mxu0 %v252
      %v353 = vpop.f32.mrb[0].mxu0
      %v354 = vadd.f32 %v230, %v353
      %v355 = vpop.f32.mrb[0].mxu0
      %v356 = vpop.f32.mrb[0].mxu0
      %v357 = vadd.f32 %v230, %v356
      %v358 = vpop.f32.mrb[0].mxu0
      %359 = vmatprep.mubr.bf16.mxu0 0
      %360 = vmatmul.mubr.bf16.gmra.mrb[0].mxu0 %v255
      %v361 = vpop.f32.mrb[0].mxu0
      %v362 = vadd.f32 %v230, %v361
      %v363 = vpop.f32.mrb[0].mxu0
      %v364 = vpop.f32.mrb[0].mxu0
      %v365 = vadd.f32 %v230, %v364
      %v366 = vpop.f32.mrb[0].mxu0
      %367 = vmatprep.mubr.bf16.mxu0 0
      %368 = vmatmul.mubr.bf16.gmra.mrb[0].mxu0 %v258
      %v369 = vpop.f32.mrb[0].mxu0
      %v370 = vadd.f32 %v230, %v369
      %v371 = vpop.f32.mrb[0].mxu0
      %v372 = vpop.f32.mrb[0].mxu0
      %v373 = vadd.f32 %v230, %v372
      %v374 = vpop.f32.mrb[0].mxu0
      %375 = vmatprep.mubr.bf16.mxu0 0
      %376 = vmatmul.mubr.bf16.gmra.mrb[0].mxu0 %v261
      %v377 = vpop.f32.mrb[0].mxu0
      %v378 = vadd.f32 %v230, %v377
      %v379 = vpop.f32.mrb[0].mxu0
      %v380 = vpop.f32.mrb[0].mxu0
      %v381 = vadd.f32 %v230, %v380
      %v382 = vpop.f32.mrb[0].mxu0
      %383 = vmatprep.mubr.bf16.mxu0 0
      %384 = vmatmul.mubr.bf16.gmra.mrb[0].mxu0 %v264
      %v385 = vpop.f32.mrb[0].mxu0
      %v386 = vadd.f32 %v230, %v385
      %v387 = vpop.f32.mrb[0].mxu0
      %v388 = vpop.f32.mrb[0].mxu0
      %v389 = vadd.f32 %v230, %v388
      %v390 = vpop.f32.mrb[0].mxu0
      %391 = vmatprep.mubr.bf16.mxu0 0
      %392 = vmatmul.mubr.bf16.gmra.mrb[0].mxu0 %v267
      %v393 = vpop.f32.mrb[0].mxu0
      %v394 = vadd.f32 %v230, %v393
      %v395 = vpop.f32.mrb[0].mxu0
      %v396 = vpop.f32.mrb[0].mxu0
      %v397 = vadd.f32 %v230, %v396
      %v398 = vpop.f32.mrb[0].mxu0
      %399 = vmatprep.mubr.bf16.mxu0 0
      %400 = vmatmul.mubr.bf16.gmra.mrb[0].mxu0 %v270
      %v401 = vpop.f32.mrb[0].mxu0
      %v402 = vadd.f32 %v230, %v401
      %v403 = vpop.f32.mrb[0].mxu0
      %v404 = vpop.f32.mrb[0].mxu0
      %v405 = vadd.f32 %v230, %v404
      %v406 = vpop.f32.mrb[0].mxu0
      %407 = vmatprep.mubr.bf16.mxu0 0
      %408 = vmatmul.mubr.bf16.gmra.mrb[0].mxu0 %v273
      %v409 = vpop.f32.mrb[0].mxu0
      %v410 = vadd.f32 %v230, %v409
      %v411 = vpop.f32.mrb[0].mxu0
      %v412 = vpop.f32.mrb[0].mxu0
      %v413 = vadd.f32 %v230, %v412
      %v414 = vpop.f32.mrb[0].mxu0
      %415 = vmatprep.mubr.bf16.mxu0 0
      %416 = vmatmul.mubr.bf16.gmra.mrb[0].mxu0 %v276
      %v417 = vpop.f32.mrb[0].mxu0
      %v418 = vadd.f32 %v230, %v417
      %v419 = vpop.f32.mrb[0].mxu0
      %v420 = vpop.f32.mrb[0].mxu0
      %v421 = vadd.f32 %v230, %v420
      %v422 = vpop.f32.mrb[0].mxu0
      %423 = vmatprep.mubr.bf16.mxu0 0
      %424 = vmatmul.mubr.bf16.gmra.mrb[0].mxu0 %v279
      %v425 = vpop.f32.mrb[0].mxu0
      %v426 = vadd.f32 %v230, %v425
      %v427 = vpop.f32.mrb[0].mxu0
      %v428 = vpop.f32.mrb[0].mxu0
      %v429 = vadd.f32 %v230, %v428
      %v430 = vpop.f32.mrb[0].mxu0
      %431 = vmatprep.mubr.bf16.mxu0 0
      %432 = vmatmul.mubr.bf16.gmra.mrb[0].mxu0 %v282
      %v433 = vpop.f32.mrb[0].mxu0
      %v434 = vadd.f32 %v230, %v433
      %v435 = vpop.f32.mrb[0].mxu0
      %v436 = vpop.f32.mrb[0].mxu0
      %v437 = vadd.f32 %v230, %v436
      %v438 = vpop.f32.mrb[0].mxu0
      %439 = vmatprep.mubr.bf16.mxu0 0
      %440 = vmatmul.mubr.bf16.gmra.mrb[0].mxu0 %v285
      %v441 = vpop.f32.mrb[0].mxu0
      %v442 = vadd.f32 %v230, %v441
      %v443 = vpop.f32.mrb[0].mxu0
      %v444 = vpop.f32.mrb[0].mxu0
      %v445 = vadd.f32 %v230, %v444
      %v446 = vpop.f32.mrb[0].mxu0
      %447 = vdwg.mxu0
      %v448 = vmax.f32 %v322, 0.0
      %v449 = vmax.f32 %v325, 0.0
      %v450 = vmax.f32 %v330, 0.0
      %v451 = vmax.f32 %v333, 0.0
      %v452 = vmax.f32 %v338, 0.0
      %v453 = vmax.f32 %v341, 0.0
      %v454 = vmax.f32 %v346, 0.0
      %v455 = vmax.f32 %v349, 0.0
      %v456 = vmax.f32 %v354, 0.0
      %v457 = vmax.f32 %v357, 0.0
      %v458 = vmax.f32 %v362, 0.0
      %v459 = vmax.f32 %v365, 0.0
      %v460 = vmax.f32 %v370, 0.0
      %v461 = vmax.f32 %v373, 0.0
      %v462 = vmax.f32 %v378, 0.0
      %v463 = vmax.f32 %v381, 0.0
      %v464 = vmax.f32 %v386, 0.0
      %v465 = vmax.f32 %v389, 0.0
      %v466 = vmax.f32 %v394, 0.0
      %v467 = vmax.f32 %v397, 0.0
      %v468 = vmax.f32 %v402, 0.0
      %v469 = vmax.f32 %v405, 0.0
      %v470 = vmax.f32 %v410, 0.0
      %v471 = vmax.f32 %v413, 0.0
      %v472 = vmax.f32 %v418, 0.0
      %v473 = vmax.f32 %v421, 0.0
      %v474 = vmax.f32 %v426, 0.0
      %v475 = vmax.f32 %v429, 0.0
      %v476 = vmax.f32 %v434, 0.0
      %v477 = vmax.f32 %v437, 0.0
      %v478 = vmax.f32 %v442, 0.0
      %v479 = vmax.f32 %v445, 0.0
      %v480 = vpack.c.bf16 %v449, %v448
      %v481 = vpack.c.bf16 %v451, %v450
      %v482 = vpack.c.bf16 %v453, %v452
      %v483 = vpack.c.bf16 %v455, %v454
      %v484 = vpack.c.bf16 %v457, %v456
      %v485 = vpack.c.bf16 %v459, %v458
      %v486 = vpack.c.bf16 %v461, %v460
      %v487 = vpack.c.bf16 %v463, %v462
      %v488 = vpack.c.bf16 %v465, %v464
      %v489 = vpack.c.bf16 %v467, %v466
      %v490 = vpack.c.bf16 %v469, %v468
      %v491 = vpack.c.bf16 %v471, %v470
      %v492 = vpack.c.bf16 %v473, %v472
      %v493 = vpack.c.bf16 %v475, %v474
      %v494 = vpack.c.bf16 %v477, %v476
      %v495 = vpack.c.bf16 %v479, %v478
      %v512 = vunpack.c.l.b16 %v480
      %v513 = vunpack.c.h.b16 %v480
      %v514 = vunpack.c.l.b16 %v481
      %v515 = vunpack.c.h.b16 %v481
      %v516 = vunpack.c.l.b16 %v482
      %v517 = vunpack.c.h.b16 %v482
      %v518 = vunpack.c.l.b16 %v483
      %v519 = vunpack.c.h.b16 %v483
      %v520 = vunpack.c.l.b16 %v484
      %v521 = vunpack.c.h.b16 %v484
      %v522 = vunpack.c.l.b16 %v485
      %v523 = vunpack.c.h.b16 %v485
      %v524 = vunpack.c.l.b16 %v486
      %v525 = vunpack.c.h.b16 %v486
      %v526 = vunpack.c.l.b16 %v487
      %v527 = vunpack.c.h.b16 %v487
      %v528 = vunpack.c.l.b16 %v488
      %v529 = vunpack.c.h.b16 %v488
      %v530 = vunpack.c.l.b16 %v489
      %v531 = vunpack.c.h.b16 %v489
      %v532 = vunpack.c.l.b16 %v490
      %v533 = vunpack.c.h.b16 %v490
      %v534 = vunpack.c.l.b16 %v491
      %v535 = vunpack.c.h.b16 %v491
      %v536 = vunpack.c.l.b16 %v492
      %v537 = vunpack.c.h.b16 %v492
      %v538 = vunpack.c.l.b16 %v493
      %v539 = vunpack.c.h.b16 %v493
      %v540 = vunpack.c.l.b16 %v494
      %v541 = vunpack.c.h.b16 %v494
      %v542 = vunpack.c.l.b16 %v495
      %v543 = vunpack.c.h.b16 %v495
      %v544 = vpack.c.b16 %v512, %v512
      %v545 = vpack.c.b16 %v513, %v513
      %v546 = vpack.c.b16 %v514, %v514
      %v547 = vpack.c.b16 %v515, %v515
      %v548 = vpack.c.b16 %v516, %v516
      %v549 = vpack.c.b16 %v517, %v517
      %v550 = vpack.c.b16 %v518, %v518
      %v551 = vpack.c.b16 %v519, %v519
      %v552 = vpack.c.b16 %v520, %v520
      %v553 = vpack.c.b16 %v521, %v521
      %v554 = vpack.c.b16 %v522, %v522
      %v555 = vpack.c.b16 %v523, %v523
      %v556 = vpack.c.b16 %v524, %v524
      %v557 = vpack.c.b16 %v525, %v525
      %v558 = vpack.c.b16 %v526, %v526
      %v559 = vpack.c.b16 %v527, %v527
      %v560 = vpack.c.b16 %v528, %v528
      %v561 = vpack.c.b16 %v529, %v529
      %v562 = vpack.c.b16 %v530, %v530
      %v563 = vpack.c.b16 %v531, %v531
      %v564 = vpack.c.b16 %v532, %v532
      %v565 = vpack.c.b16 %v533, %v533
      %v566 = vpack.c.b16 %v534, %v534
      %v567 = vpack.c.b16 %v535, %v535
      %v568 = vpack.c.b16 %v536, %v536
      %v569 = vpack.c.b16 %v537, %v537
      %v570 = vpack.c.b16 %v538, %v538
      %v571 = vpack.c.b16 %v539, %v539
      %v572 = vpack.c.b16 %v540, %v540
      %v573 = vpack.c.b16 %v541, %v541
      %v574 = vpack.c.b16 %v542, %v542
      %v575 = vpack.c.b16 %v543, %v543
      %vm608 = vcmask 125952
      %609 = vst.msk [vmem:[%s172] sm:$0xf] %vm608, %v544
      %610 = vst.msk [vmem:[%s172 + $0x4] sm:$0xf] %vm608, %v545
      %611 = vst.msk [vmem:[%s172 + $0x8] sm:$0xf] %vm608, %v546
      %612 = vst.msk [vmem:[%s172 + $0xc] sm:$0xf] %vm608, %v547
      %613 = vst.msk [vmem:[%s172 + $0x10] sm:$0xf] %vm608, %v548
      %614 = vst.msk [vmem:[%s172 + $0x14] sm:$0xf] %vm608, %v549
      %615 = vst.msk [vmem:[%s172 + $0x18] sm:$0xf] %vm608, %v550
      %616 = vst.msk [vmem:[%s172 + $0x1c] sm:$0xf] %vm608, %v551
      %617 = vst.msk [vmem:[%s172 + $0x20] sm:$0xf] %vm608, %v552
      %618 = vst.msk [vmem:[%s172 + $0x24] sm:$0xf] %vm608, %v553
      %619 = vst.msk [vmem:[%s172 + $0x28] sm:$0xf] %vm608, %v554
      %620 = vst.msk [vmem:[%s172 + $0x2c] sm:$0xf] %vm608, %v555
      %621 = vst.msk [vmem:[%s172 + $0x30] sm:$0xf] %vm608, %v556
      %622 = vst.msk [vmem:[%s172 + $0x34] sm:$0xf] %vm608, %v557
      %623 = vst.msk [vmem:[%s172 + $0x38] sm:$0xf] %vm608, %v558
      %624 = vst.msk [vmem:[%s172 + $0x3c] sm:$0xf] %vm608, %v559
      %625 = vst.msk [vmem:[%s172 + $0x40] sm:$0xf] %vm608, %v560
      %626 = vst.msk [vmem:[%s172 + $0x44] sm:$0xf] %vm608, %v561
      %627 = vst.msk [vmem:[%s172 + $0x48] sm:$0xf] %vm608, %v562
      %628 = vst.msk [vmem:[%s172 + $0x4c] sm:$0xf] %vm608, %v563
      %629 = vst.msk [vmem:[%s172 + $0x50] sm:$0xf] %vm608, %v564
      %630 = vst.msk [vmem:[%s172 + $0x54] sm:$0xf] %vm608, %v565
      %631 = vst.msk [vmem:[%s172 + $0x58] sm:$0xf] %vm608, %v566
      %632 = vst.msk [vmem:[%s172 + $0x5c] sm:$0xf] %vm608, %v567
      %633 = vst.msk [vmem:[%s172 + $0x60] sm:$0xf] %vm608, %v568
      %634 = vst.msk [vmem:[%s172 + $0x64] sm:$0xf] %vm608, %v569
      %635 = vst.msk [vmem:[%s172 + $0x68] sm:$0xf] %vm608, %v570
      %636 = vst.msk [vmem:[%s172 + $0x6c] sm:$0xf] %vm608, %v571
      %637 = vst.msk [vmem:[%s172 + $0x70] sm:$0xf] %vm608, %v572
      %638 = vst.msk [vmem:[%s172 + $0x74] sm:$0xf] %vm608, %v573
      %639 = vst.msk [vmem:[%s172 + $0x78] sm:$0xf] %vm608, %v574
      %640 = vst.msk [vmem:[%s172 + $0x7c] sm:$0xf] %vm608, %v575
      %s641 = smul.u32 32, %s14
      %p642 = scmp.lt.s32.totalorder %s641, 63
      %s643 = scalar_select %p642, %s641, 63
      %s644 = smul.addr %s643, 4
      %s645 = scalar_lea.vmem %s3, %s644
      // Predicated region
      $region33: #{resnext_bottleneck_forward.3} parent=31 // pred_check
        %p646 = pneg %p100
      $region34: #{resnext_bottleneck_forward.3} parent=31 // pred_check_branch
        %648 = sbr.rel (%p646) target = $region36
      $region35: #{resnext_bottleneck_forward.3} parent=31 // pred_region
        %s649 = smul.u32 32, %s14
      $region36: #{resnext_bottleneck_forward.3} parent=31 // pred_fallthru
        _
    $region32: #{resnext_bottleneck_forward.3} parent=5 // pred_fallthru
      _
    %p650 = scmp.le.s32.totalorder 2, %s9
    // Predicated region
    $region37: #{resnext_bottleneck_forward.3} parent=5 // pred_check
      %p651 = pneg %p650
    $region38: #{resnext_bottleneck_forward.3} parent=5 // pred_check_branch
      %653 = sbr.rel (%p651) target = $region40
    $region39: #{resnext_bottleneck_forward.3} parent=5 // pred_region
      %s654 = ssub.s32 %s9, 2
      // Predicated region
      $region41: #{resnext_bottleneck_forward.3} parent=39 // pred_check
        %p655 = pneg %p106
      $region42: #{resnext_bottleneck_forward.3} parent=39 // pred_check_branch
        %657 = sbr.rel (%p655) target = $region44
      $region43: #{resnext_bottleneck_forward.3} parent=39 // pred_region
        %s658 = smul.u32 32, %s15
        %p659 = scmp.lt.s32.totalorder %s658, 63
        %s660 = scalar_select %p659, %s658, 63
        %s661 = smul.addr %s660, 4
        %s662 = scalar_lea.vmem %s3, %s661
      $region44: #{resnext_bottleneck_forward.3} parent=39 // pred_fallthru
        _
    $region40: #{resnext_bottleneck_forward.3} parent=5 // pred_fallthru
      _
  $region6: #{resnext_bottleneck_forward.3} parent=0 // loop_footer
    %s13 = sadd.s32 1, %s9
  $region7: #{resnext_bottleneck_forward.3} parent=0 // loop_footer_branch
    %8 = sbr.rel target = $region3
  $region8: #{resnext_bottleneck_forward.3} parent=0 // loop_exit
    _

// kernel: resnext_bottleneck_forward.4
$region0: #{resnext_bottleneck_forward.4}
  #allocation0 [shape = 'u32[]', space=smem, size = 0x4, offset = 0x4, fixed_abs, tag = 'smem constant byte address 0x4 - core index']
  #allocation1 [shape = 'u32[144,128]{1,0:T(1,128)}', space=vmem, size = 0x12000, scoped, tag = 'internal scratch']
  #allocation2 [shape = 'bf16[18,48,16]{2,1,0:T(16,128)(2,1)}', space=vmem, size = 0x36000, scoped, tag = 'scratch operand']
  #allocation3 [shape = 'f32[256,16]{1,0:T(8,128)}', space=vmem, size = 0x20000, scoped, tag = 'scratch operand']
  %s0 = inlined_call_operand.vmem [shape: bf16[2,16,16,16], index: 0, kind: input, shape index: {}]
  %s1 = inlined_call_operand.vmem [shape: bf16[1,3,3,16,16], index: 1, kind: input, shape index: {}]
  %s2 = inlined_call_operand.vmem [shape: f32[1,1,16], index: 2, kind: input, shape index: {}]
  %s3 = inlined_call_operand.vmem [shape: bf16[2,16,16,16], index: 3, kind: output, shape index: {}]
  %s4 = sld [smem:[#allocation0]]
  $region45: #{resnext_bottleneck_forward.4} parent=0
    _
  %s6 = ssub.s32 1, %s4
  %s7 = scalar_select 0, %s6, %s4
  loop: start=0, step=1, limit=4
  $region2: #{resnext_bottleneck_forward.4} parent=0 // loop_pre_header
    _
  $region3: #{resnext_bottleneck_forward.4} parent=0 // loop_header
    %s9 = sphi 0, %s13
    %p10 = scmp.ge.s32.totalorder %s9, 4
    %s16 = sphi 0, %s28
    %s17 = sphi 0, %s24
    %s18 = sphi 0, %s16
    %s19 = sphi 0, %s17
    %s20 = sphi 0, %s18
    %s21 = sphi 0, %s19
    %s33 = sphi 0, %s35
    %s36 = sphi 0, %s33
    %s37 = sphi 0, %s36
    %s53 = sphi 0, %s37
    %s59 = sphi 0, %s61
    %s62 = sphi 0, %s59
    %s63 = sphi 0, %s62
    %s79 = sphi 0, %s63
    %s85 = sphi 0, %s87
    %s88 = sphi 0, %s85
    %s89 = sphi 0, %s88
    %s105 = sphi 0, %s89
    %s113 = sphi 0, %s115
    %s116 = sphi 0, %s113
    %s117 = sphi 0, %s116
    %s133 = sphi 0, %s117
  $region4: #{resnext_bottleneck_forward.4} parent=0 // loop_header_branch
    %12 = sbr.rel (%p10) target = $region8
  $region5: #{resnext_bottleneck_forward.4} parent=0 // loop_body
    %s14 = ssub.s32 %s9, 1
    %s15 = ssub.s32 %s9, 2
    %s22 = sadd.s32 1, %s17
    %p23 = scmp.ge.s32.totalorder %s22, 1
    %s24 = scalar_select %p23, 0, %s22
    %s25 = sadd.s32 1, %s16
    %s26 = scalar_select %p23, %s25, %s16
    %p27 = scmp.ge.s32.totalorder %s26, 2
    %s28 = scalar_select %p27, 0, %s26
    %s29 = ssub.s32 %s16, %s28
    %s30 = ssub.s32 %s17, %s24
    %s31 = sor.u32 %s29, %s30
    %p32 = scmp.eq.s32.totalorder %s31, 0
    %s34 = sadd.s32 %s33, 1
    %s35 = scalar_select %p32, %s33, %s34
    %p38 = pneg %p32
    %p39 = scmp.eq.s32.totalorder %s9, 1
    %p40 = por %p38, %p39
    %p41 = scmp.ne.s32.totalorder %s33, %s36
    %p42 = scmp.eq.s32.totalorder %s9, 0
    %p43 = por %p41, %p42
    %p44 = scmp.ne.s32.totalorder %s33, %s36
    %p45 = scmp.eq.s32.totalorder %s14, 1
    %p46 = por %p44, %p45
    %p47 = scmp.ne.s32.totalorder %s36, %s37
    %p48 = scmp.eq.s32.totalorder %s14, 0
    %p49 = por %p47, %p48
    %p50 = scmp.ne.s32.totalorder %s36, %s37
    %p51 = scmp.eq.s32.totalorder %s15, 1
    %p52 = por %p50, %p51
    %p54 = scmp.ne.s32.totalorder %s37, %s53
    %p55 = scmp.eq.s32.totalorder %s15, 0
    %p56 = por %p54, %p55
    %s57 = ssub.s32 %s17, %s24
    %p58 = scmp.eq.s32.totalorder %s57, 0
    %s60 = sadd.s32 %s59, 1
    %s61 = scalar_select %p58, %s59, %s60
    %p64 = pneg %p58
    %p65 = scmp.eq.s32.totalorder %s9, 1
    %p66 = por %p64, %p65
    %p67 = scmp.ne.s32.totalorder %s59, %s62
    %p68 = scmp.eq.s32.totalorder %s9, 0
    %p69 = por %p67, %p68
    %p70 = scmp.ne.s32.totalorder %s59, %s62
    %p71 = scmp.eq.s32.totalorder %s14, 1
    %p72 = por %p70, %p71
    %p73 = scmp.ne.s32.totalorder %s62, %s63
    %p74 = scmp.eq.s32.totalorder %s14, 0
    %p75 = por %p73, %p74
    %p76 = scmp.ne.s32.totalorder %s62, %s63
    %p77 = scmp.eq.s32.totalorder %s15, 1
    %p78 = por %p76, %p77
    %p80 = scmp.ne.s32.totalorder %s63, %s79
    %p81 = scmp.eq.s32.totalorder %s15, 0
    %p82 = por %p80, %p81
    %s83 = ssub.s32 %s17, %s24
    %p84 = scmp.eq.s32.totalorder %s83, 0
    %s86 = sadd.s32 %s85, 1
    %s87 = scalar_select %p84, %s85, %s86
    %p90 = pneg %p84
    %p91 = scmp.eq.s32.totalorder %s9, 1
    %p92 = por %p90, %p91
    %p93 = scmp.ne.s32.totalorder %s85, %s88
    %p94 = scmp.eq.s32.totalorder %s9, 0
    %p95 = por %p93, %p94
    %p96 = scmp.ne.s32.totalorder %s85, %s88
    %p97 = scmp.eq.s32.totalorder %s14, 1
    %p98 = por %p96, %p97
    %p99 = scmp.ne.s32.totalorder %s88, %s89
    %p100 = scmp.eq.s32.totalorder %s14, 0
    %p101 = por %p99, %p100
    %p102 = scmp.ne.s32.totalorder %s88, %s89
    %p103 = scmp.eq.s32.totalorder %s15, 1
    %p104 = por %p102, %p103
    %p106 = scmp.ne.s32.totalorder %s89, %s105
    %p107 = scmp.eq.s32.totalorder %s15, 0
    %p108 = por %p106, %p107
    %s109 = ssub.s32 %s16, %s28
    %s110 = ssub.s32 %s17, %s24
    %s111 = sor.u32 %s109, %s110
    %p112 = scmp.eq.s32.totalorder %s111, 0
    %s114 = sadd.s32 %s113, 1
    %s115 = scalar_select %p112, %s113, %s114
    %p118 = pneg %p112
    %p119 = scmp.eq.s32.totalorder %s9, 1
    %p120 = por %p118, %p119
    %p121 = scmp.ne.s32.totalorder %s113, %s116
    %p122 = scmp.eq.s32.totalorder %s9, 0
    %p123 = por %p121, %p122
    %p124 = scmp.ne.s32.totalorder %s113, %s116
    %p125 = scmp.eq.s32.totalorder %s14, 1
    %p126 = por %p124, %p125
    %p127 = scmp.ne.s32.totalorder %s116, %s117
    %p128 = scmp.eq.s32.totalorder %s14, 0
    %p129 = por %p127, %p128
    %p130 = scmp.ne.s32.totalorder %s116, %s117
    %p131 = scmp.eq.s32.totalorder %s15, 1
    %p132 = por %p130, %p131
    %p134 = scmp.ne.s32.totalorder %s117, %s133
    %p135 = scmp.eq.s32.totalorder %s15, 0
    %p136 = por %p134, %p135
    %p137 = scmp.le.s32.totalorder 1, %s9
    %p138 = scmp.lt.s32.totalorder %s9, 3
    %p139 = pnand %p137, %p138
    %p140 = pneg %p139
    // Predicated region
    $region9: #{resnext_bottleneck_forward.4} parent=5 // pred_check
      _
    $region10: #{resnext_bottleneck_forward.4} parent=5 // pred_check_branch
      %142 = sbr.rel (%p139) target = $region12
    $region11: #{resnext_bottleneck_forward.4} parent=5 // pred_region
      %s143 = ssub.s32 %s9, 1
      // Predicated region
      $region13: #{resnext_bottleneck_forward.4} parent=11 // pred_check
        %p144 = pneg %p75
      $region14: #{resnext_bottleneck_forward.4} parent=11 // pred_check_branch
        %146 = sbr.rel (%p144) target = $region16
      $region15: #{resnext_bottleneck_forward.4} parent=11 // pred_region
        %p147 = scmp.lt.s32.totalorder %s19, 0
        %s148 = scalar_select %p147, %s19, 0
        %s149 = smul.addr %s148, 18
        %s150 = smul.addr %s149, 4
        %s151 = scalar_lea.vmem %s1, %s150
      $region16: #{resnext_bottleneck_forward.4} parent=11 // pred_fallthru
        _
      // Predicated region
      $region17: #{resnext_bottleneck_forward.4} parent=11 // pred_check
        %p152 = pneg %p101
      $region18: #{resnext_bottleneck_forward.4} parent=11 // pred_check_branch
        %154 = sbr.rel (%p152) target = $region20
      $region19: #{resnext_bottleneck_forward.4} parent=11 // pred_region
        %p155 = scmp.lt.s32.totalorder %s19, 0
        %s156 = scalar_select %p155, %s19, 0
        %s157 = scalar_lea.vmem %s2, %s156
      $region20: #{resnext_bottleneck_forward.4} parent=11 // pred_fallthru
        _
    $region12: #{resnext_bottleneck_forward.4} parent=5 // pred_fallthru
      _
    %p158 = scmp.lt.s32.totalorder %s9, 2
    // Predicated region
    $region21: #{resnext_bottleneck_forward.4} parent=5 // pred_check
      %p159 = pneg %p158
    $region22: #{resnext_bottleneck_forward.4} parent=5 // pred_check_branch
      %161 = sbr.rel (%p159) target = $region24
    $region23: #{resnext_bottleneck_forward.4} parent=5 // pred_region
      // Predicated region
      $region25: #{resnext_bottleneck_forward.4} parent=23 // pred_check
        %p162 = pneg %p43
      $region26: #{resnext_bottleneck_forward.4} parent=23 // pred_check_branch
        %164 = sbr.rel (%p162) target = $region28
      $region27: #{resnext_bottleneck_forward.4} parent=23 // pred_region
        %p165 = scmp.lt.s32.totalorder %s16, 1
        %s166 = scalar_select %p165, %s16, 1
        %p167 = scmp.lt.s32.totalorder %s17, 0
        %s168 = scalar_select %p167, %s17, 0
        %s169 = smul.addr %s166, 32
        %s170 = sadd.s32 %s168, %s169
        %s171 = smul.addr %s170, 4
        %s172 = scalar_lea.vmem %s0, %s171
      $region28: #{resnext_bottleneck_forward.4} parent=23 // pred_fallthru
        _
    $region24: #{resnext_bottleneck_forward.4} parent=5 // pred_fallthru
      _
    %p173 = scmp.le.s32.totalorder 1, %s9
    %p174 = scmp.lt.s32.totalorder %s9, 3
    %p175 = pnand %p173, %p174
    %p176 = pneg %p175
    // Predicated region
    $region29: #{resnext_bottleneck_forward.4} parent=5 // pred_check
      _
    $region30: #{resnext_bottleneck_forward.4} parent=5 // pred_check_branch
      %178 = sbr.rel (%p175) target = $region32
    $region31: #{resnext_bottleneck_forward.4} parent=5 // pred_region
      %s179 = ssub.s32 %s9, 1
      %p180 = scmp.lt.s32.totalorder %s18, 1
      %s181 = scalar_select %p180, %s18, 1
      %p182 = scmp.lt.s32.totalorder %s19, 0
      %s183 = scalar_select %p182, %s19, 0
      %s184 = smul.addr %s181, 32
      %s185 = sadd.s32 %s183, %s184
      %s186 = smul.addr %s185, 4
      %s187 = scalar_lea.vmem %s0, %s186
      %p188 = pneg %p49
      %p189 = pneg %p46
      %p190 = scmp.lt.s32.totalorder %s19, 0
      %s191 = scalar_select %p190, %s19, 0
      %s192 = smul.addr %s191, 18
      %s193 = smul.addr %s192, 4
      %s194 = scalar_lea.vmem %s1, %s193
      %p195 = pneg %p75
      %p196 = pneg %p72
      %p197 = scmp.lt.s32.totalorder %s19, 0
      %s198 = scalar_select %p197, %s19, 0
      %s199 = scalar_lea.vmem %s2, %s198
      %p200 = pneg %p101
      %p201 = pneg %p98
      %p202 = pneg %p129
      %p203 = pneg %p126
      %p204 = scmp.lt.s32.totalorder %s18, 1
      %s205 = scalar_select %p204, %s18, 1
      %p206 = scmp.lt.s32.totalorder %s19, 0
      %s207 = scalar_select %p206, %s19, 0
      %s208 = smul.addr %s205, 32
      %s209 = sadd.s32 %s207, %s208
      %s210 = smul.addr %s209, 4
      %s211 = scalar_lea.vmem %s3, %s210
      %p212 = scmp.lt.s32.totalorder %s18, 1
      %s213 = scalar_select %p212, %s18, 1
      %p214 = scmp.lt.s32.totalorder %s19, 0
      %s215 = scalar_select %p214, %s19, 0
      %s216 = smul.addr %s213, 32
      %s217 = sadd.s32 %s215, %s216
      %s218 = smul.addr %s217, 4
      %s219 = scalar_lea.vmem %s0, %s218
      %p220 = scmp.lt.s32.totalorder %s19, 0
      %s221 = scalar_select %p220, %s19, 0
      %s222 = smul.addr %s221, 18
      %s223 = smul.addr %s222, 4
      %s224 = scalar_lea.vmem %s1, %s223
      %p225 = scmp.lt.s32.totalorder %s19, 0
      %s226 = scalar_select %p225, %s19, 0
      %s227 = scalar_lea.vmem %s2, %s226
      %p228 = scmp.lt.s32.totalorder %s18, 1
      %s229 = scalar_select %p228, %s18, 1
      %p230 = scmp.lt.s32.totalorder %s19, 0
      %s231 = scalar_select %p230, %s19, 0
      %s232 = smul.addr %s229, 32
      %s233 = sadd.s32 %s231, %s232
      %s234 = smul.addr %s233, 4
      %s235 = scalar_lea.vmem %s3, %s234
      %vm237 = vcmask 130048
      %238 = vst.msk [vmem:[#allocation2] sm:$0xff] %vm237, 0
      %239 = vst.msk [vmem:[#allocation2 + $0x8] sm:$0xff] %vm237, 0
      %240 = vst.msk [vmem:[#allocation2 + $0x10] sm:$0xff] %vm237, 0
      %241 = vst.msk [vmem:[#allocation2 + $0x18] sm:$0xff] %vm237, 0
      %242 = vst.msk [vmem:[#allocation2 + $0x20] sm:$0xff] %vm237, 0
      %243 = vst.msk [vmem:[#allocation2 + $0x28] sm:$0xff] %vm237, 0
      %244 = vst.msk [vmem:[#allocation2 + $0x30] sm:$0xff] %vm237, 0
      %245 = vst.msk [vmem:[#allocation2 + $0x38] sm:$0xff] %vm237, 0
      %246 = vst.msk [vmem:[#allocation2 + $0x40] sm:$0xff] %vm237, 0
      %247 = vst.msk [vmem:[#allocation2 + $0x48] sm:$0xff] %vm237, 0
      %248 = vst.msk [vmem:[#allocation2 + $0x50] sm:$0xff] %vm237, 0
      %249 = vst.msk [vmem:[#allocation2 + $0x58] sm:$0xff] %vm237, 0
      %250 = vst.msk [vmem:[#allocation2 + $0x60] sm:$0xff] %vm237, 0
      %251 = vst.msk [vmem:[#allocation2 + $0x68] sm:$0xff] %vm237, 0
      %252 = vst.msk [vmem:[#allocation2 + $0x70] sm:$0xff] %vm237, 0
      %253 = vst.msk [vmem:[#allocation2 + $0x78] sm:$0xff] %vm237, 0
      %254 = vst.msk [vmem:[#allocation2 + $0x80] sm:$0xff] %vm237, 0
      %255 = vst.msk [vmem:[#allocation2 + $0x88] sm:$0xff] %vm237, 0
      %256 = vst.msk [vmem:[#allocation2 + $0x90] sm:$0xff] %vm237, 0
      %257 = vst.msk [vmem:[#allocation2 + $0x98] sm:$0xff] %vm237, 0
      %258 = vst.msk [vmem:[#allocation2 + $0xa0] sm:$0xff] %vm237, 0
      %259 = vst.msk [vmem:[#allocation2 + $0xa8] sm:$0xff] %vm237, 0
      %260 = vst.msk [vmem:[#allocation2 + $0xb0] sm:$0xff] %vm237, 0
      %261 = vst.msk [vmem:[#allocation2 + $0xb8] sm:$0xff] %vm237, 0
      %262 = vst.msk [vmem:[#allocation2 + $0xc0] sm:$0xff] %vm237, 0
      %263 = vst.msk [vmem:[#allocation2 + $0xc8] sm:$0xff] %vm237, 0
      %264 = vst.msk [vmem:[#allocation2 + $0xd0] sm:$0xff] %vm237, 0
      %265 = vst.msk [vmem:[#allocation2 + $0xd8] sm:$0xff] %vm237, 0
      %266 = vst.msk [vmem:[#allocation2 + $0xe0] sm:$0xff] %vm237, 0
      %267 = vst.msk [vmem:[#allocation2 + $0xe8] sm:$0xff] %vm237, 0
      %268 = vst.msk [vmem:[#allocation2 + $0xf0] sm:$0xff] %vm237, 0
      %269 = vst.msk [vmem:[#allocation2 + $0xf8] sm:$0xff] %vm237, 0
      %270 = vst.msk [vmem:[#allocation2 + $0x100] sm:$0xff] %vm237, 0
      %271 = vst.msk [vmem:[#allocation2 + $0x108] sm:$0xff] %vm237, 0
      %272 = vst.msk [vmem:[#allocation2 + $0x110] sm:$0xff] %vm237, 0
      %273 = vst.msk [vmem:[#allocation2 + $0x118] sm:$0xff] %vm237, 0
      %274 = vst.msk [vmem:[#allocation2 + $0x120] sm:$0xff] %vm237, 0
      %275 = vst.msk [vmem:[#allocation2 + $0x128] sm:$0xff] %vm237, 0
      %276 = vst.msk [vmem:[#allocation2 + $0x130] sm:$0xff] %vm237, 0
      %277 = vst.msk [vmem:[#allocation2 + $0x138] sm:$0xff] %vm237, 0
      %278 = vst.msk [vmem:[#allocation2 + $0x140] sm:$0xff] %vm237, 0
      %279 = vst.msk [vmem:[#allocation2 + $0x148] sm:$0xff] %vm237, 0
      %280 = vst.msk [vmem:[#allocation2 + $0x150] sm:$0xff] %vm237, 0
      %281 = vst.msk [vmem:[#allocation2 + $0x158] sm:$0xff] %vm237, 0
      %282 = vst.msk [vmem:[#allocation2 + $0x160] sm:$0xff] %vm237, 0
      %283 = vst.msk [vmem:[#allocation2 + $0x168] sm:$0xff] %vm237, 0
      %284 = vst.msk [vmem:[#allocation2 + $0x170] sm:$0xff] %vm237, 0
      %285 = vst.msk [vmem:[#allocation2 + $0x178] sm:$0xff] %vm237, 0
      %286 = vst.msk [vmem:[#allocation2 + $0x180] sm:$0xff] %vm237, 0
      %287 = vst.msk [vmem:[#allocation2 + $0x188] sm:$0xff] %vm237, 0
      %288 = vst.msk [vmem:[#allocation2 + $0x190] sm:$0xff] %vm237, 0
      %289 = vst.msk [vmem:[#allocation2 + $0x198] sm:$0xff] %vm237, 0
      %290 = vst.msk [vmem:[#allocation2 + $0x1a0] sm:$0xff] %vm237, 0
      %291 = vst.msk [vmem:[#allocation2 + $0x1a8] sm:$0xff] %vm237, 0
      %v292 = vld [vmem:[%s219] sm:$0xf]
      %v293 = vld [vmem:[%s219 + $0x4] sm:$0xf]
      %v294 = vld [vmem:[%s219 + $0x8] sm:$0xf]
      %v295 = vld [vmem:[%s219 + $0xc] sm:$0xf]
      %v296 = vld [vmem:[%s219 + $0x10] sm:$0xf]
      %v297 = vld [vmem:[%s219 + $0x14] sm:$0xf]
      %v298 = vld [vmem:[%s219 + $0x18] sm:$0xf]
      %v299 = vld [vmem:[%s219 + $0x1c] sm:$0xf]
      %v300 = vld [vmem:[%s219 + $0x20] sm:$0xf]
      %v301 = vld [vmem:[%s219 + $0x24] sm:$0xf]
      %v302 = vld [vmem:[%s219 + $0x28] sm:$0xf]
      %v303 = vld [vmem:[%s219 + $0x2c] sm:$0xf]
      %v304 = vld [vmem:[%s219 + $0x30] sm:$0xf]
      %v305 = vld [vmem:[%s219 + $0x34] sm:$0xf]
      %v306 = vld [vmem:[%s219 + $0x38] sm:$0xf]
      %v307 = vld [vmem:[%s219 + $0x3c] sm:$0xf]
      %v308 = vld [vmem:[%s219 + $0x40] sm:$0xf]
      %v309 = vld [vmem:[%s219 + $0x44] sm:$0xf]
      %v310 = vld [vmem:[%s219 + $0x48] sm:$0xf]
      %v311 = vld [vmem:[%s219 + $0x4c] sm:$0xf]
      %v312 = vld [vmem:[%s219 + $0x50] sm:$0xf]
      %v313 = vld [vmem:[%s219 + $0x54] sm:$0xf]
      %v314 = vld [vmem:[%s219 + $0x58] sm:$0xf]
      %v315 = vld [vmem:[%s219 + $0x5c] sm:$0xf]
      %v316 = vld [vmem:[%s219 + $0x60] sm:$0xf]
      %v317 = vld [vmem:[%s219 + $0x64] sm:$0xf]
      %v318 = vld [vmem:[%s219 + $0x68] sm:$0xf]
      %v319 = vld [vmem:[%s219 + $0x6c] sm:$0xf]
      %v320 = vld [vmem:[%s219 + $0x70] sm:$0xf]
      %v321 = vld [vmem:[%s219 + $0x74] sm:$0xf]
      %v322 = vld [vmem:[%s219 + $0x78] sm:$0xf]
      %v323 = vld [vmem:[%s219 + $0x7c] sm:$0xf]
      %v356 = vunpack.c.l.b16 %v292
      %v357 = vunpack.c.l.b16 %v293
      %v358 = vunpack.c.l.b16 %v294
      %v359 = vunpack.c.l.b16 %v295
      %v360 = vunpack.c.l.b16 %v296
      %v361 = vunpack.c.l.b16 %v297
      %v362 = vunpack.c.l.b16 %v298
      %v363 = vunpack.c.l.b16 %v299
      %v364 = vunpack.c.l.b16 %v300
      %v365 = vunpack.c.l.b16 %v301
      %v366 = vunpack.c.l.b16 %v302
      %v367 = vunpack.c.l.b16 %v303
      %v368 = vunpack.c.l.b16 %v304
      %v369 = vunpack.c.l.b16 %v305
      %v370 = vunpack.c.l.b16 %v306
      %v371 = vunpack.c.l.b16 %v307
      %v372 = vunpack.c.l.b16 %v308
      %v373 = vunpack.c.l.b16 %v309
      %v374 = vunpack.c.l.b16 %v310
      %v375 = vunpack.c.l.b16 %v311
      %v376 = vunpack.c.l.b16 %v312
      %v377 = vunpack.c.l.b16 %v313
      %v378 = vunpack.c.l.b16 %v314
      %v379 = vunpack.c.l.b16 %v315
      %v380 = vunpack.c.l.b16 %v316
      %v381 = vunpack.c.l.b16 %v317
      %v382 = vunpack.c.l.b16 %v318
      %v383 = vunpack.c.l.b16 %v319
      %v384 = vunpack.c.l.b16 %v320
      %v385 = vunpack.c.l.b16 %v321
      %v386 = vunpack.c.l.b16 %v322
      %v387 = vunpack.c.l.b16 %v323
      %v388 = vpack.c.b16 %v357, %v356
      %v389 = vpack.c.b16 %v359, %v358
      %v390 = vpack.c.b16 %v361, %v360
      %v391 = vpack.c.b16 %v363, %v362
      %v392 = vpack.c.b16 %v365, %v364
      %v393 = vpack.c.b16 %v367, %v366
      %v394 = vpack.c.b16 %v369, %v368
      %v395 = vpack.c.b16 %v371, %v370
      %v396 = vpack.c.b16 %v373, %v372
      %v397 = vpack.c.b16 %v375, %v374
      %v398 = vpack.c.b16 %v377, %v376
      %v399 = vpack.c.b16 %v379, %v378
      %v400 = vpack.c.b16 %v381, %v380
      %v401 = vpack.c.b16 %v383, %v382
      %v402 = vpack.c.b16 %v385, %v384
      %v403 = vpack.c.b16 %v387, %v386
      %s420 = scalar_lea.vmem [#allocation2], 24
      %421 = vst.msk [vmem:[%s420 + $0x8] sm:$0xff] %vm237, %v388
      %422 = vst.msk [vmem:[%s420 + $0x20] sm:$0xff] %vm237, %v389
      %423 = vst.msk [vmem:[%s420 + $0x38] sm:$0xff] %vm237, %v390
      %424 = vst.msk [vmem:[%s420 + $0x50] sm:$0xff] %vm237, %v391
      %425 = vst.msk [vmem:[%s420 + $0x68] sm:$0xff] %vm237, %v392
      %426 = vst.msk [vmem:[%s420 + $0x80] sm:$0xff] %vm237, %v393
      %427 = vst.msk [vmem:[%s420 + $0x98] sm:$0xff] %vm237, %v394
      %428 = vst.msk [vmem:[%s420 + $0xb0] sm:$0xff] %vm237, %v395
      %429 = vst.msk [vmem:[%s420 + $0xc8] sm:$0xff] %vm237, %v396
      %430 = vst.msk [vmem:[%s420 + $0xe0] sm:$0xff] %vm237, %v397
      %431 = vst.msk [vmem:[%s420 + $0xf8] sm:$0xff] %vm237, %v398
      %432 = vst.msk [vmem:[%s420 + $0x110] sm:$0xff] %vm237, %v399
      %433 = vst.msk [vmem:[%s420 + $0x128] sm:$0xff] %vm237, %v400
      %434 = vst.msk [vmem:[%s420 + $0x140] sm:$0xff] %vm237, %v401
      %435 = vst.msk [vmem:[%s420 + $0x158] sm:$0xff] %vm237, %v402
      %436 = vst.msk [vmem:[%s420 + $0x170] sm:$0xff] %vm237, %v403
      %437 = vst.msk [vmem:[#allocation3] sm:$0xff] %vm237, 0.0
      %438 = vst.msk [vmem:[#allocation3 + $0x8] sm:$0xff] %vm237, 0.0
      %439 = vst.msk [vmem:[#allocation3 + $0x10] sm:$0xff] %vm237, 0.0
      %440 = vst.msk [vmem:[#allocation3 + $0x18] sm:$0xff] %vm237, 0.0
      %441 = vst.msk [vmem:[#allocation3 + $0x20] sm:$0xff] %vm237, 0.0
      %442 = vst.msk [vmem:[#allocation3 + $0x28] sm:$0xff] %vm237, 0.0
      %443 = vst.msk [vmem:[#allocation3 + $0x30] sm:$0xff] %vm237, 0.0
      %444 = vst.msk [vmem:[#allocation3 + $0x38] sm:$0xff] %vm237, 0.0
      %445 = vst.msk [vmem:[#allocation3 + $0x40] sm:$0xff] %vm237, 0.0
      %446 = vst.msk [vmem:[#allocation3 + $0x48] sm:$0xff] %vm237, 0.0
      %447 = vst.msk [vmem:[#allocation3 + $0x50] sm:$0xff] %vm237, 0.0
      %448 = vst.msk [vmem:[#allocation3 + $0x58] sm:$0xff] %vm237, 0.0
      %449 = vst.msk [vmem:[#allocation3 + $0x60] sm:$0xff] %vm237, 0.0
      %450 = vst.msk [vmem:[#allocation3 + $0x68] sm:$0xff] %vm237, 0.0
      %451 = vst.msk [vmem:[#allocation3 + $0x70] sm:$0xff] %vm237, 0.0
      %452 = vst.msk [vmem:[#allocation3 + $0x78] sm:$0xff] %vm237, 0.0
      %453 = vst.msk [vmem:[#allocation3 + $0x80] sm:$0xff] %vm237, 0.0
      %454 = vst.msk [vmem:[#allocation3 + $0x88] sm:$0xff] %vm237, 0.0
      %455 = vst.msk [vmem:[#allocation3 + $0x90] sm:$0xff] %vm237, 0.0
      %456 = vst.msk [vmem:[#allocation3 + $0x98] sm:$0xff] %vm237, 0.0
      %457 = vst.msk [vmem:[#allocation3 + $0xa0] sm:$0xff] %vm237, 0.0
      %458 = vst.msk [vmem:[#allocation3 + $0xa8] sm:$0xff] %vm237, 0.0
      %459 = vst.msk [vmem:[#allocation3 + $0xb0] sm:$0xff] %vm237, 0.0
      %460 = vst.msk [vmem:[#allocation3 + $0xb8] sm:$0xff] %vm237, 0.0
      %461 = vst.msk [vmem:[#allocation3 + $0xc0] sm:$0xff] %vm237, 0.0
      %462 = vst.msk [vmem:[#allocation3 + $0xc8] sm:$0xff] %vm237, 0.0
      %463 = vst.msk [vmem:[#allocation3 + $0xd0] sm:$0xff] %vm237, 0.0
      %464 = vst.msk [vmem:[#allocation3 + $0xd8] sm:$0xff] %vm237, 0.0
      %465 = vst.msk [vmem:[#allocation3 + $0xe0] sm:$0xff] %vm237, 0.0
      %466 = vst.msk [vmem:[#allocation3 + $0xe8] sm:$0xff] %vm237, 0.0
      %467 = vst.msk [vmem:[#allocation3 + $0xf0] sm:$0xff] %vm237, 0.0
      %468 = vst.msk [vmem:[#allocation3 + $0xf8] sm:$0xff] %vm237, 0.0
      %v469 = vld [vmem:[%s224] sm:$0xf]
      %v470 = vld [vmem:[%s224 + $0x4] sm:$0xf]
      %v471 = vld [vmem:[#allocation2] sm:$0x80]
      %v472 = vld [vmem:[#allocation2 + $0x8] sm:$0xff]
      %v473 = vld [vmem:[#allocation2 + $0x18] sm:$0x80]
      %v474 = vld [vmem:[#allocation2 + $0x20] sm:$0xff]
      %v475 = vld [vmem:[#allocation2 + $0x30] sm:$0x80]
      %v476 = vld [vmem:[#allocation2 + $0x38] sm:$0xff]
      %v477 = vld [vmem:[#allocation2 + $0x48] sm:$0x80]
      %v478 = vld [vmem:[#allocation2 + $0x50] sm:$0xff]
      %v479 = vld [vmem:[#allocation2 + $0x60] sm:$0x80]
      %v480 = vld [vmem:[#allocation2 + $0x68] sm:$0xff]
      %v481 = vld [vmem:[#allocation2 + $0x78] sm:$0x80]
      %v482 = vld [vmem:[#allocation2 + $0x80] sm:$0xff]
      %v483 = vld [vmem:[#allocation2 + $0x90] sm:$0x80]
      %v484 = vld [vmem:[#allocation2 + $0x98] sm:$0xff]
      %v485 = vld [vmem:[#allocation2 + $0xa8] sm:$0x80]
      %v486 = vld [vmem:[#allocation2 + $0xb0] sm:$0xff]
      %v487 = vld [vmem:[#allocation2 + $0xc0] sm:$0x80]
      %v488 = vld [vmem:[#allocation2 + $0xc8] sm:$0xff]
      %v489 = vld [vmem:[#allocation2 + $0xd8] sm:$0x80]
      %v490 = vld [vmem:[#allocation2 + $0xe0] sm:$0xff]
      %v491 = vld [vmem:[#allocation2 + $0xf0] sm:$0x80]
      %v492 = vld [vmem:[#allocation2 + $0xf8] sm:$0xff]
      %v493 = vld [vmem:[#allocation2 + $0x108] sm:$0x80]
      %v494 = vld [vmem:[#allocation2 + $0x110] sm:$0xff]
      %v495 = vld [vmem:[#allocation2 + $0x120] sm:$0x80]
      %v496 = vld [vmem:[#allocation2 + $0x128] sm:$0xff]
      %v497 = vld [vmem:[#allocation2 + $0x138] sm:$0x80]
      %v498 = vld [vmem:[#allocation2 + $0x140] sm:$0xff]
      %v499 = vld [vmem:[#allocation2 + $0x150] sm:$0x80]
      %v500 = vld [vmem:[#allocation2 + $0x158] sm:$0xff]
      %v501 = vld [vmem:[#allocation2 + $0x168] sm:$0x80]
      %v502 = vld [vmem:[#allocation2 + $0x170] sm:$0xff]
      %v503 = vld [vmem:[#allocation3] sm:$0xff]
      %v504 = vld [vmem:[#allocation3 + $0x8] sm:$0xff]
      %v505 = vld [vmem:[#allocation3 + $0x10] sm:$0xff]
      %v506 = vld [vmem:[#allocation3 + $0x18] sm:$0xff]
      %v507 = vld [vmem:[#allocation3 + $0x20] sm:$0xff]
      %v508 = vld [vmem:[#allocation3 + $0x28] sm:$0xff]
      %v509 = vld [vmem:[#allocation3 + $0x30] sm:$0xff]
      %v510 = vld [vmem:[#allocation3 + $0x38] sm:$0xff]
      %v511 = vld [vmem:[#allocation3 + $0x40] sm:$0xff]
      %v512 = vld [vmem:[#allocation3 + $0x48] sm:$0xff]
      %v513 = vld [vmem:[#allocation3 + $0x50] sm:$0xff]
      %v514 = vld [vmem:[#allocation3 + $0x58] sm:$0xff]
      %v515 = vld [vmem:[#allocation3 + $0x60] sm:$0xff]
      %v516 = vld [vmem:[#allocation3 + $0x68] sm:$0xff]
      %v517 = vld [vmem:[#allocation3 + $0x70] sm:$0xff]
      %v518 = vld [vmem:[#allocation3 + $0x78] sm:$0xff]
      %v519 = vld [vmem:[#allocation3 + $0x80] sm:$0xff]
      %v520 = vld [vmem:[#allocation3 + $0x88] sm:$0xff]
      %v521 = vld [vmem:[#allocation3 + $0x90] sm:$0xff]
      %v522 = vld [vmem:[#allocation3 + $0x98] sm:$0xff]
      %v523 = vld [vmem:[#allocation3 + $0xa0] sm:$0xff]
      %v524 = vld [vmem:[#allocation3 + $0xa8] sm:$0xff]
      %v525 = vld [vmem:[#allocation3 + $0xb0] sm:$0xff]
      %v526 = vld [vmem:[#allocation3 + $0xb8] sm:$0xff]
      %v527 = vld [vmem:[#allocation3 + $0xc0] sm:$0xff]
      %v528 = vld [vmem:[#allocation3 + $0xc8] sm:$0xff]
      %v529 = vld [vmem:[#allocation3 + $0xd0] sm:$0xff]
      %v530 = vld [vmem:[#allocation3 + $0xd8] sm:$0xff]
      %v531 = vld [vmem:[#allocation3 + $0xe0] sm:$0xff]
      %v532 = vld [vmem:[#allocation3 + $0xe8] sm:$0xff]
      %v533 = vld [vmem:[#allocation3 + $0xf0] sm:$0xff]
      %v534 = vld [vmem:[#allocation3 + $0xf8] sm:$0xff]
      %vm535 = vsmask.f32 256
      %v537 = vshrl.u32 %v471, 16
      %v539 = vrot.slane %v537, 7
      %v541 = vshrl.u32 %v472, 16
      %v543 = vrot.slane %v541, 7
      %v544 = vshll.u32 %v472, 16
      %v546 = vor.u32 %v543, %v544
      %v547 = vsel %vm535, %v539, %v546
      %v549 = vshrl.u32 %v473, 16
      %v551 = vrot.slane %v549, 7
      %v553 = vshrl.u32 %v474, 16
      %v555 = vrot.slane %v553, 7
      %v556 = vshll.u32 %v474, 16
      %v558 = vor.u32 %v555, %v556
      %v559 = vsel %vm535, %v551, %v558
      %v561 = vshrl.u32 %v475, 16
      %v563 = vrot.slane %v561, 7
      %v565 = vshrl.u32 %v476, 16
      %v567 = vrot.slane %v565, 7
      %v568 = vshll.u32 %v476, 16
      %v570 = vor.u32 %v567, %v568
      %v571 = vsel %vm535, %v563, %v570
      %v573 = vshrl.u32 %v477, 16
      %v575 = vrot.slane %v573, 7
      %v577 = vshrl.u32 %v478, 16
      %v579 = vrot.slane %v577, 7
      %v580 = vshll.u32 %v478, 16
      %v582 = vor.u32 %v579, %v580
      %v583 = vsel %vm535, %v575, %v582
      %v585 = vshrl.u32 %v479, 16
      %v587 = vrot.slane %v585, 7
      %v589 = vshrl.u32 %v480, 16
      %v591 = vrot.slane %v589, 7
      %v592 = vshll.u32 %v480, 16
      %v594 = vor.u32 %v591, %v592
      %v595 = vsel %vm535, %v587, %v594
      %v597 = vshrl.u32 %v481, 16
      %v599 = vrot.slane %v597, 7
      %v601 = vshrl.u32 %v482, 16
      %v603 = vrot.slane %v601, 7
      %v604 = vshll.u32 %v482, 16
      %v606 = vor.u32 %v603, %v604
      %v607 = vsel %vm535, %v599, %v606
      %v609 = vshrl.u32 %v483, 16
      %v611 = vrot.slane %v609, 7
      %v613 = vshrl.u32 %v484, 16
      %v615 = vrot.slane %v613, 7
      %v616 = vshll.u32 %v484, 16
      %v618 = vor.u32 %v615, %v616
      %v619 = vsel %vm535, %v611, %v618
      %v621 = vshrl.u32 %v485, 16
      %v623 = vrot.slane %v621, 7
      %v625 = vshrl.u32 %v486, 16
      %v627 = vrot.slane %v625, 7
      %v628 = vshll.u32 %v486, 16
      %v630 = vor.u32 %v627, %v628
      %v631 = vsel %vm535, %v623, %v630
      %v633 = vshrl.u32 %v487, 16
      %v635 = vrot.slane %v633, 7
      %v637 = vshrl.u32 %v488, 16
      %v639 = vrot.slane %v637, 7
      %v640 = vshll.u32 %v488, 16
      %v642 = vor.u32 %v639, %v640
      %v643 = vsel %vm535, %v635, %v642
      %v645 = vshrl.u32 %v489, 16
      %v647 = vrot.slane %v645, 7
      %v649 = vshrl.u32 %v490, 16
      %v651 = vrot.slane %v649, 7
      %v652 = vshll.u32 %v490, 16
      %v654 = vor.u32 %v651, %v652
      %v655 = vsel %vm535, %v647, %v654
      %v657 = vshrl.u32 %v491, 16
      %v659 = vrot.slane %v657, 7
      %v661 = vshrl.u32 %v492, 16
      %v663 = vrot.slane %v661, 7
      %v664 = vshll.u32 %v492, 16
      %v666 = vor.u32 %v663, %v664
      %v667 = vsel %vm535, %v659, %v666
      %v669 = vshrl.u32 %v493, 16
      %v671 = vrot.slane %v669, 7
      %v673 = vshrl.u32 %v494, 16
      %v675 = vrot.slane %v673, 7
      %v676 = vshll.u32 %v494, 16
      %v678 = vor.u32 %v675, %v676
      %v679 = vsel %vm535, %v671, %v678
      %v681 = vshrl.u32 %v495, 16
      %v683 = vrot.slane %v681, 7
      %v685 = vshrl.u32 %v496, 16
      %v687 = vrot.slane %v685, 7
      %v688 = vshll.u32 %v496, 16
      %v690 = vor.u32 %v687, %v688
      %v691 = vsel %vm535, %v683, %v690
      %v693 = vshrl.u32 %v497, 16
      %v695 = vrot.slane %v693, 7
      %v697 = vshrl.u32 %v498, 16
      %v699 = vrot.slane %v697, 7
      %v700 = vshll.u32 %v498, 16
      %v702 = vor.u32 %v699, %v700
      %v703 = vsel %vm535, %v695, %v702
      %v705 = vshrl.u32 %v499, 16
      %v707 = vrot.slane %v705, 7
      %v709 = vshrl.u32 %v500, 16
      %v711 = vrot.slane %v709, 7
      %v712 = vshll.u32 %v500, 16
      %v714 = vor.u32 %v711, %v712
      %v715 = vsel %vm535, %v707, %v714
      %v717 = vshrl.u32 %v501, 16
      %v719 = vrot.slane %v717, 7
      %v721 = vshrl.u32 %v502, 16
      %v723 = vrot.slane %v721, 7
      %v724 = vshll.u32 %v502, 16
      %v726 = vor.u32 %v723, %v724
      %v727 = vsel %vm535, %v719, %v726
      %v730 = vunpack.c.l.b16 %v469
      %v731 = vunpack.c.l.b16 %v470
      %v732 = vpack.c.b16 %v731, %v730
      %v735 = vsel %vm237, %v547, 0
      %v738 = vsel %vm237, %v559, 0
      %v741 = vsel %vm237, %v571, 0
      %v744 = vsel %vm237, %v583, 0
      %v747 = vsel %vm237, %v595, 0
      %v750 = vsel %vm237, %v607, 0
      %v753 = vsel %vm237, %v619, 0
      %v756 = vsel %vm237, %v631, 0
      %v759 = vsel %vm237, %v643, 0
      %v762 = vsel %vm237, %v655, 0
      %v765 = vsel %vm237, %v667, 0
      %v768 = vsel %vm237, %v679, 0
      %v771 = vsel %vm237, %v691, 0
      %v774 = vsel %vm237, %v703, 0
      %v777 = vsel %vm237, %v715, 0
      %v780 = vsel %vm237, %v727, 0
      %782 = vmatprep.subr.bf16.mxu0 0
      %783 = vmatpush1.bf16.msra.mxu0 %v732
      %784 = vmatprep.subr.bf16.mxu0 0
      %785 = vmatpush1.bf16.msra.mxu0 0
      %786 = vmatprep.subr.bf16.mxu0 0
      %787 = vmatpush1.bf16.msra.mxu0 0
      %788 = vmatprep.subr.bf16.mxu0 0
      %789 = vmatpush1.bf16.msra.mxu0 0
      %790 = vmatprep.subr.bf16.mxu0 0
      %791 = vmatpush1.bf16.msra.mxu0 0
      %792 = vmatprep.subr.bf16.mxu0 0
      %793 = vmatpush1.bf16.msra.mxu0 0
      %794 = vmatprep.subr.bf16.mxu0 0
      %795 = vmatpush1.bf16.msra.mxu0 0
      %796 = vmatprep.subr.bf16.mxu0 0
      %797 = vmatpush1.bf16.msra.mxu0 0
      %798 = vmatprep.subr.bf16.mxu0 0
      %799 = vmatpush1.bf16.msra.mxu0 0
      %800 = vmatprep.subr.bf16.mxu0 0
      %801 = vmatpush1.bf16.msra.mxu0 0
      %802 = vmatprep.subr.bf16.mxu0 0
      %803 = vmatpush1.bf16.msra.mxu0 0
      %804 = vmatprep.subr.bf16.mxu0 0
      %805 = vmatpush1.bf16.msra.mxu0 0
      %806 = vmatprep.subr.bf16.mxu0 0
      %807 = vmatpush1.bf16.msra.mxu0 0
      %808 = vmatprep.subr.bf16.mxu0 0
      %809 = vmatpush1.bf16.msra.mxu0 0
      %810 = vmatprep.subr.bf16.mxu0 0
      %811 = vmatpush1.bf16.msra.mxu0 0
      %812 = vmatprep.subr.bf16.mxu0 0
      %813 = vmatpush1.bf16.msra.mxu0 0
      %814 = vmatprep.mubr.bf16.mxu0 0
      %815 = vmatmul.mubr.bf16.gmra.mrb[0].mxu0 %v735
      %v816 = vpop.f32.mrb[0].mxu0
      %v817 = vadd.f32 0.0, %v816
      %v818 = vpop.f32.mrb[0].mxu0
      %v819 = vpop.f32.mrb[0].mxu0
      %v820 = vadd.f32 0.0, %v819
      %v821 = vpop.f32.mrb[0].mxu0
      %822 = vmatprep.mubr.bf16.mxu0 0
      %823 = vmatmul.mubr.bf16.gmra.mrb[0].mxu0 %v738
      %v824 = vpop.f32.mrb[0].mxu0
      %v825 = vadd.f32 0.0, %v824
      %v826 = vpop.f32.mrb[0].mxu0
      %v827 = vpop.f32.mrb[0].mxu0
      %v828 = vadd.f32 0.0, %v827
      %v829 = vpop.f32.mrb[0].mxu0
      %830 = vmatprep.mubr.bf16.mxu0 0
      %831 = vmatmul.mubr.bf16.gmra.mrb[0].mxu0 %v741
      %v832 = vpop.f32.mrb[0].mxu0
      %v833 = vadd.f32 0.0, %v832
      %v834 = vpop.f32.mrb[0].mxu0
      %v835 = vpop.f32.mrb[0].mxu0
      %v836 = vadd.f32 0.0, %v835
      %v837 = vpop.f32.mrb[0].mxu0
      %838 = vmatprep.mubr.bf16.mxu0 0
      %839 = vmatmul.mubr.bf16.gmra.mrb[0].mxu0 %v744
      %v840 = vpop.f32.mrb[0].mxu0
      %v841 = vadd.f32 0.0, %v840
      %v842 = vpop.f32.mrb[0].mxu0
      %v843 = vpop.f32.mrb[0].mxu0
      %v844 = vadd.f32 0.0, %v843
      %v845 = vpop.f32.mrb[0].mxu0
      %846 = vmatprep.mubr.bf16.mxu0 0
      %847 = vmatmul.mubr.bf16.gmra.mrb[0].mxu0 %v747
      %v848 = vpop.f32.mrb[0].mxu0
      %v849 = vadd.f32 0.0, %v848
      %v850 = vpop.f32.mrb[0].mxu0
      %v851 = vpop.f32.mrb[0].mxu0
      %v852 = vadd.f32 0.0, %v851
      %v853 = vpop.f32.mrb[0].mxu0
      %854 = vmatprep.mubr.bf16.mxu0 0
      %855 = vmatmul.mubr.bf16.gmra.mrb[0].mxu0 %v750
      %v856 = vpop.f32.mrb[0].mxu0
      %v857 = vadd.f32 0.0, %v856
      %v858 = vpop.f32.mrb[0].mxu0
      %v859 = vpop.f32.mrb[0].mxu0
      %v860 = vadd.f32 0.0, %v859
      %v861 = vpop.f32.mrb[0].mxu0
      %862 = vmatprep.mubr.bf16.mxu0 0
      %863 = vmatmul.mubr.bf16.gmra.mrb[0].mxu0 %v753
      %v864 = vpop.f32.mrb[0].mxu0
      %v865 = vadd.f32 0.0, %v864
      %v866 = vpop.f32.mrb[0].mxu0
      %v867 = vpop.f32.mrb[0].mxu0
      %v868 = vadd.f32 0.0, %v867
      %v869 = vpop.f32.mrb[0].mxu0
      %870 = vmatprep.mubr.bf16.mxu0 0
      %871 = vmatmul.mubr.bf16.gmra.mrb[0].mxu0 %v756
      %v872 = vpop.f32.mrb[0].mxu0
      %v873 = vadd.f32 0.0, %v872
      %v874 = vpop.f32.mrb[0].mxu0
      %v875 = vpop.f32.mrb[0].mxu0
      %v876 = vadd.f32 0.0, %v875
      %v877 = vpop.f32.mrb[0].mxu0
      %878 = vmatprep.mubr.bf16.mxu0 0
      %879 = vmatmul.mubr.bf16.gmra.mrb[0].mxu0 %v759
      %v880 = vpop.f32.mrb[0].mxu0
      %v881 = vadd.f32 0.0, %v880
      %v882 = vpop.f32.mrb[0].mxu0
      %v883 = vpop.f32.mrb[0].mxu0
      %v884 = vadd.f32 0.0, %v883
      %v885 = vpop.f32.mrb[0].mxu0
      %886 = vmatprep.mubr.bf16.mxu0 0
      %887 = vmatmul.mubr.bf16.gmra.mrb[0].mxu0 %v762
      %v888 = vpop.f32.mrb[0].mxu0
      %v889 = vadd.f32 0.0, %v888
      %v890 = vpop.f32.mrb[0].mxu0
      %v891 = vpop.f32.mrb[0].mxu0
      %v892 = vadd.f32 0.0, %v891
      %v893 = vpop.f32.mrb[0].mxu0
      %894 = vmatprep.mubr.bf16.mxu0 0
      %895 = vmatmul.mubr.bf16.gmra.mrb[0].mxu0 %v765
      %v896 = vpop.f32.mrb[0].mxu0
      %v897 = vadd.f32 0.0, %v896
      %v898 = vpop.f32.mrb[0].mxu0
      %v899 = vpop.f32.mrb[0].mxu0
      %v900 = vadd.f32 0.0, %v899
      %v901 = vpop.f32.mrb[0].mxu0
      %902 = vmatprep.mubr.bf16.mxu0 0
      %903 = vmatmul.mubr.bf16.gmra.mrb[0].mxu0 %v768
      %v904 = vpop.f32.mrb[0].mxu0
      %v905 = vadd.f32 0.0, %v904
      %v906 = vpop.f32.mrb[0].mxu0
      %v907 = vpop.f32.mrb[0].mxu0
      %v908 = vadd.f32 0.0, %v907
      %v909 = vpop.f32.mrb[0].mxu0
      %910 = vmatprep.mubr.bf16.mxu0 0
      %911 = vmatmul.mubr.bf16.gmra.mrb[0].mxu0 %v771
      %v912 = vpop.f32.mrb[0].mxu0
      %v913 = vadd.f32 0.0, %v912
      %v914 = vpop.f32.mrb[0].mxu0
      %v915 = vpop.f32.mrb[0].mxu0
      %v916 = vadd.f32 0.0, %v915
      %v917 = vpop.f32.mrb[0].mxu0
      %918 = vmatprep.mubr.bf16.mxu0 0
      %919 = vmatmul.mubr.bf16.gmra.mrb[0].mxu0 %v774
      %v920 = vpop.f32.mrb[0].mxu0
      %v921 = vadd.f32 0.0, %v920
      %v922 = vpop.f32.mrb[0].mxu0
      %v923 = vpop.f32.mrb[0].mxu0
      %v924 = vadd.f32 0.0, %v923
      %v925 = vpop.f32.mrb[0].mxu0
      %926 = vmatprep.mubr.bf16.mxu0 0
      %927 = vmatmul.mubr.bf16.gmra.mrb[0].mxu0 %v777
      %v928 = vpop.f32.mrb[0].mxu0
      %v929 = vadd.f32 0.0, %v928
      %v930 = vpop.f32.mrb[0].mxu0
      %v931 = vpop.f32.mrb[0].mxu0
      %v932 = vadd.f32 0.0, %v931
      %v933 = vpop.f32.mrb[0].mxu0
      %934 = vmatprep.mubr.bf16.mxu0 0
      %935 = vmatmul.mubr.bf16.gmra.mrb[0].mxu0 %v780
      %v936 = vpop.f32.mrb[0].mxu0
      %v937 = vadd.f32 0.0, %v936
      %v938 = vpop.f32.mrb[0].mxu0
      %v939 = vpop.f32.mrb[0].mxu0
      %v940 = vadd.f32 0.0, %v939
      %v941 = vpop.f32.mrb[0].mxu0
      %942 = vdwg.mxu0
      %v943 = vadd.f32 %v503, %v817
      %v944 = vadd.f32 %v504, %v820
      %v945 = vadd.f32 %v505, %v825
      %v946 = vadd.f32 %v506, %v828
      %v947 = vadd.f32 %v507, %v833
      %v948 = vadd.f32 %v508, %v836
      %v949 = vadd.f32 %v509, %v841
      %v950 = vadd.f32 %v510, %v844
      %v951 = vadd.f32 %v511, %v849
      %v952 = vadd.f32 %v512, %v852
      %v953 = vadd.f32 %v513, %v857
      %v954 = vadd.f32 %v514, %v860
      %v955 = vadd.f32 %v515, %v865
      %v956 = vadd.f32 %v516, %v868
      %v957 = vadd.f32 %v517, %v873
      %v958 = vadd.f32 %v518, %v876
      %v959 = vadd.f32 %v519, %v881
      %v960 = vadd.f32 %v520, %v884
      %v961 = vadd.f32 %v521, %v889
      %v962 = vadd.f32 %v522, %v892
      %v963 = vadd.f32 %v523, %v897
      %v964 = vadd.f32 %v524, %v900
      %v965 = vadd.f32 %v525, %v905
      %v966 = vadd.f32 %v526, %v908
      %v967 = vadd.f32 %v527, %v913
      %v968 = vadd.f32 %v528, %v916
      %v969 = vadd.f32 %v529, %v921
      %v970 = vadd.f32 %v530, %v924
      %v971 = vadd.f32 %v531, %v929
      %v972 = vadd.f32 %v532, %v932
      %v973 = vadd.f32 %v533, %v937
      %v974 = vadd.f32 %v534, %v940
      %975 = vst.msk [vmem:[#allocation3] sm:$0xff] %vm237, %v943
      %976 = vst.msk [vmem:[#allocation3 + $0x8] sm:$0xff] %vm237, %v944
      %977 = vst.msk [vmem:[#allocation3 + $0x10] sm:$0xff] %vm237, %v945
      %978 = vst.msk [vmem:[#allocation3 + $0x18] sm:$0xff] %vm237, %v946
      %979 = vst.msk [vmem:[#allocation3 + $0x20] sm:$0xff] %vm237, %v947
      %980 = vst.msk [vmem:[#allocation3 + $0x28] sm:$0xff] %vm237, %v948
      %981 = vst.msk [vmem:[#allocation3 + $0x30] sm:$0xff] %vm237, %v949
      %982 = vst.msk [vmem:[#allocation3 + $0x38] sm:$0xff] %vm237, %v950
      %983 = vst.msk [vmem:[#allocation3 + $0x40] sm:$0xff] %vm237, %v951
      %984 = vst.msk [vmem:[#allocation3 + $0x48] sm:$0xff] %vm237, %v952
      %985 = vst.msk [vmem:[#allocation3 + $0x50] sm:$0xff] %vm237, %v953
      %986 = vst.msk [vmem:[#allocation3 + $0x58] sm:$0xff] %vm237, %v954
      %987 = vst.msk [vmem:[#allocation3 + $0x60] sm:$0xff] %vm237, %v955
      %988 = vst.msk [vmem:[#allocation3 + $0x68] sm:$0xff] %vm237, %v956
      %989 = vst.msk [vmem:[#allocation3 + $0x70] sm:$0xff] %vm237, %v957
      %990 = vst.msk [vmem:[#allocation3 + $0x78] sm:$0xff] %vm237, %v958
      %991 = vst.msk [vmem:[#allocation3 + $0x80] sm:$0xff] %vm237, %v959
      %992 = vst.msk [vmem:[#allocation3 + $0x88] sm:$0xff] %vm237, %v960
      %993 = vst.msk [vmem:[#allocation3 + $0x90] sm:$0xff] %vm237, %v961
      %994 = vst.msk [vmem:[#allocation3 + $0x98] sm:$0xff] %vm237, %v962
      %995 = vst.msk [vmem:[#allocation3 + $0xa0] sm:$0xff] %vm237, %v963
      %996 = vst.msk [vmem:[#allocation3 + $0xa8] sm:$0xff] %vm237, %v964
      %997 = vst.msk [vmem:[#allocation3 + $0xb0] sm:$0xff] %vm237, %v965
      %998 = vst.msk [vmem:[#allocation3 + $0xb8] sm:$0xff] %vm237, %v966
      %999 = vst.msk [vmem:[#allocation3 + $0xc0] sm:$0xff] %vm237, %v967
      %1000 = vst.msk [vmem:[#allocation3 + $0xc8] sm:$0xff] %vm237, %v968
      %1001 = vst.msk [vmem:[#allocation3 + $0xd0] sm:$0xff] %vm237, %v969
      %1002 = vst.msk [vmem:[#allocation3 + $0xd8] sm:$0xff] %vm237, %v970
      %1003 = vst.msk [vmem:[#allocation3 + $0xe0] sm:$0xff] %vm237, %v971
      %1004 = vst.msk [vmem:[#allocation3 + $0xe8] sm:$0xff] %vm237, %v972
      %1005 = vst.msk [vmem:[#allocation3 + $0xf0] sm:$0xff] %vm237, %v973
      %1006 = vst.msk [vmem:[#allocation3 + $0xf8] sm:$0xff] %vm237, %v974
      %s1007 = scalar_lea.vmem %s224, 8
      %v1008 = vld [vmem:[%s1007] sm:$0xf]
      %v1009 = vld [vmem:[%s1007 + $0x4] sm:$0xf]
      %v1010 = vld [vmem:[#allocation2 + $0x8] sm:$0xff]
      %v1011 = vld [vmem:[#allocation2 + $0x20] sm:$0xff]
      %v1012 = vld [vmem:[#allocation2 + $0x38] sm:$0xff]
      %v1013 = vld [vmem:[#allocation2 + $0x50] sm:$0xff]
      %v1014 = vld [vmem:[#allocation2 + $0x68] sm:$0xff]
      %v1015 = vld [vmem:[#allocation2 + $0x80] sm:$0xff]
      %v1016 = vld [vmem:[#allocation2 + $0x98] sm:$0xff]
      %v1017 = vld [vmem:[#allocation2 + $0xb0] sm:$0xff]
      %v1018 = vld [vmem:[#allocation2 + $0xc8] sm:$0xff]
      %v1019 = vld [vmem:[#allocation2 + $0xe0] sm:$0xff]
      %v1020 = vld [vmem:[#allocation2 + $0xf8] sm:$0xff]
      %v1021 = vld [vmem:[#allocation2 + $0x110] sm:$0xff]
      %v1022 = vld [vmem:[#allocation2 + $0x128] sm:$0xff]
      %v1023 = vld [vmem:[#allocation2 + $0x140] sm:$0xff]
      %v1024 = vld [vmem:[#allocation2 + $0x158] sm:$0xff]
      %v1025 = vld [vmem:[#allocation2 + $0x170] sm:$0xff]
      %v1026 = vld [vmem:[#allocation3] sm:$0xff]
      %v1027 = vld [vmem:[#allocation3 + $0x8] sm:$0xff]
      %v1028 = vld [vmem:[#allocation3 + $0x10] sm:$0xff]
      %v1029 = vld [vmem:[#allocation3 + $0x18] sm:$0xff]
      %v1030 = vld [vmem:[#allocation3 + $0x20] sm:$0xff]
      %v1031 = vld [vmem:[#allocation3 + $0x28] sm:$0xff]
      %v1032 = vld [vmem:[#allocation3 + $0x30] sm:$0xff]
      %v1033 = vld [vmem:[#allocation3 + $0x38] sm:$0xff]
      %v1034 = vld [vmem:[#allocation3 + $0x40] sm:$0xff]
      %v1035 = vld [vmem:[#allocation3 + $0x48] sm:$0xff]
      %v1036 = vld [vmem:[#allocation3 + $0x50] sm:$0xff]
      %v1037 = vld [vmem:[#allocation3 + $0x58] sm:$0xff]
      %v1038 = vld [vmem:[#allocation3 + $0x60] sm:$0xff]
      %v1039 = vld [vmem:[#allocation3 + $0x68] sm:$0xff]
      %v1040 = vld [vmem:[#allocation3 + $0x70] sm:$0xff]
      %v1041 = vld [vmem:[#allocation3 + $0x78] sm:$0xff]
      %v1042 = vld [vmem:[#allocation3 + $0x80] sm:$0xff]
      %v1043 = vld [vmem:[#allocation3 + $0x88] sm:$0xff]
      %v1044 = vld [vmem:[#allocation3 + $0x90] sm:$0xff]
      %v1045 = vld [vmem:[#allocation3 + $0x98] sm:$0xff]
      %v1046 = vld [vmem:[#allocation3 + $0xa0] sm:$0xff]
      %v1047 = vld [vmem:[#allocation3 + $0xa8] sm:$0xff]
      %v1048 = vld [vmem:[#allocation3 + $0xb0] sm:$0xff]
      %v1049 = vld [vmem:[#allocation3 + $0xb8] sm:$0xff]
      %v1050 = vld [vmem:[#allocation3 + $0xc0] sm:$0xff]
      %v1051 = vld [vmem:[#allocation3 + $0xc8] sm:$0xff]
      %v1052 = vld [vmem:[#allocation3 + $0xd0] sm:$0xff]
      %v1053 = vld [vmem:[#allocation3 + $0xd8] sm:$0xff]
      %v1054 = vld [vmem:[#allocation3 + $0xe0] sm:$0xff]
      %v1055 = vld [vmem:[#allocation3 + $0xe8] sm:$0xff]
      %v1056 = vld [vmem:[#allocation3 + $0xf0] sm:$0xff]
      %v1057 = vld [vmem:[#allocation3 + $0xf8] sm:$0xff]
      %v1060 = vunpack.c.l.b16 %v1008
      %v1061 = vunpack.c.l.b16 %v1009
      %v1062 = vpack.c.b16 %v1061, %v1060
      %v1065 = vsel %vm237, %v1010, 0
      %v1068 = vsel %vm237, %v1011, 0
      %v1071 = vsel %vm237, %v1012, 0
      %v1074 = vsel %vm237, %v1013, 0
      %v1077 = vsel %vm237, %v1014, 0
      %v1080 = vsel %vm237, %v1015, 0
      %v1083 = vsel %vm237, %v1016, 0
      %v1086 = vsel %vm237, %v1017, 0
      %v1089 = vsel %vm237, %v1018, 0
      %v1092 = vsel %vm237, %v1019, 0
      %v1095 = vsel %vm237, %v1020, 0
      %v1098 = vsel %vm237, %v1021, 0
      %v1101 = vsel %vm237, %v1022, 0
      %v1104 = vsel %vm237, %v1023, 0
      %v1107 = vsel %vm237, %v1024, 0
      %v1110 = vsel %vm237, %v1025, 0
      %1112 = vmatprep.subr.bf16.mxu0 0
      %1113 = vmatpush1.bf16.msra.mxu0 %v1062
      %1114 = vmatprep.subr.bf16.mxu0 0
      %1115 = vmatpush1.bf16.msra.mxu0 0
      %1116 = vmatprep.subr.bf16.mxu0 0
      %1117 = vmatpush1.bf16.msra.mxu0 0
      %1118 = vmatprep.subr.bf16.mxu0 0
      %1119 = vmatpush1.bf16.msra.mxu0 0
      %1120 = vmatprep.subr.bf16.mxu0 0
      %1121 = vmatpush1.bf16.msra.mxu0 0
      %1122 = vmatprep.subr.bf16.mxu0 0
      %1123 = vmatpush1.bf16.msra.mxu0 0
      %1124 = vmatprep.subr.bf16.mxu0 0
      %1125 = vmatpush1.bf16.msra.mxu0 0
      %1126 = vmatprep.subr.bf16.mxu0 0
      %1127 = vmatpush1.bf16.msra.mxu0 0
      %1128 = vmatprep.subr.bf16.mxu0 0
      %1129 = vmatpush1.bf16.msra.mxu0 0
      %1130 = vmatprep.subr.bf16.mxu0 0
      %1131 = vmatpush1.bf16.msra.mxu0 0
      %1132 = vmatprep.subr.bf16.mxu0 0
      %1133 = vmatpush1.bf16.msra.mxu0 0
      %1134 = vmatprep.subr.bf16.mxu0 0
      %1135 = vmatpush1.bf16.msra.mxu0 0
      %1136 = vmatprep.subr.bf16.mxu0 0
      %1137 = vmatpush1.bf16.msra.mxu0 0
      %1138 = vmatprep.subr.bf16.mxu0 0
      %1139 = vmatpush1.bf16.msra.mxu0 0
      %1140 = vmatprep.subr.bf16.mxu0 0
      %1141 = vmatpush1.bf16.msra.mxu0 0
      %1142 = vmatprep.subr.bf16.mxu0 0
      %1143 = vmatpush1.bf16.msra.mxu0 0
      %1144 = vmatprep.mubr.bf16.mxu0 0
      %1145 = vmatmul.mubr.bf16.gmra.mrb[0].mxu0 %v1065
      %v1146 = vpop.f32.mrb[0].mxu0
      %v1147 = vadd.f32 0.0, %v1146
      %v1148 = vpop.f32.mrb[0].mxu0
      %v1149 = vpop.f32.mrb[0].mxu0
      %v1150 = vadd.f32 0.0, %v1149
      %v1151 = vpop.f32.mrb[0].mxu0
      %1152 = vmatprep.mubr.bf16.mxu0 0
      %1153 = vmatmul.mubr.bf16.gmra.mrb[0].mxu0 %v1068
      %v1154 = vpop.f32.mrb[0].mxu0
      %v1155 = vadd.f32 0.0, %v1154
      %v1156 = vpop.f32.mrb[0].mxu0
      %v1157 = vpop.f32.mrb[0].mxu0
      %v1158 = vadd.f32 0.0, %v1157
      %v1159 = vpop.f32.mrb[0].mxu0
      %1160 = vmatprep.mubr.bf16.mxu0 0
      %1161 = vmatmul.mubr.bf16.gmra.mrb[0].mxu0 %v1071
      %v1162 = vpop.f32.mrb[0].mxu0
      %v1163 = vadd.f32 0.0, %v1162
      %v1164 = vpop.f32.mrb[0].mxu0
      %v1165 = vpop.f32.mrb[0].mxu0
      %v1166 = vadd.f32 0.0, %v1165
      %v1167 = vpop.f32.mrb[0].mxu0
      %1168 = vmatprep.mubr.bf16.mxu0 0
      %1169 = vmatmul.mubr.bf16.gmra.mrb[0].mxu0 %v1074
      %v1170 = vpop.f32.mrb[0].mxu0
      %v1171 = vadd.f32 0.0, %v1170
      %v1172 = vpop.f32.mrb[0].mxu0
      %v1173 = vpop.f32.mrb[0].mxu0
      %v1174 = vadd.f32 0.0, %v1173
      %v1175 = vpop.f32.mrb[0].mxu0
      %1176 = vmatprep.mubr.bf16.mxu0 0
      %1177 = vmatmul.mubr.bf16.gmra.mrb[0].mxu0 %v1077
      %v1178 = vpop.f32.mrb[0].mxu0
      %v1179 = vadd.f32 0.0, %v1178
      %v1180 = vpop.f32.mrb[0].mxu0
      %v1181 = vpop.f32.mrb[0].mxu0
      %v1182 = vadd.f32 0.0, %v1181
      %v1183 = vpop.f32.mrb[0].mxu0
      %1184 = vmatprep.mubr.bf16.mxu0 0
      %1185 = vmatmul.mubr.bf16.gmra.mrb[0].mxu0 %v1080
      %v1186 = vpop.f32.mrb[0].mxu0
      %v1187 = vadd.f32 0.0, %v1186
      %v1188 = vpop.f32.mrb[0].mxu0
      %v1189 = vpop.f32.mrb[0].mxu0
      %v1190 = vadd.f32 0.0, %v1189
      %v1191 = vpop.f32.mrb[0].mxu0
      %1192 = vmatprep.mubr.bf16.mxu0 0
      %1193 = vmatmul.mubr.bf16.gmra.mrb[0].mxu0 %v1083
      %v1194 = vpop.f32.mrb[0].mxu0
      %v1195 = vadd.f32 0.0, %v1194
      %v1196 = vpop.f32.mrb[0].mxu0
      %v1197 = vpop.f32.mrb[0].mxu0
      %v1198 = vadd.f32 0.0, %v1197
      %v1199 = vpop.f32.mrb[0].mxu0
      %1200 = vmatprep.mubr.bf16.mxu0 0
      %1201 = vmatmul.mubr.bf16.gmra.mrb[0].mxu0 %v1086
      %v1202 = vpop.f32.mrb[0].mxu0
      %v1203 = vadd.f32 0.0, %v1202
      %v1204 = vpop.f32.mrb[0].mxu0
      %v1205 = vpop.f32.mrb[0].mxu0
      %v1206 = vadd.f32 0.0, %v1205
      %v1207 = vpop.f32.mrb[0].mxu0
      %1208 = vmatprep.mubr.bf16.mxu0 0
      %1209 = vmatmul.mubr.bf16.gmra.mrb[0].mxu0 %v1089
      %v1210 = vpop.f32.mrb[0].mxu0
      %v1211 = vadd.f32 0.0, %v1210
      %v1212 = vpop.f32.mrb[0].mxu0
      %v1213 = vpop.f32.mrb[0].mxu0
      %v1214 = vadd.f32 0.0, %v1213
      %v1215 = vpop.f32.mrb[0].mxu0
      %1216 = vmatprep.mubr.bf16.mxu0 0
      %1217 = vmatmul.mubr.bf16.gmra.mrb[0].mxu0 %v1092
      %v1218 = vpop.f32.mrb[0].mxu0
      %v1219 = vadd.f32 0.0, %v1218
      %v1220 = vpop.f32.mrb[0].mxu0
      %v1221 = vpop.f32.mrb[0].mxu0
      %v1222 = vadd.f32 0.0, %v1221
      %v1223 = vpop.f32.mrb[0].mxu0
      %1224 = vmatprep.mubr.bf16.mxu0 0
      %1225 = vmatmul.mubr.bf16.gmra.mrb[0].mxu0 %v1095
      %v1226 = vpop.f32.mrb[0].mxu0
      %v1227 = vadd.f32 0.0, %v1226
      %v1228 = vpop.f32.mrb[0].mxu0
      %v1229 = vpop.f32.mrb[0].mxu0
      %v1230 = vadd.f32 0.0, %v1229
      %v1231 = vpop.f32.mrb[0].mxu0
      %1232 = vmatprep.mubr.bf16.mxu0 0
      %1233 = vmatmul.mubr.bf16.gmra.mrb[0].mxu0 %v1098
      %v1234 = vpop.f32.mrb[0].mxu0
      %v1235 = vadd.f32 0.0, %v1234
      %v1236 = vpop.f32.mrb[0].mxu0
      %v1237 = vpop.f32.mrb[0].mxu0
      %v1238 = vadd.f32 0.0, %v1237
      %v1239 = vpop.f32.mrb[0].mxu0
      %1240 = vmatprep.mubr.bf16.mxu0 0
      %1241 = vmatmul.mubr.bf16.gmra.mrb[0].mxu0 %v1101
      %v1242 = vpop.f32.mrb[0].mxu0
      %v1243 = vadd.f32 0.0, %v1242
      %v1244 = vpop.f32.mrb[0].mxu0
      %v1245 = vpop.f32.mrb[0].mxu0
      %v1246 = vadd.f32 0.0, %v1245
      %v1247 = vpop.f32.mrb[0].mxu0
      %1248 = vmatprep.mubr.bf16.mxu0 0
      %1249 = vmatmul.mubr.bf16.gmra.mrb[0].mxu0 %v1104
      %v1250 = vpop.f32.mrb[0].mxu0
      %v1251 = vadd.f32 0.0, %v1250
      %v1252 = vpop.f32.mrb[0].mxu0
      %v1253 = vpop.f32.mrb[0].mxu0
      %v1254 = vadd.f32 0.0, %v1253
      %v1255 = vpop.f32.mrb[0].mxu0
      %1256 = vmatprep.mubr.bf16.mxu0 0
      %1257 = vmatmul.mubr.bf16.gmra.mrb[0].mxu0 %v1107
      %v1258 = vpop.f32.mrb[0].mxu0
      %v1259 = vadd.f32 0.0, %v1258
      %v1260 = vpop.f32.mrb[0].mxu0
      %v1261 = vpop.f32.mrb[0].mxu0
      %v1262 = vadd.f32 0.0, %v1261
      %v1263 = vpop.f32.mrb[0].mxu0
      %1264 = vmatprep.mubr.bf16.mxu0 0
      %1265 = vmatmul.mubr.bf16.gmra.mrb[0].mxu0 %v1110
      %v1266 = vpop.f32.mrb[0].mxu0
      %v1267 = vadd.f32 0.0, %v1266
      %v1268 = vpop.f32.mrb[0].mxu0
      %v1269 = vpop.f32.mrb[0].mxu0
      %v1270 = vadd.f32 0.0, %v1269
      %v1271 = vpop.f32.mrb[0].mxu0
      %1272 = vdwg.mxu0
      %v1273 = vadd.f32 %v1026, %v1147
      %v1274 = vadd.f32 %v1027, %v1150
      %v1275 = vadd.f32 %v1028, %v1155
      %v1276 = vadd.f32 %v1029, %v1158
      %v1277 = vadd.f32 %v1030, %v1163
      %v1278 = vadd.f32 %v1031, %v1166
      %v1279 = vadd.f32 %v1032, %v1171
      %v1280 = vadd.f32 %v1033, %v1174
      %v1281 = vadd.f32 %v1034, %v1179
      %v1282 = vadd.f32 %v1035, %v1182
      %v1283 = vadd.f32 %v1036, %v1187
      %v1284 = vadd.f32 %v1037, %v1190
      %v1285 = vadd.f32 %v1038, %v1195
      %v1286 = vadd.f32 %v1039, %v1198
      %v1287 = vadd.f32 %v1040, %v1203
      %v1288 = vadd.f32 %v1041, %v1206
      %v1289 = vadd.f32 %v1042, %v1211
      %v1290 = vadd.f32 %v1043, %v1214
      %v1291 = vadd.f32 %v1044, %v1219
      %v1292 = vadd.f32 %v1045, %v1222
      %v1293 = vadd.f32 %v1046, %v1227
      %v1294 = vadd.f32 %v1047, %v1230
      %v1295 = vadd.f32 %v1048, %v1235
      %v1296 = vadd.f32 %v1049, %v1238
      %v1297 = vadd.f32 %v1050, %v1243
      %v1298 = vadd.f32 %v1051, %v1246
      %v1299 = vadd.f32 %v1052, %v1251
      %v1300 = vadd.f32 %v1053, %v1254
      %v1301 = vadd.f32 %v1054, %v1259
      %v1302 = vadd.f32 %v1055, %v1262
      %v1303 = vadd.f32 %v1056, %v1267
      %v1304 = vadd.f32 %v1057, %v1270
      %1305 = vst.msk [vmem:[#allocation3] sm:$0xff] %vm237, %v1273
      %1306 = vst.msk [vmem:[#allocation3 + $0x8] sm:$0xff] %vm237, %v1274
      %1307 = vst.msk [vmem:[#allocation3 + $0x10] sm:$0xff] %vm237, %v1275
      %1308 = vst.msk [vmem:[#allocation3 + $0x18] sm:$0xff] %vm237, %v1276
      %1309 = vst.msk [vmem:[#allocation3 + $0x20] sm:$0xff] %vm237, %v1277
      %1310 = vst.msk [vmem:[#allocation3 + $0x28] sm:$0xff] %vm237, %v1278
      %1311 = vst.msk [vmem:[#allocation3 + $0x30] sm:$0xff] %vm237, %v1279
      %1312 = vst.msk [vmem:[#allocation3 + $0x38] sm:$0xff] %vm237, %v1280
      %1313 = vst.msk [vmem:[#allocation3 + $0x40] sm:$0xff] %vm237, %v1281
      %1314 = vst.msk [vmem:[#allocation3 + $0x48] sm:$0xff] %vm237, %v1282
      %1315 = vst.msk [vmem:[#allocation3 + $0x50] sm:$0xff] %vm237, %v1283
      %1316 = vst.msk [vmem:[#allocation3 + $0x58] sm:$0xff] %vm237, %v1284
      %1317 = vst.msk [vmem:[#allocation3 + $0x60] sm:$0xff] %vm237, %v1285
      %1318 = vst.msk [vmem:[#allocation3 + $0x68] sm:$0xff] %vm237, %v1286
      %1319 = vst.msk [vmem:[#allocation3 + $0x70] sm:$0xff] %vm237, %v1287
      %1320 = vst.msk [vmem:[#allocation3 + $0x78] sm:$0xff] %vm237, %v1288
      %1321 = vst.msk [vmem:[#allocation3 + $0x80] sm:$0xff] %vm237, %v1289
      %1322 = vst.msk [vmem:[#allocation3 + $0x88] sm:$0xff] %vm237, %v1290
      %1323 = vst.msk [vmem:[#allocation3 + $0x90] sm:$0xff] %vm237, %v1291
      %1324 = vst.msk [vmem:[#allocation3 + $0x98] sm:$0xff] %vm237, %v1292
      %1325 = vst.msk [vmem:[#allocation3 + $0xa0] sm:$0xff] %vm237, %v1293
      %1326 = vst.msk [vmem:[#allocation3 + $0xa8] sm:$0xff] %vm237, %v1294
      %1327 = vst.msk [vmem:[#allocation3 + $0xb0] sm:$0xff] %vm237, %v1295
      %1328 = vst.msk [vmem:[#allocation3 + $0xb8] sm:$0xff] %vm237, %v1296
      %1329 = vst.msk [vmem:[#allocation3 + $0xc0] sm:$0xff] %vm237, %v1297
      %1330 = vst.msk [vmem:[#allocation3 + $0xc8] sm:$0xff] %vm237, %v1298
      %1331 = vst.msk [vmem:[#allocation3 + $0xd0] sm:$0xff] %vm237, %v1299
      %1332 = vst.msk [vmem:[#allocation3 + $0xd8] sm:$0xff] %vm237, %v1300
      %1333 = vst.msk [vmem:[#allocation3 + $0xe0] sm:$0xff] %vm237, %v1301
      %1334 = vst.msk [vmem:[#allocation3 + $0xe8] sm:$0xff] %vm237, %v1302
      %1335 = vst.msk [vmem:[#allocation3 + $0xf0] sm:$0xff] %vm237, %v1303
      %1336 = vst.msk [vmem:[#allocation3 + $0xf8] sm:$0xff] %vm237, %v1304
      %s1337 = scalar_lea.vmem %s224, 16
      %v1338 = vld [vmem:[%s1337] sm:$0xf]
      %v1339 = vld [vmem:[%s1337 + $0x4] sm:$0xf]
      %v1340 = vld [vmem:[#allocation2 + $0x8] sm:$0xff]
      %v1341 = vld [vmem:[#allocation2 + $0x10] sm:$0x1]
      %v1342 = vld [vmem:[#allocation2 + $0x20] sm:$0xff]
      %v1343 = vld [vmem:[#allocation2 + $0x28] sm:$0x1]
      %v1344 = vld [vmem:[#allocation2 + $0x38] sm:$0xff]
      %v1345 = vld [vmem:[#allocation2 + $0x40] sm:$0x1]
      %v1346 = vld [vmem:[#allocation2 + $0x50] sm:$0xff]
      %v1347 = vld [vmem:[#allocation2 + $0x58] sm:$0x1]
      %v1348 = vld [vmem:[#allocation2 + $0x68] sm:$0xff]
      %v1349 = vld [vmem:[#allocation2 + $0x70] sm:$0x1]
      %v1350 = vld [vmem:[#allocation2 + $0x80] sm:$0xff]
      %v1351 = vld [vmem:[#allocation2 + $0x88] sm:$0x1]
      %v1352 = vld [vmem:[#allocation2 + $0x98] sm:$0xff]
      %v1353 = vld [vmem:[#allocation2 + $0xa0] sm:$0x1]
      %v1354 = vld [vmem:[#allocation2 + $0xb0] sm:$0xff]
      %v1355 = vld [vmem:[#allocation2 + $0xb8] sm:$0x1]
      %v1356 = vld [vmem:[#allocation2 + $0xc8] sm:$0xff]
      %v1357 = vld [vmem:[#allocation2 + $0xd0] sm:$0x1]
      %v1358 = vld [vmem:[#allocation2 + $0xe0] sm:$0xff]
      %v1359 = vld [vmem:[#allocation2 + $0xe8] sm:$0x1]
      %v1360 = vld [vmem:[#allocation2 + $0xf8] sm:$0xff]
      %v1361 = vld [vmem:[#allocation2 + $0x100] sm:$0x1]
      %v1362 = vld [vmem:[#allocation2 + $0x110] sm:$0xff]
      %v1363 = vld [vmem:[#allocation2 + $0x118] sm:$0x1]
      %v1364 = vld [vmem:[#allocation2 + $0x128] sm:$0xff]
      %v1365 = vld [vmem:[#allocation2 + $0x130] sm:$0x1]
      %v1366 = vld [vmem:[#allocation2 + $0x140] sm:$0xff]
      %v1367 = vld [vmem:[#allocation2 + $0x148] sm:$0x1]
      %v1368 = vld [vmem:[#allocation2 + $0x158] sm:$0xff]
      %v1369 = vld [vmem:[#allocation2 + $0x160] sm:$0x1]
      %v1370 = vld [vmem:[#allocation2 + $0x170] sm:$0xff]
      %v1371 = vld [vmem:[#allocation2 + $0x178] sm:$0x1]
      %v1372 = vld [vmem:[#allocation3] sm:$0xff]
      %v1373 = vld [vmem:[#allocation3 + $0x8] sm:$0xff]
      %v1374 = vld [vmem:[#allocation3 + $0x10] sm:$0xff]
      %v1375 = vld [vmem:[#allocation3 + $0x18] sm:$0xff]
      %v1376 = vld [vmem:[#allocation3 + $0x20] sm:$0xff]
      %v1377 = vld [vmem:[#allocation3 + $0x28] sm:$0xff]
      %v1378 = vld [vmem:[#allocation3 + $0x30] sm:$0xff]
      %v1379 = vld [vmem:[#allocation3 + $0x38] sm:$0xff]
      %v1380 = vld [vmem:[#allocation3 + $0x40] sm:$0xff]
      %v1381 = vld [vmem:[#allocation3 + $0x48] sm:$0xff]
      %v1382 = vld [vmem:[#allocation3 + $0x50] sm:$0xff]
      %v1383 = vld [vmem:[#allocation3 + $0x58] sm:$0xff]
      %v1384 = vld [vmem:[#allocation3 + $0x60] sm:$0xff]
      %v1385 = vld [vmem:[#allocation3 + $0x68] sm:$0xff]
      %v1386 = vld [vmem:[#allocation3 + $0x70] sm:$0xff]
      %v1387 = vld [vmem:[#allocation3 + $0x78] sm:$0xff]
      %v1388 = vld [vmem:[#allocation3 + $0x80] sm:$0xff]
      %v1389 = vld [vmem:[#allocation3 + $0x88] sm:$0xff]
      %v1390 = vld [vmem:[#allocation3 + $0x90] sm:$0xff]
      %v1391 = vld [vmem:[#allocation3 + $0x98] sm:$0xff]
      %v1392 = vld [vmem:[#allocation3 + $0xa0] sm:$0xff]
      %v1393 = vld [vmem:[#allocation3 + $0xa8] sm:$0xff]
      %v1394 = vld [vmem:[#allocation3 + $0xb0] sm:$0xff]
      %v1395 = vld [vmem:[#allocation3 + $0xb8] sm:$0xff]
      %v1396 = vld [vmem:[#allocation3 + $0xc0] sm:$0xff]
      %v1397 = vld [vmem:[#allocation3 + $0xc8] sm:$0xff]
      %v1398 = vld [vmem:[#allocation3 + $0xd0] sm:$0xff]
      %v1399 = vld [vmem:[#allocation3 + $0xd8] sm:$0xff]
      %v1400 = vld [vmem:[#allocation3 + $0xe0] sm:$0xff]
      %v1401 = vld [vmem:[#allocation3 + $0xe8] sm:$0xff]
      %v1402 = vld [vmem:[#allocation3 + $0xf0] sm:$0xff]
      %v1403 = vld [vmem:[#allocation3 + $0xf8] sm:$0xff]
      %vm1404 = vsmask.f32 7424
      %v1406 = vshrl.u32 %v1340, 16
      %v1408 = vshll.u32 %v1340, 16
      %v1410 = vrot.slane %v1408, 1
      %v1411 = vor.u32 %v1406, %v1410
      %v1413 = vshll.u32 %v1341, 16
      %v1415 = vrot.slane %v1413, 1
      %v1416 = vsel %vm1404, %v1411, %v1415
      %v1418 = vshrl.u32 %v1342, 16
      %v1420 = vshll.u32 %v1342, 16
      %v1422 = vrot.slane %v1420, 1
      %v1423 = vor.u32 %v1418, %v1422
      %v1425 = vshll.u32 %v1343, 16
      %v1427 = vrot.slane %v1425, 1
      %v1428 = vsel %vm1404, %v1423, %v1427
      %v1430 = vshrl.u32 %v1344, 16
      %v1432 = vshll.u32 %v1344, 16
      %v1434 = vrot.slane %v1432, 1
      %v1435 = vor.u32 %v1430, %v1434
      %v1437 = vshll.u32 %v1345, 16
      %v1439 = vrot.slane %v1437, 1
      %v1440 = vsel %vm1404, %v1435, %v1439
      %v1442 = vshrl.u32 %v1346, 16
      %v1444 = vshll.u32 %v1346, 16
      %v1446 = vrot.slane %v1444, 1
      %v1447 = vor.u32 %v1442, %v1446
      %v1449 = vshll.u32 %v1347, 16
      %v1451 = vrot.slane %v1449, 1
      %v1452 = vsel %vm1404, %v1447, %v1451
      %v1454 = vshrl.u32 %v1348, 16
      %v1456 = vshll.u32 %v1348, 16
      %v1458 = vrot.slane %v1456, 1
      %v1459 = vor.u32 %v1454, %v1458
      %v1461 = vshll.u32 %v1349, 16
      %v1463 = vrot.slane %v1461, 1
      %v1464 = vsel %vm1404, %v1459, %v1463
      %v1466 = vshrl.u32 %v1350, 16
      %v1468 = vshll.u32 %v1350, 16
      %v1470 = vrot.slane %v1468, 1
      %v1471 = vor.u32 %v1466, %v1470
      %v1473 = vshll.u32 %v1351, 16
      %v1475 = vrot.slane %v1473, 1
      %v1476 = vsel %vm1404, %v1471, %v1475
      %v1478 = vshrl.u32 %v1352, 16
      %v1480 = vshll.u32 %v1352, 16
      %v1482 = vrot.slane %v1480, 1
      %v1483 = vor.u32 %v1478, %v1482
      %v1485 = vshll.u32 %v1353, 16
      %v1487 = vrot.slane %v1485, 1
      %v1488 = vsel %vm1404, %v1483, %v1487
      %v1490 = vshrl.u32 %v1354, 16
      %v1492 = vshll.u32 %v1354, 16
      %v1494 = vrot.slane %v1492, 1
      %v1495 = vor.u32 %v1490, %v1494
      %v1497 = vshll.u32 %v1355, 16
      %v1499 = vrot.slane %v1497, 1
      %v1500 = vsel %vm1404, %v1495, %v1499
      %v1502 = vshrl.u32 %v1356, 16
      %v1504 = vshll.u32 %v1356, 16
      %v1506 = vrot.slane %v1504, 1
      %v1507 = vor.u32 %v1502, %v1506
      %v1509 = vshll.u32 %v1357, 16
      %v1511 = vrot.slane %v1509, 1
      %v1512 = vsel %vm1404, %v1507, %v1511
      %v1514 = vshrl.u32 %v1358, 16
      %v1516 = vshll.u32 %v1358, 16
      %v1518 = vrot.slane %v1516, 1
      %v1519 = vor.u32 %v1514, %v1518
      %v1521 = vshll.u32 %v1359, 16
      %v1523 = vrot.slane %v1521, 1
      %v1524 = vsel %vm1404, %v1519, %v1523
      %v1526 = vshrl.u32 %v1360, 16
      %v1528 = vshll.u32 %v1360, 16
      %v1530 = vrot.slane %v1528, 1
      %v1531 = vor.u32 %v1526, %v1530
      %v1533 = vshll.u32 %v1361, 16
      %v1535 = vrot.slane %v1533, 1
      %v1536 = vsel %vm1404, %v1531, %v1535
      %v1538 = vshrl.u32 %v1362, 16
      %v1540 = vshll.u32 %v1362, 16
      %v1542 = vrot.slane %v1540, 1
      %v1543 = vor.u32 %v1538, %v1542
      %v1545 = vshll.u32 %v1363, 16
      %v1547 = vrot.slane %v1545, 1
      %v1548 = vsel %vm1404, %v1543, %v1547
      %v1550 = vshrl.u32 %v1364, 16
      %v1552 = vshll.u32 %v1364, 16
      %v1554 = vrot.slane %v1552, 1
      %v1555 = vor.u32 %v1550, %v1554
      %v1557 = vshll.u32 %v1365, 16
      %v1559 = vrot.slane %v1557, 1
      %v1560 = vsel %vm1404, %v1555, %v1559
      %v1562 = vshrl.u32 %v1366, 16
      %v1564 = vshll.u32 %v1366, 16
      %v1566 = vrot.slane %v1564, 1
      %v1567 = vor.u32 %v1562, %v1566
      %v1569 = vshll.u32 %v1367, 16
      %v1571 = vrot.slane %v1569, 1
      %v1572 = vsel %vm1404, %v1567, %v1571
      %v1574 = vshrl.u32 %v1368, 16
      %v1576 = vshll.u32 %v1368, 16
      %v1578 = vrot.slane %v1576, 1
      %v1579 = vor.u32 %v1574, %v1578
      %v1581 = vshll.u32 %v1369, 16
      %v1583 = vrot.slane %v1581, 1
      %v1584 = vsel %vm1404, %v1579, %v1583
      %v1586 = vshrl.u32 %v1370, 16
      %v1588 = vshll.u32 %v1370, 16
      %v1590 = vrot.slane %v1588, 1
      %v1591 = vor.u32 %v1586, %v1590
      %v1593 = vshll.u32 %v1371, 16
      %v1595 = vrot.slane %v1593, 1
      %v1596 = vsel %vm1404, %v1591, %v1595
      %v1599 = vunpack.c.l.b16 %v1338
      %v1600 = vunpack.c.l.b16 %v1339
      %v1601 = vpack.c.b16 %v1600, %v1599
      %v1604 = vsel %vm237, %v1416, 0
      %v1607 = vsel %vm237, %v1428, 0
      %v1610 = vsel %vm237, %v1440, 0
      %v1613 = vsel %vm237, %v1452, 0
      %v1616 = vsel %vm237, %v1464, 0
      %v1619 = vsel %vm237, %v1476, 0
      %v1622 = vsel %vm237, %v1488, 0
      %v1625 = vsel %vm237, %v1500, 0
      %v1628 = vsel %vm237, %v1512, 0
      %v1631 = vsel %vm237, %v1524, 0
      %v1634 = vsel %vm237, %v1536, 0
      %v1637 = vsel %vm237, %v1548, 0
      %v1640 = vsel %vm237, %v1560, 0
      %v1643 = vsel %vm237, %v1572, 0
      %v1646 = vsel %vm237, %v1584, 0
      %v1649 = vsel %vm237, %v1596, 0
      %1651 = vmatprep.subr.bf16.mxu0 0
      %1652 = vmatpush1.bf16.msra.mxu0 %v1601
      %1653 = vmatprep.subr.bf16.mxu0 0
      %1654 = vmatpush1.bf16.msra.mxu0 0
      %1655 = vmatprep.subr.bf16.mxu0 0
      %1656 = vmatpush1.bf16.msra.mxu0 0
      %1657 = vmatprep.subr.bf16.mxu0 0
      %1658 = vmatpush1.bf16.msra.mxu0 0
      %1659 = vmatprep.subr.bf16.mxu0 0
      %1660 = vmatpush1.bf16.msra.mxu0 0
      %1661 = vmatprep.subr.bf16.mxu0 0
      %1662 = vmatpush1.bf16.msra.mxu0 0
      %1663 = vmatprep.subr.bf16.mxu0 0
      %1664 = vmatpush1.bf16.msra.mxu0 0
      %1665 = vmatprep.subr.bf16.mxu0 0
      %1666 = vmatpush1.bf16.msra.mxu0 0
      %1667 = vmatprep.subr.bf16.mxu0 0
      %1668 = vmatpush1.bf16.msra.mxu0 0
      %1669 = vmatprep.subr.bf16.mxu0 0
      %1670 = vmatpush1.bf16.msra.mxu0 0
      %1671 = vmatprep.subr.bf16.mxu0 0
      %1672 = vmatpush1.bf16.msra.mxu0 0
      %1673 = vmatprep.subr.bf16.mxu0 0
      %1674 = vmatpush1.bf16.msra.mxu0 0
      %1675 = vmatprep.subr.bf16.mxu0 0
      %1676 = vmatpush1.bf16.msra.mxu0 0
      %1677 = vmatprep.subr.bf16.mxu0 0
      %1678 = vmatpush1.bf16.msra.mxu0 0
      %1679 = vmatprep.subr.bf16.mxu0 0
      %1680 = vmatpush1.bf16.msra.mxu0 0
      %1681 = vmatprep.subr.bf16.mxu0 0
      %1682 = vmatpush1.bf16.msra.mxu0 0
      %1683 = vmatprep.mubr.bf16.mxu0 0
      %1684 = vmatmul.mubr.bf16.gmra.mrb[0].mxu0 %v1604
      %v1685 = vpop.f32.mrb[0].mxu0
      %v1686 = vadd.f32 0.0, %v1685
      %v1687 = vpop.f32.mrb[0].mxu0
      %v1688 = vpop.f32.mrb[0].mxu0
      %v1689 = vadd.f32 0.0, %v1688
      %v1690 = vpop.f32.mrb[0].mxu0
      %1691 = vmatprep.mubr.bf16.mxu0 0
      %1692 = vmatmul.mubr.bf16.gmra.mrb[0].mxu0 %v1607
      %v1693 = vpop.f32.mrb[0].mxu0
      %v1694 = vadd.f32 0.0, %v1693
      %v1695 = vpop.f32.mrb[0].mxu0
      %v1696 = vpop.f32.mrb[0].mxu0
      %v1697 = vadd.f32 0.0, %v1696
      %v1698 = vpop.f32.mrb[0].mxu0
      %1699 = vmatprep.mubr.bf16.mxu0 0
      %1700 = vmatmul.mubr.bf16.gmra.mrb[0].mxu0 %v1610
      %v1701 = vpop.f32.mrb[0].mxu0
      %v1702 = vadd.f32 0.0, %v1701
      %v1703 = vpop.f32.mrb[0].mxu0
      %v1704 = vpop.f32.mrb[0].mxu0
      %v1705 = vadd.f32 0.0, %v1704
      %v1706 = vpop.f32.mrb[0].mxu0
      %1707 = vmatprep.mubr.bf16.mxu0 0
      %1708 = vmatmul.mubr.bf16.gmra.mrb[0].mxu0 %v1613
      %v1709 = vpop.f32.mrb[0].mxu0
      %v1710 = vadd.f32 0.0, %v1709
      %v1711 = vpop.f32.mrb[0].mxu0
      %v1712 = vpop.f32.mrb[0].mxu0
      %v1713 = vadd.f32 0.0, %v1712
      %v1714 = vpop.f32.mrb[0].mxu0
      %1715 = vmatprep.mubr.bf16.mxu0 0
      %1716 = vmatmul.mubr.bf16.gmra.mrb[0].mxu0 %v1616
      %v1717 = vpop.f32.mrb[0].mxu0
      %v1718 = vadd.f32 0.0, %v1717
      %v1719 = vpop.f32.mrb[0].mxu0
      %v1720 = vpop.f32.mrb[0].mxu0
      %v1721 = vadd.f32 0.0, %v1720
      %v1722 = vpop.f32.mrb[0].mxu0
      %1723 = vmatprep.mubr.bf16.mxu0 0
      %1724 = vmatmul.mubr.bf16.gmra.mrb[0].mxu0 %v1619
      %v1725 = vpop.f32.mrb[0].mxu0
      %v1726 = vadd.f32 0.0, %v1725
      %v1727 = vpop.f32.mrb[0].mxu0
      %v1728 = vpop.f32.mrb[0].mxu0
      %v1729 = vadd.f32 0.0, %v1728
      %v1730 = vpop.f32.mrb[0].mxu0
      %1731 = vmatprep.mubr.bf16.mxu0 0
      %1732 = vmatmul.mubr.bf16.gmra.mrb[0].mxu0 %v1622
      %v1733 = vpop.f32.mrb[0].mxu0
      %v1734 = vadd.f32 0.0, %v1733
      %v1735 = vpop.f32.mrb[0].mxu0
      %v1736 = vpop.f32.mrb[0].mxu0
      %v1737 = vadd.f32 0.0, %v1736
      %v1738 = vpop.f32.mrb[0].mxu0
      %1739 = vmatprep.mubr.bf16.mxu0 0
      %1740 = vmatmul.mubr.bf16.gmra.mrb[0].mxu0 %v1625
      %v1741 = vpop.f32.mrb[0].mxu0
      %v1742 = vadd.f32 0.0, %v1741
      %v1743 = vpop.f32.mrb[0].mxu0
      %v1744 = vpop.f32.mrb[0].mxu0
      %v1745 = vadd.f32 0.0, %v1744
      %v1746 = vpop.f32.mrb[0].mxu0
      %1747 = vmatprep.mubr.bf16.mxu0 0
      %1748 = vmatmul.mubr.bf16.gmra.mrb[0].mxu0 %v1628
      %v1749 = vpop.f32.mrb[0].mxu0
      %v1750 = vadd.f32 0.0, %v1749
      %v1751 = vpop.f32.mrb[0].mxu0
      %v1752 = vpop.f32.mrb[0].mxu0
      %v1753 = vadd.f32 0.0, %v1752
      %v1754 = vpop.f32.mrb[0].mxu0
      %1755 = vmatprep.mubr.bf16.mxu0 0
      %1756 = vmatmul.mubr.bf16.gmra.mrb[0].mxu0 %v1631
      %v1757 = vpop.f32.mrb[0].mxu0
      %v1758 = vadd.f32 0.0, %v1757
      %v1759 = vpop.f32.mrb[0].mxu0
      %v1760 = vpop.f32.mrb[0].mxu0
      %v1761 = vadd.f32 0.0, %v1760
      %v1762 = vpop.f32.mrb[0].mxu0
      %1763 = vmatprep.mubr.bf16.mxu0 0
      %1764 = vmatmul.mubr.bf16.gmra.mrb[0].mxu0 %v1634
      %v1765 = vpop.f32.mrb[0].mxu0
      %v1766 = vadd.f32 0.0, %v1765
      %v1767 = vpop.f32.mrb[0].mxu0
      %v1768 = vpop.f32.mrb[0].mxu0
      %v1769 = vadd.f32 0.0, %v1768
      %v1770 = vpop.f32.mrb[0].mxu0
      %1771 = vmatprep.mubr.bf16.mxu0 0
      %1772 = vmatmul.mubr.bf16.gmra.mrb[0].mxu0 %v1637
      %v1773 = vpop.f32.mrb[0].mxu0
      %v1774 = vadd.f32 0.0, %v1773
      %v1775 = vpop.f32.mrb[0].mxu0
      %v1776 = vpop.f32.mrb[0].mxu0
      %v1777 = vadd.f32 0.0, %v1776
      %v1778 = vpop.f32.mrb[0].mxu0
      %1779 = vmatprep.mubr.bf16.mxu0 0
      %1780 = vmatmul.mubr.bf16.gmra.mrb[0].mxu0 %v1640
      %v1781 = vpop.f32.mrb[0].mxu0
      %v1782 = vadd.f32 0.0, %v1781
      %v1783 = vpop.f32.mrb[0].mxu0
      %v1784 = vpop.f32.mrb[0].mxu0
      %v1785 = vadd.f32 0.0, %v1784
      %v1786 = vpop.f32.mrb[0].mxu0
      %1787 = vmatprep.mubr.bf16.mxu0 0
      %1788 = vmatmul.mubr.bf16.gmra.mrb[0].mxu0 %v1643
      %v1789 = vpop.f32.mrb[0].mxu0
      %v1790 = vadd.f32 0.0, %v1789
      %v1791 = vpop.f32.mrb[0].mxu0
      %v1792 = vpop.f32.mrb[0].mxu0
      %v1793 = vadd.f32 0.0, %v1792
      %v1794 = vpop.f32.mrb[0].mxu0
      %1795 = vmatprep.mubr.bf16.mxu0 0
      %1796 = vmatmul.mubr.bf16.gmra.mrb[0].mxu0 %v1646
      %v1797 = vpop.f32.mrb[0].mxu0
      %v1798 = vadd.f32 0.0, %v1797
      %v1799 = vpop.f32.mrb[0].mxu0
      %v1800 = vpop.f32.mrb[0].mxu0
      %v1801 = vadd.f32 0.0, %v1800
      %v1802 = vpop.f32.mrb[0].mxu0
      %1803 = vmatprep.mubr.bf16.mxu0 0
      %1804 = vmatmul.mubr.bf16.gmra.mrb[0].mxu0 %v1649
      %v1805 = vpop.f32.mrb[0].mxu0
      %v1806 = vadd.f32 0.0, %v1805
      %v1807 = vpop.f32.mrb[0].mxu0
      %v1808 = vpop.f32.mrb[0].mxu0
      %v1809 = vadd.f32 0.0, %v1808
      %v1810 = vpop.f32.mrb[0].mxu0
      %1811 = vdwg.mxu0
      %v1812 = vadd.f32 %v1372, %v1686
      %v1813 = vadd.f32 %v1373, %v1689
      %v1814 = vadd.f32 %v1374, %v1694
      %v1815 = vadd.f32 %v1375, %v1697
      %v1816 = vadd.f32 %v1376, %v1702
      %v1817 = vadd.f32 %v1377, %v1705
      %v1818 = vadd.f32 %v1378, %v1710
      %v1819 = vadd.f32 %v1379, %v1713
      %v1820 = vadd.f32 %v1380, %v1718
      %v1821 = vadd.f32 %v1381, %v1721
      %v1822 = vadd.f32 %v1382, %v1726
      %v1823 = vadd.f32 %v1383, %v1729
      %v1824 = vadd.f32 %v1384, %v1734
      %v1825 = vadd.f32 %v1385, %v1737
      %v1826 = vadd.f32 %v1386, %v1742
      %v1827 = vadd.f32 %v1387, %v1745
      %v1828 = vadd.f32 %v1388, %v1750
      %v1829 = vadd.f32 %v1389, %v1753
      %v1830 = vadd.f32 %v1390, %v1758
      %v1831 = vadd.f32 %v1391, %v1761
      %v1832 = vadd.f32 %v1392, %v1766
      %v1833 = vadd.f32 %v1393, %v1769
      %v1834 = vadd.f32 %v1394, %v1774
      %v1835 = vadd.f32 %v1395, %v1777
      %v1836 = vadd.f32 %v1396, %v1782
      %v1837 = vadd.f32 %v1397, %v1785
      %v1838 = vadd.f32 %v1398, %v1790
      %v1839 = vadd.f32 %v1399, %v1793
      %v1840 = vadd.f32 %v1400, %v1798
      %v1841 = vadd.f32 %v1401, %v1801
      %v1842 = vadd.f32 %v1402, %v1806
      %v1843 = vadd.f32 %v1403, %v1809
      %1844 = vst.msk [vmem:[#allocation3] sm:$0xff] %vm237, %v1812
      %1845 = vst.msk [vmem:[#allocation3 + $0x8] sm:$0xff] %vm237, %v1813
      %1846 = vst.msk [vmem:[#allocation3 + $0x10] sm:$0xff] %vm237, %v1814
      %1847 = vst.msk [vmem:[#allocation3 + $0x18] sm:$0xff] %vm237, %v1815
      %1848 = vst.msk [vmem:[#allocation3 + $0x20] sm:$0xff] %vm237, %v1816
      %1849 = vst.msk [vmem:[#allocation3 + $0x28] sm:$0xff] %vm237, %v1817
      %1850 = vst.msk [vmem:[#allocation3 + $0x30] sm:$0xff] %vm237, %v1818
      %1851 = vst.msk [vmem:[#allocation3 + $0x38] sm:$0xff] %vm237, %v1819
      %1852 = vst.msk [vmem:[#allocation3 + $0x40] sm:$0xff] %vm237, %v1820
      %1853 = vst.msk [vmem:[#allocation3 + $0x48] sm:$0xff] %vm237, %v1821
      %1854 = vst.msk [vmem:[#allocation3 + $0x50] sm:$0xff] %vm237, %v1822
      %1855 = vst.msk [vmem:[#allocation3 + $0x58] sm:$0xff] %vm237, %v1823
      %1856 = vst.msk [vmem:[#allocation3 + $0x60] sm:$0xff] %vm237, %v1824
      %1857 = vst.msk [vmem:[#allocation3 + $0x68] sm:$0xff] %vm237, %v1825
      %1858 = vst.msk [vmem:[#allocation3 + $0x70] sm:$0xff] %vm237, %v1826
      %1859 = vst.msk [vmem:[#allocation3 + $0x78] sm:$0xff] %vm237, %v1827
      %1860 = vst.msk [vmem:[#allocation3 + $0x80] sm:$0xff] %vm237, %v1828
      %1861 = vst.msk [vmem:[#allocation3 + $0x88] sm:$0xff] %vm237, %v1829
      %1862 = vst.msk [vmem:[#allocation3 + $0x90] sm:$0xff] %vm237, %v1830
      %1863 = vst.msk [vmem:[#allocation3 + $0x98] sm:$0xff] %vm237, %v1831
      %1864 = vst.msk [vmem:[#allocation3 + $0xa0] sm:$0xff] %vm237, %v1832
      %1865 = vst.msk [vmem:[#allocation3 + $0xa8] sm:$0xff] %vm237, %v1833
      %1866 = vst.msk [vmem:[#allocation3 + $0xb0] sm:$0xff] %vm237, %v1834
      %1867 = vst.msk [vmem:[#allocation3 + $0xb8] sm:$0xff] %vm237, %v1835
      %1868 = vst.msk [vmem:[#allocation3 + $0xc0] sm:$0xff] %vm237, %v1836
      %1869 = vst.msk [vmem:[#allocation3 + $0xc8] sm:$0xff] %vm237, %v1837
      %1870 = vst.msk [vmem:[#allocation3 + $0xd0] sm:$0xff] %vm237, %v1838
      %1871 = vst.msk [vmem:[#allocation3 + $0xd8] sm:$0xff] %vm237, %v1839
      %1872 = vst.msk [vmem:[#allocation3 + $0xe0] sm:$0xff] %vm237, %v1840
      %1873 = vst.msk [vmem:[#allocation3 + $0xe8] sm:$0xff] %vm237, %v1841
      %1874 = vst.msk [vmem:[#allocation3 + $0xf0] sm:$0xff] %vm237, %v1842
      %1875 = vst.msk [vmem:[#allocation3 + $0xf8] sm:$0xff] %vm237, %v1843
      %s1876 = scalar_lea.vmem %s224, 24
      %v1877 = vld [vmem:[%s1876] sm:$0xf]
      %v1878 = vld [vmem:[%s1876 + $0x4] sm:$0xf]
      %v1879 = vld [vmem:[%s420] sm:$0x80]
      %v1880 = vld [vmem:[%s420 + $0x8] sm:$0xff]
      %v1881 = vld [vmem:[%s420 + $0x18] sm:$0x80]
      %v1882 = vld [vmem:[%s420 + $0x20] sm:$0xff]
      %v1883 = vld [vmem:[%s420 + $0x30] sm:$0x80]
      %v1884 = vld [vmem:[%s420 + $0x38] sm:$0xff]
      %v1885 = vld [vmem:[%s420 + $0x48] sm:$0x80]
      %v1886 = vld [vmem:[%s420 + $0x50] sm:$0xff]
      %v1887 = vld [vmem:[%s420 + $0x60] sm:$0x80]
      %v1888 = vld [vmem:[%s420 + $0x68] sm:$0xff]
      %v1889 = vld [vmem:[%s420 + $0x78] sm:$0x80]
      %v1890 = vld [vmem:[%s420 + $0x80] sm:$0xff]
      %v1891 = vld [vmem:[%s420 + $0x90] sm:$0x80]
      %v1892 = vld [vmem:[%s420 + $0x98] sm:$0xff]
      %v1893 = vld [vmem:[%s420 + $0xa8] sm:$0x80]
      %v1894 = vld [vmem:[%s420 + $0xb0] sm:$0xff]
      %v1895 = vld [vmem:[%s420 + $0xc0] sm:$0x80]
      %v1896 = vld [vmem:[%s420 + $0xc8] sm:$0xff]
      %v1897 = vld [vmem:[%s420 + $0xd8] sm:$0x80]
      %v1898 = vld [vmem:[%s420 + $0xe0] sm:$0xff]
      %v1899 = vld [vmem:[%s420 + $0xf0] sm:$0x80]
      %v1900 = vld [vmem:[%s420 + $0xf8] sm:$0xff]
      %v1901 = vld [vmem:[%s420 + $0x108] sm:$0x80]
      %v1902 = vld [vmem:[%s420 + $0x110] sm:$0xff]
      %v1903 = vld [vmem:[%s420 + $0x120] sm:$0x80]
      %v1904 = vld [vmem:[%s420 + $0x128] sm:$0xff]
      %v1905 = vld [vmem:[%s420 + $0x138] sm:$0x80]
      %v1906 = vld [vmem:[%s420 + $0x140] sm:$0xff]
      %v1907 = vld [vmem:[%s420 + $0x150] sm:$0x80]
      %v1908 = vld [vmem:[%s420 + $0x158] sm:$0xff]
      %v1909 = vld [vmem:[%s420 + $0x168] sm:$0x80]
      %v1910 = vld [vmem:[%s420 + $0x170] sm:$0xff]
      %v1911 = vld [vmem:[#allocation3] sm:$0xff]
      %v1912 = vld [vmem:[#allocation3 + $0x8] sm:$0xff]
      %v1913 = vld [vmem:[#allocation3 + $0x10] sm:$0xff]
      %v1914 = vld [vmem:[#allocation3 + $0x18] sm:$0xff]
      %v1915 = vld [vmem:[#allocation3 + $0x20] sm:$0xff]
      %v1916 = vld [vmem:[#allocation3 + $0x28] sm:$0xff]
      %v1917 = vld [vmem:[#allocation3 + $0x30] sm:$0xff]
      %v1918 = vld [vmem:[#allocation3 + $0x38] sm:$0xff]
      %v1919 = vld [vmem:[#allocation3 + $0x40] sm:$0xff]
      %v1920 = vld [vmem:[#allocation3 + $0x48] sm:$0xff]
      %v1921 = vld [vmem:[#allocation3 + $0x50] sm:$0xff]
      %v1922 = vld [vmem:[#allocation3 + $0x58] sm:$0xff]
      %v1923 = vld [vmem:[#allocation3 + $0x60] sm:$0xff]
      %v1924 = vld [vmem:[#allocation3 + $0x68] sm:$0xff]
      %v1925 = vld [vmem:[#allocation3 + $0x70] sm:$0xff]
      %v1926 = vld [vmem:[#allocation3 + $0x78] sm:$0xff]
      %v1927 = vld [vmem:[#allocation3 + $0x80] sm:$0xff]
      %v1928 = vld [vmem:[#allocation3 + $0x88] sm:$0xff]
      %v1929 = vld [vmem:[#allocation3 + $0x90] sm:$0xff]
      %v1930 = vld [vmem:[#allocation3 + $0x98] sm:$0xff]
      %v1931 = vld [vmem:[#allocation3 + $0xa0] sm:$0xff]
      %v1932 = vld [vmem:[#allocation3 + $0xa8] sm:$0xff]
      %v1933 = vld [vmem:[#allocation3 + $0xb0] sm:$0xff]
      %v1934 = vld [vmem:[#allocation3 + $0xb8] sm:$0xff]
      %v1935 = vld [vmem:[#allocation3 + $0xc0] sm:$0xff]
      %v1936 = vld [vmem:[#allocation3 + $0xc8] sm:$0xff]
      %v1937 = vld [vmem:[#allocation3 + $0xd0] sm:$0xff]
      %v1938 = vld [vmem:[#allocation3 + $0xd8] sm:$0xff]
      %v1939 = vld [vmem:[#allocation3 + $0xe0] sm:$0xff]
      %v1940 = vld [vmem:[#allocation3 + $0xe8] sm:$0xff]
      %v1941 = vld [vmem:[#allocation3 + $0xf0] sm:$0xff]
      %v1942 = vld [vmem:[#allocation3 + $0xf8] sm:$0xff]
      %v1944 = vshrl.u32 %v1879, 16
      %v1946 = vrot.slane %v1944, 7
      %v1948 = vshrl.u32 %v1880, 16
      %v1950 = vrot.slane %v1948, 7
      %v1951 = vshll.u32 %v1880, 16
      %v1953 = vor.u32 %v1950, %v1951
      %v1954 = vsel %vm535, %v1946, %v1953
      %v1956 = vshrl.u32 %v1881, 16
      %v1958 = vrot.slane %v1956, 7
      %v1960 = vshrl.u32 %v1882, 16
      %v1962 = vrot.slane %v1960, 7
      %v1963 = vshll.u32 %v1882, 16
      %v1965 = vor.u32 %v1962, %v1963
      %v1966 = vsel %vm535, %v1958, %v1965
      %v1968 = vshrl.u32 %v1883, 16
      %v1970 = vrot.slane %v1968, 7
      %v1972 = vshrl.u32 %v1884, 16
      %v1974 = vrot.slane %v1972, 7
      %v1975 = vshll.u32 %v1884, 16
      %v1977 = vor.u32 %v1974, %v1975
      %v1978 = vsel %vm535, %v1970, %v1977
      %v1980 = vshrl.u32 %v1885, 16
      %v1982 = vrot.slane %v1980, 7
      %v1984 = vshrl.u32 %v1886, 16
      %v1986 = vrot.slane %v1984, 7
      %v1987 = vshll.u32 %v1886, 16
      %v1989 = vor.u32 %v1986, %v1987
      %v1990 = vsel %vm535, %v1982, %v1989
      %v1992 = vshrl.u32 %v1887, 16
      %v1994 = vrot.slane %v1992, 7
      %v1996 = vshrl.u32 %v1888, 16
      %v1998 = vrot.slane %v1996, 7
      %v1999 = vshll.u32 %v1888, 16
      %v2001 = vor.u32 %v1998, %v1999
      %v2002 = vsel %vm535, %v1994, %v2001
      %v2004 = vshrl.u32 %v1889, 16
      %v2006 = vrot.slane %v2004, 7
      %v2008 = vshrl.u32 %v1890, 16
      %v2010 = vrot.slane %v2008, 7
      %v2011 = vshll.u32 %v1890, 16
      %v2013 = vor.u32 %v2010, %v2011
      %v2014 = vsel %vm535, %v2006, %v2013
      %v2016 = vshrl.u32 %v1891, 16
      %v2018 = vrot.slane %v2016, 7
      %v2020 = vshrl.u32 %v1892, 16
      %v2022 = vrot.slane %v2020, 7
      %v2023 = vshll.u32 %v1892, 16
      %v2025 = vor.u32 %v2022, %v2023
      %v2026 = vsel %vm535, %v2018, %v2025
      %v2028 = vshrl.u32 %v1893, 16
      %v2030 = vrot.slane %v2028, 7
      %v2032 = vshrl.u32 %v1894, 16
      %v2034 = vrot.slane %v2032, 7
      %v2035 = vshll.u32 %v1894, 16
      %v2037 = vor.u32 %v2034, %v2035
      %v2038 = vsel %vm535, %v2030, %v2037
      %v2040 = vshrl.u32 %v1895, 16
      %v2042 = vrot.slane %v2040, 7
      %v2044 = vshrl.u32 %v1896, 16
      %v2046 = vrot.slane %v2044, 7
      %v2047 = vshll.u32 %v1896, 16
      %v2049 = vor.u32 %v2046, %v2047
      %v2050 = vsel %vm535, %v2042, %v2049
      %v2052 = vshrl.u32 %v1897, 16
      %v2054 = vrot.slane %v2052, 7
      %v2056 = vshrl.u32 %v1898, 16
      %v2058 = vrot.slane %v2056, 7
      %v2059 = vshll.u32 %v1898, 16
      %v2061 = vor.u32 %v2058, %v2059
      %v2062 = vsel %vm535, %v2054, %v2061
      %v2064 = vshrl.u32 %v1899, 16
      %v2066 = vrot.slane %v2064, 7
      %v2068 = vshrl.u32 %v1900, 16
      %v2070 = vrot.slane %v2068, 7
      %v2071 = vshll.u32 %v1900, 16
      %v2073 = vor.u32 %v2070, %v2071
      %v2074 = vsel %vm535, %v2066, %v2073
      %v2076 = vshrl.u32 %v1901, 16
      %v2078 = vrot.slane %v2076, 7
      %v2080 = vshrl.u32 %v1902, 16
      %v2082 = vrot.slane %v2080, 7
      %v2083 = vshll.u32 %v1902, 16
      %v2085 = vor.u32 %v2082, %v2083
      %v2086 = vsel %vm535, %v2078, %v2085
      %v2088 = vshrl.u32 %v1903, 16
      %v2090 = vrot.slane %v2088, 7
      %v2092 = vshrl.u32 %v1904, 16
      %v2094 = vrot.slane %v2092, 7
      %v2095 = vshll.u32 %v1904, 16
      %v2097 = vor.u32 %v2094, %v2095
      %v2098 = vsel %vm535, %v2090, %v2097
      %v2100 = vshrl.u32 %v1905, 16
      %v2102 = vrot.slane %v2100, 7
      %v2104 = vshrl.u32 %v1906, 16
      %v2106 = vrot.slane %v2104, 7
      %v2107 = vshll.u32 %v1906, 16
      %v2109 = vor.u32 %v2106, %v2107
      %v2110 = vsel %vm535, %v2102, %v2109
      %v2112 = vshrl.u32 %v1907, 16
      %v2114 = vrot.slane %v2112, 7
      %v2116 = vshrl.u32 %v1908, 16
      %v2118 = vrot.slane %v2116, 7
      %v2119 = vshll.u32 %v1908, 16
      %v2121 = vor.u32 %v2118, %v2119
      %v2122 = vsel %vm535, %v2114, %v2121
      %v2124 = vshrl.u32 %v1909, 16
      %v2126 = vrot.slane %v2124, 7
      %v2128 = vshrl.u32 %v1910, 16
      %v2130 = vrot.slane %v2128, 7
      %v2131 = vshll.u32 %v1910, 16
      %v2133 = vor.u32 %v2130, %v2131
      %v2134 = vsel %vm535, %v2126, %v2133
      %v2137 = vunpack.c.l.b16 %v1877
      %v2138 = vunpack.c.l.b16 %v1878
      %v2139 = vpack.c.b16 %v2138, %v2137
      %v2142 = vsel %vm237, %v1954, 0
      %v2145 = vsel %vm237, %v1966, 0
      %v2148 = vsel %vm237, %v1978, 0
      %v2151 = vsel %vm237, %v1990, 0
      %v2154 = vsel %vm237, %v2002, 0
      %v2157 = vsel %vm237, %v2014, 0
      %v2160 = vsel %vm237, %v2026, 0
      %v2163 = vsel %vm237, %v2038, 0
      %v2166 = vsel %vm237, %v2050, 0
      %v2169 = vsel %vm237, %v2062, 0
      %v2172 = vsel %vm237, %v2074, 0
      %v2175 = vsel %vm237, %v2086, 0
      %v2178 = vsel %vm237, %v2098, 0
      %v2181 = vsel %vm237, %v2110, 0
      %v2184 = vsel %vm237, %v2122, 0
      %v2187 = vsel %vm237, %v2134, 0
      %2189 = vmatprep.subr.bf16.mxu0 0
      %2190 = vmatpush1.bf16.msra.mxu0 %v2139
      %2191 = vmatprep.subr.bf16.mxu0 0
      %2192 = vmatpush1.bf16.msra.mxu0 0
      %2193 = vmatprep.subr.bf16.mxu0 0
      %2194 = vmatpush1.bf16.msra.mxu0 0
      %2195 = vmatprep.subr.bf16.mxu0 0
      %2196 = vmatpush1.bf16.msra.mxu0 0
      %2197 = vmatprep.subr.bf16.mxu0 0
      %2198 = vmatpush1.bf16.msra.mxu0 0
      %2199 = vmatprep.subr.bf16.mxu0 0
      %2200 = vmatpush1.bf16.msra.mxu0 0
      %2201 = vmatprep.subr.bf16.mxu0 0
      %2202 = vmatpush1.bf16.msra.mxu0 0
      %2203 = vmatprep.subr.bf16.mxu0 0
      %2204 = vmatpush1.bf16.msra.mxu0 0
      %2205 = vmatprep.subr.bf16.mxu0 0
      %2206 = vmatpush1.bf16.msra.mxu0 0
      %2207 = vmatprep.subr.bf16.mxu0 0
      %2208 = vmatpush1.bf16.msra.mxu0 0
      %2209 = vmatprep.subr.bf16.mxu0 0
      %2210 = vmatpush1.bf16.msra.mxu0 0
      %2211 = vmatprep.subr.bf16.mxu0 0
      %2212 = vmatpush1.bf16.msra.mxu0 0
      %2213 = vmatprep.subr.bf16.mxu0 0
      %2214 = vmatpush1.bf16.msra.mxu0 0
      %2215 = vmatprep.subr.bf16.mxu0 0
      %2216 = vmatpush1.bf16.msra.mxu0 0
      %2217 = vmatprep.subr.bf16.mxu0 0
      %2218 = vmatpush1.bf16.msra.mxu0 0
      %2219 = vmatprep.subr.bf16.mxu0 0
      %2220 = vmatpush1.bf16.msra.mxu0 0
      %2221 = vmatprep.mubr.bf16.mxu0 0
      %2222 = vmatmul.mubr.bf16.gmra.mrb[0].mxu0 %v2142
      %v2223 = vpop.f32.mrb[0].mxu0
      %v2224 = vadd.f32 0.0, %v2223
      %v2225 = vpop.f32.mrb[0].mxu0
      %v2226 = vpop.f32.mrb[0].mxu0
      %v2227 = vadd.f32 0.0, %v2226
      %v2228 = vpop.f32.mrb[0].mxu0
      %2229 = vmatprep.mubr.bf16.mxu0 0
      %2230 = vmatmul.mubr.bf16.gmra.mrb[0].mxu0 %v2145
      %v2231 = vpop.f32.mrb[0].mxu0
      %v2232 = vadd.f32 0.0, %v2231
      %v2233 = vpop.f32.mrb[0].mxu0
      %v2234 = vpop.f32.mrb[0].mxu0
      %v2235 = vadd.f32 0.0, %v2234
      %v2236 = vpop.f32.mrb[0].mxu0
      %2237 = vmatprep.mubr.bf16.mxu0 0
      %2238 = vmatmul.mubr.bf16.gmra.mrb[0].mxu0 %v2148
      %v2239 = vpop.f32.mrb[0].mxu0
      %v2240 = vadd.f32 0.0, %v2239
      %v2241 = vpop.f32.mrb[0].mxu0
      %v2242 = vpop.f32.mrb[0].mxu0
      %v2243 = vadd.f32 0.0, %v2242
      %v2244 = vpop.f32.mrb[0].mxu0
      %2245 = vmatprep.mubr.bf16.mxu0 0
      %2246 = vmatmul.mubr.bf16.gmra.mrb[0].mxu0 %v2151
      %v2247 = vpop.f32.mrb[0].mxu0
      %v2248 = vadd.f32 0.0, %v2247
      %v2249 = vpop.f32.mrb[0].mxu0
      %v2250 = vpop.f32.mrb[0].mxu0
      %v2251 = vadd.f32 0.0, %v2250
      %v2252 = vpop.f32.mrb[0].mxu0
      %2253 = vmatprep.mubr.bf16.mxu0 0
      %2254 = vmatmul.mubr.bf16.gmra.mrb[0].mxu0 %v2154
      %v2255 = vpop.f32.mrb[0].mxu0
      %v2256 = vadd.f32 0.0, %v2255
      %v2257 = vpop.f32.mrb[0].mxu0
      %v2258 = vpop.f32.mrb[0].mxu0
      %v2259 = vadd.f32 0.0, %v2258
      %v2260 = vpop.f32.mrb[0].mxu0
      %2261 = vmatprep.mubr.bf16.mxu0 0
      %2262 = vmatmul.mubr.bf16.gmra.mrb[0].mxu0 %v2157
      %v2263 = vpop.f32.mrb[0].mxu0
      %v2264 = vadd.f32 0.0, %v2263
      %v2265 = vpop.f32.mrb[0].mxu0
      %v2266 = vpop.f32.mrb[0].mxu0
      %v2267 = vadd.f32 0.0, %v2266
      %v2268 = vpop.f32.mrb[0].mxu0
      %2269 = vmatprep.mubr.bf16.mxu0 0
      %2270 = vmatmul.mubr.bf16.gmra.mrb[0].mxu0 %v2160
      %v2271 = vpop.f32.mrb[0].mxu0
      %v2272 = vadd.f32 0.0, %v2271
      %v2273 = vpop.f32.mrb[0].mxu0
      %v2274 = vpop.f32.mrb[0].mxu0
      %v2275 = vadd.f32 0.0, %v2274
      %v2276 = vpop.f32.mrb[0].mxu0
      %2277 = vmatprep.mubr.bf16.mxu0 0
      %2278 = vmatmul.mubr.bf16.gmra.mrb[0].mxu0 %v2163
      %v2279 = vpop.f32.mrb[0].mxu0
      %v2280 = vadd.f32 0.0, %v2279
      %v2281 = vpop.f32.mrb[0].mxu0
      %v2282 = vpop.f32.mrb[0].mxu0
      %v2283 = vadd.f32 0.0, %v2282
      %v2284 = vpop.f32.mrb[0].mxu0
      %2285 = vmatprep.mubr.bf16.mxu0 0
      %2286 = vmatmul.mubr.bf16.gmra.mrb[0].mxu0 %v2166
      %v2287 = vpop.f32.mrb[0].mxu0
      %v2288 = vadd.f32 0.0, %v2287
      %v2289 = vpop.f32.mrb[0].mxu0
      %v2290 = vpop.f32.mrb[0].mxu0
      %v2291 = vadd.f32 0.0, %v2290
      %v2292 = vpop.f32.mrb[0].mxu0
      %2293 = vmatprep.mubr.bf16.mxu0 0
      %2294 = vmatmul.mubr.bf16.gmra.mrb[0].mxu0 %v2169
      %v2295 = vpop.f32.mrb[0].mxu0
      %v2296 = vadd.f32 0.0, %v2295
      %v2297 = vpop.f32.mrb[0].mxu0
      %v2298 = vpop.f32.mrb[0].mxu0
      %v2299 = vadd.f32 0.0, %v2298
      %v2300 = vpop.f32.mrb[0].mxu0
      %2301 = vmatprep.mubr.bf16.mxu0 0
      %2302 = vmatmul.mubr.bf16.gmra.mrb[0].mxu0 %v2172
      %v2303 = vpop.f32.mrb[0].mxu0
      %v2304 = vadd.f32 0.0, %v2303
      %v2305 = vpop.f32.mrb[0].mxu0
      %v2306 = vpop.f32.mrb[0].mxu0
      %v2307 = vadd.f32 0.0, %v2306
      %v2308 = vpop.f32.mrb[0].mxu0
      %2309 = vmatprep.mubr.bf16.mxu0 0
      %2310 = vmatmul.mubr.bf16.gmra.mrb[0].mxu0 %v2175
      %v2311 = vpop.f32.mrb[0].mxu0
      %v2312 = vadd.f32 0.0, %v2311
      %v2313 = vpop.f32.mrb[0].mxu0
      %v2314 = vpop.f32.mrb[0].mxu0
      %v2315 = vadd.f32 0.0, %v2314
      %v2316 = vpop.f32.mrb[0].mxu0
      %2317 = vmatprep.mubr.bf16.mxu0 0
      %2318 = vmatmul.mubr.bf16.gmra.mrb[0].mxu0 %v2178
      %v2319 = vpop.f32.mrb[0].mxu0
      %v2320 = vadd.f32 0.0, %v2319
      %v2321 = vpop.f32.mrb[0].mxu0
      %v2322 = vpop.f32.mrb[0].mxu0
      %v2323 = vadd.f32 0.0, %v2322
      %v2324 = vpop.f32.mrb[0].mxu0
      %2325 = vmatprep.mubr.bf16.mxu0 0
      %2326 = vmatmul.mubr.bf16.gmra.mrb[0].mxu0 %v2181
      %v2327 = vpop.f32.mrb[0].mxu0
      %v2328 = vadd.f32 0.0, %v2327
      %v2329 = vpop.f32.mrb[0].mxu0
      %v2330 = vpop.f32.mrb[0].mxu0
      %v2331 = vadd.f32 0.0, %v2330
      %v2332 = vpop.f32.mrb[0].mxu0
      %2333 = vmatprep.mubr.bf16.mxu0 0
      %2334 = vmatmul.mubr.bf16.gmra.mrb[0].mxu0 %v2184
      %v2335 = vpop.f32.mrb[0].mxu0
      %v2336 = vadd.f32 0.0, %v2335
      %v2337 = vpop.f32.mrb[0].mxu0
      %v2338 = vpop.f32.mrb[0].mxu0
      %v2339 = vadd.f32 0.0, %v2338
      %v2340 = vpop.f32.mrb[0].mxu0
      %2341 = vmatprep.mubr.bf16.mxu0 0
      %2342 = vmatmul.mubr.bf16.gmra.mrb[0].mxu0 %v2187
      %v2343 = vpop.f32.mrb[0].mxu0
      %v2344 = vadd.f32 0.0, %v2343
      %v2345 = vpop.f32.mrb[0].mxu0
      %v2346 = vpop.f32.mrb[0].mxu0
      %v2347 = vadd.f32 0.0, %v2346
      %v2348 = vpop.f32.mrb[0].mxu0
      %2349 = vdwg.mxu0
      %v2350 = vadd.f32 %v1911, %v2224
      %v2351 = vadd.f32 %v1912, %v2227
      %v2352 = vadd.f32 %v1913, %v2232
      %v2353 = vadd.f32 %v1914, %v2235
      %v2354 = vadd.f32 %v1915, %v2240
      %v2355 = vadd.f32 %v1916, %v2243
      %v2356 = vadd.f32 %v1917, %v2248
      %v2357 = vadd.f32 %v1918, %v2251
      %v2358 = vadd.f32 %v1919, %v2256
      %v2359 = vadd.f32 %v1920, %v2259
      %v2360 = vadd.f32 %v1921, %v2264
      %v2361 = vadd.f32 %v1922, %v2267
      %v2362 = vadd.f32 %v1923, %v2272
      %v2363 = vadd.f32 %v1924, %v2275
      %v2364 = vadd.f32 %v1925, %v2280
      %v2365 = vadd.f32 %v1926, %v2283
      %v2366 = vadd.f32 %v1927, %v2288
      %v2367 = vadd.f32 %v1928, %v2291
      %v2368 = vadd.f32 %v1929, %v2296
      %v2369 = vadd.f32 %v1930, %v2299
      %v2370 = vadd.f32 %v1931, %v2304
      %v2371 = vadd.f32 %v1932, %v2307
      %v2372 = vadd.f32 %v1933, %v2312
      %v2373 = vadd.f32 %v1934, %v2315
      %v2374 = vadd.f32 %v1935, %v2320
      %v2375 = vadd.f32 %v1936, %v2323
      %v2376 = vadd.f32 %v1937, %v2328
      %v2377 = vadd.f32 %v1938, %v2331
      %v2378 = vadd.f32 %v1939, %v2336
      %v2379 = vadd.f32 %v1940, %v2339
      %v2380 = vadd.f32 %v1941, %v2344
      %v2381 = vadd.f32 %v1942, %v2347
      %2382 = vst.msk [vmem:[#allocation3] sm:$0xff] %vm237, %v2350
      %2383 = vst.msk [vmem:[#allocation3 + $0x8] sm:$0xff] %vm237, %v2351
      %2384 = vst.msk [vmem:[#allocation3 + $0x10] sm:$0xff] %vm237, %v2352
      %2385 = vst.msk [vmem:[#allocation3 + $0x18] sm:$0xff] %vm237, %v2353
      %2386 = vst.msk [vmem:[#allocation3 + $0x20] sm:$0xff] %vm237, %v2354
      %2387 = vst.msk [vmem:[#allocation3 + $0x28] sm:$0xff] %vm237, %v2355
      %2388 = vst.msk [vmem:[#allocation3 + $0x30] sm:$0xff] %vm237, %v2356
      %2389 = vst.msk [vmem:[#allocation3 + $0x38] sm:$0xff] %vm237, %v2357
      %2390 = vst.msk [vmem:[#allocation3 + $0x40] sm:$0xff] %vm237, %v2358
      %2391 = vst.msk [vmem:[#allocation3 + $0x48] sm:$0xff] %vm237, %v2359
      %2392 = vst.msk [vmem:[#allocation3 + $0x50] sm:$0xff] %vm237, %v2360
      %2393 = vst.msk [vmem:[#allocation3 + $0x58] sm:$0xff] %vm237, %v2361
      %2394 = vst.msk [vmem:[#allocation3 + $0x60] sm:$0xff] %vm237, %v2362
      %2395 = vst.msk [vmem:[#allocation3 + $0x68] sm:$0xff] %vm237, %v2363
      %2396 = vst.msk [vmem:[#allocation3 + $0x70] sm:$0xff] %vm237, %v2364
      %2397 = vst.msk [vmem:[#allocation3 + $0x78] sm:$0xff] %vm237, %v2365
      %2398 = vst.msk [vmem:[#allocation3 + $0x80] sm:$0xff] %vm237, %v2366
      %2399 = vst.msk [vmem:[#allocation3 + $0x88] sm:$0xff] %vm237, %v2367
      %2400 = vst.msk [vmem:[#allocation3 + $0x90] sm:$0xff] %vm237, %v2368
      %2401 = vst.msk [vmem:[#allocation3 + $0x98] sm:$0xff] %vm237, %v2369
      %2402 = vst.msk [vmem:[#allocation3 + $0xa0] sm:$0xff] %vm237, %v2370
      %2403 = vst.msk [vmem:[#allocation3 + $0xa8] sm:$0xff] %vm237, %v2371
      %2404 = vst.msk [vmem:[#allocation3 + $0xb0] sm:$0xff] %vm237, %v2372
      %2405 = vst.msk [vmem:[#allocation3 + $0xb8] sm:$0xff] %vm237, %v2373
      %2406 = vst.msk [vmem:[#allocation3 + $0xc0] sm:$0xff] %vm237, %v2374
      %2407 = vst.msk [vmem:[#allocation3 + $0xc8] sm:$0xff] %vm237, %v2375
      %2408 = vst.msk [vmem:[#allocation3 + $0xd0] sm:$0xff] %vm237, %v2376
      %2409 = vst.msk [vmem:[#allocation3 + $0xd8] sm:$0xff] %vm237, %v2377
      %2410 = vst.msk [vmem:[#allocation3 + $0xe0] sm:$0xff] %vm237, %v2378
      %2411 = vst.msk [vmem:[#allocation3 + $0xe8] sm:$0xff] %vm237, %v2379
      %2412 = vst.msk [vmem:[#allocation3 + $0xf0] sm:$0xff] %vm237, %v2380
      %2413 = vst.msk [vmem:[#allocation3 + $0xf8] sm:$0xff] %vm237, %v2381
      %s2414 = scalar_lea.vmem %s224, 32
      %v2415 = vld [vmem:[%s2414] sm:$0xf]
      %v2416 = vld [vmem:[%s2414 + $0x4] sm:$0xf]
      %v2417 = vld [vmem:[%s420 + $0x8] sm:$0xff]
      %v2418 = vld [vmem:[%s420 + $0x20] sm:$0xff]
      %v2419 = vld [vmem:[%s420 + $0x38] sm:$0xff]
      %v2420 = vld [vmem:[%s420 + $0x50] sm:$0xff]
      %v2421 = vld [vmem:[%s420 + $0x68] sm:$0xff]
      %v2422 = vld [vmem:[%s420 + $0x80] sm:$0xff]
      %v2423 = vld [vmem:[%s420 + $0x98] sm:$0xff]
      %v2424 = vld [vmem:[%s420 + $0xb0] sm:$0xff]
      %v2425 = vld [vmem:[%s420 + $0xc8] sm:$0xff]
      %v2426 = vld [vmem:[%s420 + $0xe0] sm:$0xff]
      %v2427 = vld [vmem:[%s420 + $0xf8] sm:$0xff]
      %v2428 = vld [vmem:[%s420 + $0x110] sm:$0xff]
      %v2429 = vld [vmem:[%s420 + $0x128] sm:$0xff]
      %v2430 = vld [vmem:[%s420 + $0x140] sm:$0xff]
      %v2431 = vld [vmem:[%s420 + $0x158] sm:$0xff]
      %v2432 = vld [vmem:[%s420 + $0x170] sm:$0xff]
      %v2433 = vld [vmem:[#allocation3] sm:$0xff]
      %v2434 = vld [vmem:[#allocation3 + $0x8] sm:$0xff]
      %v2435 = vld [vmem:[#allocation3 + $0x10] sm:$0xff]
      %v2436 = vld [vmem:[#allocation3 + $0x18] sm:$0xff]
      %v2437 = vld [vmem:[#allocation3 + $0x20] sm:$0xff]
      %v2438 = vld [vmem:[#allocation3 + $0x28] sm:$0xff]
      %v2439 = vld [vmem:[#allocation3 + $0x30] sm:$0xff]
      %v2440 = vld [vmem:[#allocation3 + $0x38] sm:$0xff]
      %v2441 = vld [vmem:[#allocation3 + $0x40] sm:$0xff]
      %v2442 = vld [vmem:[#allocation3 + $0x48] sm:$0xff]
      %v2443 = vld [vmem:[#allocation3 + $0x50] sm:$0xff]
      %v2444 = vld [vmem:[#allocation3 + $0x58] sm:$0xff]
      %v2445 = vld [vmem:[#allocation3 + $0x60] sm:$0xff]
      %v2446 = vld [vmem:[#allocation3 + $0x68] sm:$0xff]
      %v2447 = vld [vmem:[#allocation3 + $0x70] sm:$0xff]
      %v2448 = vld [vmem:[#allocation3 + $0x78] sm:$0xff]
      %v2449 = vld [vmem:[#allocation3 + $0x80] sm:$0xff]
      %v2450 = vld [vmem:[#allocation3 + $0x88] sm:$0xff]
      %v2451 = vld [vmem:[#allocation3 + $0x90] sm:$0xff]
      %v2452 = vld [vmem:[#allocation3 + $0x98] sm:$0xff]
      %v2453 = vld [vmem:[#allocation3 + $0xa0] sm:$0xff]
      %v2454 = vld [vmem:[#allocation3 + $0xa8] sm:$0xff]
      %v2455 = vld [vmem:[#allocation3 + $0xb0] sm:$0xff]
      %v2456 = vld [vmem:[#allocation3 + $0xb8] sm:$0xff]
      %v2457 = vld [vmem:[#allocation3 + $0xc0] sm:$0xff]
      %v2458 = vld [vmem:[#allocation3 + $0xc8] sm:$0xff]
      %v2459 = vld [vmem:[#allocation3 + $0xd0] sm:$0xff]
      %v2460 = vld [vmem:[#allocation3 + $0xd8] sm:$0xff]
      %v2461 = vld [vmem:[#allocation3 + $0xe0] sm:$0xff]
      %v2462 = vld [vmem:[#allocation3 + $0xe8] sm:$0xff]
      %v2463 = vld [vmem:[#allocation3 + $0xf0] sm:$0xff]
      %v2464 = vld [vmem:[#allocation3 + $0xf8] sm:$0xff]
      %v2467 = vunpack.c.l.b16 %v2415
      %v2468 = vunpack.c.l.b16 %v2416
      %v2469 = vpack.c.b16 %v2468, %v2467
      %v2472 = vsel %vm237, %v2417, 0
      %v2475 = vsel %vm237, %v2418, 0
      %v2478 = vsel %vm237, %v2419, 0
      %v2481 = vsel %vm237, %v2420, 0
      %v2484 = vsel %vm237, %v2421, 0
      %v2487 = vsel %vm237, %v2422, 0
      %v2490 = vsel %vm237, %v2423, 0
      %v2493 = vsel %vm237, %v2424, 0
      %v2496 = vsel %vm237, %v2425, 0
      %v2499 = vsel %vm237, %v2426, 0
      %v2502 = vsel %vm237, %v2427, 0
      %v2505 = vsel %vm237, %v2428, 0
      %v2508 = vsel %vm237, %v2429, 0
      %v2511 = vsel %vm237, %v2430, 0
      %v2514 = vsel %vm237, %v2431, 0
      %v2517 = vsel %vm237, %v2432, 0
      %2519 = vmatprep.subr.bf16.mxu0 0
      %2520 = vmatpush1.bf16.msra.mxu0 %v2469
      %2521 = vmatprep.subr.bf16.mxu0 0
      %2522 = vmatpush1.bf16.msra.mxu0 0
      %2523 = vmatprep.subr.bf16.mxu0 0
      %2524 = vmatpush1.bf16.msra.mxu0 0
      %2525 = vmatprep.subr.bf16.mxu0 0
      %2526 = vmatpush1.bf16.msra.mxu0 0
      %2527 = vmatprep.subr.bf16.mxu0 0
      %2528 = vmatpush1.bf16.msra.mxu0 0
      %2529 = vmatprep.subr.bf16.mxu0 0
      %2530 = vmatpush1.bf16.msra.mxu0 0
      %2531 = vmatprep.subr.bf16.mxu0 0
      %2532 = vmatpush1.bf16.msra.mxu0 0
      %2533 = vmatprep.subr.bf16.mxu0 0
      %2534 = vmatpush1.bf16.msra.mxu0 0
      %2535 = vmatprep.subr.bf16.mxu0 0
      %2536 = vmatpush1.bf16.msra.mxu0 0
      %2537 = vmatprep.subr.bf16.mxu0 0
      %2538 = vmatpush1.bf16.msra.mxu0 0
      %2539 = vmatprep.subr.bf16.mxu0 0
      %2540 = vmatpush1.bf16.msra.mxu0 0
      %2541 = vmatprep.subr.bf16.mxu0 0
      %2542 = vmatpush1.bf16.msra.mxu0 0
      %2543 = vmatprep.subr.bf16.mxu0 0
      %2544 = vmatpush1.bf16.msra.mxu0 0
      %2545 = vmatprep.subr.bf16.mxu0 0
      %2546 = vmatpush1.bf16.msra.mxu0 0
      %2547 = vmatprep.subr.bf16.mxu0 0
      %2548 = vmatpush1.bf16.msra.mxu0 0
      %2549 = vmatprep.subr.bf16.mxu0 0
      %2550 = vmatpush1.bf16.msra.mxu0 0
      %2551 = vmatprep.mubr.bf16.mxu0 0
      %2552 = vmatmul.mubr.bf16.gmra.mrb[0].mxu0 %v2472
      %v2553 = vpop.f32.mrb[0].mxu0
      %v2554 = vadd.f32 0.0, %v2553
      %v2555 = vpop.f32.mrb[0].mxu0
      %v2556 = vpop.f32.mrb[0].mxu0
      %v2557 = vadd.f32 0.0, %v2556
      %v2558 = vpop.f32.mrb[0].mxu0
      %2559 = vmatprep.mubr.bf16.mxu0 0
      %2560 = vmatmul.mubr.bf16.gmra.mrb[0].mxu0 %v2475
      %v2561 = vpop.f32.mrb[0].mxu0
      %v2562 = vadd.f32 0.0, %v2561
      %v2563 = vpop.f32.mrb[0].mxu0
      %v2564 = vpop.f32.mrb[0].mxu0
      %v2565 = vadd.f32 0.0, %v2564
      %v2566 = vpop.f32.mrb[0].mxu0
      %2567 = vmatprep.mubr.bf16.mxu0 0
      %2568 = vmatmul.mubr.bf16.gmra.mrb[0].mxu0 %v2478
      %v2569 = vpop.f32.mrb[0].mxu0
      %v2570 = vadd.f32 0.0, %v2569
      %v2571 = vpop.f32.mrb[0].mxu0
      %v2572 = vpop.f32.mrb[0].mxu0
      %v2573 = vadd.f32 0.0, %v2572
      %v2574 = vpop.f32.mrb[0].mxu0
      %2575 = vmatprep.mubr.bf16.mxu0 0
      %2576 = vmatmul.mubr.bf16.gmra.mrb[0].mxu0 %v2481
      %v2577 = vpop.f32.mrb[0].mxu0
      %v2578 = vadd.f32 0.0, %v2577
      %v2579 = vpop.f32.mrb[0].mxu0
      %v2580 = vpop.f32.mrb[0].mxu0
      %v2581 = vadd.f32 0.0, %v2580
      %v2582 = vpop.f32.mrb[0].mxu0
      %2583 = vmatprep.mubr.bf16.mxu0 0
      %2584 = vmatmul.mubr.bf16.gmra.mrb[0].mxu0 %v2484
      %v2585 = vpop.f32.mrb[0].mxu0
      %v2586 = vadd.f32 0.0, %v2585
      %v2587 = vpop.f32.mrb[0].mxu0
      %v2588 = vpop.f32.mrb[0].mxu0
      %v2589 = vadd.f32 0.0, %v2588
      %v2590 = vpop.f32.mrb[0].mxu0
      %2591 = vmatprep.mubr.bf16.mxu0 0
      %2592 = vmatmul.mubr.bf16.gmra.mrb[0].mxu0 %v2487
      %v2593 = vpop.f32.mrb[0].mxu0
      %v2594 = vadd.f32 0.0, %v2593
      %v2595 = vpop.f32.mrb[0].mxu0
      %v2596 = vpop.f32.mrb[0].mxu0
      %v2597 = vadd.f32 0.0, %v2596
      %v2598 = vpop.f32.mrb[0].mxu0
      %2599 = vmatprep.mubr.bf16.mxu0 0
      %2600 = vmatmul.mubr.bf16.gmra.mrb[0].mxu0 %v2490
      %v2601 = vpop.f32.mrb[0].mxu0
      %v2602 = vadd.f32 0.0, %v2601
      %v2603 = vpop.f32.mrb[0].mxu0
      %v2604 = vpop.f32.mrb[0].mxu0
      %v2605 = vadd.f32 0.0, %v2604
      %v2606 = vpop.f32.mrb[0].mxu0
      %2607 = vmatprep.mubr.bf16.mxu0 0
      %2608 = vmatmul.mubr.bf16.gmra.mrb[0].mxu0 %v2493
      %v2609 = vpop.f32.mrb[0].mxu0
      %v2610 = vadd.f32 0.0, %v2609
      %v2611 = vpop.f32.mrb[0].mxu0
      %v2612 = vpop.f32.mrb[0].mxu0
      %v2613 = vadd.f32 0.0, %v2612
      %v2614 = vpop.f32.mrb[0].mxu0
      %2615 = vmatprep.mubr.bf16.mxu0 0
      %2616 = vmatmul.mubr.bf16.gmra.mrb[0].mxu0 %v2496
      %v2617 = vpop.f32.mrb[0].mxu0
      %v2618 = vadd.f32 0.0, %v2617
      %v2619 = vpop.f32.mrb[0].mxu0
      %v2620 = vpop.f32.mrb[0].mxu0
      %v2621 = vadd.f32 0.0, %v2620
      %v2622 = vpop.f32.mrb[0].mxu0
      %2623 = vmatprep.mubr.bf16.mxu0 0
      %2624 = vmatmul.mubr.bf16.gmra.mrb[0].mxu0 %v2499
      %v2625 = vpop.f32.mrb[0].mxu0
      %v2626 = vadd.f32 0.0, %v2625
      %v2627 = vpop.f32.mrb[0].mxu0
      %v2628 = vpop.f32.mrb[0].mxu0
      %v2629 = vadd.f32 0.0, %v2628
      %v2630 = vpop.f32.mrb[0].mxu0
      %2631 = vmatprep.mubr.bf16.mxu0 0
      %2632 = vmatmul.mubr.bf16.gmra.mrb[0].mxu0 %v2502
      %v2633 = vpop.f32.mrb[0].mxu0
      %v2634 = vadd.f32 0.0, %v2633
      %v2635 = vpop.f32.mrb[0].mxu0
      %v2636 = vpop.f32.mrb[0].mxu0
      %v2637 = vadd.f32 0.0, %v2636
      %v2638 = vpop.f32.mrb[0].mxu0
      %2639 = vmatprep.mubr.bf16.mxu0 0
      %2640 = vmatmul.mubr.bf16.gmra.mrb[0].mxu0 %v2505
      %v2641 = vpop.f32.mrb[0].mxu0
      %v2642 = vadd.f32 0.0, %v2641
      %v2643 = vpop.f32.mrb[0].mxu0
      %v2644 = vpop.f32.mrb[0].mxu0
      %v2645 = vadd.f32 0.0, %v2644
      %v2646 = vpop.f32.mrb[0].mxu0
      %2647 = vmatprep.mubr.bf16.mxu0 0
      %2648 = vmatmul.mubr.bf16.gmra.mrb[0].mxu0 %v2508
      %v2649 = vpop.f32.mrb[0].mxu0
      %v2650 = vadd.f32 0.0, %v2649
      %v2651 = vpop.f32.mrb[0].mxu0
      %v2652 = vpop.f32.mrb[0].mxu0
      %v2653 = vadd.f32 0.0, %v2652
      %v2654 = vpop.f32.mrb[0].mxu0
      %2655 = vmatprep.mubr.bf16.mxu0 0
      %2656 = vmatmul.mubr.bf16.gmra.mrb[0].mxu0 %v2511
      %v2657 = vpop.f32.mrb[0].mxu0
      %v2658 = vadd.f32 0.0, %v2657
      %v2659 = vpop.f32.mrb[0].mxu0
      %v2660 = vpop.f32.mrb[0].mxu0
      %v2661 = vadd.f32 0.0, %v2660
      %v2662 = vpop.f32.mrb[0].mxu0
      %2663 = vmatprep.mubr.bf16.mxu0 0
      %2664 = vmatmul.mubr.bf16.gmra.mrb[0].mxu0 %v2514
      %v2665 = vpop.f32.mrb[0].mxu0
      %v2666 = vadd.f32 0.0, %v2665
      %v2667 = vpop.f32.mrb[0].mxu0
      %v2668 = vpop.f32.mrb[0].mxu0
      %v2669 = vadd.f32 0.0, %v2668
      %v2670 = vpop.f32.mrb[0].mxu0
      %2671 = vmatprep.mubr.bf16.mxu0 0
      %2672 = vmatmul.mubr.bf16.gmra.mrb[0].mxu0 %v2517
      %v2673 = vpop.f32.mrb[0].mxu0
      %v2674 = vadd.f32 0.0, %v2673
      %v2675 = vpop.f32.mrb[0].mxu0
      %v2676 = vpop.f32.mrb[0].mxu0
      %v2677 = vadd.f32 0.0, %v2676
      %v2678 = vpop.f32.mrb[0].mxu0
      %2679 = vdwg.mxu0
      %v2680 = vadd.f32 %v2433, %v2554
      %v2681 = vadd.f32 %v2434, %v2557
      %v2682 = vadd.f32 %v2435, %v2562
      %v2683 = vadd.f32 %v2436, %v2565
      %v2684 = vadd.f32 %v2437, %v2570
      %v2685 = vadd.f32 %v2438, %v2573
      %v2686 = vadd.f32 %v2439, %v2578
      %v2687 = vadd.f32 %v2440, %v2581
      %v2688 = vadd.f32 %v2441, %v2586
      %v2689 = vadd.f32 %v2442, %v2589
      %v2690 = vadd.f32 %v2443, %v2594
      %v2691 = vadd.f32 %v2444, %v2597
      %v2692 = vadd.f32 %v2445, %v2602
      %v2693 = vadd.f32 %v2446, %v2605
      %v2694 = vadd.f32 %v2447, %v2610
      %v2695 = vadd.f32 %v2448, %v2613
      %v2696 = vadd.f32 %v2449, %v2618
      %v2697 = vadd.f32 %v2450, %v2621
      %v2698 = vadd.f32 %v2451, %v2626
      %v2699 = vadd.f32 %v2452, %v2629
      %v2700 = vadd.f32 %v2453, %v2634
      %v2701 = vadd.f32 %v2454, %v2637
      %v2702 = vadd.f32 %v2455, %v2642
      %v2703 = vadd.f32 %v2456, %v2645
      %v2704 = vadd.f32 %v2457, %v2650
      %v2705 = vadd.f32 %v2458, %v2653
      %v2706 = vadd.f32 %v2459, %v2658
      %v2707 = vadd.f32 %v2460, %v2661
      %v2708 = vadd.f32 %v2461, %v2666
      %v2709 = vadd.f32 %v2462, %v2669
      %v2710 = vadd.f32 %v2463, %v2674
      %v2711 = vadd.f32 %v2464, %v2677
      %2712 = vst.msk [vmem:[#allocation3] sm:$0xff] %vm237, %v2680
      %2713 = vst.msk [vmem:[#allocation3 + $0x8] sm:$0xff] %vm237, %v2681
      %2714 = vst.msk [vmem:[#allocation3 + $0x10] sm:$0xff] %vm237, %v2682
      %2715 = vst.msk [vmem:[#allocation3 + $0x18] sm:$0xff] %vm237, %v2683
      %2716 = vst.msk [vmem:[#allocation3 + $0x20] sm:$0xff] %vm237, %v2684
      %2717 = vst.msk [vmem:[#allocation3 + $0x28] sm:$0xff] %vm237, %v2685
      %2718 = vst.msk [vmem:[#allocation3 + $0x30] sm:$0xff] %vm237, %v2686
      %2719 = vst.msk [vmem:[#allocation3 + $0x38] sm:$0xff] %vm237, %v2687
      %2720 = vst.msk [vmem:[#allocation3 + $0x40] sm:$0xff] %vm237, %v2688
      %2721 = vst.msk [vmem:[#allocation3 + $0x48] sm:$0xff] %vm237, %v2689
      %2722 = vst.msk [vmem:[#allocation3 + $0x50] sm:$0xff] %vm237, %v2690
      %2723 = vst.msk [vmem:[#allocation3 + $0x58] sm:$0xff] %vm237, %v2691
      %2724 = vst.msk [vmem:[#allocation3 + $0x60] sm:$0xff] %vm237, %v2692
      %2725 = vst.msk [vmem:[#allocation3 + $0x68] sm:$0xff] %vm237, %v2693
      %2726 = vst.msk [vmem:[#allocation3 + $0x70] sm:$0xff] %vm237, %v2694
      %2727 = vst.msk [vmem:[#allocation3 + $0x78] sm:$0xff] %vm237, %v2695
      %2728 = vst.msk [vmem:[#allocation3 + $0x80] sm:$0xff] %vm237, %v2696
      %2729 = vst.msk [vmem:[#allocation3 + $0x88] sm:$0xff] %vm237, %v2697
      %2730 = vst.msk [vmem:[#allocation3 + $0x90] sm:$0xff] %vm237, %v2698
      %2731 = vst.msk [vmem:[#allocation3 + $0x98] sm:$0xff] %vm237, %v2699
      %2732 = vst.msk [vmem:[#allocation3 + $0xa0] sm:$0xff] %vm237, %v2700
      %2733 = vst.msk [vmem:[#allocation3 + $0xa8] sm:$0xff] %vm237, %v2701
      %2734 = vst.msk [vmem:[#allocation3 + $0xb0] sm:$0xff] %vm237, %v2702
      %2735 = vst.msk [vmem:[#allocation3 + $0xb8] sm:$0xff] %vm237, %v2703
      %2736 = vst.msk [vmem:[#allocation3 + $0xc0] sm:$0xff] %vm237, %v2704
      %2737 = vst.msk [vmem:[#allocation3 + $0xc8] sm:$0xff] %vm237, %v2705
      %2738 = vst.msk [vmem:[#allocation3 + $0xd0] sm:$0xff] %vm237, %v2706
      %2739 = vst.msk [vmem:[#allocation3 + $0xd8] sm:$0xff] %vm237, %v2707
      %2740 = vst.msk [vmem:[#allocation3 + $0xe0] sm:$0xff] %vm237, %v2708
      %2741 = vst.msk [vmem:[#allocation3 + $0xe8] sm:$0xff] %vm237, %v2709
      %2742 = vst.msk [vmem:[#allocation3 + $0xf0] sm:$0xff] %vm237, %v2710
      %2743 = vst.msk [vmem:[#allocation3 + $0xf8] sm:$0xff] %vm237, %v2711
      %s2744 = scalar_lea.vmem %s224, 40
      %v2745 = vld [vmem:[%s2744] sm:$0xf]
      %v2746 = vld [vmem:[%s2744 + $0x4] sm:$0xf]
      %v2747 = vld [vmem:[%s420 + $0x8] sm:$0xff]
      %v2748 = vld [vmem:[%s420 + $0x10] sm:$0x1]
      %v2749 = vld [vmem:[%s420 + $0x20] sm:$0xff]
      %v2750 = vld [vmem:[%s420 + $0x28] sm:$0x1]
      %v2751 = vld [vmem:[%s420 + $0x38] sm:$0xff]
      %v2752 = vld [vmem:[%s420 + $0x40] sm:$0x1]
      %v2753 = vld [vmem:[%s420 + $0x50] sm:$0xff]
      %v2754 = vld [vmem:[%s420 + $0x58] sm:$0x1]
      %v2755 = vld [vmem:[%s420 + $0x68] sm:$0xff]
      %v2756 = vld [vmem:[%s420 + $0x70] sm:$0x1]
      %v2757 = vld [vmem:[%s420 + $0x80] sm:$0xff]
      %v2758 = vld [vmem:[%s420 + $0x88] sm:$0x1]
      %v2759 = vld [vmem:[%s420 + $0x98] sm:$0xff]
      %v2760 = vld [vmem:[%s420 + $0xa0] sm:$0x1]
      %v2761 = vld [vmem:[%s420 + $0xb0] sm:$0xff]
      %v2762 = vld [vmem:[%s420 + $0xb8] sm:$0x1]
      %v2763 = vld [vmem:[%s420 + $0xc8] sm:$0xff]
      %v2764 = vld [vmem:[%s420 + $0xd0] sm:$0x1]
      %v2765 = vld [vmem:[%s420 + $0xe0] sm:$0xff]
      %v2766 = vld [vmem:[%s420 + $0xe8] sm:$0x1]
      %v2767 = vld [vmem:[%s420 + $0xf8] sm:$0xff]
      %v2768 = vld [vmem:[%s420 + $0x100] sm:$0x1]
      %v2769 = vld [vmem:[%s420 + $0x110] sm:$0xff]
      %v2770 = vld [vmem:[%s420 + $0x118] sm:$0x1]
      %v2771 = vld [vmem:[%s420 + $0x128] sm:$0xff]
      %v2772 = vld [vmem:[%s420 + $0x130] sm:$0x1]
      %v2773 = vld [vmem:[%s420 + $0x140] sm:$0xff]
      %v2774 = vld [vmem:[%s420 + $0x148] sm:$0x1]
      %v2775 = vld [vmem:[%s420 + $0x158] sm:$0xff]
      %v2776 = vld [vmem:[%s420 + $0x160] sm:$0x1]
      %v2777 = vld [vmem:[%s420 + $0x170] sm:$0xff]
      %v2778 = vld [vmem:[%s420 + $0x178] sm:$0x1]
      %v2779 = vld [vmem:[#allocation3] sm:$0xff]
      %v2780 = vld [vmem:[#allocation3 + $0x8] sm:$0xff]
      %v2781 = vld [vmem:[#allocation3 + $0x10] sm:$0xff]
      %v2782 = vld [vmem:[#allocation3 + $0x18] sm:$0xff]
      %v2783 = vld [vmem:[#allocation3 + $0x20] sm:$0xff]
      %v2784 = vld [vmem:[#allocation3 + $0x28] sm:$0xff]
      %v2785 = vld [vmem:[#allocation3 + $0x30] sm:$0xff]
      %v2786 = vld [vmem:[#allocation3 + $0x38] sm:$0xff]
      %v2787 = vld [vmem:[#allocation3 + $0x40] sm:$0xff]
      %v2788 = vld [vmem:[#allocation3 + $0x48] sm:$0xff]
      %v2789 = vld [vmem:[#allocation3 + $0x50] sm:$0xff]
      %v2790 = vld [vmem:[#allocation3 + $0x58] sm:$0xff]
      %v2791 = vld [vmem:[#allocation3 + $0x60] sm:$0xff]
      %v2792 = vld [vmem:[#allocation3 + $0x68] sm:$0xff]
      %v2793 = vld [vmem:[#allocation3 + $0x70] sm:$0xff]
      %v2794 = vld [vmem:[#allocation3 + $0x78] sm:$0xff]
      %v2795 = vld [vmem:[#allocation3 + $0x80] sm:$0xff]
      %v2796 = vld [vmem:[#allocation3 + $0x88] sm:$0xff]
      %v2797 = vld [vmem:[#allocation3 + $0x90] sm:$0xff]
      %v2798 = vld [vmem:[#allocation3 + $0x98] sm:$0xff]
      %v2799 = vld [vmem:[#allocation3 + $0xa0] sm:$0xff]
      %v2800 = vld [vmem:[#allocation3 + $0xa8] sm:$0xff]
      %v2801 = vld [vmem:[#allocation3 + $0xb0] sm:$0xff]
      %v2802 = vld [vmem:[#allocation3 + $0xb8] sm:$0xff]
      %v2803 = vld [vmem:[#allocation3 + $0xc0] sm:$0xff]
      %v2804 = vld [vmem:[#allocation3 + $0xc8] sm:$0xff]
      %v2805 = vld [vmem:[#allocation3 + $0xd0] sm:$0xff]
      %v2806 = vld [vmem:[#allocation3 + $0xd8] sm:$0xff]
      %v2807 = vld [vmem:[#allocation3 + $0xe0] sm:$0xff]
      %v2808 = vld [vmem:[#allocation3 + $0xe8] sm:$0xff]
      %v2809 = vld [vmem:[#allocation3 + $0xf0] sm:$0xff]
      %v2810 = vld [vmem:[#allocation3 + $0xf8] sm:$0xff]
      %v2812 = vshrl.u32 %v2747, 16
      %v2814 = vshll.u32 %v2747, 16
      %v2816 = vrot.slane %v2814, 1
      %v2817 = vor.u32 %v2812, %v2816
      %v2819 = vshll.u32 %v2748, 16
      %v2821 = vrot.slane %v2819, 1
      %v2822 = vsel %vm1404, %v2817, %v2821
      %v2824 = vshrl.u32 %v2749, 16
      %v2826 = vshll.u32 %v2749, 16
      %v2828 = vrot.slane %v2826, 1
      %v2829 = vor.u32 %v2824, %v2828
      %v2831 = vshll.u32 %v2750, 16
      %v2833 = vrot.slane %v2831, 1
      %v2834 = vsel %vm1404, %v2829, %v2833
      %v2836 = vshrl.u32 %v2751, 16
      %v2838 = vshll.u32 %v2751, 16
      %v2840 = vrot.slane %v2838, 1
      %v2841 = vor.u32 %v2836, %v2840
      %v2843 = vshll.u32 %v2752, 16
      %v2845 = vrot.slane %v2843, 1
      %v2846 = vsel %vm1404, %v2841, %v2845
      %v2848 = vshrl.u32 %v2753, 16
      %v2850 = vshll.u32 %v2753, 16
      %v2852 = vrot.slane %v2850, 1
      %v2853 = vor.u32 %v2848, %v2852
      %v2855 = vshll.u32 %v2754, 16
      %v2857 = vrot.slane %v2855, 1
      %v2858 = vsel %vm1404, %v2853, %v2857
      %v2860 = vshrl.u32 %v2755, 16
      %v2862 = vshll.u32 %v2755, 16
      %v2864 = vrot.slane %v2862, 1
      %v2865 = vor.u32 %v2860, %v2864
      %v2867 = vshll.u32 %v2756, 16
      %v2869 = vrot.slane %v2867, 1
      %v2870 = vsel %vm1404, %v2865, %v2869
      %v2872 = vshrl.u32 %v2757, 16
      %v2874 = vshll.u32 %v2757, 16
      %v2876 = vrot.slane %v2874, 1
      %v2877 = vor.u32 %v2872, %v2876
      %v2879 = vshll.u32 %v2758, 16
      %v2881 = vrot.slane %v2879, 1
      %v2882 = vsel %vm1404, %v2877, %v2881
      %v2884 = vshrl.u32 %v2759, 16
      %v2886 = vshll.u32 %v2759, 16
      %v2888 = vrot.slane %v2886, 1
      %v2889 = vor.u32 %v2884, %v2888
      %v2891 = vshll.u32 %v2760, 16
      %v2893 = vrot.slane %v2891, 1
      %v2894 = vsel %vm1404, %v2889, %v2893
      %v2896 = vshrl.u32 %v2761, 16
      %v2898 = vshll.u32 %v2761, 16
      %v2900 = vrot.slane %v2898, 1
      %v2901 = vor.u32 %v2896, %v2900
      %v2903 = vshll.u32 %v2762, 16
      %v2905 = vrot.slane %v2903, 1
      %v2906 = vsel %vm1404, %v2901, %v2905
      %v2908 = vshrl.u32 %v2763, 16
      %v2910 = vshll.u32 %v2763, 16
      %v2912 = vrot.slane %v2910, 1
      %v2913 = vor.u32 %v2908, %v2912
      %v2915 = vshll.u32 %v2764, 16
      %v2917 = vrot.slane %v2915, 1
      %v2918 = vsel %vm1404, %v2913, %v2917
      %v2920 = vshrl.u32 %v2765, 16
      %v2922 = vshll.u32 %v2765, 16
      %v2924 = vrot.slane %v2922, 1
      %v2925 = vor.u32 %v2920, %v2924
      %v2927 = vshll.u32 %v2766, 16
      %v2929 = vrot.slane %v2927, 1
      %v2930 = vsel %vm1404, %v2925, %v2929
      %v2932 = vshrl.u32 %v2767, 16
      %v2934 = vshll.u32 %v2767, 16
      %v2936 = vrot.slane %v2934, 1
      %v2937 = vor.u32 %v2932, %v2936
      %v2939 = vshll.u32 %v2768, 16
      %v2941 = vrot.slane %v2939, 1
      %v2942 = vsel %vm1404, %v2937, %v2941
      %v2944 = vshrl.u32 %v2769, 16
      %v2946 = vshll.u32 %v2769, 16
      %v2948 = vrot.slane %v2946, 1
      %v2949 = vor.u32 %v2944, %v2948
      %v2951 = vshll.u32 %v2770, 16
      %v2953 = vrot.slane %v2951, 1
      %v2954 = vsel %vm1404, %v2949, %v2953
      %v2956 = vshrl.u32 %v2771, 16
      %v2958 = vshll.u32 %v2771, 16
      %v2960 = vrot.slane %v2958, 1
      %v2961 = vor.u32 %v2956, %v2960
      %v2963 = vshll.u32 %v2772, 16
      %v2965 = vrot.slane %v2963, 1
      %v2966 = vsel %vm1404, %v2961, %v2965
      %v2968 = vshrl.u32 %v2773, 16
      %v2970 = vshll.u32 %v2773, 16
      %v2972 = vrot.slane %v2970, 1
      %v2973 = vor.u32 %v2968, %v2972
      %v2975 = vshll.u32 %v2774, 16
      %v2977 = vrot.slane %v2975, 1
      %v2978 = vsel %vm1404, %v2973, %v2977
      %v2980 = vshrl.u32 %v2775, 16
      %v2982 = vshll.u32 %v2775, 16
      %v2984 = vrot.slane %v2982, 1
      %v2985 = vor.u32 %v2980, %v2984
      %v2987 = vshll.u32 %v2776, 16
      %v2989 = vrot.slane %v2987, 1
      %v2990 = vsel %vm1404, %v2985, %v2989
      %v2992 = vshrl.u32 %v2777, 16
      %v2994 = vshll.u32 %v2777, 16
      %v2996 = vrot.slane %v2994, 1
      %v2997 = vor.u32 %v2992, %v2996
      %v2999 = vshll.u32 %v2778, 16
      %v3001 = vrot.slane %v2999, 1
      %v3002 = vsel %vm1404, %v2997, %v3001
      %v3005 = vunpack.c.l.b16 %v2745
      %v3006 = vunpack.c.l.b16 %v2746
      %v3007 = vpack.c.b16 %v3006, %v3005
      %v3010 = vsel %vm237, %v2822, 0
      %v3013 = vsel %vm237, %v2834, 0
      %v3016 = vsel %vm237, %v2846, 0
      %v3019 = vsel %vm237, %v2858, 0
      %v3022 = vsel %vm237, %v2870, 0
      %v3025 = vsel %vm237, %v2882, 0
      %v3028 = vsel %vm237, %v2894, 0
      %v3031 = vsel %vm237, %v2906, 0
      %v3034 = vsel %vm237, %v2918, 0
      %v3037 = vsel %vm237, %v2930, 0
      %v3040 = vsel %vm237, %v2942, 0
      %v3043 = vsel %vm237, %v2954, 0
      %v3046 = vsel %vm237, %v2966, 0
      %v3049 = vsel %vm237, %v2978, 0
      %v3052 = vsel %vm237, %v2990, 0
      %v3055 = vsel %vm237, %v3002, 0
      %3057 = vmatprep.subr.bf16.mxu0 0
      %3058 = vmatpush1.bf16.msra.mxu0 %v3007
      %3059 = vmatprep.subr.bf16.mxu0 0
      %3060 = vmatpush1.bf16.msra.mxu0 0
      %3061 = vmatprep.subr.bf16.mxu0 0
      %3062 = vmatpush1.bf16.msra.mxu0 0
      %3063 = vmatprep.subr.bf16.mxu0 0
      %3064 = vmatpush1.bf16.msra.mxu0 0
      %3065 = vmatprep.subr.bf16.mxu0 0
      %3066 = vmatpush1.bf16.msra.mxu0 0
      %3067 = vmatprep.subr.bf16.mxu0 0
      %3068 = vmatpush1.bf16.msra.mxu0 0
      %3069 = vmatprep.subr.bf16.mxu0 0
      %3070 = vmatpush1.bf16.msra.mxu0 0
      %3071 = vmatprep.subr.bf16.mxu0 0
      %3072 = vmatpush1.bf16.msra.mxu0 0
      %3073 = vmatprep.subr.bf16.mxu0 0
      %3074 = vmatpush1.bf16.msra.mxu0 0
      %3075 = vmatprep.subr.bf16.mxu0 0
      %3076 = vmatpush1.bf16.msra.mxu0 0
      %3077 = vmatprep.subr.bf16.mxu0 0
      %3078 = vmatpush1.bf16.msra.mxu0 0
      %3079 = vmatprep.subr.bf16.mxu0 0
      %3080 = vmatpush1.bf16.msra.mxu0 0
      %3081 = vmatprep.subr.bf16.mxu0 0
      %3082 = vmatpush1.bf16.msra.mxu0 0
      %3083 = vmatprep.subr.bf16.mxu0 0
      %3084 = vmatpush1.bf16.msra.mxu0 0
      %3085 = vmatprep.subr.bf16.mxu0 0
      %3086 = vmatpush1.bf16.msra.mxu0 0
      %3087 = vmatprep.subr.bf16.mxu0 0
      %3088 = vmatpush1.bf16.msra.mxu0 0
      %3089 = vmatprep.mubr.bf16.mxu0 0
      %3090 = vmatmul.mubr.bf16.gmra.mrb[0].mxu0 %v3010
      %v3091 = vpop.f32.mrb[0].mxu0
      %v3092 = vadd.f32 0.0, %v3091
      %v3093 = vpop.f32.mrb[0].mxu0
      %v3094 = vpop.f32.mrb[0].mxu0
      %v3095 = vadd.f32 0.0, %v3094
      %v3096 = vpop.f32.mrb[0].mxu0
      %3097 = vmatprep.mubr.bf16.mxu0 0
      %3098 = vmatmul.mubr.bf16.gmra.mrb[0].mxu0 %v3013
      %v3099 = vpop.f32.mrb[0].mxu0
      %v3100 = vadd.f32 0.0, %v3099
      %v3101 = vpop.f32.mrb[0].mxu0
      %v3102 = vpop.f32.mrb[0].mxu0
      %v3103 = vadd.f32 0.0, %v3102
      %v3104 = vpop.f32.mrb[0].mxu0
      %3105 = vmatprep.mubr.bf16.mxu0 0
      %3106 = vmatmul.mubr.bf16.gmra.mrb[0].mxu0 %v3016
      %v3107 = vpop.f32.mrb[0].mxu0
      %v3108 = vadd.f32 0.0, %v3107
      %v3109 = vpop.f32.mrb[0].mxu0
      %v3110 = vpop.f32.mrb[0].mxu0
      %v3111 = vadd.f32 0.0, %v3110
      %v3112 = vpop.f32.mrb[0].mxu0
      %3113 = vmatprep.mubr.bf16.mxu0 0
      %3114 = vmatmul.mubr.bf16.gmra.mrb[0].mxu0 %v3019
      %v3115 = vpop.f32.mrb[0].mxu0
      %v3116 = vadd.f32 0.0, %v3115
      %v3117 = vpop.f32.mrb[0].mxu0
      %v3118 = vpop.f32.mrb[0].mxu0
      %v3119 = vadd.f32 0.0, %v3118
      %v3120 = vpop.f32.mrb[0].mxu0
      %3121 = vmatprep.mubr.bf16.mxu0 0
      %3122 = vmatmul.mubr.bf16.gmra.mrb[0].mxu0 %v3022
      %v3123 = vpop.f32.mrb[0].mxu0
      %v3124 = vadd.f32 0.0, %v3123
      %v3125 = vpop.f32.mrb[0].mxu0
      %v3126 = vpop.f32.mrb[0].mxu0
      %v3127 = vadd.f32 0.0, %v3126
      %v3128 = vpop.f32.mrb[0].mxu0
      %3129 = vmatprep.mubr.bf16.mxu0 0
      %3130 = vmatmul.mubr.bf16.gmra.mrb[0].mxu0 %v3025
      %v3131 = vpop.f32.mrb[0].mxu0
      %v3132 = vadd.f32 0.0, %v3131
      %v3133 = vpop.f32.mrb[0].mxu0
      %v3134 = vpop.f32.mrb[0].mxu0
      %v3135 = vadd.f32 0.0, %v3134
      %v3136 = vpop.f32.mrb[0].mxu0
      %3137 = vmatprep.mubr.bf16.mxu0 0
      %3138 = vmatmul.mubr.bf16.gmra.mrb[0].mxu0 %v3028
      %v3139 = vpop.f32.mrb[0].mxu0
      %v3140 = vadd.f32 0.0, %v3139
      %v3141 = vpop.f32.mrb[0].mxu0
      %v3142 = vpop.f32.mrb[0].mxu0
      %v3143 = vadd.f32 0.0, %v3142
      %v3144 = vpop.f32.mrb[0].mxu0
      %3145 = vmatprep.mubr.bf16.mxu0 0
      %3146 = vmatmul.mubr.bf16.gmra.mrb[0].mxu0 %v3031
      %v3147 = vpop.f32.mrb[0].mxu0
      %v3148 = vadd.f32 0.0, %v3147
      %v3149 = vpop.f32.mrb[0].mxu0
      %v3150 = vpop.f32.mrb[0].mxu0
      %v3151 = vadd.f32 0.0, %v3150
      %v3152 = vpop.f32.mrb[0].mxu0
      %3153 = vmatprep.mubr.bf16.mxu0 0
      %3154 = vmatmul.mubr.bf16.gmra.mrb[0].mxu0 %v3034
      %v3155 = vpop.f32.mrb[0].mxu0
      %v3156 = vadd.f32 0.0, %v3155
      %v3157 = vpop.f32.mrb[0].mxu0
      %v3158 = vpop.f32.mrb[0].mxu0
      %v3159 = vadd.f32 0.0, %v3158
      %v3160 = vpop.f32.mrb[0].mxu0
      %3161 = vmatprep.mubr.bf16.mxu0 0
      %3162 = vmatmul.mubr.bf16.gmra.mrb[0].mxu0 %v3037
      %v3163 = vpop.f32.mrb[0].mxu0
      %v3164 = vadd.f32 0.0, %v3163
      %v3165 = vpop.f32.mrb[0].mxu0
      %v3166 = vpop.f32.mrb[0].mxu0
      %v3167 = vadd.f32 0.0, %v3166
      %v3168 = vpop.f32.mrb[0].mxu0
      %3169 = vmatprep.mubr.bf16.mxu0 0
      %3170 = vmatmul.mubr.bf16.gmra.mrb[0].mxu0 %v3040
      %v3171 = vpop.f32.mrb[0].mxu0
      %v3172 = vadd.f32 0.0, %v3171
      %v3173 = vpop.f32.mrb[0].mxu0
      %v3174 = vpop.f32.mrb[0].mxu0
      %v3175 = vadd.f32 0.0, %v3174
      %v3176 = vpop.f32.mrb[0].mxu0
      %3177 = vmatprep.mubr.bf16.mxu0 0
      %3178 = vmatmul.mubr.bf16.gmra.mrb[0].mxu0 %v3043
      %v3179 = vpop.f32.mrb[0].mxu0
      %v3180 = vadd.f32 0.0, %v3179
      %v3181 = vpop.f32.mrb[0].mxu0
      %v3182 = vpop.f32.mrb[0].mxu0
      %v3183 = vadd.f32 0.0, %v3182
      %v3184 = vpop.f32.mrb[0].mxu0
      %3185 = vmatprep.mubr.bf16.mxu0 0
      %3186 = vmatmul.mubr.bf16.gmra.mrb[0].mxu0 %v3046
      %v3187 = vpop.f32.mrb[0].mxu0
      %v3188 = vadd.f32 0.0, %v3187
      %v3189 = vpop.f32.mrb[0].mxu0
      %v3190 = vpop.f32.mrb[0].mxu0
      %v3191 = vadd.f32 0.0, %v3190
      %v3192 = vpop.f32.mrb[0].mxu0
      %3193 = vmatprep.mubr.bf16.mxu0 0
      %3194 = vmatmul.mubr.bf16.gmra.mrb[0].mxu0 %v3049
      %v3195 = vpop.f32.mrb[0].mxu0
      %v3196 = vadd.f32 0.0, %v3195
      %v3197 = vpop.f32.mrb[0].mxu0
      %v3198 = vpop.f32.mrb[0].mxu0
      %v3199 = vadd.f32 0.0, %v3198
      %v3200 = vpop.f32.mrb[0].mxu0
      %3201 = vmatprep.mubr.bf16.mxu0 0
      %3202 = vmatmul.mubr.bf16.gmra.mrb[0].mxu0 %v3052
      %v3203 = vpop.f32.mrb[0].mxu0
      %v3204 = vadd.f32 0.0, %v3203
      %v3205 = vpop.f32.mrb[0].mxu0
      %v3206 = vpop.f32.mrb[0].mxu0
      %v3207 = vadd.f32 0.0, %v3206
      %v3208 = vpop.f32.mrb[0].mxu0
      %3209 = vmatprep.mubr.bf16.mxu0 0
      %3210 = vmatmul.mubr.bf16.gmra.mrb[0].mxu0 %v3055
      %v3211 = vpop.f32.mrb[0].mxu0
      %v3212 = vadd.f32 0.0, %v3211
      %v3213 = vpop.f32.mrb[0].mxu0
      %v3214 = vpop.f32.mrb[0].mxu0
      %v3215 = vadd.f32 0.0, %v3214
      %v3216 = vpop.f32.mrb[0].mxu0
      %3217 = vdwg.mxu0
      %v3218 = vadd.f32 %v2779, %v3092
      %v3219 = vadd.f32 %v2780, %v3095
      %v3220 = vadd.f32 %v2781, %v3100
      %v3221 = vadd.f32 %v2782, %v3103
      %v3222 = vadd.f32 %v2783, %v3108
      %v3223 = vadd.f32 %v2784, %v3111
      %v3224 = vadd.f32 %v2785, %v3116
      %v3225 = vadd.f32 %v2786, %v3119
      %v3226 = vadd.f32 %v2787, %v3124
      %v3227 = vadd.f32 %v2788, %v3127
      %v3228 = vadd.f32 %v2789, %v3132
      %v3229 = vadd.f32 %v2790, %v3135
      %v3230 = vadd.f32 %v2791, %v3140
      %v3231 = vadd.f32 %v2792, %v3143
      %v3232 = vadd.f32 %v2793, %v3148
      %v3233 = vadd.f32 %v2794, %v3151
      %v3234 = vadd.f32 %v2795, %v3156
      %v3235 = vadd.f32 %v2796, %v3159
      %v3236 = vadd.f32 %v2797, %v3164
      %v3237 = vadd.f32 %v2798, %v3167
      %v3238 = vadd.f32 %v2799, %v3172
      %v3239 = vadd.f32 %v2800, %v3175
      %v3240 = vadd.f32 %v2801, %v3180
      %v3241 = vadd.f32 %v2802, %v3183
      %v3242 = vadd.f32 %v2803, %v3188
      %v3243 = vadd.f32 %v2804, %v3191
      %v3244 = vadd.f32 %v2805, %v3196
      %v3245 = vadd.f32 %v2806, %v3199
      %v3246 = vadd.f32 %v2807, %v3204
      %v3247 = vadd.f32 %v2808, %v3207
      %v3248 = vadd.f32 %v2809, %v3212
      %v3249 = vadd.f32 %v2810, %v3215
      %3250 = vst.msk [vmem:[#allocation3] sm:$0xff] %vm237, %v3218
      %3251 = vst.msk [vmem:[#allocation3 + $0x8] sm:$0xff] %vm237, %v3219
      %3252 = vst.msk [vmem:[#allocation3 + $0x10] sm:$0xff] %vm237, %v3220
      %3253 = vst.msk [vmem:[#allocation3 + $0x18] sm:$0xff] %vm237, %v3221
      %3254 = vst.msk [vmem:[#allocation3 + $0x20] sm:$0xff] %vm237, %v3222
      %3255 = vst.msk [vmem:[#allocation3 + $0x28] sm:$0xff] %vm237, %v3223
      %3256 = vst.msk [vmem:[#allocation3 + $0x30] sm:$0xff] %vm237, %v3224
      %3257 = vst.msk [vmem:[#allocation3 + $0x38] sm:$0xff] %vm237, %v3225
      %3258 = vst.msk [vmem:[#allocation3 + $0x40] sm:$0xff] %vm237, %v3226
      %3259 = vst.msk [vmem:[#allocation3 + $0x48] sm:$0xff] %vm237, %v3227
      %3260 = vst.msk [vmem:[#allocation3 + $0x50] sm:$0xff] %vm237, %v3228
      %3261 = vst.msk [vmem:[#allocation3 + $0x58] sm:$0xff] %vm237, %v3229
      %3262 = vst.msk [vmem:[#allocation3 + $0x60] sm:$0xff] %vm237, %v3230
      %3263 = vst.msk [vmem:[#allocation3 + $0x68] sm:$0xff] %vm237, %v3231
      %3264 = vst.msk [vmem:[#allocation3 + $0x70] sm:$0xff] %vm237, %v3232
      %3265 = vst.msk [vmem:[#allocation3 + $0x78] sm:$0xff] %vm237, %v3233
      %3266 = vst.msk [vmem:[#allocation3 + $0x80] sm:$0xff] %vm237, %v3234
      %3267 = vst.msk [vmem:[#allocation3 + $0x88] sm:$0xff] %vm237, %v3235
      %3268 = vst.msk [vmem:[#allocation3 + $0x90] sm:$0xff] %vm237, %v3236
      %3269 = vst.msk [vmem:[#allocation3 + $0x98] sm:$0xff] %vm237, %v3237
      %3270 = vst.msk [vmem:[#allocation3 + $0xa0] sm:$0xff] %vm237, %v3238
      %3271 = vst.msk [vmem:[#allocation3 + $0xa8] sm:$0xff] %vm237, %v3239
      %3272 = vst.msk [vmem:[#allocation3 + $0xb0] sm:$0xff] %vm237, %v3240
      %3273 = vst.msk [vmem:[#allocation3 + $0xb8] sm:$0xff] %vm237, %v3241
      %3274 = vst.msk [vmem:[#allocation3 + $0xc0] sm:$0xff] %vm237, %v3242
      %3275 = vst.msk [vmem:[#allocation3 + $0xc8] sm:$0xff] %vm237, %v3243
      %3276 = vst.msk [vmem:[#allocation3 + $0xd0] sm:$0xff] %vm237, %v3244
      %3277 = vst.msk [vmem:[#allocation3 + $0xd8] sm:$0xff] %vm237, %v3245
      %3278 = vst.msk [vmem:[#allocation3 + $0xe0] sm:$0xff] %vm237, %v3246
      %3279 = vst.msk [vmem:[#allocation3 + $0xe8] sm:$0xff] %vm237, %v3247
      %3280 = vst.msk [vmem:[#allocation3 + $0xf0] sm:$0xff] %vm237, %v3248
      %3281 = vst.msk [vmem:[#allocation3 + $0xf8] sm:$0xff] %vm237, %v3249
      %s3282 = scalar_lea.vmem %s224, 48
      %v3283 = vld [vmem:[%s3282] sm:$0xf]
      %v3284 = vld [vmem:[%s3282 + $0x4] sm:$0xf]
      %s3285 = scalar_lea.vmem [#allocation2], 48
      %v3286 = vld [vmem:[%s3285] sm:$0x80]
      %v3287 = vld [vmem:[%s3285 + $0x8] sm:$0xff]
      %v3288 = vld [vmem:[%s3285 + $0x18] sm:$0x80]
      %v3289 = vld [vmem:[%s3285 + $0x20] sm:$0xff]
      %v3290 = vld [vmem:[%s3285 + $0x30] sm:$0x80]
      %v3291 = vld [vmem:[%s3285 + $0x38] sm:$0xff]
      %v3292 = vld [vmem:[%s3285 + $0x48] sm:$0x80]
      %v3293 = vld [vmem:[%s3285 + $0x50] sm:$0xff]
      %v3294 = vld [vmem:[%s3285 + $0x60] sm:$0x80]
      %v3295 = vld [vmem:[%s3285 + $0x68] sm:$0xff]
      %v3296 = vld [vmem:[%s3285 + $0x78] sm:$0x80]
      %v3297 = vld [vmem:[%s3285 + $0x80] sm:$0xff]
      %v3298 = vld [vmem:[%s3285 + $0x90] sm:$0x80]
      %v3299 = vld [vmem:[%s3285 + $0x98] sm:$0xff]
      %v3300 = vld [vmem:[%s3285 + $0xa8] sm:$0x80]
      %v3301 = vld [vmem:[%s3285 + $0xb0] sm:$0xff]
      %v3302 = vld [vmem:[%s3285 + $0xc0] sm:$0x80]
      %v3303 = vld [vmem:[%s3285 + $0xc8] sm:$0xff]
      %v3304 = vld [vmem:[%s3285 + $0xd8] sm:$0x80]
      %v3305 = vld [vmem:[%s3285 + $0xe0] sm:$0xff]
      %v3306 = vld [vmem:[%s3285 + $0xf0] sm:$0x80]
      %v3307 = vld [vmem:[%s3285 + $0xf8] sm:$0xff]
      %v3308 = vld [vmem:[%s3285 + $0x108] sm:$0x80]
      %v3309 = vld [vmem:[%s3285 + $0x110] sm:$0xff]
      %v3310 = vld [vmem:[%s3285 + $0x120] sm:$0x80]
      %v3311 = vld [vmem:[%s3285 + $0x128] sm:$0xff]
      %v3312 = vld [vmem:[%s3285 + $0x138] sm:$0x80]
      %v3313 = vld [vmem:[%s3285 + $0x140] sm:$0xff]
      %v3314 = vld [vmem:[%s3285 + $0x150] sm:$0x80]
      %v3315 = vld [vmem:[%s3285 + $0x158] sm:$0xff]
      %v3316 = vld [vmem:[%s3285 + $0x168] sm:$0x80]
      %v3317 = vld [vmem:[%s3285 + $0x170] sm:$0xff]
      %v3318 = vld [vmem:[#allocation3] sm:$0xff]
      %v3319 = vld [vmem:[#allocation3 + $0x8] sm:$0xff]
      %v3320 = vld [vmem:[#allocation3 + $0x10] sm:$0xff]
      %v3321 = vld [vmem:[#allocation3 + $0x18] sm:$0xff]
      %v3322 = vld [vmem:[#allocation3 + $0x20] sm:$0xff]
      %v3323 = vld [vmem:[#allocation3 + $0x28] sm:$0xff]
      %v3324 = vld [vmem:[#allocation3 + $0x30] sm:$0xff]
      %v3325 = vld [vmem:[#allocation3 + $0x38] sm:$0xff]
      %v3326 = vld [vmem:[#allocation3 + $0x40] sm:$0xff]
      %v3327 = vld [vmem:[#allocation3 + $0x48] sm:$0xff]
      %v3328 = vld [vmem:[#allocation3 + $0x50] sm:$0xff]
      %v3329 = vld [vmem:[#allocation3 + $0x58] sm:$0xff]
      %v3330 = vld [vmem:[#allocation3 + $0x60] sm:$0xff]
      %v3331 = vld [vmem:[#allocation3 + $0x68] sm:$0xff]
      %v3332 = vld [vmem:[#allocation3 + $0x70] sm:$0xff]
      %v3333 = vld [vmem:[#allocation3 + $0x78] sm:$0xff]
      %v3334 = vld [vmem:[#allocation3 + $0x80] sm:$0xff]
      %v3335 = vld [vmem:[#allocation3 + $0x88] sm:$0xff]
      %v3336 = vld [vmem:[#allocation3 + $0x90] sm:$0xff]
      %v3337 = vld [vmem:[#allocation3 + $0x98] sm:$0xff]
      %v3338 = vld [vmem:[#allocation3 + $0xa0] sm:$0xff]
      %v3339 = vld [vmem:[#allocation3 + $0xa8] sm:$0xff]
      %v3340 = vld [vmem:[#allocation3 + $0xb0] sm:$0xff]
      %v3341 = vld [vmem:[#allocation3 + $0xb8] sm:$0xff]
      %v3342 = vld [vmem:[#allocation3 + $0xc0] sm:$0xff]
      %v3343 = vld [vmem:[#allocation3 + $0xc8] sm:$0xff]
      %v3344 = vld [vmem:[#allocation3 + $0xd0] sm:$0xff]
      %v3345 = vld [vmem:[#allocation3 + $0xd8] sm:$0xff]
      %v3346 = vld [vmem:[#allocation3 + $0xe0] sm:$0xff]
      %v3347 = vld [vmem:[#allocation3 + $0xe8] sm:$0xff]
      %v3348 = vld [vmem:[#allocation3 + $0xf0] sm:$0xff]
      %v3349 = vld [vmem:[#allocation3 + $0xf8] sm:$0xff]
      %v3351 = vshrl.u32 %v3286, 16
      %v3353 = vrot.slane %v3351, 7
      %v3355 = vshrl.u32 %v3287, 16
      %v3357 = vrot.slane %v3355, 7
      %v3358 = vshll.u32 %v3287, 16
      %v3360 = vor.u32 %v3357, %v3358
      %v3361 = vsel %vm535, %v3353, %v3360
      %v3363 = vshrl.u32 %v3288, 16
      %v3365 = vrot.slane %v3363, 7
      %v3367 = vshrl.u32 %v3289, 16
      %v3369 = vrot.slane %v3367, 7
      %v3370 = vshll.u32 %v3289, 16
      %v3372 = vor.u32 %v3369, %v3370
      %v3373 = vsel %vm535, %v3365, %v3372
      %v3375 = vshrl.u32 %v3290, 16
      %v3377 = vrot.slane %v3375, 7
      %v3379 = vshrl.u32 %v3291, 16
      %v3381 = vrot.slane %v3379, 7
      %v3382 = vshll.u32 %v3291, 16
      %v3384 = vor.u32 %v3381, %v3382
      %v3385 = vsel %vm535, %v3377, %v3384
      %v3387 = vshrl.u32 %v3292, 16
      %v3389 = vrot.slane %v3387, 7
      %v3391 = vshrl.u32 %v3293, 16
      %v3393 = vrot.slane %v3391, 7
      %v3394 = vshll.u32 %v3293, 16
      %v3396 = vor.u32 %v3393, %v3394
      %v3397 = vsel %vm535, %v3389, %v3396
      %v3399 = vshrl.u32 %v3294, 16
      %v3401 = vrot.slane %v3399, 7
      %v3403 = vshrl.u32 %v3295, 16
      %v3405 = vrot.slane %v3403, 7
      %v3406 = vshll.u32 %v3295, 16
      %v3408 = vor.u32 %v3405, %v3406
      %v3409 = vsel %vm535, %v3401, %v3408
      %v3411 = vshrl.u32 %v3296, 16
      %v3413 = vrot.slane %v3411, 7
      %v3415 = vshrl.u32 %v3297, 16
      %v3417 = vrot.slane %v3415, 7
      %v3418 = vshll.u32 %v3297, 16
      %v3420 = vor.u32 %v3417, %v3418
      %v3421 = vsel %vm535, %v3413, %v3420
      %v3423 = vshrl.u32 %v3298, 16
      %v3425 = vrot.slane %v3423, 7
      %v3427 = vshrl.u32 %v3299, 16
      %v3429 = vrot.slane %v3427, 7
      %v3430 = vshll.u32 %v3299, 16
      %v3432 = vor.u32 %v3429, %v3430
      %v3433 = vsel %vm535, %v3425, %v3432
      %v3435 = vshrl.u32 %v3300, 16
      %v3437 = vrot.slane %v3435, 7
      %v3439 = vshrl.u32 %v3301, 16
      %v3441 = vrot.slane %v3439, 7
      %v3442 = vshll.u32 %v3301, 16
      %v3444 = vor.u32 %v3441, %v3442
      %v3445 = vsel %vm535, %v3437, %v3444
      %v3447 = vshrl.u32 %v3302, 16
      %v3449 = vrot.slane %v3447, 7
      %v3451 = vshrl.u32 %v3303, 16
      %v3453 = vrot.slane %v3451, 7
      %v3454 = vshll.u32 %v3303, 16
      %v3456 = vor.u32 %v3453, %v3454
      %v3457 = vsel %vm535, %v3449, %v3456
      %v3459 = vshrl.u32 %v3304, 16
      %v3461 = vrot.slane %v3459, 7
      %v3463 = vshrl.u32 %v3305, 16
      %v3465 = vrot.slane %v3463, 7
      %v3466 = vshll.u32 %v3305, 16
      %v3468 = vor.u32 %v3465, %v3466
      %v3469 = vsel %vm535, %v3461, %v3468
      %v3471 = vshrl.u32 %v3306, 16
      %v3473 = vrot.slane %v3471, 7
      %v3475 = vshrl.u32 %v3307, 16
      %v3477 = vrot.slane %v3475, 7
      %v3478 = vshll.u32 %v3307, 16
      %v3480 = vor.u32 %v3477, %v3478
      %v3481 = vsel %vm535, %v3473, %v3480
      %v3483 = vshrl.u32 %v3308, 16
      %v3485 = vrot.slane %v3483, 7
      %v3487 = vshrl.u32 %v3309, 16
      %v3489 = vrot.slane %v3487, 7
      %v3490 = vshll.u32 %v3309, 16
      %v3492 = vor.u32 %v3489, %v3490
      %v3493 = vsel %vm535, %v3485, %v3492
      %v3495 = vshrl.u32 %v3310, 16
      %v3497 = vrot.slane %v3495, 7
      %v3499 = vshrl.u32 %v3311, 16
      %v3501 = vrot.slane %v3499, 7
      %v3502 = vshll.u32 %v3311, 16
      %v3504 = vor.u32 %v3501, %v3502
      %v3505 = vsel %vm535, %v3497, %v3504
      %v3507 = vshrl.u32 %v3312, 16
      %v3509 = vrot.slane %v3507, 7
      %v3511 = vshrl.u32 %v3313, 16
      %v3513 = vrot.slane %v3511, 7
      %v3514 = vshll.u32 %v3313, 16
      %v3516 = vor.u32 %v3513, %v3514
      %v3517 = vsel %vm535, %v3509, %v3516
      %v3519 = vshrl.u32 %v3314, 16
      %v3521 = vrot.slane %v3519, 7
      %v3523 = vshrl.u32 %v3315, 16
      %v3525 = vrot.slane %v3523, 7
      %v3526 = vshll.u32 %v3315, 16
      %v3528 = vor.u32 %v3525, %v3526
      %v3529 = vsel %vm535, %v3521, %v3528
      %v3531 = vshrl.u32 %v3316, 16
      %v3533 = vrot.slane %v3531, 7
      %v3535 = vshrl.u32 %v3317, 16
      %v3537 = vrot.slane %v3535, 7
      %v3538 = vshll.u32 %v3317, 16
      %v3540 = vor.u32 %v3537, %v3538
      %v3541 = vsel %vm535, %v3533, %v3540
      %v3544 = vunpack.c.l.b16 %v3283
      %v3545 = vunpack.c.l.b16 %v3284
      %v3546 = vpack.c.b16 %v3545, %v3544
      %v3549 = vsel %vm237, %v3361, 0
      %v3552 = vsel %vm237, %v3373, 0
      %v3555 = vsel %vm237, %v3385, 0
      %v3558 = vsel %vm237, %v3397, 0
      %v3561 = vsel %vm237, %v3409, 0
      %v3564 = vsel %vm237, %v3421, 0
      %v3567 = vsel %vm237, %v3433, 0
      %v3570 = vsel %vm237, %v3445, 0
      %v3573 = vsel %vm237, %v3457, 0
      %v3576 = vsel %vm237, %v3469, 0
      %v3579 = vsel %vm237, %v3481, 0
      %v3582 = vsel %vm237, %v3493, 0
      %v3585 = vsel %vm237, %v3505, 0
      %v3588 = vsel %vm237, %v3517, 0
      %v3591 = vsel %vm237, %v3529, 0
      %v3594 = vsel %vm237, %v3541, 0
      %3596 = vmatprep.subr.bf16.mxu0 0
      %3597 = vmatpush1.bf16.msra.mxu0 %v3546
      %3598 = vmatprep.subr.bf16.mxu0 0
      %3599 = vmatpush1.bf16.msra.mxu0 0
      %3600 = vmatprep.subr.bf16.mxu0 0
      %3601 = vmatpush1.bf16.msra.mxu0 0
      %3602 = vmatprep.subr.bf16.mxu0 0
      %3603 = vmatpush1.bf16.msra.mxu0 0
      %3604 = vmatprep.subr.bf16.mxu0 0
      %3605 = vmatpush1.bf16.msra.mxu0 0
      %3606 = vmatprep.subr.bf16.mxu0 0
      %3607 = vmatpush1.bf16.msra.mxu0 0
      %3608 = vmatprep.subr.bf16.mxu0 0
      %3609 = vmatpush1.bf16.msra.mxu0 0
      %3610 = vmatprep.subr.bf16.mxu0 0
      %3611 = vmatpush1.bf16.msra.mxu0 0
      %3612 = vmatprep.subr.bf16.mxu0 0
      %3613 = vmatpush1.bf16.msra.mxu0 0
      %3614 = vmatprep.subr.bf16.mxu0 0
      %3615 = vmatpush1.bf16.msra.mxu0 0
      %3616 = vmatprep.subr.bf16.mxu0 0
      %3617 = vmatpush1.bf16.msra.mxu0 0
      %3618 = vmatprep.subr.bf16.mxu0 0
      %3619 = vmatpush1.bf16.msra.mxu0 0
      %3620 = vmatprep.subr.bf16.mxu0 0
      %3621 = vmatpush1.bf16.msra.mxu0 0
      %3622 = vmatprep.subr.bf16.mxu0 0
      %3623 = vmatpush1.bf16.msra.mxu0 0
      %3624 = vmatprep.subr.bf16.mxu0 0
      %3625 = vmatpush1.bf16.msra.mxu0 0
      %3626 = vmatprep.subr.bf16.mxu0 0
      %3627 = vmatpush1.bf16.msra.mxu0 0
      %3628 = vmatprep.mubr.bf16.mxu0 0
      %3629 = vmatmul.mubr.bf16.gmra.mrb[0].mxu0 %v3549
      %v3630 = vpop.f32.mrb[0].mxu0
      %v3631 = vadd.f32 0.0, %v3630
      %v3632 = vpop.f32.mrb[0].mxu0
      %v3633 = vpop.f32.mrb[0].mxu0
      %v3634 = vadd.f32 0.0, %v3633
      %v3635 = vpop.f32.mrb[0].mxu0
      %3636 = vmatprep.mubr.bf16.mxu0 0
      %3637 = vmatmul.mubr.bf16.gmra.mrb[0].mxu0 %v3552
      %v3638 = vpop.f32.mrb[0].mxu0
      %v3639 = vadd.f32 0.0, %v3638
      %v3640 = vpop.f32.mrb[0].mxu0
      %v3641 = vpop.f32.mrb[0].mxu0
      %v3642 = vadd.f32 0.0, %v3641
      %v3643 = vpop.f32.mrb[0].mxu0
      %3644 = vmatprep.mubr.bf16.mxu0 0
      %3645 = vmatmul.mubr.bf16.gmra.mrb[0].mxu0 %v3555
      %v3646 = vpop.f32.mrb[0].mxu0
      %v3647 = vadd.f32 0.0, %v3646
      %v3648 = vpop.f32.mrb[0].mxu0
      %v3649 = vpop.f32.mrb[0].mxu0
      %v3650 = vadd.f32 0.0, %v3649
      %v3651 = vpop.f32.mrb[0].mxu0
      %3652 = vmatprep.mubr.bf16.mxu0 0
      %3653 = vmatmul.mubr.bf16.gmra.mrb[0].mxu0 %v3558
      %v3654 = vpop.f32.mrb[0].mxu0
      %v3655 = vadd.f32 0.0, %v3654
      %v3656 = vpop.f32.mrb[0].mxu0
      %v3657 = vpop.f32.mrb[0].mxu0
      %v3658 = vadd.f32 0.0, %v3657
      %v3659 = vpop.f32.mrb[0].mxu0
      %3660 = vmatprep.mubr.bf16.mxu0 0
      %3661 = vmatmul.mubr.bf16.gmra.mrb[0].mxu0 %v3561
      %v3662 = vpop.f32.mrb[0].mxu0
      %v3663 = vadd.f32 0.0, %v3662
      %v3664 = vpop.f32.mrb[0].mxu0
      %v3665 = vpop.f32.mrb[0].mxu0
      %v3666 = vadd.f32 0.0, %v3665
      %v3667 = vpop.f32.mrb[0].mxu0
      %3668 = vmatprep.mubr.bf16.mxu0 0
      %3669 = vmatmul.mubr.bf16.gmra.mrb[0].mxu0 %v3564
      %v3670 = vpop.f32.mrb[0].mxu0
      %v3671 = vadd.f32 0.0, %v3670
      %v3672 = vpop.f32.mrb[0].mxu0
      %v3673 = vpop.f32.mrb[0].mxu0
      %v3674 = vadd.f32 0.0, %v3673
      %v3675 = vpop.f32.mrb[0].mxu0
      %3676 = vmatprep.mubr.bf16.mxu0 0
      %3677 = vmatmul.mubr.bf16.gmra.mrb[0].mxu0 %v3567
      %v3678 = vpop.f32.mrb[0].mxu0
      %v3679 = vadd.f32 0.0, %v3678
      %v3680 = vpop.f32.mrb[0].mxu0
      %v3681 = vpop.f32.mrb[0].mxu0
      %v3682 = vadd.f32 0.0, %v3681
      %v3683 = vpop.f32.mrb[0].mxu0
      %3684 = vmatprep.mubr.bf16.mxu0 0
      %3685 = vmatmul.mubr.bf16.gmra.mrb[0].mxu0 %v3570
      %v3686 = vpop.f32.mrb[0].mxu0
      %v3687 = vadd.f32 0.0, %v3686
      %v3688 = vpop.f32.mrb[0].mxu0
      %v3689 = vpop.f32.mrb[0].mxu0
      %v3690 = vadd.f32 0.0, %v3689
      %v3691 = vpop.f32.mrb[0].mxu0
      %3692 = vmatprep.mubr.bf16.mxu0 0
      %3693 = vmatmul.mubr.bf16.gmra.mrb[0].mxu0 %v3573
      %v3694 = vpop.f32.mrb[0].mxu0
      %v3695 = vadd.f32 0.0, %v3694
      %v3696 = vpop.f32.mrb[0].mxu0
      %v3697 = vpop.f32.mrb[0].mxu0
      %v3698 = vadd.f32 0.0, %v3697
      %v3699 = vpop.f32.mrb[0].mxu0
      %3700 = vmatprep.mubr.bf16.mxu0 0
      %3701 = vmatmul.mubr.bf16.gmra.mrb[0].mxu0 %v3576
      %v3702 = vpop.f32.mrb[0].mxu0
      %v3703 = vadd.f32 0.0, %v3702
      %v3704 = vpop.f32.mrb[0].mxu0
      %v3705 = vpop.f32.mrb[0].mxu0
      %v3706 = vadd.f32 0.0, %v3705
      %v3707 = vpop.f32.mrb[0].mxu0
      %3708 = vmatprep.mubr.bf16.mxu0 0
      %3709 = vmatmul.mubr.bf16.gmra.mrb[0].mxu0 %v3579
      %v3710 = vpop.f32.mrb[0].mxu0
      %v3711 = vadd.f32 0.0, %v3710
      %v3712 = vpop.f32.mrb[0].mxu0
      %v3713 = vpop.f32.mrb[0].mxu0
      %v3714 = vadd.f32 0.0, %v3713
      %v3715 = vpop.f32.mrb[0].mxu0
      %3716 = vmatprep.mubr.bf16.mxu0 0
      %3717 = vmatmul.mubr.bf16.gmra.mrb[0].mxu0 %v3582
      %v3718 = vpop.f32.mrb[0].mxu0
      %v3719 = vadd.f32 0.0, %v3718
      %v3720 = vpop.f32.mrb[0].mxu0
      %v3721 = vpop.f32.mrb[0].mxu0
      %v3722 = vadd.f32 0.0, %v3721
      %v3723 = vpop.f32.mrb[0].mxu0
      %3724 = vmatprep.mubr.bf16.mxu0 0
      %3725 = vmatmul.mubr.bf16.gmra.mrb[0].mxu0 %v3585
      %v3726 = vpop.f32.mrb[0].mxu0
      %v3727 = vadd.f32 0.0, %v3726
      %v3728 = vpop.f32.mrb[0].mxu0
      %v3729 = vpop.f32.mrb[0].mxu0
      %v3730 = vadd.f32 0.0, %v3729
      %v3731 = vpop.f32.mrb[0].mxu0
      %3732 = vmatprep.mubr.bf16.mxu0 0
      %3733 = vmatmul.mubr.bf16.gmra.mrb[0].mxu0 %v3588
      %v3734 = vpop.f32.mrb[0].mxu0
      %v3735 = vadd.f32 0.0, %v3734
      %v3736 = vpop.f32.mrb[0].mxu0
      %v3737 = vpop.f32.mrb[0].mxu0
      %v3738 = vadd.f32 0.0, %v3737
      %v3739 = vpop.f32.mrb[0].mxu0
      %3740 = vmatprep.mubr.bf16.mxu0 0
      %3741 = vmatmul.mubr.bf16.gmra.mrb[0].mxu0 %v3591
      %v3742 = vpop.f32.mrb[0].mxu0
      %v3743 = vadd.f32 0.0, %v3742
      %v3744 = vpop.f32.mrb[0].mxu0
      %v3745 = vpop.f32.mrb[0].mxu0
      %v3746 = vadd.f32 0.0, %v3745
      %v3747 = vpop.f32.mrb[0].mxu0
      %3748 = vmatprep.mubr.bf16.mxu0 0
      %3749 = vmatmul.mubr.bf16.gmra.mrb[0].mxu0 %v3594
      %v3750 = vpop.f32.mrb[0].mxu0
      %v3751 = vadd.f32 0.0, %v3750
      %v3752 = vpop.f32.mrb[0].mxu0
      %v3753 = vpop.f32.mrb[0].mxu0
      %v3754 = vadd.f32 0.0, %v3753
      %v3755 = vpop.f32.mrb[0].mxu0
      %3756 = vdwg.mxu0
      %v3757 = vadd.f32 %v3318, %v3631
      %v3758 = vadd.f32 %v3319, %v3634
      %v3759 = vadd.f32 %v3320, %v3639
      %v3760 = vadd.f32 %v3321, %v3642
      %v3761 = vadd.f32 %v3322, %v3647
      %v3762 = vadd.f32 %v3323, %v3650
      %v3763 = vadd.f32 %v3324, %v3655
      %v3764 = vadd.f32 %v3325, %v3658
      %v3765 = vadd.f32 %v3326, %v3663
      %v3766 = vadd.f32 %v3327, %v3666
      %v3767 = vadd.f32 %v3328, %v3671
      %v3768 = vadd.f32 %v3329, %v3674
      %v3769 = vadd.f32 %v3330, %v3679
      %v3770 = vadd.f32 %v3331, %v3682
      %v3771 = vadd.f32 %v3332, %v3687
      %v3772 = vadd.f32 %v3333, %v3690
      %v3773 = vadd.f32 %v3334, %v3695
      %v3774 = vadd.f32 %v3335, %v3698
      %v3775 = vadd.f32 %v3336, %v3703
      %v3776 = vadd.f32 %v3337, %v3706
      %v3777 = vadd.f32 %v3338, %v3711
      %v3778 = vadd.f32 %v3339, %v3714
      %v3779 = vadd.f32 %v3340, %v3719
      %v3780 = vadd.f32 %v3341, %v3722
      %v3781 = vadd.f32 %v3342, %v3727
      %v3782 = vadd.f32 %v3343, %v3730
      %v3783 = vadd.f32 %v3344, %v3735
      %v3784 = vadd.f32 %v3345, %v3738
      %v3785 = vadd.f32 %v3346, %v3743
      %v3786 = vadd.f32 %v3347, %v3746
      %v3787 = vadd.f32 %v3348, %v3751
      %v3788 = vadd.f32 %v3349, %v3754
      %3789 = vst.msk [vmem:[#allocation3] sm:$0xff] %vm237, %v3757
      %3790 = vst.msk [vmem:[#allocation3 + $0x8] sm:$0xff] %vm237, %v3758
      %3791 = vst.msk [vmem:[#allocation3 + $0x10] sm:$0xff] %vm237, %v3759
      %3792 = vst.msk [vmem:[#allocation3 + $0x18] sm:$0xff] %vm237, %v3760
      %3793 = vst.msk [vmem:[#allocation3 + $0x20] sm:$0xff] %vm237, %v3761
      %3794 = vst.msk [vmem:[#allocation3 + $0x28] sm:$0xff] %vm237, %v3762
      %3795 = vst.msk [vmem:[#allocation3 + $0x30] sm:$0xff] %vm237, %v3763
      %3796 = vst.msk [vmem:[#allocation3 + $0x38] sm:$0xff] %vm237, %v3764
      %3797 = vst.msk [vmem:[#allocation3 + $0x40] sm:$0xff] %vm237, %v3765
      %3798 = vst.msk [vmem:[#allocation3 + $0x48] sm:$0xff] %vm237, %v3766
      %3799 = vst.msk [vmem:[#allocation3 + $0x50] sm:$0xff] %vm237, %v3767
      %3800 = vst.msk [vmem:[#allocation3 + $0x58] sm:$0xff] %vm237, %v3768
      %3801 = vst.msk [vmem:[#allocation3 + $0x60] sm:$0xff] %vm237, %v3769
      %3802 = vst.msk [vmem:[#allocation3 + $0x68] sm:$0xff] %vm237, %v3770
      %3803 = vst.msk [vmem:[#allocation3 + $0x70] sm:$0xff] %vm237, %v3771
      %3804 = vst.msk [vmem:[#allocation3 + $0x78] sm:$0xff] %vm237, %v3772
      %3805 = vst.msk [vmem:[#allocation3 + $0x80] sm:$0xff] %vm237, %v3773
      %3806 = vst.msk [vmem:[#allocation3 + $0x88] sm:$0xff] %vm237, %v3774
      %3807 = vst.msk [vmem:[#allocation3 + $0x90] sm:$0xff] %vm237, %v3775
      %3808 = vst.msk [vmem:[#allocation3 + $0x98] sm:$0xff] %vm237, %v3776
      %3809 = vst.msk [vmem:[#allocation3 + $0xa0] sm:$0xff] %vm237, %v3777
      %3810 = vst.msk [vmem:[#allocation3 + $0xa8] sm:$0xff] %vm237, %v3778
      %3811 = vst.msk [vmem:[#allocation3 + $0xb0] sm:$0xff] %vm237, %v3779
      %3812 = vst.msk [vmem:[#allocation3 + $0xb8] sm:$0xff] %vm237, %v3780
      %3813 = vst.msk [vmem:[#allocation3 + $0xc0] sm:$0xff] %vm237, %v3781
      %3814 = vst.msk [vmem:[#allocation3 + $0xc8] sm:$0xff] %vm237, %v3782
      %3815 = vst.msk [vmem:[#allocation3 + $0xd0] sm:$0xff] %vm237, %v3783
      %3816 = vst.msk [vmem:[#allocation3 + $0xd8] sm:$0xff] %vm237, %v3784
      %3817 = vst.msk [vmem:[#allocation3 + $0xe0] sm:$0xff] %vm237, %v3785
      %3818 = vst.msk [vmem:[#allocation3 + $0xe8] sm:$0xff] %vm237, %v3786
      %3819 = vst.msk [vmem:[#allocation3 + $0xf0] sm:$0xff] %vm237, %v3787
      %3820 = vst.msk [vmem:[#allocation3 + $0xf8] sm:$0xff] %vm237, %v3788
      %s3821 = scalar_lea.vmem %s224, 56
      %v3822 = vld [vmem:[%s3821] sm:$0xf]
      %v3823 = vld [vmem:[%s3821 + $0x4] sm:$0xf]
      %v3824 = vld [vmem:[%s3285 + $0x8] sm:$0xff]
      %v3825 = vld [vmem:[%s3285 + $0x20] sm:$0xff]
      %v3826 = vld [vmem:[%s3285 + $0x38] sm:$0xff]
      %v3827 = vld [vmem:[%s3285 + $0x50] sm:$0xff]
      %v3828 = vld [vmem:[%s3285 + $0x68] sm:$0xff]
      %v3829 = vld [vmem:[%s3285 + $0x80] sm:$0xff]
      %v3830 = vld [vmem:[%s3285 + $0x98] sm:$0xff]
      %v3831 = vld [vmem:[%s3285 + $0xb0] sm:$0xff]
      %v3832 = vld [vmem:[%s3285 + $0xc8] sm:$0xff]
      %v3833 = vld [vmem:[%s3285 + $0xe0] sm:$0xff]
      %v3834 = vld [vmem:[%s3285 + $0xf8] sm:$0xff]
      %v3835 = vld [vmem:[%s3285 + $0x110] sm:$0xff]
      %v3836 = vld [vmem:[%s3285 + $0x128] sm:$0xff]
      %v3837 = vld [vmem:[%s3285 + $0x140] sm:$0xff]
      %v3838 = vld [vmem:[%s3285 + $0x158] sm:$0xff]
      %v3839 = vld [vmem:[%s3285 + $0x170] sm:$0xff]
      %v3840 = vld [vmem:[#allocation3] sm:$0xff]
      %v3841 = vld [vmem:[#allocation3 + $0x8] sm:$0xff]
      %v3842 = vld [vmem:[#allocation3 + $0x10] sm:$0xff]
      %v3843 = vld [vmem:[#allocation3 + $0x18] sm:$0xff]
      %v3844 = vld [vmem:[#allocation3 + $0x20] sm:$0xff]
      %v3845 = vld [vmem:[#allocation3 + $0x28] sm:$0xff]
      %v3846 = vld [vmem:[#allocation3 + $0x30] sm:$0xff]
      %v3847 = vld [vmem:[#allocation3 + $0x38] sm:$0xff]
      %v3848 = vld [vmem:[#allocation3 + $0x40] sm:$0xff]
      %v3849 = vld [vmem:[#allocation3 + $0x48] sm:$0xff]
      %v3850 = vld [vmem:[#allocation3 + $0x50] sm:$0xff]
      %v3851 = vld [vmem:[#allocation3 + $0x58] sm:$0xff]
      %v3852 = vld [vmem:[#allocation3 + $0x60] sm:$0xff]
      %v3853 = vld [vmem:[#allocation3 + $0x68] sm:$0xff]
      %v3854 = vld [vmem:[#allocation3 + $0x70] sm:$0xff]
      %v3855 = vld [vmem:[#allocation3 + $0x78] sm:$0xff]
      %v3856 = vld [vmem:[#allocation3 + $0x80] sm:$0xff]
      %v3857 = vld [vmem:[#allocation3 + $0x88] sm:$0xff]
      %v3858 = vld [vmem:[#allocation3 + $0x90] sm:$0xff]
      %v3859 = vld [vmem:[#allocation3 + $0x98] sm:$0xff]
      %v3860 = vld [vmem:[#allocation3 + $0xa0] sm:$0xff]
      %v3861 = vld [vmem:[#allocation3 + $0xa8] sm:$0xff]
      %v3862 = vld [vmem:[#allocation3 + $0xb0] sm:$0xff]
      %v3863 = vld [vmem:[#allocation3 + $0xb8] sm:$0xff]
      %v3864 = vld [vmem:[#allocation3 + $0xc0] sm:$0xff]
      %v3865 = vld [vmem:[#allocation3 + $0xc8] sm:$0xff]
      %v3866 = vld [vmem:[#allocation3 + $0xd0] sm:$0xff]
      %v3867 = vld [vmem:[#allocation3 + $0xd8] sm:$0xff]
      %v3868 = vld [vmem:[#allocation3 + $0xe0] sm:$0xff]
      %v3869 = vld [vmem:[#allocation3 + $0xe8] sm:$0xff]
      %v3870 = vld [vmem:[#allocation3 + $0xf0] sm:$0xff]
      %v3871 = vld [vmem:[#allocation3 + $0xf8] sm:$0xff]
      %v3874 = vunpack.c.l.b16 %v3822
      %v3875 = vunpack.c.l.b16 %v3823
      %v3876 = vpack.c.b16 %v3875, %v3874
      %v3879 = vsel %vm237, %v3824, 0
      %v3882 = vsel %vm237, %v3825, 0
      %v3885 = vsel %vm237, %v3826, 0
      %v3888 = vsel %vm237, %v3827, 0
      %v3891 = vsel %vm237, %v3828, 0
      %v3894 = vsel %vm237, %v3829, 0
      %v3897 = vsel %vm237, %v3830, 0
      %v3900 = vsel %vm237, %v3831, 0
      %v3903 = vsel %vm237, %v3832, 0
      %v3906 = vsel %vm237, %v3833, 0
      %v3909 = vsel %vm237, %v3834, 0
      %v3912 = vsel %vm237, %v3835, 0
      %v3915 = vsel %vm237, %v3836, 0
      %v3918 = vsel %vm237, %v3837, 0
      %v3921 = vsel %vm237, %v3838, 0
      %v3924 = vsel %vm237, %v3839, 0
      %3926 = vmatprep.subr.bf16.mxu0 0
      %3927 = vmatpush1.bf16.msra.mxu0 %v3876
      %3928 = vmatprep.subr.bf16.mxu0 0
      %3929 = vmatpush1.bf16.msra.mxu0 0
      %3930 = vmatprep.subr.bf16.mxu0 0
      %3931 = vmatpush1.bf16.msra.mxu0 0
      %3932 = vmatprep.subr.bf16.mxu0 0
      %3933 = vmatpush1.bf16.msra.mxu0 0
      %3934 = vmatprep.subr.bf16.mxu0 0
      %3935 = vmatpush1.bf16.msra.mxu0 0
      %3936 = vmatprep.subr.bf16.mxu0 0
      %3937 = vmatpush1.bf16.msra.mxu0 0
      %3938 = vmatprep.subr.bf16.mxu0 0
      %3939 = vmatpush1.bf16.msra.mxu0 0
      %3940 = vmatprep.subr.bf16.mxu0 0
      %3941 = vmatpush1.bf16.msra.mxu0 0
      %3942 = vmatprep.subr.bf16.mxu0 0
      %3943 = vmatpush1.bf16.msra.mxu0 0
      %3944 = vmatprep.subr.bf16.mxu0 0
      %3945 = vmatpush1.bf16.msra.mxu0 0
      %3946 = vmatprep.subr.bf16.mxu0 0
      %3947 = vmatpush1.bf16.msra.mxu0 0
      %3948 = vmatprep.subr.bf16.mxu0 0
      %3949 = vmatpush1.bf16.msra.mxu0 0
      %3950 = vmatprep.subr.bf16.mxu0 0
      %3951 = vmatpush1.bf16.msra.mxu0 0
      %3952 = vmatprep.subr.bf16.mxu0 0
      %3953 = vmatpush1.bf16.msra.mxu0 0
      %3954 = vmatprep.subr.bf16.mxu0 0
      %3955 = vmatpush1.bf16.msra.mxu0 0
      %3956 = vmatprep.subr.bf16.mxu0 0
      %3957 = vmatpush1.bf16.msra.mxu0 0
      %3958 = vmatprep.mubr.bf16.mxu0 0
      %3959 = vmatmul.mubr.bf16.gmra.mrb[0].mxu0 %v3879
      %v3960 = vpop.f32.mrb[0].mxu0
      %v3961 = vadd.f32 0.0, %v3960
      %v3962 = vpop.f32.mrb[0].mxu0
      %v3963 = vpop.f32.mrb[0].mxu0
      %v3964 = vadd.f32 0.0, %v3963
      %v3965 = vpop.f32.mrb[0].mxu0
      %3966 = vmatprep.mubr.bf16.mxu0 0
      %3967 = vmatmul.mubr.bf16.gmra.mrb[0].mxu0 %v3882
      %v3968 = vpop.f32.mrb[0].mxu0
      %v3969 = vadd.f32 0.0, %v3968
      %v3970 = vpop.f32.mrb[0].mxu0
      %v3971 = vpop.f32.mrb[0].mxu0
      %v3972 = vadd.f32 0.0, %v3971
      %v3973 = vpop.f32.mrb[0].mxu0
      %3974 = vmatprep.mubr.bf16.mxu0 0
      %3975 = vmatmul.mubr.bf16.gmra.mrb[0].mxu0 %v3885
      %v3976 = vpop.f32.mrb[0].mxu0
      %v3977 = vadd.f32 0.0, %v3976
      %v3978 = vpop.f32.mrb[0].mxu0
      %v3979 = vpop.f32.mrb[0].mxu0
      %v3980 = vadd.f32 0.0, %v3979
      %v3981 = vpop.f32.mrb[0].mxu0
      %3982 = vmatprep.mubr.bf16.mxu0 0
      %3983 = vmatmul.mubr.bf16.gmra.mrb[0].mxu0 %v3888
      %v3984 = vpop.f32.mrb[0].mxu0
      %v3985 = vadd.f32 0.0, %v3984
      %v3986 = vpop.f32.mrb[0].mxu0
      %v3987 = vpop.f32.mrb[0].mxu0
      %v3988 = vadd.f32 0.0, %v3987
      %v3989 = vpop.f32.mrb[0].mxu0
      %3990 = vmatprep.mubr.bf16.mxu0 0
      %3991 = vmatmul.mubr.bf16.gmra.mrb[0].mxu0 %v3891
      %v3992 = vpop.f32.mrb[0].mxu0
      %v3993 = vadd.f32 0.0, %v3992
      %v3994 = vpop.f32.mrb[0].mxu0
      %v3995 = vpop.f32.mrb[0].mxu0
      %v3996 = vadd.f32 0.0, %v3995
      %v3997 = vpop.f32.mrb[0].mxu0
      %3998 = vmatprep.mubr.bf16.mxu0 0
      %3999 = vmatmul.mubr.bf16.gmra.mrb[0].mxu0 %v3894
      %v4000 = vpop.f32.mrb[0].mxu0
      %v4001 = vadd.f32 0.0, %v4000
      %v4002 = vpop.f32.mrb[0].mxu0
      %v4003 = vpop.f32.mrb[0].mxu0
      %v4004 = vadd.f32 0.0, %v4003
      %v4005 = vpop.f32.mrb[0].mxu0
      %4006 = vmatprep.mubr.bf16.mxu0 0
      %4007 = vmatmul.mubr.bf16.gmra.mrb[0].mxu0 %v3897
      %v4008 = vpop.f32.mrb[0].mxu0
      %v4009 = vadd.f32 0.0, %v4008
      %v4010 = vpop.f32.mrb[0].mxu0
      %v4011 = vpop.f32.mrb[0].mxu0
      %v4012 = vadd.f32 0.0, %v4011
      %v4013 = vpop.f32.mrb[0].mxu0
      %4014 = vmatprep.mubr.bf16.mxu0 0
      %4015 = vmatmul.mubr.bf16.gmra.mrb[0].mxu0 %v3900
      %v4016 = vpop.f32.mrb[0].mxu0
      %v4017 = vadd.f32 0.0, %v4016
      %v4018 = vpop.f32.mrb[0].mxu0
      %v4019 = vpop.f32.mrb[0].mxu0
      %v4020 = vadd.f32 0.0, %v4019
      %v4021 = vpop.f32.mrb[0].mxu0
      %4022 = vmatprep.mubr.bf16.mxu0 0
      %4023 = vmatmul.mubr.bf16.gmra.mrb[0].mxu0 %v3903
      %v4024 = vpop.f32.mrb[0].mxu0
      %v4025 = vadd.f32 0.0, %v4024
      %v4026 = vpop.f32.mrb[0].mxu0
      %v4027 = vpop.f32.mrb[0].mxu0
      %v4028 = vadd.f32 0.0, %v4027
      %v4029 = vpop.f32.mrb[0].mxu0
      %4030 = vmatprep.mubr.bf16.mxu0 0
      %4031 = vmatmul.mubr.bf16.gmra.mrb[0].mxu0 %v3906
      %v4032 = vpop.f32.mrb[0].mxu0
      %v4033 = vadd.f32 0.0, %v4032
      %v4034 = vpop.f32.mrb[0].mxu0
      %v4035 = vpop.f32.mrb[0].mxu0
      %v4036 = vadd.f32 0.0, %v4035
      %v4037 = vpop.f32.mrb[0].mxu0
      %4038 = vmatprep.mubr.bf16.mxu0 0
      %4039 = vmatmul.mubr.bf16.gmra.mrb[0].mxu0 %v3909
      %v4040 = vpop.f32.mrb[0].mxu0
      %v4041 = vadd.f32 0.0, %v4040
      %v4042 = vpop.f32.mrb[0].mxu0
      %v4043 = vpop.f32.mrb[0].mxu0
      %v4044 = vadd.f32 0.0, %v4043
      %v4045 = vpop.f32.mrb[0].mxu0
      %4046 = vmatprep.mubr.bf16.mxu0 0
      %4047 = vmatmul.mubr.bf16.gmra.mrb[0].mxu0 %v3912
      %v4048 = vpop.f32.mrb[0].mxu0
      %v4049 = vadd.f32 0.0, %v4048
      %v4050 = vpop.f32.mrb[0].mxu0
      %v4051 = vpop.f32.mrb[0].mxu0
      %v4052 = vadd.f32 0.0, %v4051
      %v4053 = vpop.f32.mrb[0].mxu0
      %4054 = vmatprep.mubr.bf16.mxu0 0
      %4055 = vmatmul.mubr.bf16.gmra.mrb[0].mxu0 %v3915
      %v4056 = vpop.f32.mrb[0].mxu0
      %v4057 = vadd.f32 0.0, %v4056
      %v4058 = vpop.f32.mrb[0].mxu0
      %v4059 = vpop.f32.mrb[0].mxu0
      %v4060 = vadd.f32 0.0, %v4059
      %v4061 = vpop.f32.mrb[0].mxu0
      %4062 = vmatprep.mubr.bf16.mxu0 0
      %4063 = vmatmul.mubr.bf16.gmra.mrb[0].mxu0 %v3918
      %v4064 = vpop.f32.mrb[0].mxu0
      %v4065 = vadd.f32 0.0, %v4064
      %v4066 = vpop.f32.mrb[0].mxu0
      %v4067 = vpop.f32.mrb[0].mxu0
      %v4068 = vadd.f32 0.0, %v4067
      %v4069 = vpop.f32.mrb[0].mxu0
      %4070 = vmatprep.mubr.bf16.mxu0 0
      %4071 = vmatmul.mubr.bf16.gmra.mrb[0].mxu0 %v3921
      %v4072 = vpop.f32.mrb[0].mxu0
      %v4073 = vadd.f32 0.0, %v4072
      %v4074 = vpop.f32.mrb[0].mxu0
      %v4075 = vpop.f32.mrb[0].mxu0
      %v4076 = vadd.f32 0.0, %v4075
      %v4077 = vpop.f32.mrb[0].mxu0
      %4078 = vmatprep.mubr.bf16.mxu0 0
      %4079 = vmatmul.mubr.bf16.gmra.mrb[0].mxu0 %v3924
      %v4080 = vpop.f32.mrb[0].mxu0
      %v4081 = vadd.f32 0.0, %v4080
      %v4082 = vpop.f32.mrb[0].mxu0
      %v4083 = vpop.f32.mrb[0].mxu0
      %v4084 = vadd.f32 0.0, %v4083
      %v4085 = vpop.f32.mrb[0].mxu0
      %4086 = vdwg.mxu0
      %v4087 = vadd.f32 %v3840, %v3961
      %v4088 = vadd.f32 %v3841, %v3964
      %v4089 = vadd.f32 %v3842, %v3969
      %v4090 = vadd.f32 %v3843, %v3972
      %v4091 = vadd.f32 %v3844, %v3977
      %v4092 = vadd.f32 %v3845, %v3980
      %v4093 = vadd.f32 %v3846, %v3985
      %v4094 = vadd.f32 %v3847, %v3988
      %v4095 = vadd.f32 %v3848, %v3993
      %v4096 = vadd.f32 %v3849, %v3996
      %v4097 = vadd.f32 %v3850, %v4001
      %v4098 = vadd.f32 %v3851, %v4004
      %v4099 = vadd.f32 %v3852, %v4009
      %v4100 = vadd.f32 %v3853, %v4012
      %v4101 = vadd.f32 %v3854, %v4017
      %v4102 = vadd.f32 %v3855, %v4020
      %v4103 = vadd.f32 %v3856, %v4025
      %v4104 = vadd.f32 %v3857, %v4028
      %v4105 = vadd.f32 %v3858, %v4033
      %v4106 = vadd.f32 %v3859, %v4036
      %v4107 = vadd.f32 %v3860, %v4041
      %v4108 = vadd.f32 %v3861, %v4044
      %v4109 = vadd.f32 %v3862, %v4049
      %v4110 = vadd.f32 %v3863, %v4052
      %v4111 = vadd.f32 %v3864, %v4057
      %v4112 = vadd.f32 %v3865, %v4060
      %v4113 = vadd.f32 %v3866, %v4065
      %v4114 = vadd.f32 %v3867, %v4068
      %v4115 = vadd.f32 %v3868, %v4073
      %v4116 = vadd.f32 %v3869, %v4076
      %v4117 = vadd.f32 %v3870, %v4081
      %v4118 = vadd.f32 %v3871, %v4084
      %4119 = vst.msk [vmem:[#allocation3] sm:$0xff] %vm237, %v4087
      %4120 = vst.msk [vmem:[#allocation3 + $0x8] sm:$0xff] %vm237, %v4088
      %4121 = vst.msk [vmem:[#allocation3 + $0x10] sm:$0xff] %vm237, %v4089
      %4122 = vst.msk [vmem:[#allocation3 + $0x18] sm:$0xff] %vm237, %v4090
      %4123 = vst.msk [vmem:[#allocation3 + $0x20] sm:$0xff] %vm237, %v4091
      %4124 = vst.msk [vmem:[#allocation3 + $0x28] sm:$0xff] %vm237, %v4092
      %4125 = vst.msk [vmem:[#allocation3 + $0x30] sm:$0xff] %vm237, %v4093
      %4126 = vst.msk [vmem:[#allocation3 + $0x38] sm:$0xff] %vm237, %v4094
      %4127 = vst.msk [vmem:[#allocation3 + $0x40] sm:$0xff] %vm237, %v4095
      %4128 = vst.msk [vmem:[#allocation3 + $0x48] sm:$0xff] %vm237, %v4096
      %4129 = vst.msk [vmem:[#allocation3 + $0x50] sm:$0xff] %vm237, %v4097
      %4130 = vst.msk [vmem:[#allocation3 + $0x58] sm:$0xff] %vm237, %v4098
      %4131 = vst.msk [vmem:[#allocation3 + $0x60] sm:$0xff] %vm237, %v4099
      %4132 = vst.msk [vmem:[#allocation3 + $0x68] sm:$0xff] %vm237, %v4100
      %4133 = vst.msk [vmem:[#allocation3 + $0x70] sm:$0xff] %vm237, %v4101
      %4134 = vst.msk [vmem:[#allocation3 + $0x78] sm:$0xff] %vm237, %v4102
      %4135 = vst.msk [vmem:[#allocation3 + $0x80] sm:$0xff] %vm237, %v4103
      %4136 = vst.msk [vmem:[#allocation3 + $0x88] sm:$0xff] %vm237, %v4104
      %4137 = vst.msk [vmem:[#allocation3 + $0x90] sm:$0xff] %vm237, %v4105
      %4138 = vst.msk [vmem:[#allocation3 + $0x98] sm:$0xff] %vm237, %v4106
      %4139 = vst.msk [vmem:[#allocation3 + $0xa0] sm:$0xff] %vm237, %v4107
      %4140 = vst.msk [vmem:[#allocation3 + $0xa8] sm:$0xff] %vm237, %v4108
      %4141 = vst.msk [vmem:[#allocation3 + $0xb0] sm:$0xff] %vm237, %v4109
      %4142 = vst.msk [vmem:[#allocation3 + $0xb8] sm:$0xff] %vm237, %v4110
      %4143 = vst.msk [vmem:[#allocation3 + $0xc0] sm:$0xff] %vm237, %v4111
      %4144 = vst.msk [vmem:[#allocation3 + $0xc8] sm:$0xff] %vm237, %v4112
      %4145 = vst.msk [vmem:[#allocation3 + $0xd0] sm:$0xff] %vm237, %v4113
      %4146 = vst.msk [vmem:[#allocation3 + $0xd8] sm:$0xff] %vm237, %v4114
      %4147 = vst.msk [vmem:[#allocation3 + $0xe0] sm:$0xff] %vm237, %v4115
      %4148 = vst.msk [vmem:[#allocation3 + $0xe8] sm:$0xff] %vm237, %v4116
      %4149 = vst.msk [vmem:[#allocation3 + $0xf0] sm:$0xff] %vm237, %v4117
      %4150 = vst.msk [vmem:[#allocation3 + $0xf8] sm:$0xff] %vm237, %v4118
      %s4151 = scalar_lea.vmem %s224, 64
      %v4152 = vld [vmem:[%s4151] sm:$0xf]
      %v4153 = vld [vmem:[%s4151 + $0x4] sm:$0xf]
      %v4154 = vld [vmem:[%s3285 + $0x8] sm:$0xff]
      %v4155 = vld [vmem:[%s3285 + $0x10] sm:$0x1]
      %v4156 = vld [vmem:[%s3285 + $0x20] sm:$0xff]
      %v4157 = vld [vmem:[%s3285 + $0x28] sm:$0x1]
      %v4158 = vld [vmem:[%s3285 + $0x38] sm:$0xff]
      %v4159 = vld [vmem:[%s3285 + $0x40] sm:$0x1]
      %v4160 = vld [vmem:[%s3285 + $0x50] sm:$0xff]
      %v4161 = vld [vmem:[%s3285 + $0x58] sm:$0x1]
      %v4162 = vld [vmem:[%s3285 + $0x68] sm:$0xff]
      %v4163 = vld [vmem:[%s3285 + $0x70] sm:$0x1]
      %v4164 = vld [vmem:[%s3285 + $0x80] sm:$0xff]
      %v4165 = vld [vmem:[%s3285 + $0x88] sm:$0x1]
      %v4166 = vld [vmem:[%s3285 + $0x98] sm:$0xff]
      %v4167 = vld [vmem:[%s3285 + $0xa0] sm:$0x1]
      %v4168 = vld [vmem:[%s3285 + $0xb0] sm:$0xff]
      %v4169 = vld [vmem:[%s3285 + $0xb8] sm:$0x1]
      %v4170 = vld [vmem:[%s3285 + $0xc8] sm:$0xff]
      %v4171 = vld [vmem:[%s3285 + $0xd0] sm:$0x1]
      %v4172 = vld [vmem:[%s3285 + $0xe0] sm:$0xff]
      %v4173 = vld [vmem:[%s3285 + $0xe8] sm:$0x1]
      %v4174 = vld [vmem:[%s3285 + $0xf8] sm:$0xff]
      %v4175 = vld [vmem:[%s3285 + $0x100] sm:$0x1]
      %v4176 = vld [vmem:[%s3285 + $0x110] sm:$0xff]
      %v4177 = vld [vmem:[%s3285 + $0x118] sm:$0x1]
      %v4178 = vld [vmem:[%s3285 + $0x128] sm:$0xff]
      %v4179 = vld [vmem:[%s3285 + $0x130] sm:$0x1]
      %v4180 = vld [vmem:[%s3285 + $0x140] sm:$0xff]
      %v4181 = vld [vmem:[%s3285 + $0x148] sm:$0x1]
      %v4182 = vld [vmem:[%s3285 + $0x158] sm:$0xff]
      %v4183 = vld [vmem:[%s3285 + $0x160] sm:$0x1]
      %v4184 = vld [vmem:[%s3285 + $0x170] sm:$0xff]
      %v4185 = vld [vmem:[%s3285 + $0x178] sm:$0x1]
      %v4186 = vld [vmem:[#allocation3] sm:$0xff]
      %v4187 = vld [vmem:[#allocation3 + $0x8] sm:$0xff]
      %v4188 = vld [vmem:[#allocation3 + $0x10] sm:$0xff]
      %v4189 = vld [vmem:[#allocation3 + $0x18] sm:$0xff]
      %v4190 = vld [vmem:[#allocation3 + $0x20] sm:$0xff]
      %v4191 = vld [vmem:[#allocation3 + $0x28] sm:$0xff]
      %v4192 = vld [vmem:[#allocation3 + $0x30] sm:$0xff]
      %v4193 = vld [vmem:[#allocation3 + $0x38] sm:$0xff]
      %v4194 = vld [vmem:[#allocation3 + $0x40] sm:$0xff]
      %v4195 = vld [vmem:[#allocation3 + $0x48] sm:$0xff]
      %v4196 = vld [vmem:[#allocation3 + $0x50] sm:$0xff]
      %v4197 = vld [vmem:[#allocation3 + $0x58] sm:$0xff]
      %v4198 = vld [vmem:[#allocation3 + $0x60] sm:$0xff]
      %v4199 = vld [vmem:[#allocation3 + $0x68] sm:$0xff]
      %v4200 = vld [vmem:[#allocation3 + $0x70] sm:$0xff]
      %v4201 = vld [vmem:[#allocation3 + $0x78] sm:$0xff]
      %v4202 = vld [vmem:[#allocation3 + $0x80] sm:$0xff]
      %v4203 = vld [vmem:[#allocation3 + $0x88] sm:$0xff]
      %v4204 = vld [vmem:[#allocation3 + $0x90] sm:$0xff]
      %v4205 = vld [vmem:[#allocation3 + $0x98] sm:$0xff]
      %v4206 = vld [vmem:[#allocation3 + $0xa0] sm:$0xff]
      %v4207 = vld [vmem:[#allocation3 + $0xa8] sm:$0xff]
      %v4208 = vld [vmem:[#allocation3 + $0xb0] sm:$0xff]
      %v4209 = vld [vmem:[#allocation3 + $0xb8] sm:$0xff]
      %v4210 = vld [vmem:[#allocation3 + $0xc0] sm:$0xff]
      %v4211 = vld [vmem:[#allocation3 + $0xc8] sm:$0xff]
      %v4212 = vld [vmem:[#allocation3 + $0xd0] sm:$0xff]
      %v4213 = vld [vmem:[#allocation3 + $0xd8] sm:$0xff]
      %v4214 = vld [vmem:[#allocation3 + $0xe0] sm:$0xff]
      %v4215 = vld [vmem:[#allocation3 + $0xe8] sm:$0xff]
      %v4216 = vld [vmem:[#allocation3 + $0xf0] sm:$0xff]
      %v4217 = vld [vmem:[#allocation3 + $0xf8] sm:$0xff]
      %v4219 = vshrl.u32 %v4154, 16
      %v4221 = vshll.u32 %v4154, 16
      %v4223 = vrot.slane %v4221, 1
      %v4224 = vor.u32 %v4219, %v4223
      %v4226 = vshll.u32 %v4155, 16
      %v4228 = vrot.slane %v4226, 1
      %v4229 = vsel %vm1404, %v4224, %v4228
      %v4231 = vshrl.u32 %v4156, 16
      %v4233 = vshll.u32 %v4156, 16
      %v4235 = vrot.slane %v4233, 1
      %v4236 = vor.u32 %v4231, %v4235
      %v4238 = vshll.u32 %v4157, 16
      %v4240 = vrot.slane %v4238, 1
      %v4241 = vsel %vm1404, %v4236, %v4240
      %v4243 = vshrl.u32 %v4158, 16
      %v4245 = vshll.u32 %v4158, 16
      %v4247 = vrot.slane %v4245, 1
      %v4248 = vor.u32 %v4243, %v4247
      %v4250 = vshll.u32 %v4159, 16
      %v4252 = vrot.slane %v4250, 1
      %v4253 = vsel %vm1404, %v4248, %v4252
      %v4255 = vshrl.u32 %v4160, 16
      %v4257 = vshll.u32 %v4160, 16
      %v4259 = vrot.slane %v4257, 1
      %v4260 = vor.u32 %v4255, %v4259
      %v4262 = vshll.u32 %v4161, 16
      %v4264 = vrot.slane %v4262, 1
      %v4265 = vsel %vm1404, %v4260, %v4264
      %v4267 = vshrl.u32 %v4162, 16
      %v4269 = vshll.u32 %v4162, 16
      %v4271 = vrot.slane %v4269, 1
      %v4272 = vor.u32 %v4267, %v4271
      %v4274 = vshll.u32 %v4163, 16
      %v4276 = vrot.slane %v4274, 1
      %v4277 = vsel %vm1404, %v4272, %v4276
      %v4279 = vshrl.u32 %v4164, 16
      %v4281 = vshll.u32 %v4164, 16
      %v4283 = vrot.slane %v4281, 1
      %v4284 = vor.u32 %v4279, %v4283
      %v4286 = vshll.u32 %v4165, 16
      %v4288 = vrot.slane %v4286, 1
      %v4289 = vsel %vm1404, %v4284, %v4288
      %v4291 = vshrl.u32 %v4166, 16
      %v4293 = vshll.u32 %v4166, 16
      %v4295 = vrot.slane %v4293, 1
      %v4296 = vor.u32 %v4291, %v4295
      %v4298 = vshll.u32 %v4167, 16
      %v4300 = vrot.slane %v4298, 1
      %v4301 = vsel %vm1404, %v4296, %v4300
      %v4303 = vshrl.u32 %v4168, 16
      %v4305 = vshll.u32 %v4168, 16
      %v4307 = vrot.slane %v4305, 1
      %v4308 = vor.u32 %v4303, %v4307
      %v4310 = vshll.u32 %v4169, 16
      %v4312 = vrot.slane %v4310, 1
      %v4313 = vsel %vm1404, %v4308, %v4312
      %v4315 = vshrl.u32 %v4170, 16
      %v4317 = vshll.u32 %v4170, 16
      %v4319 = vrot.slane %v4317, 1
      %v4320 = vor.u32 %v4315, %v4319
      %v4322 = vshll.u32 %v4171, 16
      %v4324 = vrot.slane %v4322, 1
      %v4325 = vsel %vm1404, %v4320, %v4324
      %v4327 = vshrl.u32 %v4172, 16
      %v4329 = vshll.u32 %v4172, 16
      %v4331 = vrot.slane %v4329, 1
      %v4332 = vor.u32 %v4327, %v4331
      %v4334 = vshll.u32 %v4173, 16
      %v4336 = vrot.slane %v4334, 1
      %v4337 = vsel %vm1404, %v4332, %v4336
      %v4339 = vshrl.u32 %v4174, 16
      %v4341 = vshll.u32 %v4174, 16
      %v4343 = vrot.slane %v4341, 1
      %v4344 = vor.u32 %v4339, %v4343
      %v4346 = vshll.u32 %v4175, 16
      %v4348 = vrot.slane %v4346, 1
      %v4349 = vsel %vm1404, %v4344, %v4348
      %v4351 = vshrl.u32 %v4176, 16
      %v4353 = vshll.u32 %v4176, 16
      %v4355 = vrot.slane %v4353, 1
      %v4356 = vor.u32 %v4351, %v4355
      %v4358 = vshll.u32 %v4177, 16
      %v4360 = vrot.slane %v4358, 1
      %v4361 = vsel %vm1404, %v4356, %v4360
      %v4363 = vshrl.u32 %v4178, 16
      %v4365 = vshll.u32 %v4178, 16
      %v4367 = vrot.slane %v4365, 1
      %v4368 = vor.u32 %v4363, %v4367
      %v4370 = vshll.u32 %v4179, 16
      %v4372 = vrot.slane %v4370, 1
      %v4373 = vsel %vm1404, %v4368, %v4372
      %v4375 = vshrl.u32 %v4180, 16
      %v4377 = vshll.u32 %v4180, 16
      %v4379 = vrot.slane %v4377, 1
      %v4380 = vor.u32 %v4375, %v4379
      %v4382 = vshll.u32 %v4181, 16
      %v4384 = vrot.slane %v4382, 1
      %v4385 = vsel %vm1404, %v4380, %v4384
      %v4387 = vshrl.u32 %v4182, 16
      %v4389 = vshll.u32 %v4182, 16
      %v4391 = vrot.slane %v4389, 1
      %v4392 = vor.u32 %v4387, %v4391
      %v4394 = vshll.u32 %v4183, 16
      %v4396 = vrot.slane %v4394, 1
      %v4397 = vsel %vm1404, %v4392, %v4396
      %v4399 = vshrl.u32 %v4184, 16
      %v4401 = vshll.u32 %v4184, 16
      %v4403 = vrot.slane %v4401, 1
      %v4404 = vor.u32 %v4399, %v4403
      %v4406 = vshll.u32 %v4185, 16
      %v4408 = vrot.slane %v4406, 1
      %v4409 = vsel %vm1404, %v4404, %v4408
      %v4412 = vunpack.c.l.b16 %v4152
      %v4413 = vunpack.c.l.b16 %v4153
      %v4414 = vpack.c.b16 %v4413, %v4412
      %v4417 = vsel %vm237, %v4229, 0
      %v4420 = vsel %vm237, %v4241, 0
      %v4423 = vsel %vm237, %v4253, 0
      %v4426 = vsel %vm237, %v4265, 0
      %v4429 = vsel %vm237, %v4277, 0
      %v4432 = vsel %vm237, %v4289, 0
      %v4435 = vsel %vm237, %v4301, 0
      %v4438 = vsel %vm237, %v4313, 0
      %v4441 = vsel %vm237, %v4325, 0
      %v4444 = vsel %vm237, %v4337, 0
      %v4447 = vsel %vm237, %v4349, 0
      %v4450 = vsel %vm237, %v4361, 0
      %v4453 = vsel %vm237, %v4373, 0
      %v4456 = vsel %vm237, %v4385, 0
      %v4459 = vsel %vm237, %v4397, 0
      %v4462 = vsel %vm237, %v4409, 0
      %4464 = vmatprep.subr.bf16.mxu0 0
      %4465 = vmatpush1.bf16.msra.mxu0 %v4414
      %4466 = vmatprep.subr.bf16.mxu0 0
      %4467 = vmatpush1.bf16.msra.mxu0 0
      %4468 = vmatprep.subr.bf16.mxu0 0
      %4469 = vmatpush1.bf16.msra.mxu0 0
      %4470 = vmatprep.subr.bf16.mxu0 0
      %4471 = vmatpush1.bf16.msra.mxu0 0
      %4472 = vmatprep.subr.bf16.mxu0 0
      %4473 = vmatpush1.bf16.msra.mxu0 0
      %4474 = vmatprep.subr.bf16.mxu0 0
      %4475 = vmatpush1.bf16.msra.mxu0 0
      %4476 = vmatprep.subr.bf16.mxu0 0
      %4477 = vmatpush1.bf16.msra.mxu0 0
      %4478 = vmatprep.subr.bf16.mxu0 0
      %4479 = vmatpush1.bf16.msra.mxu0 0
      %4480 = vmatprep.subr.bf16.mxu0 0
      %4481 = vmatpush1.bf16.msra.mxu0 0
      %4482 = vmatprep.subr.bf16.mxu0 0
      %4483 = vmatpush1.bf16.msra.mxu0 0
      %4484 = vmatprep.subr.bf16.mxu0 0
      %4485 = vmatpush1.bf16.msra.mxu0 0
      %4486 = vmatprep.subr.bf16.mxu0 0
      %4487 = vmatpush1.bf16.msra.mxu0 0
      %4488 = vmatprep.subr.bf16.mxu0 0
      %4489 = vmatpush1.bf16.msra.mxu0 0
      %4490 = vmatprep.subr.bf16.mxu0 0
      %4491 = vmatpush1.bf16.msra.mxu0 0
      %4492 = vmatprep.subr.bf16.mxu0 0
      %4493 = vmatpush1.bf16.msra.mxu0 0
      %4494 = vmatprep.subr.bf16.mxu0 0
      %4495 = vmatpush1.bf16.msra.mxu0 0
      %4496 = vmatprep.mubr.bf16.mxu0 0
      %4497 = vmatmul.mubr.bf16.gmra.mrb[0].mxu0 %v4417
      %v4498 = vpop.f32.mrb[0].mxu0
      %v4499 = vadd.f32 0.0, %v4498
      %v4500 = vpop.f32.mrb[0].mxu0
      %v4501 = vpop.f32.mrb[0].mxu0
      %v4502 = vadd.f32 0.0, %v4501
      %v4503 = vpop.f32.mrb[0].mxu0
      %4504 = vmatprep.mubr.bf16.mxu0 0
      %4505 = vmatmul.mubr.bf16.gmra.mrb[0].mxu0 %v4420
      %v4506 = vpop.f32.mrb[0].mxu0
      %v4507 = vadd.f32 0.0, %v4506
      %v4508 = vpop.f32.mrb[0].mxu0
      %v4509 = vpop.f32.mrb[0].mxu0
      %v4510 = vadd.f32 0.0, %v4509
      %v4511 = vpop.f32.mrb[0].mxu0
      %4512 = vmatprep.mubr.bf16.mxu0 0
      %4513 = vmatmul.mubr.bf16.gmra.mrb[0].mxu0 %v4423
      %v4514 = vpop.f32.mrb[0].mxu0
      %v4515 = vadd.f32 0.0, %v4514
      %v4516 = vpop.f32.mrb[0].mxu0
      %v4517 = vpop.f32.mrb[0].mxu0
      %v4518 = vadd.f32 0.0, %v4517
      %v4519 = vpop.f32.mrb[0].mxu0
      %4520 = vmatprep.mubr.bf16.mxu0 0
      %4521 = vmatmul.mubr.bf16.gmra.mrb[0].mxu0 %v4426
      %v4522 = vpop.f32.mrb[0].mxu0
      %v4523 = vadd.f32 0.0, %v4522
      %v4524 = vpop.f32.mrb[0].mxu0
      %v4525 = vpop.f32.mrb[0].mxu0
      %v4526 = vadd.f32 0.0, %v4525
      %v4527 = vpop.f32.mrb[0].mxu0
      %4528 = vmatprep.mubr.bf16.mxu0 0
      %4529 = vmatmul.mubr.bf16.gmra.mrb[0].mxu0 %v4429
      %v4530 = vpop.f32.mrb[0].mxu0
      %v4531 = vadd.f32 0.0, %v4530
      %v4532 = vpop.f32.mrb[0].mxu0
      %v4533 = vpop.f32.mrb[0].mxu0
      %v4534 = vadd.f32 0.0, %v4533
      %v4535 = vpop.f32.mrb[0].mxu0
      %4536 = vmatprep.mubr.bf16.mxu0 0
      %4537 = vmatmul.mubr.bf16.gmra.mrb[0].mxu0 %v4432
      %v4538 = vpop.f32.mrb[0].mxu0
      %v4539 = vadd.f32 0.0, %v4538
      %v4540 = vpop.f32.mrb[0].mxu0
      %v4541 = vpop.f32.mrb[0].mxu0
      %v4542 = vadd.f32 0.0, %v4541
      %v4543 = vpop.f32.mrb[0].mxu0
      %4544 = vmatprep.mubr.bf16.mxu0 0
      %4545 = vmatmul.mubr.bf16.gmra.mrb[0].mxu0 %v4435
      %v4546 = vpop.f32.mrb[0].mxu0
      %v4547 = vadd.f32 0.0, %v4546
      %v4548 = vpop.f32.mrb[0].mxu0
      %v4549 = vpop.f32.mrb[0].mxu0
      %v4550 = vadd.f32 0.0, %v4549
      %v4551 = vpop.f32.mrb[0].mxu0
      %4552 = vmatprep.mubr.bf16.mxu0 0
      %4553 = vmatmul.mubr.bf16.gmra.mrb[0].mxu0 %v4438
      %v4554 = vpop.f32.mrb[0].mxu0
      %v4555 = vadd.f32 0.0, %v4554
      %v4556 = vpop.f32.mrb[0].mxu0
      %v4557 = vpop.f32.mrb[0].mxu0
      %v4558 = vadd.f32 0.0, %v4557
      %v4559 = vpop.f32.mrb[0].mxu0
      %4560 = vmatprep.mubr.bf16.mxu0 0
      %4561 = vmatmul.mubr.bf16.gmra.mrb[0].mxu0 %v4441
      %v4562 = vpop.f32.mrb[0].mxu0
      %v4563 = vadd.f32 0.0, %v4562
      %v4564 = vpop.f32.mrb[0].mxu0
      %v4565 = vpop.f32.mrb[0].mxu0
      %v4566 = vadd.f32 0.0, %v4565
      %v4567 = vpop.f32.mrb[0].mxu0
      %4568 = vmatprep.mubr.bf16.mxu0 0
      %4569 = vmatmul.mubr.bf16.gmra.mrb[0].mxu0 %v4444
      %v4570 = vpop.f32.mrb[0].mxu0
      %v4571 = vadd.f32 0.0, %v4570
      %v4572 = vpop.f32.mrb[0].mxu0
      %v4573 = vpop.f32.mrb[0].mxu0
      %v4574 = vadd.f32 0.0, %v4573
      %v4575 = vpop.f32.mrb[0].mxu0
      %4576 = vmatprep.mubr.bf16.mxu0 0
      %4577 = vmatmul.mubr.bf16.gmra.mrb[0].mxu0 %v4447
      %v4578 = vpop.f32.mrb[0].mxu0
      %v4579 = vadd.f32 0.0, %v4578
      %v4580 = vpop.f32.mrb[0].mxu0
      %v4581 = vpop.f32.mrb[0].mxu0
      %v4582 = vadd.f32 0.0, %v4581
      %v4583 = vpop.f32.mrb[0].mxu0
      %4584 = vmatprep.mubr.bf16.mxu0 0
      %4585 = vmatmul.mubr.bf16.gmra.mrb[0].mxu0 %v4450
      %v4586 = vpop.f32.mrb[0].mxu0
      %v4587 = vadd.f32 0.0, %v4586
      %v4588 = vpop.f32.mrb[0].mxu0
      %v4589 = vpop.f32.mrb[0].mxu0
      %v4590 = vadd.f32 0.0, %v4589
      %v4591 = vpop.f32.mrb[0].mxu0
      %4592 = vmatprep.mubr.bf16.mxu0 0
      %4593 = vmatmul.mubr.bf16.gmra.mrb[0].mxu0 %v4453
      %v4594 = vpop.f32.mrb[0].mxu0
      %v4595 = vadd.f32 0.0, %v4594
      %v4596 = vpop.f32.mrb[0].mxu0
      %v4597 = vpop.f32.mrb[0].mxu0
      %v4598 = vadd.f32 0.0, %v4597
      %v4599 = vpop.f32.mrb[0].mxu0
      %4600 = vmatprep.mubr.bf16.mxu0 0
      %4601 = vmatmul.mubr.bf16.gmra.mrb[0].mxu0 %v4456
      %v4602 = vpop.f32.mrb[0].mxu0
      %v4603 = vadd.f32 0.0, %v4602
      %v4604 = vpop.f32.mrb[0].mxu0
      %v4605 = vpop.f32.mrb[0].mxu0
      %v4606 = vadd.f32 0.0, %v4605
      %v4607 = vpop.f32.mrb[0].mxu0
      %4608 = vmatprep.mubr.bf16.mxu0 0
      %4609 = vmatmul.mubr.bf16.gmra.mrb[0].mxu0 %v4459
      %v4610 = vpop.f32.mrb[0].mxu0
      %v4611 = vadd.f32 0.0, %v4610
      %v4612 = vpop.f32.mrb[0].mxu0
      %v4613 = vpop.f32.mrb[0].mxu0
      %v4614 = vadd.f32 0.0, %v4613
      %v4615 = vpop.f32.mrb[0].mxu0
      %4616 = vmatprep.mubr.bf16.mxu0 0
      %4617 = vmatmul.mubr.bf16.gmra.mrb[0].mxu0 %v4462
      %v4618 = vpop.f32.mrb[0].mxu0
      %v4619 = vadd.f32 0.0, %v4618
      %v4620 = vpop.f32.mrb[0].mxu0
      %v4621 = vpop.f32.mrb[0].mxu0
      %v4622 = vadd.f32 0.0, %v4621
      %v4623 = vpop.f32.mrb[0].mxu0
      %4624 = vdwg.mxu0
      %v4625 = vadd.f32 %v4186, %v4499
      %v4626 = vadd.f32 %v4187, %v4502
      %v4627 = vadd.f32 %v4188, %v4507
      %v4628 = vadd.f32 %v4189, %v4510
      %v4629 = vadd.f32 %v4190, %v4515
      %v4630 = vadd.f32 %v4191, %v4518
      %v4631 = vadd.f32 %v4192, %v4523
      %v4632 = vadd.f32 %v4193, %v4526
      %v4633 = vadd.f32 %v4194, %v4531
      %v4634 = vadd.f32 %v4195, %v4534
      %v4635 = vadd.f32 %v4196, %v4539
      %v4636 = vadd.f32 %v4197, %v4542
      %v4637 = vadd.f32 %v4198, %v4547
      %v4638 = vadd.f32 %v4199, %v4550
      %v4639 = vadd.f32 %v4200, %v4555
      %v4640 = vadd.f32 %v4201, %v4558
      %v4641 = vadd.f32 %v4202, %v4563
      %v4642 = vadd.f32 %v4203, %v4566
      %v4643 = vadd.f32 %v4204, %v4571
      %v4644 = vadd.f32 %v4205, %v4574
      %v4645 = vadd.f32 %v4206, %v4579
      %v4646 = vadd.f32 %v4207, %v4582
      %v4647 = vadd.f32 %v4208, %v4587
      %v4648 = vadd.f32 %v4209, %v4590
      %v4649 = vadd.f32 %v4210, %v4595
      %v4650 = vadd.f32 %v4211, %v4598
      %v4651 = vadd.f32 %v4212, %v4603
      %v4652 = vadd.f32 %v4213, %v4606
      %v4653 = vadd.f32 %v4214, %v4611
      %v4654 = vadd.f32 %v4215, %v4614
      %v4655 = vadd.f32 %v4216, %v4619
      %v4656 = vadd.f32 %v4217, %v4622
      %4657 = vst.msk [vmem:[#allocation3] sm:$0xff] %vm237, %v4625
      %4658 = vst.msk [vmem:[#allocation3 + $0x8] sm:$0xff] %vm237, %v4626
      %4659 = vst.msk [vmem:[#allocation3 + $0x10] sm:$0xff] %vm237, %v4627
      %4660 = vst.msk [vmem:[#allocation3 + $0x18] sm:$0xff] %vm237, %v4628
      %4661 = vst.msk [vmem:[#allocation3 + $0x20] sm:$0xff] %vm237, %v4629
      %4662 = vst.msk [vmem:[#allocation3 + $0x28] sm:$0xff] %vm237, %v4630
      %4663 = vst.msk [vmem:[#allocation3 + $0x30] sm:$0xff] %vm237, %v4631
      %4664 = vst.msk [vmem:[#allocation3 + $0x38] sm:$0xff] %vm237, %v4632
      %4665 = vst.msk [vmem:[#allocation3 + $0x40] sm:$0xff] %vm237, %v4633
      %4666 = vst.msk [vmem:[#allocation3 + $0x48] sm:$0xff] %vm237, %v4634
      %4667 = vst.msk [vmem:[#allocation3 + $0x50] sm:$0xff] %vm237, %v4635
      %4668 = vst.msk [vmem:[#allocation3 + $0x58] sm:$0xff] %vm237, %v4636
      %4669 = vst.msk [vmem:[#allocation3 + $0x60] sm:$0xff] %vm237, %v4637
      %4670 = vst.msk [vmem:[#allocation3 + $0x68] sm:$0xff] %vm237, %v4638
      %4671 = vst.msk [vmem:[#allocation3 + $0x70] sm:$0xff] %vm237, %v4639
      %4672 = vst.msk [vmem:[#allocation3 + $0x78] sm:$0xff] %vm237, %v4640
      %4673 = vst.msk [vmem:[#allocation3 + $0x80] sm:$0xff] %vm237, %v4641
      %4674 = vst.msk [vmem:[#allocation3 + $0x88] sm:$0xff] %vm237, %v4642
      %4675 = vst.msk [vmem:[#allocation3 + $0x90] sm:$0xff] %vm237, %v4643
      %4676 = vst.msk [vmem:[#allocation3 + $0x98] sm:$0xff] %vm237, %v4644
      %4677 = vst.msk [vmem:[#allocation3 + $0xa0] sm:$0xff] %vm237, %v4645
      %4678 = vst.msk [vmem:[#allocation3 + $0xa8] sm:$0xff] %vm237, %v4646
      %4679 = vst.msk [vmem:[#allocation3 + $0xb0] sm:$0xff] %vm237, %v4647
      %4680 = vst.msk [vmem:[#allocation3 + $0xb8] sm:$0xff] %vm237, %v4648
      %4681 = vst.msk [vmem:[#allocation3 + $0xc0] sm:$0xff] %vm237, %v4649
      %4682 = vst.msk [vmem:[#allocation3 + $0xc8] sm:$0xff] %vm237, %v4650
      %4683 = vst.msk [vmem:[#allocation3 + $0xd0] sm:$0xff] %vm237, %v4651
      %4684 = vst.msk [vmem:[#allocation3 + $0xd8] sm:$0xff] %vm237, %v4652
      %4685 = vst.msk [vmem:[#allocation3 + $0xe0] sm:$0xff] %vm237, %v4653
      %4686 = vst.msk [vmem:[#allocation3 + $0xe8] sm:$0xff] %vm237, %v4654
      %4687 = vst.msk [vmem:[#allocation3 + $0xf0] sm:$0xff] %vm237, %v4655
      %4688 = vst.msk [vmem:[#allocation3 + $0xf8] sm:$0xff] %vm237, %v4656
      %v4689 = vld [vmem:[#allocation3] sm:$0xff]
      %v4690 = vld [vmem:[#allocation3 + $0x8] sm:$0xff]
      %v4691 = vld [vmem:[#allocation3 + $0x10] sm:$0xff]
      %v4692 = vld [vmem:[#allocation3 + $0x18] sm:$0xff]
      %v4693 = vld [vmem:[#allocation3 + $0x20] sm:$0xff]
      %v4694 = vld [vmem:[#allocation3 + $0x28] sm:$0xff]
      %v4695 = vld [vmem:[#allocation3 + $0x30] sm:$0xff]
      %v4696 = vld [vmem:[#allocation3 + $0x38] sm:$0xff]
      %v4697 = vld [vmem:[#allocation3 + $0x40] sm:$0xff]
      %v4698 = vld [vmem:[#allocation3 + $0x48] sm:$0xff]
      %v4699 = vld [vmem:[#allocation3 + $0x50] sm:$0xff]
      %v4700 = vld [vmem:[#allocation3 + $0x58] sm:$0xff]
      %v4701 = vld [vmem:[#allocation3 + $0x60] sm:$0xff]
      %v4702 = vld [vmem:[#allocation3 + $0x68] sm:$0xff]
      %v4703 = vld [vmem:[#allocation3 + $0x70] sm:$0xff]
      %v4704 = vld [vmem:[#allocation3 + $0x78] sm:$0xff]
      %v4705 = vld [vmem:[#allocation3 + $0x80] sm:$0xff]
      %v4706 = vld [vmem:[#allocation3 + $0x88] sm:$0xff]
      %v4707 = vld [vmem:[#allocation3 + $0x90] sm:$0xff]
      %v4708 = vld [vmem:[#allocation3 + $0x98] sm:$0xff]
      %v4709 = vld [vmem:[#allocation3 + $0xa0] sm:$0xff]
      %v4710 = vld [vmem:[#allocation3 + $0xa8] sm:$0xff]
      %v4711 = vld [vmem:[#allocation3 + $0xb0] sm:$0xff]
      %v4712 = vld [vmem:[#allocation3 + $0xb8] sm:$0xff]
      %v4713 = vld [vmem:[#allocation3 + $0xc0] sm:$0xff]
      %v4714 = vld [vmem:[#allocation3 + $0xc8] sm:$0xff]
      %v4715 = vld [vmem:[#allocation3 + $0xd0] sm:$0xff]
      %v4716 = vld [vmem:[#allocation3 + $0xd8] sm:$0xff]
      %v4717 = vld [vmem:[#allocation3 + $0xe0] sm:$0xff]
      %v4718 = vld [vmem:[#allocation3 + $0xe8] sm:$0xff]
      %v4719 = vld [vmem:[#allocation3 + $0xf0] sm:$0xff]
      %v4720 = vld [vmem:[#allocation3 + $0xf8] sm:$0xff]
      %v4721 = vld [vmem:[%s227] sm:$0x1]
      %v4723 = vlaneseq
      %v4724 = vshrl.u32 %v4723, 7
      %v4725 = vsub.s32 0, %v4724
      %v4726 = vrot.slane %v4721, %v4725
      %v4728 = vadd.f32 %v4689, %v4726
      %v4729 = vadd.f32 %v4690, %v4726
      %v4730 = vadd.f32 %v4691, %v4726
      %v4731 = vadd.f32 %v4692, %v4726
      %v4732 = vadd.f32 %v4693, %v4726
      %v4733 = vadd.f32 %v4694, %v4726
      %v4734 = vadd.f32 %v4695, %v4726
      %v4735 = vadd.f32 %v4696, %v4726
      %v4736 = vadd.f32 %v4697, %v4726
      %v4737 = vadd.f32 %v4698, %v4726
      %v4738 = vadd.f32 %v4699, %v4726
      %v4739 = vadd.f32 %v4700, %v4726
      %v4740 = vadd.f32 %v4701, %v4726
      %v4741 = vadd.f32 %v4702, %v4726
      %v4742 = vadd.f32 %v4703, %v4726
      %v4743 = vadd.f32 %v4704, %v4726
      %v4744 = vadd.f32 %v4705, %v4726
      %v4745 = vadd.f32 %v4706, %v4726
      %v4746 = vadd.f32 %v4707, %v4726
      %v4747 = vadd.f32 %v4708, %v4726
      %v4748 = vadd.f32 %v4709, %v4726
      %v4749 = vadd.f32 %v4710, %v4726
      %v4750 = vadd.f32 %v4711, %v4726
      %v4751 = vadd.f32 %v4712, %v4726
      %v4752 = vadd.f32 %v4713, %v4726
      %v4753 = vadd.f32 %v4714, %v4726
      %v4754 = vadd.f32 %v4715, %v4726
      %v4755 = vadd.f32 %v4716, %v4726
      %v4756 = vadd.f32 %v4717, %v4726
      %v4757 = vadd.f32 %v4718, %v4726
      %v4758 = vadd.f32 %v4719, %v4726
      %v4759 = vadd.f32 %v4720, %v4726
      %v4760 = vmax.f32 %v4728, 0.0
      %v4761 = vmax.f32 %v4729, 0.0
      %v4762 = vmax.f32 %v4730, 0.0
      %v4763 = vmax.f32 %v4731, 0.0
      %v4764 = vmax.f32 %v4732, 0.0
      %v4765 = vmax.f32 %v4733, 0.0
      %v4766 = vmax.f32 %v4734, 0.0
      %v4767 = vmax.f32 %v4735, 0.0
      %v4768 = vmax.f32 %v4736, 0.0
      %v4769 = vmax.f32 %v4737, 0.0
      %v4770 = vmax.f32 %v4738, 0.0
      %v4771 = vmax.f32 %v4739, 0.0
      %v4772 = vmax.f32 %v4740, 0.0
      %v4773 = vmax.f32 %v4741, 0.0
      %v4774 = vmax.f32 %v4742, 0.0
      %v4775 = vmax.f32 %v4743, 0.0
      %v4776 = vmax.f32 %v4744, 0.0
      %v4777 = vmax.f32 %v4745, 0.0
      %v4778 = vmax.f32 %v4746, 0.0
      %v4779 = vmax.f32 %v4747, 0.0
      %v4780 = vmax.f32 %v4748, 0.0
      %v4781 = vmax.f32 %v4749, 0.0
      %v4782 = vmax.f32 %v4750, 0.0
      %v4783 = vmax.f32 %v4751, 0.0
      %v4784 = vmax.f32 %v4752, 0.0
      %v4785 = vmax.f32 %v4753, 0.0
      %v4786 = vmax.f32 %v4754, 0.0
      %v4787 = vmax.f32 %v4755, 0.0
      %v4788 = vmax.f32 %v4756, 0.0
      %v4789 = vmax.f32 %v4757, 0.0
      %v4790 = vmax.f32 %v4758, 0.0
      %v4791 = vmax.f32 %v4759, 0.0
      %v4792 = vpack.c.bf16 %v4761, %v4760
      %v4793 = vpack.c.bf16 %v4763, %v4762
      %v4794 = vpack.c.bf16 %v4765, %v4764
      %v4795 = vpack.c.bf16 %v4767, %v4766
      %v4796 = vpack.c.bf16 %v4769, %v4768
      %v4797 = vpack.c.bf16 %v4771, %v4770
      %v4798 = vpack.c.bf16 %v4773, %v4772
      %v4799 = vpack.c.bf16 %v4775, %v4774
      %v4800 = vpack.c.bf16 %v4777, %v4776
      %v4801 = vpack.c.bf16 %v4779, %v4778
      %v4802 = vpack.c.bf16 %v4781, %v4780
      %v4803 = vpack.c.bf16 %v4783, %v4782
      %v4804 = vpack.c.bf16 %v4785, %v4784
      %v4805 = vpack.c.bf16 %v4787, %v4786
      %v4806 = vpack.c.bf16 %v4789, %v4788
      %v4807 = vpack.c.bf16 %v4791, %v4790
      %v4824 = vunpack.c.l.b16 %v4792
      %v4825 = vunpack.c.h.b16 %v4792
      %v4826 = vunpack.c.l.b16 %v4793
      %v4827 = vunpack.c.h.b16 %v4793
      %v4828 = vunpack.c.l.b16 %v4794
      %v4829 = vunpack.c.h.b16 %v4794
      %v4830 = vunpack.c.l.b16 %v4795
      %v4831 = vunpack.c.h.b16 %v4795
      %v4832 = vunpack.c.l.b16 %v4796
      %v4833 = vunpack.c.h.b16 %v4796
      %v4834 = vunpack.c.l.b16 %v4797
      %v4835 = vunpack.c.h.b16 %v4797
      %v4836 = vunpack.c.l.b16 %v4798
      %v4837 = vunpack.c.h.b16 %v4798
      %v4838 = vunpack.c.l.b16 %v4799
      %v4839 = vunpack.c.h.b16 %v4799
      %v4840 = vunpack.c.l.b16 %v4800
      %v4841 = vunpack.c.h.b16 %v4800
      %v4842 = vunpack.c.l.b16 %v4801
      %v4843 = vunpack.c.h.b16 %v4801
      %v4844 = vunpack.c.l.b16 %v4802
      %v4845 = vunpack.c.h.b16 %v4802
      %v4846 = vunpack.c.l.b16 %v4803
      %v4847 = vunpack.c.h.b16 %v4803
      %v4848 = vunpack.c.l.b16 %v4804
      %v4849 = vunpack.c.h.b16 %v4804
      %v4850 = vunpack.c.l.b16 %v4805
      %v4851 = vunpack.c.h.b16 %v4805
      %v4852 = vunpack.c.l.b16 %v4806
      %v4853 = vunpack.c.h.b16 %v4806
      %v4854 = vunpack.c.l.b16 %v4807
      %v4855 = vunpack.c.h.b16 %v4807
      %v4856 = vpack.c.b16 %v4824, %v4824
      %v4857 = vpack.c.b16 %v4825, %v4825
      %v4858 = vpack.c.b16 %v4826, %v4826
      %v4859 = vpack.c.b16 %v4827, %v4827
      %v4860 = vpack.c.b16 %v4828, %v4828
      %v4861 = vpack.c.b16 %v4829, %v4829
      %v4862 = vpack.c.b16 %v4830, %v4830
      %v4863 = vpack.c.b16 %v4831, %v4831
      %v4864 = vpack.c.b16 %v4832, %v4832
      %v4865 = vpack.c.b16 %v4833, %v4833
      %v4866 = vpack.c.b16 %v4834, %v4834
      %v4867 = vpack.c.b16 %v4835, %v4835
      %v4868 = vpack.c.b16 %v4836, %v4836
      %v4869 = vpack.c.b16 %v4837, %v4837
      %v4870 = vpack.c.b16 %v4838, %v4838
      %v4871 = vpack.c.b16 %v4839, %v4839
      %v4872 = vpack.c.b16 %v4840, %v4840
      %v4873 = vpack.c.b16 %v4841, %v4841
      %v4874 = vpack.c.b16 %v4842, %v4842
      %v4875 = vpack.c.b16 %v4843, %v4843
      %v4876 = vpack.c.b16 %v4844, %v4844
      %v4877 = vpack.c.b16 %v4845, %v4845
      %v4878 = vpack.c.b16 %v4846, %v4846
      %v4879 = vpack.c.b16 %v4847, %v4847
      %v4880 = vpack.c.b16 %v4848, %v4848
      %v4881 = vpack.c.b16 %v4849, %v4849
      %v4882 = vpack.c.b16 %v4850, %v4850
      %v4883 = vpack.c.b16 %v4851, %v4851
      %v4884 = vpack.c.b16 %v4852, %v4852
      %v4885 = vpack.c.b16 %v4853, %v4853
      %v4886 = vpack.c.b16 %v4854, %v4854
      %v4887 = vpack.c.b16 %v4855, %v4855
      %vm4920 = vcmask 125952
      %4921 = vst.msk [vmem:[%s235] sm:$0xf] %vm4920, %v4856
      %4922 = vst.msk [vmem:[%s235 + $0x4] sm:$0xf] %vm4920, %v4857
      %4923 = vst.msk [vmem:[%s235 + $0x8] sm:$0xf] %vm4920, %v4858
      %4924 = vst.msk [vmem:[%s235 + $0xc] sm:$0xf] %vm4920, %v4859
      %4925 = vst.msk [vmem:[%s235 + $0x10] sm:$0xf] %vm4920, %v4860
      %4926 = vst.msk [vmem:[%s235 + $0x14] sm:$0xf] %vm4920, %v4861
      %4927 = vst.msk [vmem:[%s235 + $0x18] sm:$0xf] %vm4920, %v4862
      %4928 = vst.msk [vmem:[%s235 + $0x1c] sm:$0xf] %vm4920, %v4863
      %4929 = vst.msk [vmem:[%s235 + $0x20] sm:$0xf] %vm4920, %v4864
      %4930 = vst.msk [vmem:[%s235 + $0x24] sm:$0xf] %vm4920, %v4865
      %4931 = vst.msk [vmem:[%s235 + $0x28] sm:$0xf] %vm4920, %v4866
      %4932 = vst.msk [vmem:[%s235 + $0x2c] sm:$0xf] %vm4920, %v4867
      %4933 = vst.msk [vmem:[%s235 + $0x30] sm:$0xf] %vm4920, %v4868
      %4934 = vst.msk [vmem:[%s235 + $0x34] sm:$0xf] %vm4920, %v4869
      %4935 = vst.msk [vmem:[%s235 + $0x38] sm:$0xf] %vm4920, %v4870
      %4936 = vst.msk [vmem:[%s235 + $0x3c] sm:$0xf] %vm4920, %v4871
      %4937 = vst.msk [vmem:[%s235 + $0x40] sm:$0xf] %vm4920, %v4872
      %4938 = vst.msk [vmem:[%s235 + $0x44] sm:$0xf] %vm4920, %v4873
      %4939 = vst.msk [vmem:[%s235 + $0x48] sm:$0xf] %vm4920, %v4874
      %4940 = vst.msk [vmem:[%s235 + $0x4c] sm:$0xf] %vm4920, %v4875
      %4941 = vst.msk [vmem:[%s235 + $0x50] sm:$0xf] %vm4920, %v4876
      %4942 = vst.msk [vmem:[%s235 + $0x54] sm:$0xf] %vm4920, %v4877
      %4943 = vst.msk [vmem:[%s235 + $0x58] sm:$0xf] %vm4920, %v4878
      %4944 = vst.msk [vmem:[%s235 + $0x5c] sm:$0xf] %vm4920, %v4879
      %4945 = vst.msk [vmem:[%s235 + $0x60] sm:$0xf] %vm4920, %v4880
      %4946 = vst.msk [vmem:[%s235 + $0x64] sm:$0xf] %vm4920, %v4881
      %4947 = vst.msk [vmem:[%s235 + $0x68] sm:$0xf] %vm4920, %v4882
      %4948 = vst.msk [vmem:[%s235 + $0x6c] sm:$0xf] %vm4920, %v4883
      %4949 = vst.msk [vmem:[%s235 + $0x70] sm:$0xf] %vm4920, %v4884
      %4950 = vst.msk [vmem:[%s235 + $0x74] sm:$0xf] %vm4920, %v4885
      %4951 = vst.msk [vmem:[%s235 + $0x78] sm:$0xf] %vm4920, %v4886
      %4952 = vst.msk [vmem:[%s235 + $0x7c] sm:$0xf] %vm4920, %v4887
      %p4953 = scmp.lt.s32.totalorder %s18, 1
      %s4954 = scalar_select %p4953, %s18, 1
      %p4955 = scmp.lt.s32.totalorder %s19, 0
      %s4956 = scalar_select %p4955, %s19, 0
      %s4957 = smul.addr %s4954, 32
      %s4958 = sadd.s32 %s4956, %s4957
      %s4959 = smul.addr %s4958, 4
      %s4960 = scalar_lea.vmem %s3, %s4959
      // Predicated region
      $region33: #{resnext_bottleneck_forward.4} parent=31 // pred_check
        %p4961 = pneg %p126
      $region34: #{resnext_bottleneck_forward.4} parent=31 // pred_check_branch
        %4963 = sbr.rel (%p4961) target = $region36
      $region35: #{resnext_bottleneck_forward.4} parent=31 // pred_region
        _
      $region36: #{resnext_bottleneck_forward.4} parent=31 // pred_fallthru
        _
    $region32: #{resnext_bottleneck_forward.4} parent=5 // pred_fallthru
      _
    %p4964 = scmp.le.s32.totalorder 2, %s9
    // Predicated region
    $region37: #{resnext_bottleneck_forward.4} parent=5 // pred_check
      %p4965 = pneg %p4964
    $region38: #{resnext_bottleneck_forward.4} parent=5 // pred_check_branch
      %4967 = sbr.rel (%p4965) target = $region40
    $region39: #{resnext_bottleneck_forward.4} parent=5 // pred_region
      %s4968 = ssub.s32 %s9, 2
      // Predicated region
      $region41: #{resnext_bottleneck_forward.4} parent=39 // pred_check
        %p4969 = pneg %p132
      $region42: #{resnext_bottleneck_forward.4} parent=39 // pred_check_branch
        %4971 = sbr.rel (%p4969) target = $region44
      $region43: #{resnext_bottleneck_forward.4} parent=39 // pred_region
        %p4972 = scmp.lt.s32.totalorder %s20, 1
        %s4973 = scalar_select %p4972, %s20, 1
        %p4974 = scmp.lt.s32.totalorder %s21, 0
        %s4975 = scalar_select %p4974, %s21, 0
        %s4976 = smul.addr %s4973, 32
        %s4977 = sadd.s32 %s4975, %s4976
        %s4978 = smul.addr %s4977, 4
        %s4979 = scalar_lea.vmem %s3, %s4978
      $region44: #{resnext_bottleneck_forward.4} parent=39 // pred_fallthru
        _
    $region40: #{resnext_bottleneck_forward.4} parent=5 // pred_fallthru
      _
  $region6: #{resnext_bottleneck_forward.4} parent=0 // loop_footer
    %s13 = sadd.s32 1, %s9
  $region7: #{resnext_bottleneck_forward.4} parent=0 // loop_footer_branch
    %8 = sbr.rel target = $region3
  $region8: #{resnext_bottleneck_forward.4} parent=0 // loop_exit
    _

</llo_original>
